<compile_context>
chip_gen: v7x
topology: tpu7x:2x2x1
jax: 0.10.0
libtpu: 0.0.40
codegen_flags: <defaults>
</compile_context>

<pallas_src>
import functools

import jax
import jax.numpy as jnp
from jax import lax
from jax.experimental import pallas as pl
from jax.experimental.pallas import tpu as pltpu

# Small shapes consistent with the module: C % H == 0 and head_dim even (rotary).
N_EMBD = 96
N_HEAD = 6
HEAD_DIM = N_EMBD // N_HEAD   # 16


# ---------------------------------------------------------------------------
# Fused kernel: QKV proj + RMS norm + rotary + causal attention (head-batched)
#               + output projection; `batch_block` batch elements per grid step.
# ---------------------------------------------------------------------------
def _attn_kernel(x_ref, wqkv_ref, wproj_ref, seg_ref, rot_ref,
                 cosq_ref, sinq_ref, cosk_ref, sink_ref, bd_ref, bias_ref,
                 o_ref, y_ref, p_ref,
                 *, n_head, head_dim, batch_block, qkv_slot, eps, use_bf16):
    Bb = batch_block
    _, T, C = x_ref.shape
    H, D = n_head, head_dim
    M = Bb * T

    def mm(a, b):
        # MXU matmul; optionally bf16 operands with f32 accumulation.
        if use_bf16:
            a = a.astype(jnp.bfloat16)
            b = b.astype(jnp.bfloat16)
        return jnp.dot(a, b, preferred_element_type=jnp.float32)

    # Merge the batch block into one (Bb*T, C) row slab (layout-free reshape).
    x = x_ref[...].reshape(M, C)

    # ---- fused QKV projection: one MXU issue over all Bb*T rows -------------
    qkv = mm(x, wqkv_ref[...])
    q = qkv[:, 0:C]
    k = qkv[:, qkv_slot:qkv_slot + C]
    v = qkv[:, 2 * qkv_slot:2 * qkv_slot + C]

    # ---- per-head RMS norm at full (M, C) width (kept f32) ------------------
    # seg is block-diagonal with 1/D inside each head block, so (t*t) @ seg is
    # the per-head mean of squares broadcast across that head's columns.
    seg = seg_ref[...]

    def rmsnorm(t):
        ms = jnp.dot(t * t, seg, preferred_element_type=jnp.float32)
        return t * lax.rsqrt(ms + eps)

    q = rmsnorm(q)
    k = rmsnorm(k)

    # ---- rotary at full width; rotate-half(+sign) via signed permutation ----
    # 1/sqrt(D) softmax scale is folded into the q-path cos/sin tables (exact).
    rot = rot_ref[...]

    def rope(t, cos, sin):
        t_rot = jnp.dot(t, rot, preferred_element_type=jnp.float32)
        return t * cos + t_rot * sin

    q = rope(q, cosq_ref[...], sinq_ref[...])
    k = rope(k, cosk_ref[...], sink_ref[...])

    bd = bd_ref[...]        # (H*T, C) block-diagonal 0/1 head mask
    bias = bias_ref[...]    # (T, H*T) additive causal mask (0 / -1e30), per head

    # TODO(synk): for long T switch to a flash-style KV-tiled online-softmax loop
    # (and add a query-block parallel grid axis so v7x keeps 2 TCs busy at B==1);
    # the (T, H*T) score tile below does not scale to long sequences.
    for b in range(Bb):                      # static, small -> unrolled
        lo = b * T
        qb = q[lo:lo + T, :]                  # sublane slices (T multiple of 8)
        kb = k[lo:lo + T, :]
        vb = v[lo:lo + T, :]

        # Head-batched operands: block-diagonal K / V, built once per batch elem.
        k_bd = jnp.concatenate([kb] * H, axis=0) * bd          # (H*T, C)
        v_bd = jnp.concatenate([vb] * H, axis=0) * bd          # (H*T, C)

        # Scores: one contraction-C matmul -> (T, H*T); column block h holds
        # the (T, T) scores of head h.  No explicit transpose of K.
        if use_bf16:
            s = lax.dot_general(qb.astype(jnp.bfloat16), k_bd.astype(jnp.bfloat16),
                                (((1,), (1,)), ((), ())),
                                preferred_element_type=jnp.float32)
        else:
            s = lax.dot_general(qb, k_bd, (((1,), (1,)), ((), ())),
                                preferred_element_type=jnp.float32)
        s = s + bias                                           # causal mask

        # Per-head softmax on lane-tile-aligned 128-wide column blocks; the
        # normalized probabilities land in a VMEM scratch (bounds live ranges).
        for h in range(H):
            sh = s[:, h * T:(h + 1) * T]
            mh = jnp.max(sh, axis=-1, keepdims=True)
            ph = jnp.exp(sh - mh)
            lh = jnp.sum(ph, axis=-1, keepdims=True)
            # approx=True would move this to the EUP but exceeds 5e-5 parity.
            p_ref[:, h * T:(h + 1) * T] = ph * pl.reciprocal(lh, approx=False)

        # Head-batched P @ V: one contraction-(H*T) matmul -> dense (T, C).
        y_ref[lo:lo + T, :] = mm(p_ref[...], v_bd)

    # ---- single fused output projection over all Bb*T rows ------------------
    out = mm(y_ref[...], wproj_ref[...])
    o_ref[...] = out.reshape(Bb, T, C)        # lane-dense (Bb, T, C) store


# ---------------------------------------------------------------------------
# Constant tables (hoisted out of the per-call path; cached on static shapes).
# ---------------------------------------------------------------------------
@functools.lru_cache(maxsize=None)
def _attn_tables(T, C, H, D):
    d = D // 2
    # Rotary cos/sin, rounded through bf16 like the PyTorch Rotary module,
    # broadcast to full per-head width: [cos|cos], [sin|sin] tiled over heads.
    inv_freq = 1.0 / (10000.0 ** (jnp.arange(0, D, 2, dtype=jnp.float32) / D))
    freqs = jnp.outer(jnp.arange(T, dtype=jnp.float32), inv_freq)      # (T, d)
    cos = jnp.cos(freqs).astype(jnp.bfloat16).astype(jnp.float32)
    sin = jnp.sin(freqs).astype(jnp.bfloat16).astype(jnp.float32)
    cos_full = jnp.tile(jnp.concatenate([cos, cos], axis=-1), (1, H))  # (T, C)
    sin_full = jnp.tile(jnp.concatenate([sin, sin], axis=-1), (1, H))  # (T, C)

    idx = jnp.arange(C)
    i = idx[:, None]      # input column
    j = idx[None, :]      # output column
    # Block-diagonal segment-mean matrix: seg[i, j] = 1/D if same head else 0.
    seg = jnp.where((i // D) == (j // D), 1.0 / D, 0.0).astype(jnp.float32)
    # Block-diagonal signed rotate-half: (x @ rot) = [x2, -x1] within each head.
    plus = (i == j + d) & ((j % D) < d)
    minus = (i == j - d) & ((j % D) >= d)
    rot = plus.astype(jnp.float32) - minus.astype(jnp.float32)

    # Block-diagonal head mask for the expanded K / V operands: (H*T, C).
    r = jnp.arange(H * T)[:, None]
    c = jnp.arange(C)[None, :]
    bd = ((c // D) == (r // T)).astype(jnp.float32)

    # Additive causal mask, tiled per head along the columns: (T, H*T).
    t1 = jnp.arange(T)[:, None]
    t2 = jnp.arange(T)[None, :]
    bias_block = jnp.where(t2 <= t1, 0.0, -1e30).astype(jnp.float32)
    bias = jnp.tile(bias_block, (1, H))

    return cos_full, sin_full, seg, rot, bd, bias


# ---------------------------------------------------------------------------
# Wrapper
# ---------------------------------------------------------------------------
def causal_self_attention(x, wq, wk, wv, wproj, n_head=N_HEAD, *,
                          batch_block=None, use_bf16=False):
    """x: (B, T, C).  Weights are torch nn.Linear weights, shape (out, in)."""
    B, T, C = x.shape
    H = n_head
    D = C // H
    assert C % H == 0 and D % 2 == 0
    eps = float(jnp.finfo(jnp.float32).eps)

    # Default: 2 parallel grid steps (keeps both v7x TCs busy), each processing
    # half the batch.  On v5e/v6e pass batch_block=B for one fat serial step.
    if batch_block is None:
        batch_block = B // 2 if (B % 2 == 0 and B >= 2) else 1
    assert B % batch_block == 0
    Bb = batch_block
    n_steps = B // Bb
    M = Bb * T

    # Pack Q/K/V weights (transposed, since torch Linear does x @ W.T) into a
    # single operand; each block starts on a 128-lane boundary so the kernel's
    # Q/K/V slices are lane-tile aligned.
    slot = ((C + 127) // 128) * 128
    pad = slot - C

    def _padded(w):
        return jnp.pad(w.T.astype(jnp.float32), ((0, 0), (0, pad)))

    wqkv = jnp.concatenate([_padded(wq), _padded(wk), _padded(wv)], axis=1)
    wproj_t = wproj.T.astype(jnp.float32)                          # (C, C)

    cos_full, sin_full, seg, rot, bd, bias = _attn_tables(T, C, H, D)
    scale = 1.0 / float(D) ** 0.5               # exact power of two for D=16
    cos_t = jnp.tile(cos_full, (Bb, 1))          # (Bb*T, C)
    sin_t = jnp.tile(sin_full, (Bb, 1))
    cosq, sinq = cos_t * scale, sin_t * scale    # scale folded into q tables
    cosk, sink = cos_t, sin_t

    kernel = functools.partial(_attn_kernel, n_head=H, head_dim=D,
                               batch_block=Bb, qkv_slot=slot, eps=eps,
                               use_bf16=use_bf16)
    return pl.pallas_call(
        kernel,
        out_shape=jax.ShapeDtypeStruct((B, T, C), jnp.float32),
        grid=(n_steps,),
        in_specs=[
            pl.BlockSpec((Bb, T, C), lambda g: (g, 0, 0)),         # x block
            pl.BlockSpec((C, 3 * slot), lambda g: (0, 0)),         # packed Wqkv
            pl.BlockSpec((C, C), lambda g: (0, 0)),                # Wproj^T
            pl.BlockSpec((C, C), lambda g: (0, 0)),                # segment mean
            pl.BlockSpec((C, C), lambda g: (0, 0)),                # rotate-half
            pl.BlockSpec((M, C), lambda g: (0, 0)),                # cos_q (scaled)
            pl.BlockSpec((M, C), lambda g: (0, 0)),                # sin_q (scaled)
            pl.BlockSpec((M, C), lambda g: (0, 0)),                # cos_k
            pl.BlockSpec((M, C), lambda g: (0, 0)),                # sin_k
            pl.BlockSpec((H * T, C), lambda g: (0, 0)),            # block-diag mask
            pl.BlockSpec((T, H * T), lambda g: (0, 0)),            # causal bias
        ],
        out_specs=pl.BlockSpec((Bb, T, C), lambda g: (g, 0, 0)),
        scratch_shapes=[
            pltpu.VMEM((M, C), jnp.float32),        # y accumulator (pre-proj)
            pltpu.VMEM((T, H * T), jnp.float32),    # normalized probabilities
        ],
        compiler_params=pltpu.CompilerParams(
            dimension_semantics=("parallel",)),
    )(x, wqkv, wproj_t, seg, rot, cosq, sinq, cosk, sink, bd, bias)


# ---------------------------------------------------------------------------
# Pure-JAX reference (mirrors the PyTorch forward) for correctness checking.
# ---------------------------------------------------------------------------
def reference(x, wq, wk, wv, wproj, n_head=N_HEAD):
    B, T, C = x.shape
    H = n_head
    D = C // H
    q = (x @ wq.T).reshape(B, T, H, D)
    k = (x @ wk.T).reshape(B, T, H, D)
    v = (x @ wv.T).reshape(B, T, H, D)

    eps = jnp.finfo(jnp.float32).eps
    rmsn = lambda t: t * jax.lax.rsqrt(jnp.mean(t * t, -1, keepdims=True) + eps)
    q, k = rmsn(q), rmsn(k)

    inv_freq = 1.0 / (10000.0 ** (jnp.arange(0, D, 2, dtype=jnp.float32) / D))
    freqs = jnp.outer(jnp.arange(T, dtype=jnp.float32), inv_freq)
    cos = jnp.cos(freqs).astype(jnp.bfloat16).astype(jnp.float32)[None, :, None, :]
    sin = jnp.sin(freqs).astype(jnp.bfloat16).astype(jnp.float32)[None, :, None, :]

    def rope(t):
        d = D // 2
        t1, t2 = t[..., :d], t[..., d:]
        return jnp.concatenate([t1 * cos + t2 * sin, -t1 * sin + t2 * cos], -1)

    q, k = rope(q), rope(k)
    qh, kh, vh = (jnp.transpose(a, (0, 2, 1, 3)) for a in (q, k, v))
    s = jnp.einsum('bhqd,bhkd->bhqk', qh, kh) / jnp.sqrt(jnp.float32(D))
    mask = jnp.tril(jnp.ones((T, T), dtype=bool))
    s = jnp.where(mask, s, -jnp.inf)
    p = jax.nn.softmax(s, axis=-1)
    y = jnp.einsum('bhqk,bhkd->bhqd', p, vh)
    y = jnp.transpose(y, (0, 2, 1, 3)).reshape(B, T, C)
    return y @ wproj.T


if __name__ == "__main__":
    # B=4 so the default batch_block=2 exercises both the merged-row projections
    # (M = 256 rows) and 2 parallel grid steps.
    B, T, C = 4, 128, N_EMBD

    key = jax.random.PRNGKey(0)
    kx, kq, kk, kv, kp = jax.random.split(key, 5)
    x = jax.random.normal(kx, (B, T, C), dtype=jnp.float32)
    # torch Linear weight shape: (out_features, in_features).
    # NOTE: the module zero-inits c_proj; random weights here so the fused
    # projection path is actually exercised (shapes match __init__ exactly).
    wq = jax.random.normal(kq, (C, C), dtype=jnp.float32) * 0.02
    wk = jax.random.normal(kk, (C, C), dtype=jnp.float32) * 0.02
    wv = jax.random.normal(kv, (C, C), dtype=jnp.float32) * 0.02
    wproj = jax.random.normal(kp, (C, C), dtype=jnp.float32) * 0.02

    ref = reference(x, wq, wk, wv, wproj)

    # f32 MXU path: tight parity with the f32 reference.
    out = jax.block_until_ready(causal_self_attention(x, wq, wk, wv, wproj))
    assert out.shape == (B, T, C)
    err = float(jnp.max(jnp.abs(out - ref)))
    assert jnp.allclose(out, ref, atol=5e-5, rtol=5e-5), err

    # bf16 MXU operand path (v5e/v6e/v7x perf lever): looser numerical check.
    out_bf16 = jax.block_until_ready(
        causal_self_attention(x, wq, wk, wv, wproj, use_bf16=True))
    err_bf16 = float(jnp.max(jnp.abs(out_bf16 - ref)))
    assert jnp.allclose(out_bf16, ref, atol=5e-2, rtol=5e-2), err_bf16

    print("KERNEL_OK")
</pallas_src>

<mosaic_0001>
module attributes {stable_mosaic.version = 11 : i64} {
  func.func @_attn_kernel(%arg0: i32, %arg1: memref<2x128x96xf32, #tpu.memory_space<vmem>>, %arg2: memref<96x384xf32, #tpu.memory_space<vmem>>, %arg3: memref<96x96xf32, #tpu.memory_space<vmem>>, %arg4: memref<96x96xf32, #tpu.memory_space<vmem>>, %arg5: memref<96x96xf32, #tpu.memory_space<vmem>>, %arg6: memref<256x96xf32, #tpu.memory_space<vmem>>, %arg7: memref<256x96xf32, #tpu.memory_space<vmem>>, %arg8: memref<256x96xf32, #tpu.memory_space<vmem>>, %arg9: memref<256x96xf32, #tpu.memory_space<vmem>>, %arg10: memref<768x96xf32, #tpu.memory_space<vmem>>, %arg11: memref<128x768xf32, #tpu.memory_space<vmem>>, %arg12: memref<2x128x96xf32, #tpu.memory_space<vmem>>, %arg13: memref<256x96xf32, #tpu.memory_space<vmem>>, %arg14: memref<128x768xf32, #tpu.memory_space<vmem>>) attributes {dimension_semantics = [#tpu.dimension_semantics<parallel>], iteration_bounds = array<i64: 2>, scalar_prefetch = 0 : i64, scratch_operands = 2 : i64, tpu.core_type = #tpu.core_type<tc>, window_params = [{transform_indices = @transform_0, window_bounds = array<i64: 2, 128, 96>}, {pipeline_mode = #tpu.pipeline_mode<synchronous>, transform_indices = @transform_1, window_bounds = array<i64: 96, 384>}, {pipeline_mode = #tpu.pipeline_mode<synchronous>, transform_indices = @transform_2, window_bounds = array<i64: 96, 96>}, {pipeline_mode = #tpu.pipeline_mode<synchronous>, transform_indices = @transform_3, window_bounds = array<i64: 96, 96>}, {pipeline_mode = #tpu.pipeline_mode<synchronous>, transform_indices = @transform_4, window_bounds = array<i64: 96, 96>}, {pipeline_mode = #tpu.pipeline_mode<synchronous>, transform_indices = @transform_5, window_bounds = array<i64: 256, 96>}, {pipeline_mode = #tpu.pipeline_mode<synchronous>, transform_indices = @transform_6, window_bounds = array<i64: 256, 96>}, {pipeline_mode = #tpu.pipeline_mode<synchronous>, transform_indices = @transform_7, window_bounds = array<i64: 256, 96>}, {pipeline_mode = #tpu.pipeline_mode<synchronous>, transform_indices = @transform_8, window_bounds = array<i64: 256, 96>}, {pipeline_mode = #tpu.pipeline_mode<synchronous>, transform_indices = @transform_9, window_bounds = array<i64: 768, 96>}, {pipeline_mode = #tpu.pipeline_mode<synchronous>, transform_indices = @transform_10, window_bounds = array<i64: 128, 768>}, {transform_indices = @transform_11, window_bounds = array<i64: 2, 128, 96>}]} {
    %c0 = arith.constant 0 : index
    %c0_0 = arith.constant 0 : index
    %c0_1 = arith.constant 0 : index
    %0 = vector.load %arg1[%c0, %c0_0, %c0_1] : memref<2x128x96xf32, #tpu.memory_space<vmem>>, vector<2x128x96xf32>
    %1 = vector.shape_cast %0 : vector<2x128x96xf32> to vector<256x96xf32>
    %c0_2 = arith.constant 0 : index
    %c0_3 = arith.constant 0 : index
    %2 = vector.load %arg2[%c0_2, %c0_3] : memref<96x384xf32, #tpu.memory_space<vmem>>, vector<96x384xf32>
    %cst = arith.constant dense<0.000000e+00> : vector<256x384xf32>
    %3 = tpu.matmul %1, %2, %cst {dimension_numbers = #tpu.dot_dimension_numbers<[1], [0], [0], [1], [0, 0, 1, 1], [], []>} : vector<256x96xf32>, vector<96x384xf32>, vector<256x384xf32> -> vector<256x384xf32>
    %4 = vector.extract_strided_slice %3 {offsets = [0, 0], sizes = [256, 96], strides = [1, 1]} : vector<256x384xf32> to vector<256x96xf32>
    %5 = vector.extract_strided_slice %3 {offsets = [0, 128], sizes = [256, 96], strides = [1, 1]} : vector<256x384xf32> to vector<256x96xf32>
    %6 = vector.extract_strided_slice %3 {offsets = [0, 256], sizes = [256, 96], strides = [1, 1]} : vector<256x384xf32> to vector<256x96xf32>
    %c0_4 = arith.constant 0 : index
    %c0_5 = arith.constant 0 : index
    %7 = vector.load %arg4[%c0_4, %c0_5] : memref<96x96xf32, #tpu.memory_space<vmem>>, vector<96x96xf32>
    %8 = arith.mulf %4, %4 : vector<256x96xf32>
    %cst_6 = arith.constant dense<0.000000e+00> : vector<256x96xf32>
    %9 = tpu.matmul %8, %7, %cst_6 {dimension_numbers = #tpu.dot_dimension_numbers<[1], [0], [0], [1], [0, 0, 1, 1], [], []>} : vector<256x96xf32>, vector<96x96xf32>, vector<256x96xf32> -> vector<256x96xf32>
    %cst_7 = arith.constant 1.1920929E-7 : f32
    %10 = vector.broadcast %cst_7 : f32 to vector<256x96xf32>
    %11 = arith.addf %9, %10 : vector<256x96xf32>
    %12 = math.rsqrt %11 : vector<256x96xf32>
    %13 = arith.mulf %4, %12 : vector<256x96xf32>
    %14 = arith.mulf %5, %5 : vector<256x96xf32>
    %cst_8 = arith.constant dense<0.000000e+00> : vector<256x96xf32>
    %15 = tpu.matmul %14, %7, %cst_8 {dimension_numbers = #tpu.dot_dimension_numbers<[1], [0], [0], [1], [0, 0, 1, 1], [], []>} : vector<256x96xf32>, vector<96x96xf32>, vector<256x96xf32> -> vector<256x96xf32>
    %cst_9 = arith.constant 1.1920929E-7 : f32
    %16 = vector.broadcast %cst_9 : f32 to vector<256x96xf32>
    %17 = arith.addf %15, %16 : vector<256x96xf32>
    %18 = math.rsqrt %17 : vector<256x96xf32>
    %19 = arith.mulf %5, %18 : vector<256x96xf32>
    %c0_10 = arith.constant 0 : index
    %c0_11 = arith.constant 0 : index
    %20 = vector.load %arg5[%c0_10, %c0_11] : memref<96x96xf32, #tpu.memory_space<vmem>>, vector<96x96xf32>
    %c0_12 = arith.constant 0 : index
    %c0_13 = arith.constant 0 : index
    %21 = vector.load %arg6[%c0_12, %c0_13] : memref<256x96xf32, #tpu.memory_space<vmem>>, vector<256x96xf32>
    %c0_14 = arith.constant 0 : index
    %c0_15 = arith.constant 0 : index
    %22 = vector.load %arg7[%c0_14, %c0_15] : memref<256x96xf32, #tpu.memory_space<vmem>>, vector<256x96xf32>
    %cst_16 = arith.constant dense<0.000000e+00> : vector<256x96xf32>
    %23 = tpu.matmul %13, %20, %cst_16 {dimension_numbers = #tpu.dot_dimension_numbers<[1], [0], [0], [1], [0, 0, 1, 1], [], []>} : vector<256x96xf32>, vector<96x96xf32>, vector<256x96xf32> -> vector<256x96xf32>
    %24 = arith.mulf %13, %21 : vector<256x96xf32>
    %25 = arith.mulf %23, %22 : vector<256x96xf32>
    %26 = arith.addf %24, %25 : vector<256x96xf32>
    %c0_17 = arith.constant 0 : index
    %c0_18 = arith.constant 0 : index
    %27 = vector.load %arg8[%c0_17, %c0_18] : memref<256x96xf32, #tpu.memory_space<vmem>>, vector<256x96xf32>
    %c0_19 = arith.constant 0 : index
    %c0_20 = arith.constant 0 : index
    %28 = vector.load %arg9[%c0_19, %c0_20] : memref<256x96xf32, #tpu.memory_space<vmem>>, vector<256x96xf32>
    %cst_21 = arith.constant dense<0.000000e+00> : vector<256x96xf32>
    %29 = tpu.matmul %19, %20, %cst_21 {dimension_numbers = #tpu.dot_dimension_numbers<[1], [0], [0], [1], [0, 0, 1, 1], [], []>} : vector<256x96xf32>, vector<96x96xf32>, vector<256x96xf32> -> vector<256x96xf32>
    %30 = arith.mulf %19, %27 : vector<256x96xf32>
    %31 = arith.mulf %29, %28 : vector<256x96xf32>
    %32 = arith.addf %30, %31 : vector<256x96xf32>
    %c0_22 = arith.constant 0 : index
    %c0_23 = arith.constant 0 : index
    %33 = vector.load %arg10[%c0_22, %c0_23] : memref<768x96xf32, #tpu.memory_space<vmem>>, vector<768x96xf32>
    %c0_24 = arith.constant 0 : index
    %c0_25 = arith.constant 0 : index
    %34 = vector.load %arg11[%c0_24, %c0_25] : memref<128x768xf32, #tpu.memory_space<vmem>>, vector<128x768xf32>
    %35 = vector.extract_strided_slice %26 {offsets = [0, 0], sizes = [128, 96], strides = [1, 1]} : vector<256x96xf32> to vector<128x96xf32>
    %36 = vector.extract_strided_slice %32 {offsets = [0, 0], sizes = [128, 96], strides = [1, 1]} : vector<256x96xf32> to vector<128x96xf32>
    %37 = vector.extract_strided_slice %6 {offsets = [0, 0], sizes = [128, 96], strides = [1, 1]} : vector<256x96xf32> to vector<128x96xf32>
    %38 = tpu.concatenate %36, %36, %36, %36, %36, %36 in 0 : vector<128x96xf32>, vector<128x96xf32>, vector<128x96xf32>, vector<128x96xf32>, vector<128x96xf32>, vector<128x96xf32> -> vector<768x96xf32>
    %39 = arith.mulf %38, %33 : vector<768x96xf32>
    %40 = tpu.concatenate %37, %37, %37, %37, %37, %37 in 0 : vector<128x96xf32>, vector<128x96xf32>, vector<128x96xf32>, vector<128x96xf32>, vector<128x96xf32>, vector<128x96xf32> -> vector<768x96xf32>
    %41 = arith.mulf %40, %33 : vector<768x96xf32>
    %cst_26 = arith.constant dense<0.000000e+00> : vector<128x768xf32>
    %42 = tpu.matmul %35, %39, %cst_26 {dimension_numbers = #tpu.dot_dimension_numbers<[1], [1], [0], [0], [0, 0, 1, 0], [], []>} : vector<128x96xf32>, vector<768x96xf32>, vector<128x768xf32> -> vector<128x768xf32>
    %43 = arith.addf %42, %34 : vector<128x768xf32>
    %44 = vector.extract_strided_slice %43 {offsets = [0, 0], sizes = [128, 128], strides = [1, 1]} : vector<128x768xf32> to vector<128x128xf32>
    %cst_27 = arith.constant dense<0xFF800000> : vector<128xf32>
    %45 = vector.multi_reduction <maximumf>, %44, %cst_27 [1] : vector<128x128xf32> to vector<128xf32>
    %46 = vector.shape_cast %45 : vector<128xf32> to vector<128x1xf32>
    %47 = vector.broadcast %46 : vector<128x1xf32> to vector<128x128xf32>
    %48 = arith.subf %44, %47 : vector<128x128xf32>
    %49 = math.exp %48 : vector<128x128xf32>
    %cst_28 = arith.constant dense<0.000000e+00> : vector<128xf32>
    %50 = vector.multi_reduction <add>, %49, %cst_28 [1] : vector<128x128xf32> to vector<128xf32>
    %51 = vector.shape_cast %50 : vector<128xf32> to vector<128x1xf32>
    %52 = tpu.reciprocal %51 : vector<128x1xf32> -> vector<128x1xf32>
    %53 = vector.broadcast %52 : vector<128x1xf32> to vector<128x128xf32>
    %54 = arith.mulf %49, %53 : vector<128x128xf32>
    %c0_29 = arith.constant 0 : index
    %c0_30 = arith.constant 0 : index
    %55 = vector.load %arg14[%c0_29, %c0_30] : memref<128x768xf32, #tpu.memory_space<vmem>>, vector<128x128xf32>
    tpu.vector_store %arg14[%c0_29, %c0_30], %54 {strides = array<i32>} : memref<128x768xf32, #tpu.memory_space<vmem>>, vector<128x128xf32>,
    %56 = vector.extract_strided_slice %43 {offsets = [0, 128], sizes = [128, 128], strides = [1, 1]} : vector<128x768xf32> to vector<128x128xf32>
    %cst_31 = arith.constant dense<0xFF800000> : vector<128xf32>
    %57 = vector.multi_reduction <maximumf>, %56, %cst_31 [1] : vector<128x128xf32> to vector<128xf32>
    %58 = vector.shape_cast %57 : vector<128xf32> to vector<128x1xf32>
    %59 = vector.broadcast %58 : vector<128x1xf32> to vector<128x128xf32>
    %60 = arith.subf %56, %59 : vector<128x128xf32>
    %61 = math.exp %60 : vector<128x128xf32>
    %cst_32 = arith.constant dense<0.000000e+00> : vector<128xf32>
    %62 = vector.multi_reduction <add>, %61, %cst_32 [1] : vector<128x128xf32> to vector<128xf32>
    %63 = vector.shape_cast %62 : vector<128xf32> to vector<128x1xf32>
    %64 = tpu.reciprocal %63 : vector<128x1xf32> -> vector<128x1xf32>
    %65 = vector.broadcast %64 : vector<128x1xf32> to vector<128x128xf32>
    %66 = arith.mulf %61, %65 : vector<128x128xf32>
    %c0_33 = arith.constant 0 : index
    %c128 = arith.constant 128 : index
    %67 = vector.load %arg14[%c0_33, %c128] : memref<128x768xf32, #tpu.memory_space<vmem>>, vector<128x128xf32>
    tpu.vector_store %arg14[%c0_33, %c128], %66 {strides = array<i32>} : memref<128x768xf32, #tpu.memory_space<vmem>>, vector<128x128xf32>,
    %68 = vector.extract_strided_slice %43 {offsets = [0, 256], sizes = [128, 128], strides = [1, 1]} : vector<128x768xf32> to vector<128x128xf32>
    %cst_34 = arith.constant dense<0xFF800000> : vector<128xf32>
    %69 = vector.multi_reduction <maximumf>, %68, %cst_34 [1] : vector<128x128xf32> to vector<128xf32>
    %70 = vector.shape_cast %69 : vector<128xf32> to vector<128x1xf32>
    %71 = vector.broadcast %70 : vector<128x1xf32> to vector<128x128xf32>
    %72 = arith.subf %68, %71 : vector<128x128xf32>
    %73 = math.exp %72 : vector<128x128xf32>
    %cst_35 = arith.constant dense<0.000000e+00> : vector<128xf32>
    %74 = vector.multi_reduction <add>, %73, %cst_35 [1] : vector<128x128xf32> to vector<128xf32>
    %75 = vector.shape_cast %74 : vector<128xf32> to vector<128x1xf32>
    %76 = tpu.reciprocal %75 : vector<128x1xf32> -> vector<128x1xf32>
    %77 = vector.broadcast %76 : vector<128x1xf32> to vector<128x128xf32>
    %78 = arith.mulf %73, %77 : vector<128x128xf32>
    %c0_36 = arith.constant 0 : index
    %c256 = arith.constant 256 : index
    %79 = vector.load %arg14[%c0_36, %c256] : memref<128x768xf32, #tpu.memory_space<vmem>>, vector<128x128xf32>
    tpu.vector_store %arg14[%c0_36, %c256], %78 {strides = array<i32>} : memref<128x768xf32, #tpu.memory_space<vmem>>, vector<128x128xf32>,
    %80 = vector.extract_strided_slice %43 {offsets = [0, 384], sizes = [128, 128], strides = [1, 1]} : vector<128x768xf32> to vector<128x128xf32>
    %cst_37 = arith.constant dense<0xFF800000> : vector<128xf32>
    %81 = vector.multi_reduction <maximumf>, %80, %cst_37 [1] : vector<128x128xf32> to vector<128xf32>
    %82 = vector.shape_cast %81 : vector<128xf32> to vector<128x1xf32>
    %83 = vector.broadcast %82 : vector<128x1xf32> to vector<128x128xf32>
    %84 = arith.subf %80, %83 : vector<128x128xf32>
    %85 = math.exp %84 : vector<128x128xf32>
    %cst_38 = arith.constant dense<0.000000e+00> : vector<128xf32>
    %86 = vector.multi_reduction <add>, %85, %cst_38 [1] : vector<128x128xf32> to vector<128xf32>
    %87 = vector.shape_cast %86 : vector<128xf32> to vector<128x1xf32>
    %88 = tpu.reciprocal %87 : vector<128x1xf32> -> vector<128x1xf32>
    %89 = vector.broadcast %88 : vector<128x1xf32> to vector<128x128xf32>
    %90 = arith.mulf %85, %89 : vector<128x128xf32>
    %c0_39 = arith.constant 0 : index
    %c384 = arith.constant 384 : index
    %91 = vector.load %arg14[%c0_39, %c384] : memref<128x768xf32, #tpu.memory_space<vmem>>, vector<128x128xf32>
    tpu.vector_store %arg14[%c0_39, %c384], %90 {strides = array<i32>} : memref<128x768xf32, #tpu.memory_space<vmem>>, vector<128x128xf32>,
    %92 = vector.extract_strided_slice %43 {offsets = [0, 512], sizes = [128, 128], strides = [1, 1]} : vector<128x768xf32> to vector<128x128xf32>
    %cst_40 = arith.constant dense<0xFF800000> : vector<128xf32>
    %93 = vector.multi_reduction <maximumf>, %92, %cst_40 [1] : vector<128x128xf32> to vector<128xf32>
    %94 = vector.shape_cast %93 : vector<128xf32> to vector<128x1xf32>
    %95 = vector.broadcast %94 : vector<128x1xf32> to vector<128x128xf32>
    %96 = arith.subf %92, %95 : vector<128x128xf32>
    %97 = math.exp %96 : vector<128x128xf32>
    %cst_41 = arith.constant dense<0.000000e+00> : vector<128xf32>
    %98 = vector.multi_reduction <add>, %97, %cst_41 [1] : vector<128x128xf32> to vector<128xf32>
    %99 = vector.shape_cast %98 : vector<128xf32> to vector<128x1xf32>
    %100 = tpu.reciprocal %99 : vector<128x1xf32> -> vector<128x1xf32>
    %101 = vector.broadcast %100 : vector<128x1xf32> to vector<128x128xf32>
    %102 = arith.mulf %97, %101 : vector<128x128xf32>
    %c0_42 = arith.constant 0 : index
    %c512 = arith.constant 512 : index
    %103 = vector.load %arg14[%c0_42, %c512] : memref<128x768xf32, #tpu.memory_space<vmem>>, vector<128x128xf32>
    tpu.vector_store %arg14[%c0_42, %c512], %102 {strides = array<i32>} : memref<128x768xf32, #tpu.memory_space<vmem>>, vector<128x128xf32>,
    %104 = vector.extract_strided_slice %43 {offsets = [0, 640], sizes = [128, 128], strides = [1, 1]} : vector<128x768xf32> to vector<128x128xf32>
    %cst_43 = arith.constant dense<0xFF800000> : vector<128xf32>
    %105 = vector.multi_reduction <maximumf>, %104, %cst_43 [1] : vector<128x128xf32> to vector<128xf32>
    %106 = vector.shape_cast %105 : vector<128xf32> to vector<128x1xf32>
    %107 = vector.broadcast %106 : vector<128x1xf32> to vector<128x128xf32>
    %108 = arith.subf %104, %107 : vector<128x128xf32>
    %109 = math.exp %108 : vector<128x128xf32>
    %cst_44 = arith.constant dense<0.000000e+00> : vector<128xf32>
    %110 = vector.multi_reduction <add>, %109, %cst_44 [1] : vector<128x128xf32> to vector<128xf32>
    %111 = vector.shape_cast %110 : vector<128xf32> to vector<128x1xf32>
    %112 = tpu.reciprocal %111 : vector<128x1xf32> -> vector<128x1xf32>
    %113 = vector.broadcast %112 : vector<128x1xf32> to vector<128x128xf32>
    %114 = arith.mulf %109, %113 : vector<128x128xf32>
    %c0_45 = arith.constant 0 : index
    %c640 = arith.constant 640 : index
    %115 = vector.load %arg14[%c0_45, %c640] : memref<128x768xf32, #tpu.memory_space<vmem>>, vector<128x128xf32>
    tpu.vector_store %arg14[%c0_45, %c640], %114 {strides = array<i32>} : memref<128x768xf32, #tpu.memory_space<vmem>>, vector<128x128xf32>,
    %c0_46 = arith.constant 0 : index
    %c0_47 = arith.constant 0 : index
    %116 = vector.load %arg14[%c0_46, %c0_47] : memref<128x768xf32, #tpu.memory_space<vmem>>, vector<128x768xf32>
    %cst_48 = arith.constant dense<0.000000e+00> : vector<128x96xf32>
    %117 = tpu.matmul %116, %41, %cst_48 {dimension_numbers = #tpu.dot_dimension_numbers<[1], [0], [0], [1], [0, 0, 1, 1], [], []>} : vector<128x768xf32>, vector<768x96xf32>, vector<128x96xf32> -> vector<128x96xf32>
    %c0_49 = arith.constant 0 : index
    %c0_50 = arith.constant 0 : index
    %118 = vector.load %arg13[%c0_49, %c0_50] : memref<256x96xf32, #tpu.memory_space<vmem>>, vector<128x96xf32>
    tpu.vector_store %arg13[%c0_49, %c0_50], %117 {strides = array<i32>} : memref<256x96xf32, #tpu.memory_space<vmem>>, vector<128x96xf32>,
    %119 = vector.extract_strided_slice %26 {offsets = [128, 0], sizes = [128, 96], strides = [1, 1]} : vector<256x96xf32> to vector<128x96xf32>
    %120 = vector.extract_strided_slice %32 {offsets = [128, 0], sizes = [128, 96], strides = [1, 1]} : vector<256x96xf32> to vector<128x96xf32>
    %121 = vector.extract_strided_slice %6 {offsets = [128, 0], sizes = [128, 96], strides = [1, 1]} : vector<256x96xf32> to vector<128x96xf32>
    %122 = tpu.concatenate %120, %120, %120, %120, %120, %120 in 0 : vector<128x96xf32>, vector<128x96xf32>, vector<128x96xf32>, vector<128x96xf32>, vector<128x96xf32>, vector<128x96xf32> -> vector<768x96xf32>
    %123 = arith.mulf %122, %33 : vector<768x96xf32>
    %124 = tpu.concatenate %121, %121, %121, %121, %121, %121 in 0 : vector<128x96xf32>, vector<128x96xf32>, vector<128x96xf32>, vector<128x96xf32>, vector<128x96xf32>, vector<128x96xf32> -> vector<768x96xf32>
    %125 = arith.mulf %124, %33 : vector<768x96xf32>
    %cst_51 = arith.constant dense<0.000000e+00> : vector<128x768xf32>
    %126 = tpu.matmul %119, %123, %cst_51 {dimension_numbers = #tpu.dot_dimension_numbers<[1], [1], [0], [0], [0, 0, 1, 0], [], []>} : vector<128x96xf32>, vector<768x96xf32>, vector<128x768xf32> -> vector<128x768xf32>
    %127 = arith.addf %126, %34 : vector<128x768xf32>
    %128 = vector.extract_strided_slice %127 {offsets = [0, 0], sizes = [128, 128], strides = [1, 1]} : vector<128x768xf32> to vector<128x128xf32>
    %cst_52 = arith.constant dense<0xFF800000> : vector<128xf32>
    %129 = vector.multi_reduction <maximumf>, %128, %cst_52 [1] : vector<128x128xf32> to vector<128xf32>
    %130 = vector.shape_cast %129 : vector<128xf32> to vector<128x1xf32>
    %131 = vector.broadcast %130 : vector<128x1xf32> to vector<128x128xf32>
    %132 = arith.subf %128, %131 : vector<128x128xf32>
    %133 = math.exp %132 : vector<128x128xf32>
    %cst_53 = arith.constant dense<0.000000e+00> : vector<128xf32>
    %134 = vector.multi_reduction <add>, %133, %cst_53 [1] : vector<128x128xf32> to vector<128xf32>
    %135 = vector.shape_cast %134 : vector<128xf32> to vector<128x1xf32>
    %136 = tpu.reciprocal %135 : vector<128x1xf32> -> vector<128x1xf32>
    %137 = vector.broadcast %136 : vector<128x1xf32> to vector<128x128xf32>
    %138 = arith.mulf %133, %137 : vector<128x128xf32>
    %c0_54 = arith.constant 0 : index
    %c0_55 = arith.constant 0 : index
    %139 = vector.load %arg14[%c0_54, %c0_55] : memref<128x768xf32, #tpu.memory_space<vmem>>, vector<128x128xf32>
    tpu.vector_store %arg14[%c0_54, %c0_55], %138 {strides = array<i32>} : memref<128x768xf32, #tpu.memory_space<vmem>>, vector<128x128xf32>,
    %140 = vector.extract_strided_slice %127 {offsets = [0, 128], sizes = [128, 128], strides = [1, 1]} : vector<128x768xf32> to vector<128x128xf32>
    %cst_56 = arith.constant dense<0xFF800000> : vector<128xf32>
    %141 = vector.multi_reduction <maximumf>, %140, %cst_56 [1] : vector<128x128xf32> to vector<128xf32>
    %142 = vector.shape_cast %141 : vector<128xf32> to vector<128x1xf32>
    %143 = vector.broadcast %142 : vector<128x1xf32> to vector<128x128xf32>
    %144 = arith.subf %140, %143 : vector<128x128xf32>
    %145 = math.exp %144 : vector<128x128xf32>
    %cst_57 = arith.constant dense<0.000000e+00> : vector<128xf32>
    %146 = vector.multi_reduction <add>, %145, %cst_57 [1] : vector<128x128xf32> to vector<128xf32>
    %147 = vector.shape_cast %146 : vector<128xf32> to vector<128x1xf32>
    %148 = tpu.reciprocal %147 : vector<128x1xf32> -> vector<128x1xf32>
    %149 = vector.broadcast %148 : vector<128x1xf32> to vector<128x128xf32>
    %150 = arith.mulf %145, %149 : vector<128x128xf32>
    %c0_58 = arith.constant 0 : index
    %c128_59 = arith.constant 128 : index
    %151 = vector.load %arg14[%c0_58, %c128_59] : memref<128x768xf32, #tpu.memory_space<vmem>>, vector<128x128xf32>
    tpu.vector_store %arg14[%c0_58, %c128_59], %150 {strides = array<i32>} : memref<128x768xf32, #tpu.memory_space<vmem>>, vector<128x128xf32>,
    %152 = vector.extract_strided_slice %127 {offsets = [0, 256], sizes = [128, 128], strides = [1, 1]} : vector<128x768xf32> to vector<128x128xf32>
    %cst_60 = arith.constant dense<0xFF800000> : vector<128xf32>
    %153 = vector.multi_reduction <maximumf>, %152, %cst_60 [1] : vector<128x128xf32> to vector<128xf32>
    %154 = vector.shape_cast %153 : vector<128xf32> to vector<128x1xf32>
    %155 = vector.broadcast %154 : vector<128x1xf32> to vector<128x128xf32>
    %156 = arith.subf %152, %155 : vector<128x128xf32>
    %157 = math.exp %156 : vector<128x128xf32>
    %cst_61 = arith.constant dense<0.000000e+00> : vector<128xf32>
    %158 = vector.multi_reduction <add>, %157, %cst_61 [1] : vector<128x128xf32> to vector<128xf32>
    %159 = vector.shape_cast %158 : vector<128xf32> to vector<128x1xf32>
    %160 = tpu.reciprocal %159 : vector<128x1xf32> -> vector<128x1xf32>
    %161 = vector.broadcast %160 : vector<128x1xf32> to vector<128x128xf32>
    %162 = arith.mulf %157, %161 : vector<128x128xf32>
    %c0_62 = arith.constant 0 : index
    %c256_63 = arith.constant 256 : index
    %163 = vector.load %arg14[%c0_62, %c256_63] : memref<128x768xf32, #tpu.memory_space<vmem>>, vector<128x128xf32>
    tpu.vector_store %arg14[%c0_62, %c256_63], %162 {strides = array<i32>} : memref<128x768xf32, #tpu.memory_space<vmem>>, vector<128x128xf32>,
    %164 = vector.extract_strided_slice %127 {offsets = [0, 384], sizes = [128, 128], strides = [1, 1]} : vector<128x768xf32> to vector<128x128xf32>
    %cst_64 = arith.constant dense<0xFF800000> : vector<128xf32>
    %165 = vector.multi_reduction <maximumf>, %164, %cst_64 [1] : vector<128x128xf32> to vector<128xf32>
    %166 = vector.shape_cast %165 : vector<128xf32> to vector<128x1xf32>
    %167 = vector.broadcast %166 : vector<128x1xf32> to vector<128x128xf32>
    %168 = arith.subf %164, %167 : vector<128x128xf32>
    %169 = math.exp %168 : vector<128x128xf32>
    %cst_65 = arith.constant dense<0.000000e+00> : vector<128xf32>
    %170 = vector.multi_reduction <add>, %169, %cst_65 [1] : vector<128x128xf32> to vector<128xf32>
    %171 = vector.shape_cast %170 : vector<128xf32> to vector<128x1xf32>
    %172 = tpu.reciprocal %171 : vector<128x1xf32> -> vector<128x1xf32>
    %173 = vector.broadcast %172 : vector<128x1xf32> to vector<128x128xf32>
    %174 = arith.mulf %169, %173 : vector<128x128xf32>
    %c0_66 = arith.constant 0 : index
    %c384_67 = arith.constant 384 : index
    %175 = vector.load %arg14[%c0_66, %c384_67] : memref<128x768xf32, #tpu.memory_space<vmem>>, vector<128x128xf32>
    tpu.vector_store %arg14[%c0_66, %c384_67], %174 {strides = array<i32>} : memref<128x768xf32, #tpu.memory_space<vmem>>, vector<128x128xf32>,
    %176 = vector.extract_strided_slice %127 {offsets = [0, 512], sizes = [128, 128], strides = [1, 1]} : vector<128x768xf32> to vector<128x128xf32>
    %cst_68 = arith.constant dense<0xFF800000> : vector<128xf32>
    %177 = vector.multi_reduction <maximumf>, %176, %cst_68 [1] : vector<128x128xf32> to vector<128xf32>
    %178 = vector.shape_cast %177 : vector<128xf32> to vector<128x1xf32>
    %179 = vector.broadcast %178 : vector<128x1xf32> to vector<128x128xf32>
    %180 = arith.subf %176, %179 : vector<128x128xf32>
    %181 = math.exp %180 : vector<128x128xf32>
    %cst_69 = arith.constant dense<0.000000e+00> : vector<128xf32>
    %182 = vector.multi_reduction <add>, %181, %cst_69 [1] : vector<128x128xf32> to vector<128xf32>
    %183 = vector.shape_cast %182 : vector<128xf32> to vector<128x1xf32>
    %184 = tpu.reciprocal %183 : vector<128x1xf32> -> vector<128x1xf32>
    %185 = vector.broadcast %184 : vector<128x1xf32> to vector<128x128xf32>
    %186 = arith.mulf %181, %185 : vector<128x128xf32>
    %c0_70 = arith.constant 0 : index
    %c512_71 = arith.constant 512 : index
    %187 = vector.load %arg14[%c0_70, %c512_71] : memref<128x768xf32, #tpu.memory_space<vmem>>, vector<128x128xf32>
    tpu.vector_store %arg14[%c0_70, %c512_71], %186 {strides = array<i32>} : memref<128x768xf32, #tpu.memory_space<vmem>>, vector<128x128xf32>,
    %188 = vector.extract_strided_slice %127 {offsets = [0, 640], sizes = [128, 128], strides = [1, 1]} : vector<128x768xf32> to vector<128x128xf32>
    %cst_72 = arith.constant dense<0xFF800000> : vector<128xf32>
    %189 = vector.multi_reduction <maximumf>, %188, %cst_72 [1] : vector<128x128xf32> to vector<128xf32>
    %190 = vector.shape_cast %189 : vector<128xf32> to vector<128x1xf32>
    %191 = vector.broadcast %190 : vector<128x1xf32> to vector<128x128xf32>
    %192 = arith.subf %188, %191 : vector<128x128xf32>
    %193 = math.exp %192 : vector<128x128xf32>
    %cst_73 = arith.constant dense<0.000000e+00> : vector<128xf32>
    %194 = vector.multi_reduction <add>, %193, %cst_73 [1] : vector<128x128xf32> to vector<128xf32>
    %195 = vector.shape_cast %194 : vector<128xf32> to vector<128x1xf32>
    %196 = tpu.reciprocal %195 : vector<128x1xf32> -> vector<128x1xf32>
    %197 = vector.broadcast %196 : vector<128x1xf32> to vector<128x128xf32>
    %198 = arith.mulf %193, %197 : vector<128x128xf32>
    %c0_74 = arith.constant 0 : index
    %c640_75 = arith.constant 640 : index
    %199 = vector.load %arg14[%c0_74, %c640_75] : memref<128x768xf32, #tpu.memory_space<vmem>>, vector<128x128xf32>
    tpu.vector_store %arg14[%c0_74, %c640_75], %198 {strides = array<i32>} : memref<128x768xf32, #tpu.memory_space<vmem>>, vector<128x128xf32>,
    %c0_76 = arith.constant 0 : index
    %c0_77 = arith.constant 0 : index
    %200 = vector.load %arg14[%c0_76, %c0_77] : memref<128x768xf32, #tpu.memory_space<vmem>>, vector<128x768xf32>
    %cst_78 = arith.constant dense<0.000000e+00> : vector<128x96xf32>
    %201 = tpu.matmul %200, %125, %cst_78 {dimension_numbers = #tpu.dot_dimension_numbers<[1], [0], [0], [1], [0, 0, 1, 1], [], []>} : vector<128x768xf32>, vector<768x96xf32>, vector<128x96xf32> -> vector<128x96xf32>
    %c128_79 = arith.constant 128 : index
    %c0_80 = arith.constant 0 : index
    %202 = vector.load %arg13[%c128_79, %c0_80] : memref<256x96xf32, #tpu.memory_space<vmem>>, vector<128x96xf32>
    tpu.vector_store %arg13[%c128_79, %c0_80], %201 {strides = array<i32>} : memref<256x96xf32, #tpu.memory_space<vmem>>, vector<128x96xf32>,
    %c0_81 = arith.constant 0 : index
    %c0_82 = arith.constant 0 : index
    %203 = vector.load %arg13[%c0_81, %c0_82] : memref<256x96xf32, #tpu.memory_space<vmem>>, vector<256x96xf32>
    %c0_83 = arith.constant 0 : index
    %c0_84 = arith.constant 0 : index
    %204 = vector.load %arg3[%c0_83, %c0_84] : memref<96x96xf32, #tpu.memory_space<vmem>>, vector<96x96xf32>
    %cst_85 = arith.constant dense<0.000000e+00> : vector<256x96xf32>
    %205 = tpu.matmul %203, %204, %cst_85 {dimension_numbers = #tpu.dot_dimension_numbers<[1], [0], [0], [1], [0, 0, 1, 1], [], []>} : vector<256x96xf32>, vector<96x96xf32>, vector<256x96xf32> -> vector<256x96xf32>
    %206 = vector.shape_cast %205 : vector<256x96xf32> to vector<2x128x96xf32>
    %c0_86 = arith.constant 0 : index
    %c0_87 = arith.constant 0 : index
    %c0_88 = arith.constant 0 : index
    %207 = vector.load %arg12[%c0_86, %c0_87, %c0_88] : memref<2x128x96xf32, #tpu.memory_space<vmem>>, vector<2x128x96xf32>
    tpu.vector_store %arg12[%c0_86, %c0_87, %c0_88], %206 {strides = array<i32>} : memref<2x128x96xf32, #tpu.memory_space<vmem>>, vector<2x128x96xf32>,
    return
  }
  func.func @transform_0(%arg0: i32) -> (i32, i32, i32) {
    %c0_i32 = arith.constant 0 : i32
    %c0_i32_0 = arith.constant 0 : i32
    %c0_i32_1 = arith.constant 0 : i32
    return %arg0, %c0_i32, %c0_i32_0 : i32, i32, i32
  }
  func.func @transform_1(%arg0: i32) -> (i32, i32) {
    %c0_i32 = arith.constant 0 : i32
    %c0_i32_0 = arith.constant 0 : i32
    %c0_i32_1 = arith.constant 0 : i32
    return %c0_i32, %c0_i32_0 : i32, i32
  }
  func.func @transform_2(%arg0: i32) -> (i32, i32) {
    %c0_i32 = arith.constant 0 : i32
    %c0_i32_0 = arith.constant 0 : i32
    %c0_i32_1 = arith.constant 0 : i32
    return %c0_i32, %c0_i32_0 : i32, i32
  }
  func.func @transform_3(%arg0: i32) -> (i32, i32) {
    %c0_i32 = arith.constant 0 : i32
    %c0_i32_0 = arith.constant 0 : i32
    %c0_i32_1 = arith.constant 0 : i32
    return %c0_i32, %c0_i32_0 : i32, i32
  }
  func.func @transform_4(%arg0: i32) -> (i32, i32) {
    %c0_i32 = arith.constant 0 : i32
    %c0_i32_0 = arith.constant 0 : i32
    %c0_i32_1 = arith.constant 0 : i32
    return %c0_i32, %c0_i32_0 : i32, i32
  }
  func.func @transform_5(%arg0: i32) -> (i32, i32) {
    %c0_i32 = arith.constant 0 : i32
    %c0_i32_0 = arith.constant 0 : i32
    %c0_i32_1 = arith.constant 0 : i32
    return %c0_i32, %c0_i32_0 : i32, i32
  }
  func.func @transform_6(%arg0: i32) -> (i32, i32) {
    %c0_i32 = arith.constant 0 : i32
    %c0_i32_0 = arith.constant 0 : i32
    %c0_i32_1 = arith.constant 0 : i32
    return %c0_i32, %c0_i32_0 : i32, i32
  }
  func.func @transform_7(%arg0: i32) -> (i32, i32) {
    %c0_i32 = arith.constant 0 : i32
    %c0_i32_0 = arith.constant 0 : i32
    %c0_i32_1 = arith.constant 0 : i32
    return %c0_i32, %c0_i32_0 : i32, i32
  }
  func.func @transform_8(%arg0: i32) -> (i32, i32) {
    %c0_i32 = arith.constant 0 : i32
    %c0_i32_0 = arith.constant 0 : i32
    %c0_i32_1 = arith.constant 0 : i32
    return %c0_i32, %c0_i32_0 : i32, i32
  }
  func.func @transform_9(%arg0: i32) -> (i32, i32) {
    %c0_i32 = arith.constant 0 : i32
    %c0_i32_0 = arith.constant 0 : i32
    %c0_i32_1 = arith.constant 0 : i32
    return %c0_i32, %c0_i32_0 : i32, i32
  }
  func.func @transform_10(%arg0: i32) -> (i32, i32) {
    %c0_i32 = arith.constant 0 : i32
    %c0_i32_0 = arith.constant 0 : i32
    %c0_i32_1 = arith.constant 0 : i32
    return %c0_i32, %c0_i32_0 : i32, i32
  }
  func.func @transform_11(%arg0: i32) -> (i32, i32, i32) {
    %c0_i32 = arith.constant 0 : i32
    %c0_i32_0 = arith.constant 0 : i32
    %c0_i32_1 = arith.constant 0 : i32
    return %arg0, %c0_i32, %c0_i32_0 : i32, i32, i32
  }
}

</mosaic_0001>

<llo_original>
// kernel: tpu_custom_call.1
$region0: #{tpu_custom_call.1}
  #allocation0 [shape = 'u32[]', space=smem, size = 0x4, offset = 0x4, fixed_abs, tag = 'smem constant byte address 0x4 - core index']
  #allocation1 [shape = 'u32[144,128]{1,0:T(1,128)}', space=vmem, size = 0x12000, scoped, tag = 'internal scratch']
  #allocation2 [shape = 'f32[256,96]{1,0:T(8,128)}', space=vmem, size = 0x20000, scoped, tag = 'scratch operand']
  #allocation3 [shape = 'f32[128,768]{1,0:T(8,128)}', space=vmem, size = 0x60000, scoped, tag = 'scratch operand']
  %s0 = inlined_call_operand.vmem [shape: f32[4,128,96], index: 0, kind: input, shape index: {}]
  %s1 = inlined_call_operand.vmem [shape: f32[96,384], index: 1, kind: input, shape index: {}]
  %s2 = inlined_call_operand.vmem [shape: f32[96,96], index: 2, kind: input, shape index: {}]
  %s3 = inlined_call_operand.vmem [shape: f32[96,96], index: 3, kind: input, shape index: {}]
  %s4 = inlined_call_operand.vmem [shape: f32[96,96], index: 4, kind: input, shape index: {}]
  %s5 = inlined_call_operand.vmem [shape: f32[256,96], index: 5, kind: input, shape index: {}]
  %s6 = inlined_call_operand.vmem [shape: f32[256,96], index: 6, kind: input, shape index: {}]
  %s7 = inlined_call_operand.vmem [shape: f32[256,96], index: 7, kind: input, shape index: {}]
  %s8 = inlined_call_operand.vmem [shape: f32[256,96], index: 8, kind: input, shape index: {}]
  %s9 = inlined_call_operand.vmem [shape: f32[768,96], index: 9, kind: input, shape index: {}]
  %s10 = inlined_call_operand.vmem [shape: f32[128,768], index: 10, kind: input, shape index: {}]
  %s11 = inlined_call_operand.vmem [shape: f32[4,128,96], index: 11, kind: output, shape index: {}]
  %s12 = sld [smem:[#allocation0]]
  $region77: #{tpu_custom_call.1} parent=0
    _
  %s14 = ssub.s32 1, %s12
  %s15 = scalar_select 0, %s14, %s12
  loop: start=0, step=1, limit=4
  $region2: #{tpu_custom_call.1} parent=0 // loop_pre_header
    _
  $region3: #{tpu_custom_call.1} parent=0 // loop_header
    %s17 = sphi 0, %s21
    %p18 = scmp.ge.s32.totalorder %s17, 4
    %s27 = sphi 0, %s29
    %s30 = sphi 0, %s27
    %s31 = sphi 0, %s30
    %s47 = sphi 0, %s31
    %s51 = sphi 0, %s51
    %s53 = sphi 0, %s51
    %s54 = sphi 0, %s53
    %s68 = sphi 0, %s54
    %s72 = sphi 0, %s72
    %s74 = sphi 0, %s72
    %s75 = sphi 0, %s74
    %s89 = sphi 0, %s75
    %s93 = sphi 0, %s93
    %s95 = sphi 0, %s93
    %s96 = sphi 0, %s95
    %s110 = sphi 0, %s96
    %s114 = sphi 0, %s114
    %s116 = sphi 0, %s114
    %s117 = sphi 0, %s116
    %s131 = sphi 0, %s117
    %s135 = sphi 0, %s135
    %s137 = sphi 0, %s135
    %s138 = sphi 0, %s137
    %s152 = sphi 0, %s138
    %s156 = sphi 0, %s156
    %s158 = sphi 0, %s156
    %s159 = sphi 0, %s158
    %s173 = sphi 0, %s159
    %s177 = sphi 0, %s177
    %s179 = sphi 0, %s177
    %s180 = sphi 0, %s179
    %s194 = sphi 0, %s180
    %s198 = sphi 0, %s198
    %s200 = sphi 0, %s198
    %s201 = sphi 0, %s200
    %s215 = sphi 0, %s201
    %s219 = sphi 0, %s219
    %s221 = sphi 0, %s219
    %s222 = sphi 0, %s221
    %s236 = sphi 0, %s222
    %s240 = sphi 0, %s240
    %s242 = sphi 0, %s240
    %s243 = sphi 0, %s242
    %s257 = sphi 0, %s243
    %s263 = sphi 0, %s265
    %s266 = sphi 0, %s263
    %s267 = sphi 0, %s266
    %s283 = sphi 0, %s267
  $region4: #{tpu_custom_call.1} parent=0 // loop_header_branch
    %20 = sbr.rel (%p18) target = $region8
  $region5: #{tpu_custom_call.1} parent=0 // loop_body
    %s22 = ssub.s32 %s17, 1
    %s23 = ssub.s32 %s17, 2
    %s24 = sadd.s32 %s17, 1
    %s25 = ssub.s32 %s17, %s24
    %p26 = scmp.eq.s32.totalorder %s25, 0
    %s28 = sadd.s32 %s27, 1
    %s29 = scalar_select %p26, %s27, %s28
    %p32 = pneg %p26
    %p33 = scmp.eq.s32.totalorder %s17, 1
    %p34 = por %p32, %p33
    %p35 = scmp.ne.s32.totalorder %s27, %s30
    %p36 = scmp.eq.s32.totalorder %s17, 0
    %p37 = por %p35, %p36
    %p38 = scmp.ne.s32.totalorder %s27, %s30
    %p39 = scmp.eq.s32.totalorder %s22, 1
    %p40 = por %p38, %p39
    %p41 = scmp.ne.s32.totalorder %s30, %s31
    %p42 = scmp.eq.s32.totalorder %s22, 0
    %p43 = por %p41, %p42
    %p44 = scmp.ne.s32.totalorder %s30, %s31
    %p45 = scmp.eq.s32.totalorder %s23, 1
    %p46 = por %p44, %p45
    %p48 = scmp.ne.s32.totalorder %s31, %s47
    %p49 = scmp.eq.s32.totalorder %s23, 0
    %p50 = por %p48, %p49
    %s52 = sadd.s32 %s51, 1
    %p55 = scmp.eq.s32.totalorder %s17, 1
    %p56 = scmp.ne.s32.totalorder %s51, %s53
    %p57 = scmp.eq.s32.totalorder %s17, 0
    %p58 = por %p56, %p57
    %p59 = scmp.ne.s32.totalorder %s51, %s53
    %p60 = scmp.eq.s32.totalorder %s22, 1
    %p61 = por %p59, %p60
    %p62 = scmp.ne.s32.totalorder %s53, %s54
    %p63 = scmp.eq.s32.totalorder %s22, 0
    %p64 = por %p62, %p63
    %p65 = scmp.ne.s32.totalorder %s53, %s54
    %p66 = scmp.eq.s32.totalorder %s23, 1
    %p67 = por %p65, %p66
    %p69 = scmp.ne.s32.totalorder %s54, %s68
    %p70 = scmp.eq.s32.totalorder %s23, 0
    %p71 = por %p69, %p70
    %s73 = sadd.s32 %s72, 1
    %p76 = scmp.eq.s32.totalorder %s17, 1
    %p77 = scmp.ne.s32.totalorder %s72, %s74
    %p78 = scmp.eq.s32.totalorder %s17, 0
    %p79 = por %p77, %p78
    %p80 = scmp.ne.s32.totalorder %s72, %s74
    %p81 = scmp.eq.s32.totalorder %s22, 1
    %p82 = por %p80, %p81
    %p83 = scmp.ne.s32.totalorder %s74, %s75
    %p84 = scmp.eq.s32.totalorder %s22, 0
    %p85 = por %p83, %p84
    %p86 = scmp.ne.s32.totalorder %s74, %s75
    %p87 = scmp.eq.s32.totalorder %s23, 1
    %p88 = por %p86, %p87
    %p90 = scmp.ne.s32.totalorder %s75, %s89
    %p91 = scmp.eq.s32.totalorder %s23, 0
    %p92 = por %p90, %p91
    %s94 = sadd.s32 %s93, 1
    %p97 = scmp.eq.s32.totalorder %s17, 1
    %p98 = scmp.ne.s32.totalorder %s93, %s95
    %p99 = scmp.eq.s32.totalorder %s17, 0
    %p100 = por %p98, %p99
    %p101 = scmp.ne.s32.totalorder %s93, %s95
    %p102 = scmp.eq.s32.totalorder %s22, 1
    %p103 = por %p101, %p102
    %p104 = scmp.ne.s32.totalorder %s95, %s96
    %p105 = scmp.eq.s32.totalorder %s22, 0
    %p106 = por %p104, %p105
    %p107 = scmp.ne.s32.totalorder %s95, %s96
    %p108 = scmp.eq.s32.totalorder %s23, 1
    %p109 = por %p107, %p108
    %p111 = scmp.ne.s32.totalorder %s96, %s110
    %p112 = scmp.eq.s32.totalorder %s23, 0
    %p113 = por %p111, %p112
    %s115 = sadd.s32 %s114, 1
    %p118 = scmp.eq.s32.totalorder %s17, 1
    %p119 = scmp.ne.s32.totalorder %s114, %s116
    %p120 = scmp.eq.s32.totalorder %s17, 0
    %p121 = por %p119, %p120
    %p122 = scmp.ne.s32.totalorder %s114, %s116
    %p123 = scmp.eq.s32.totalorder %s22, 1
    %p124 = por %p122, %p123
    %p125 = scmp.ne.s32.totalorder %s116, %s117
    %p126 = scmp.eq.s32.totalorder %s22, 0
    %p127 = por %p125, %p126
    %p128 = scmp.ne.s32.totalorder %s116, %s117
    %p129 = scmp.eq.s32.totalorder %s23, 1
    %p130 = por %p128, %p129
    %p132 = scmp.ne.s32.totalorder %s117, %s131
    %p133 = scmp.eq.s32.totalorder %s23, 0
    %p134 = por %p132, %p133
    %s136 = sadd.s32 %s135, 1
    %p139 = scmp.eq.s32.totalorder %s17, 1
    %p140 = scmp.ne.s32.totalorder %s135, %s137
    %p141 = scmp.eq.s32.totalorder %s17, 0
    %p142 = por %p140, %p141
    %p143 = scmp.ne.s32.totalorder %s135, %s137
    %p144 = scmp.eq.s32.totalorder %s22, 1
    %p145 = por %p143, %p144
    %p146 = scmp.ne.s32.totalorder %s137, %s138
    %p147 = scmp.eq.s32.totalorder %s22, 0
    %p148 = por %p146, %p147
    %p149 = scmp.ne.s32.totalorder %s137, %s138
    %p150 = scmp.eq.s32.totalorder %s23, 1
    %p151 = por %p149, %p150
    %p153 = scmp.ne.s32.totalorder %s138, %s152
    %p154 = scmp.eq.s32.totalorder %s23, 0
    %p155 = por %p153, %p154
    %s157 = sadd.s32 %s156, 1
    %p160 = scmp.eq.s32.totalorder %s17, 1
    %p161 = scmp.ne.s32.totalorder %s156, %s158
    %p162 = scmp.eq.s32.totalorder %s17, 0
    %p163 = por %p161, %p162
    %p164 = scmp.ne.s32.totalorder %s156, %s158
    %p165 = scmp.eq.s32.totalorder %s22, 1
    %p166 = por %p164, %p165
    %p167 = scmp.ne.s32.totalorder %s158, %s159
    %p168 = scmp.eq.s32.totalorder %s22, 0
    %p169 = por %p167, %p168
    %p170 = scmp.ne.s32.totalorder %s158, %s159
    %p171 = scmp.eq.s32.totalorder %s23, 1
    %p172 = por %p170, %p171
    %p174 = scmp.ne.s32.totalorder %s159, %s173
    %p175 = scmp.eq.s32.totalorder %s23, 0
    %p176 = por %p174, %p175
    %s178 = sadd.s32 %s177, 1
    %p181 = scmp.eq.s32.totalorder %s17, 1
    %p182 = scmp.ne.s32.totalorder %s177, %s179
    %p183 = scmp.eq.s32.totalorder %s17, 0
    %p184 = por %p182, %p183
    %p185 = scmp.ne.s32.totalorder %s177, %s179
    %p186 = scmp.eq.s32.totalorder %s22, 1
    %p187 = por %p185, %p186
    %p188 = scmp.ne.s32.totalorder %s179, %s180
    %p189 = scmp.eq.s32.totalorder %s22, 0
    %p190 = por %p188, %p189
    %p191 = scmp.ne.s32.totalorder %s179, %s180
    %p192 = scmp.eq.s32.totalorder %s23, 1
    %p193 = por %p191, %p192
    %p195 = scmp.ne.s32.totalorder %s180, %s194
    %p196 = scmp.eq.s32.totalorder %s23, 0
    %p197 = por %p195, %p196
    %s199 = sadd.s32 %s198, 1
    %p202 = scmp.eq.s32.totalorder %s17, 1
    %p203 = scmp.ne.s32.totalorder %s198, %s200
    %p204 = scmp.eq.s32.totalorder %s17, 0
    %p205 = por %p203, %p204
    %p206 = scmp.ne.s32.totalorder %s198, %s200
    %p207 = scmp.eq.s32.totalorder %s22, 1
    %p208 = por %p206, %p207
    %p209 = scmp.ne.s32.totalorder %s200, %s201
    %p210 = scmp.eq.s32.totalorder %s22, 0
    %p211 = por %p209, %p210
    %p212 = scmp.ne.s32.totalorder %s200, %s201
    %p213 = scmp.eq.s32.totalorder %s23, 1
    %p214 = por %p212, %p213
    %p216 = scmp.ne.s32.totalorder %s201, %s215
    %p217 = scmp.eq.s32.totalorder %s23, 0
    %p218 = por %p216, %p217
    %s220 = sadd.s32 %s219, 1
    %p223 = scmp.eq.s32.totalorder %s17, 1
    %p224 = scmp.ne.s32.totalorder %s219, %s221
    %p225 = scmp.eq.s32.totalorder %s17, 0
    %p226 = por %p224, %p225
    %p227 = scmp.ne.s32.totalorder %s219, %s221
    %p228 = scmp.eq.s32.totalorder %s22, 1
    %p229 = por %p227, %p228
    %p230 = scmp.ne.s32.totalorder %s221, %s222
    %p231 = scmp.eq.s32.totalorder %s22, 0
    %p232 = por %p230, %p231
    %p233 = scmp.ne.s32.totalorder %s221, %s222
    %p234 = scmp.eq.s32.totalorder %s23, 1
    %p235 = por %p233, %p234
    %p237 = scmp.ne.s32.totalorder %s222, %s236
    %p238 = scmp.eq.s32.totalorder %s23, 0
    %p239 = por %p237, %p238
    %s241 = sadd.s32 %s240, 1
    %p244 = scmp.eq.s32.totalorder %s17, 1
    %p245 = scmp.ne.s32.totalorder %s240, %s242
    %p246 = scmp.eq.s32.totalorder %s17, 0
    %p247 = por %p245, %p246
    %p248 = scmp.ne.s32.totalorder %s240, %s242
    %p249 = scmp.eq.s32.totalorder %s22, 1
    %p250 = por %p248, %p249
    %p251 = scmp.ne.s32.totalorder %s242, %s243
    %p252 = scmp.eq.s32.totalorder %s22, 0
    %p253 = por %p251, %p252
    %p254 = scmp.ne.s32.totalorder %s242, %s243
    %p255 = scmp.eq.s32.totalorder %s23, 1
    %p256 = por %p254, %p255
    %p258 = scmp.ne.s32.totalorder %s243, %s257
    %p259 = scmp.eq.s32.totalorder %s23, 0
    %p260 = por %p258, %p259
    %s261 = ssub.s32 %s17, %s24
    %p262 = scmp.eq.s32.totalorder %s261, 0
    %s264 = sadd.s32 %s263, 1
    %s265 = scalar_select %p262, %s263, %s264
    %p268 = pneg %p262
    %p269 = scmp.eq.s32.totalorder %s17, 1
    %p270 = por %p268, %p269
    %p271 = scmp.ne.s32.totalorder %s263, %s266
    %p272 = scmp.eq.s32.totalorder %s17, 0
    %p273 = por %p271, %p272
    %p274 = scmp.ne.s32.totalorder %s263, %s266
    %p275 = scmp.eq.s32.totalorder %s22, 1
    %p276 = por %p274, %p275
    %p277 = scmp.ne.s32.totalorder %s266, %s267
    %p278 = scmp.eq.s32.totalorder %s22, 0
    %p279 = por %p277, %p278
    %p280 = scmp.ne.s32.totalorder %s266, %s267
    %p281 = scmp.eq.s32.totalorder %s23, 1
    %p282 = por %p280, %p281
    %p284 = scmp.ne.s32.totalorder %s267, %s283
    %p285 = scmp.eq.s32.totalorder %s23, 0
    %p286 = por %p284, %p285
    %p287 = scmp.le.s32.totalorder 1, %s17
    %p288 = scmp.lt.s32.totalorder %s17, 3
    %p289 = pnand %p287, %p288
    %p290 = pneg %p289
    // Predicated region
    $region9: #{tpu_custom_call.1} parent=5 // pred_check
      _
    $region10: #{tpu_custom_call.1} parent=5 // pred_check_branch
      %292 = sbr.rel (%p289) target = $region12
    $region11: #{tpu_custom_call.1} parent=5 // pred_region
      %s293 = ssub.s32 %s17, 1
      // Predicated region
      $region13: #{tpu_custom_call.1} parent=11 // pred_check
        %p294 = pneg %p64
      $region14: #{tpu_custom_call.1} parent=11 // pred_check_branch
        %296 = sbr.rel (%p294) target = $region16
      $region15: #{tpu_custom_call.1} parent=11 // pred_region
        _
      $region16: #{tpu_custom_call.1} parent=11 // pred_fallthru
        _
      // Predicated region
      $region17: #{tpu_custom_call.1} parent=11 // pred_check
        %p297 = pneg %p85
      $region18: #{tpu_custom_call.1} parent=11 // pred_check_branch
        %299 = sbr.rel (%p297) target = $region20
      $region19: #{tpu_custom_call.1} parent=11 // pred_region
        _
      $region20: #{tpu_custom_call.1} parent=11 // pred_fallthru
        _
      // Predicated region
      $region21: #{tpu_custom_call.1} parent=11 // pred_check
        %p300 = pneg %p106
      $region22: #{tpu_custom_call.1} parent=11 // pred_check_branch
        %302 = sbr.rel (%p300) target = $region24
      $region23: #{tpu_custom_call.1} parent=11 // pred_region
        _
      $region24: #{tpu_custom_call.1} parent=11 // pred_fallthru
        _
      // Predicated region
      $region25: #{tpu_custom_call.1} parent=11 // pred_check
        %p303 = pneg %p127
      $region26: #{tpu_custom_call.1} parent=11 // pred_check_branch
        %305 = sbr.rel (%p303) target = $region28
      $region27: #{tpu_custom_call.1} parent=11 // pred_region
        _
      $region28: #{tpu_custom_call.1} parent=11 // pred_fallthru
        _
      // Predicated region
      $region29: #{tpu_custom_call.1} parent=11 // pred_check
        %p306 = pneg %p148
      $region30: #{tpu_custom_call.1} parent=11 // pred_check_branch
        %308 = sbr.rel (%p306) target = $region32
      $region31: #{tpu_custom_call.1} parent=11 // pred_region
        _
      $region32: #{tpu_custom_call.1} parent=11 // pred_fallthru
        _
      // Predicated region
      $region33: #{tpu_custom_call.1} parent=11 // pred_check
        %p309 = pneg %p169
      $region34: #{tpu_custom_call.1} parent=11 // pred_check_branch
        %311 = sbr.rel (%p309) target = $region36
      $region35: #{tpu_custom_call.1} parent=11 // pred_region
        _
      $region36: #{tpu_custom_call.1} parent=11 // pred_fallthru
        _
      // Predicated region
      $region37: #{tpu_custom_call.1} parent=11 // pred_check
        %p312 = pneg %p190
      $region38: #{tpu_custom_call.1} parent=11 // pred_check_branch
        %314 = sbr.rel (%p312) target = $region40
      $region39: #{tpu_custom_call.1} parent=11 // pred_region
        _
      $region40: #{tpu_custom_call.1} parent=11 // pred_fallthru
        _
      // Predicated region
      $region41: #{tpu_custom_call.1} parent=11 // pred_check
        %p315 = pneg %p211
      $region42: #{tpu_custom_call.1} parent=11 // pred_check_branch
        %317 = sbr.rel (%p315) target = $region44
      $region43: #{tpu_custom_call.1} parent=11 // pred_region
        _
      $region44: #{tpu_custom_call.1} parent=11 // pred_fallthru
        _
      // Predicated region
      $region45: #{tpu_custom_call.1} parent=11 // pred_check
        %p318 = pneg %p232
      $region46: #{tpu_custom_call.1} parent=11 // pred_check_branch
        %320 = sbr.rel (%p318) target = $region48
      $region47: #{tpu_custom_call.1} parent=11 // pred_region
        _
      $region48: #{tpu_custom_call.1} parent=11 // pred_fallthru
        _
      // Predicated region
      $region49: #{tpu_custom_call.1} parent=11 // pred_check
        %p321 = pneg %p253
      $region50: #{tpu_custom_call.1} parent=11 // pred_check_branch
        %323 = sbr.rel (%p321) target = $region52
      $region51: #{tpu_custom_call.1} parent=11 // pred_region
        _
      $region52: #{tpu_custom_call.1} parent=11 // pred_fallthru
        _
    $region12: #{tpu_custom_call.1} parent=5 // pred_fallthru
      _
    %p324 = scmp.lt.s32.totalorder %s17, 2
    // Predicated region
    $region53: #{tpu_custom_call.1} parent=5 // pred_check
      %p325 = pneg %p324
    $region54: #{tpu_custom_call.1} parent=5 // pred_check_branch
      %327 = sbr.rel (%p325) target = $region56
    $region55: #{tpu_custom_call.1} parent=5 // pred_region
      // Predicated region
      $region57: #{tpu_custom_call.1} parent=55 // pred_check
        %p328 = pneg %p37
      $region58: #{tpu_custom_call.1} parent=55 // pred_check_branch
        %330 = sbr.rel (%p328) target = $region60
      $region59: #{tpu_custom_call.1} parent=55 // pred_region
        %s331 = smul.u32 2, %s17
        %p332 = scmp.lt.s32.totalorder %s331, 3
        %s333 = scalar_select %p332, %s331, 3
        %s334 = smul.addr %s333, 16
        %s335 = smul.addr %s334, 8
        %s336 = scalar_lea.vmem %s0, %s335
        %s337 = smul.u32 2, %s17
      $region60: #{tpu_custom_call.1} parent=55 // pred_fallthru
        _
    $region56: #{tpu_custom_call.1} parent=5 // pred_fallthru
      _
    %p338 = scmp.le.s32.totalorder 1, %s17
    %p339 = scmp.lt.s32.totalorder %s17, 3
    %p340 = pnand %p338, %p339
    %p341 = pneg %p340
    // Predicated region
    $region61: #{tpu_custom_call.1} parent=5 // pred_check
      _
    $region62: #{tpu_custom_call.1} parent=5 // pred_check_branch
      %343 = sbr.rel (%p340) target = $region64
    $region63: #{tpu_custom_call.1} parent=5 // pred_region
      %s344 = ssub.s32 %s17, 1
      %s345 = smul.u32 2, %s22
      %p346 = scmp.lt.s32.totalorder %s345, 3
      %s347 = scalar_select %p346, %s345, 3
      %s348 = smul.addr %s347, 16
      %s349 = smul.addr %s348, 8
      %s350 = scalar_lea.vmem %s0, %s349
      %p351 = pneg %p43
      %p352 = pneg %p40
      %p353 = pneg %p64
      %p354 = pneg %p61
      %p355 = pneg %p85
      %p356 = pneg %p82
      %p357 = pneg %p106
      %p358 = pneg %p103
      %p359 = pneg %p127
      %p360 = pneg %p124
      %p361 = pneg %p148
      %p362 = pneg %p145
      %p363 = pneg %p169
      %p364 = pneg %p166
      %p365 = pneg %p190
      %p366 = pneg %p187
      %p367 = pneg %p211
      %p368 = pneg %p208
      %p369 = pneg %p232
      %p370 = pneg %p229
      %p371 = pneg %p253
      %p372 = pneg %p250
      %p373 = pneg %p279
      %p374 = pneg %p276
      %s375 = smul.u32 2, %s22
      %p376 = scmp.lt.s32.totalorder %s375, 3
      %s377 = scalar_select %p376, %s375, 3
      %s378 = smul.addr %s377, 16
      %s379 = smul.addr %s378, 8
      %s380 = scalar_lea.vmem %s11, %s379
      %s381 = smul.u32 2, %s22
      %p382 = scmp.lt.s32.totalorder %s381, 3
      %s383 = scalar_select %p382, %s381, 3
      %s384 = smul.addr %s383, 16
      %s385 = smul.addr %s384, 8
      %s386 = scalar_lea.vmem %s0, %s385
      %s387 = smul.u32 2, %s22
      %s388 = smul.u32 2, %s22
      %p389 = scmp.lt.s32.totalorder %s388, 3
      %s390 = scalar_select %p389, %s388, 3
      %s391 = smul.addr %s390, 16
      %s392 = smul.addr %s391, 8
      %s393 = scalar_lea.vmem %s11, %s392
      %s394 = smul.u32 2, %s22
      %v395 = vld [vmem:[%s386] sm:$0xff]
      %v396 = vld [vmem:[%s386 + $0x8] sm:$0xff]
      %v397 = vld [vmem:[%s386 + $0x10] sm:$0xff]
      %v398 = vld [vmem:[%s386 + $0x18] sm:$0xff]
      %v399 = vld [vmem:[%s386 + $0x20] sm:$0xff]
      %v400 = vld [vmem:[%s386 + $0x28] sm:$0xff]
      %v401 = vld [vmem:[%s386 + $0x30] sm:$0xff]
      %v402 = vld [vmem:[%s386 + $0x38] sm:$0xff]
      %v403 = vld [vmem:[%s386 + $0x40] sm:$0xff]
      %v404 = vld [vmem:[%s386 + $0x48] sm:$0xff]
      %v405 = vld [vmem:[%s386 + $0x50] sm:$0xff]
      %v406 = vld [vmem:[%s386 + $0x58] sm:$0xff]
      %v407 = vld [vmem:[%s386 + $0x60] sm:$0xff]
      %v408 = vld [vmem:[%s386 + $0x68] sm:$0xff]
      %v409 = vld [vmem:[%s386 + $0x70] sm:$0xff]
      %v410 = vld [vmem:[%s386 + $0x78] sm:$0xff]
      %v411 = vld [vmem:[%s386 + $0x80] sm:$0xff]
      %v412 = vld [vmem:[%s386 + $0x88] sm:$0xff]
      %v413 = vld [vmem:[%s386 + $0x90] sm:$0xff]
      %v414 = vld [vmem:[%s386 + $0x98] sm:$0xff]
      %v415 = vld [vmem:[%s386 + $0xa0] sm:$0xff]
      %v416 = vld [vmem:[%s386 + $0xa8] sm:$0xff]
      %v417 = vld [vmem:[%s386 + $0xb0] sm:$0xff]
      %v418 = vld [vmem:[%s386 + $0xb8] sm:$0xff]
      %v419 = vld [vmem:[%s386 + $0xc0] sm:$0xff]
      %v420 = vld [vmem:[%s386 + $0xc8] sm:$0xff]
      %v421 = vld [vmem:[%s386 + $0xd0] sm:$0xff]
      %v422 = vld [vmem:[%s386 + $0xd8] sm:$0xff]
      %v423 = vld [vmem:[%s386 + $0xe0] sm:$0xff]
      %v424 = vld [vmem:[%s386 + $0xe8] sm:$0xff]
      %v425 = vld [vmem:[%s386 + $0xf0] sm:$0xff]
      %v426 = vld [vmem:[%s386 + $0xf8] sm:$0xff]
      %v427 = vld [vmem:[%s1] sm:$0xff]
      %v428 = vld [vmem:[%s1 + $0x8] sm:$0xff]
      %v429 = vld [vmem:[%s1 + $0x10] sm:$0xff]
      %v430 = vld [vmem:[%s1 + $0x18] sm:$0xff]
      %v431 = vld [vmem:[%s1 + $0x20] sm:$0xff]
      %v432 = vld [vmem:[%s1 + $0x28] sm:$0xff]
      %v433 = vld [vmem:[%s1 + $0x30] sm:$0xff]
      %v434 = vld [vmem:[%s1 + $0x38] sm:$0xff]
      %v435 = vld [vmem:[%s1 + $0x40] sm:$0xff]
      %v436 = vld [vmem:[%s1 + $0x48] sm:$0xff]
      %v437 = vld [vmem:[%s1 + $0x50] sm:$0xff]
      %v438 = vld [vmem:[%s1 + $0x58] sm:$0xff]
      %v439 = vld [vmem:[%s1 + $0x60] sm:$0xff]
      %v440 = vld [vmem:[%s1 + $0x68] sm:$0xff]
      %v441 = vld [vmem:[%s1 + $0x70] sm:$0xff]
      %v442 = vld [vmem:[%s1 + $0x78] sm:$0xff]
      %v443 = vld [vmem:[%s1 + $0x80] sm:$0xff]
      %v444 = vld [vmem:[%s1 + $0x88] sm:$0xff]
      %v445 = vld [vmem:[%s1 + $0x90] sm:$0xff]
      %v446 = vld [vmem:[%s1 + $0x98] sm:$0xff]
      %v447 = vld [vmem:[%s1 + $0xa0] sm:$0xff]
      %v448 = vld [vmem:[%s1 + $0xa8] sm:$0xff]
      %v449 = vld [vmem:[%s1 + $0xb0] sm:$0xff]
      %v450 = vld [vmem:[%s1 + $0xb8] sm:$0xff]
      %v451 = vld [vmem:[%s1 + $0xc0] sm:$0xff]
      %v452 = vld [vmem:[%s1 + $0xc8] sm:$0xff]
      %v453 = vld [vmem:[%s1 + $0xd0] sm:$0xff]
      %v454 = vld [vmem:[%s1 + $0xd8] sm:$0xff]
      %v455 = vld [vmem:[%s1 + $0xe0] sm:$0xff]
      %v456 = vld [vmem:[%s1 + $0xe8] sm:$0xff]
      %v457 = vld [vmem:[%s1 + $0xf0] sm:$0xff]
      %v458 = vld [vmem:[%s1 + $0xf8] sm:$0xff]
      %v459 = vld [vmem:[%s1 + $0x100] sm:$0xff]
      %v460 = vld [vmem:[%s1 + $0x108] sm:$0xff]
      %v461 = vld [vmem:[%s1 + $0x110] sm:$0xff]
      %v462 = vld [vmem:[%s1 + $0x118] sm:$0xff]
      %vm463 = vcmask 785408
      %v465 = vsel %vm463, %v395, 0
      %v468 = vsel %vm463, %v396, 0
      %v471 = vsel %vm463, %v397, 0
      %v474 = vsel %vm463, %v398, 0
      %v477 = vsel %vm463, %v399, 0
      %v480 = vsel %vm463, %v400, 0
      %v483 = vsel %vm463, %v401, 0
      %v486 = vsel %vm463, %v402, 0
      %v489 = vsel %vm463, %v403, 0
      %v492 = vsel %vm463, %v404, 0
      %v495 = vsel %vm463, %v405, 0
      %v498 = vsel %vm463, %v406, 0
      %v501 = vsel %vm463, %v407, 0
      %v504 = vsel %vm463, %v408, 0
      %v507 = vsel %vm463, %v409, 0
      %v510 = vsel %vm463, %v410, 0
      %v513 = vsel %vm463, %v411, 0
      %v516 = vsel %vm463, %v412, 0
      %v519 = vsel %vm463, %v413, 0
      %v522 = vsel %vm463, %v414, 0
      %v525 = vsel %vm463, %v415, 0
      %v528 = vsel %vm463, %v416, 0
      %v531 = vsel %vm463, %v417, 0
      %v534 = vsel %vm463, %v418, 0
      %v537 = vsel %vm463, %v419, 0
      %v540 = vsel %vm463, %v420, 0
      %v543 = vsel %vm463, %v421, 0
      %v546 = vsel %vm463, %v422, 0
      %v549 = vsel %vm463, %v423, 0
      %v552 = vsel %vm463, %v424, 0
      %v555 = vsel %vm463, %v425, 0
      %v558 = vsel %vm463, %v426, 0
      %560 = vmatprep.subr.mxu0 %v428
      %561 = vmatpush1.msra.mxu0 %v427
      %562 = vmatprep.subr.mxu0 %v431
      %563 = vmatpush1.msra.mxu0 %v430
      %564 = vmatprep.subr.mxu0 %v434
      %565 = vmatpush1.msra.mxu0 %v433
      %566 = vmatprep.subr.mxu0 %v437
      %567 = vmatpush1.msra.mxu0 %v436
      %568 = vmatprep.subr.mxu0 %v440
      %569 = vmatpush1.msra.mxu0 %v439
      %570 = vmatprep.subr.mxu0 %v443
      %571 = vmatpush1.msra.mxu0 %v442
      %572 = vmatprep.subr.mxu0 %v446
      %573 = vmatpush1.msra.mxu0 %v445
      %574 = vmatprep.subr.mxu0 %v449
      %575 = vmatpush1.msra.mxu0 %v448
      %576 = vmatprep.subr.mxu0 %v452
      %577 = vmatpush1.msra.mxu0 %v451
      %578 = vmatprep.subr.mxu0 %v455
      %579 = vmatpush1.msra.mxu0 %v454
      %580 = vmatprep.subr.mxu0 %v458
      %581 = vmatpush1.msra.mxu0 %v457
      %582 = vmatprep.subr.mxu0 %v461
      %583 = vmatpush1.msra.mxu0 %v460
      %584 = vmatprep.subr.mxu0 0.0
      %585 = vmatpush1.msra.mxu0 0.0
      %586 = vmatprep.subr.mxu0 0.0
      %587 = vmatpush1.msra.mxu0 0.0
      %588 = vmatprep.subr.mxu0 0.0
      %589 = vmatpush1.msra.mxu0 0.0
      %590 = vmatprep.subr.mxu0 0.0
      %591 = vmatpush1.msra.mxu0 0.0
      %592 = vmatprep.subr.mxu0 0.0
      %593 = vmatpush1.msra.mxu0 0.0
      %594 = vmatprep.subr.mxu0 0.0
      %595 = vmatpush1.msra.mxu0 0.0
      %596 = vmatprep.subr.mxu0 0.0
      %597 = vmatpush1.msra.mxu0 0.0
      %598 = vmatprep.subr.mxu0 0.0
      %599 = vmatpush1.msra.mxu0 0.0
      %600 = vmatprep.subr.mxu0 0.0
      %601 = vmatpush1.msra.mxu0 0.0
      %602 = vmatprep.subr.mxu0 0.0
      %603 = vmatpush1.msra.mxu0 0.0
      %604 = vmatprep.subr.mxu0 0.0
      %605 = vmatpush1.msra.mxu0 0.0
      %606 = vmatprep.subr.mxu0 0.0
      %607 = vmatpush1.msra.mxu0 0.0
      %608 = vmatprep.subr.mxu0 0.0
      %609 = vmatpush1.msra.mxu0 0.0
      %610 = vmatprep.subr.mxu0 0.0
      %611 = vmatpush1.msra.mxu0 0.0
      %612 = vmatprep.subr.mxu0 0.0
      %613 = vmatpush1.msra.mxu0 0.0
      %614 = vmatprep.subr.mxu0 0.0
      %615 = vmatpush1.msra.mxu0 0.0
      %616 = vmatprep.subr.mxu0 0.0
      %617 = vmatpush1.msra.mxu0 0.0
      %618 = vmatprep.subr.mxu0 0.0
      %619 = vmatpush1.msra.mxu0 0.0
      %620 = vmatprep.subr.mxu0 0.0
      %621 = vmatpush1.msra.mxu0 0.0
      %622 = vmatprep.subr.mxu0 0.0
      %623 = vmatpush1.msra.mxu0 0.0
      %624 = vmatprep.mubr.f32.mxu0 0.0
      %625 = vmatmul.mubr.f32.gmra.mrb[0].mxu0 %v465
      %v626 = vpop.f32.mrb[0].mxu0
      %v627 = vadd.f32 0.0, %v626
      %v628 = vpop.f32.mrb[0].mxu0
      %v629 = vadd.f32 0.0, %v628
      %630 = vmatprep.mubr.f32.mxu0 0.0
      %631 = vmatmul.mubr.f32.gmra.mrb[0].mxu0 %v468
      %v632 = vpop.f32.mrb[0].mxu0
      %v633 = vadd.f32 0.0, %v632
      %v634 = vpop.f32.mrb[0].mxu0
      %v635 = vadd.f32 0.0, %v634
      %636 = vmatprep.mubr.f32.mxu0 0.0
      %637 = vmatmul.mubr.f32.gmra.mrb[0].mxu0 %v471
      %v638 = vpop.f32.mrb[0].mxu0
      %v639 = vadd.f32 0.0, %v638
      %v640 = vpop.f32.mrb[0].mxu0
      %v641 = vadd.f32 0.0, %v640
      %642 = vmatprep.mubr.f32.mxu0 0.0
      %643 = vmatmul.mubr.f32.gmra.mrb[0].mxu0 %v474
      %v644 = vpop.f32.mrb[0].mxu0
      %v645 = vadd.f32 0.0, %v644
      %v646 = vpop.f32.mrb[0].mxu0
      %v647 = vadd.f32 0.0, %v646
      %648 = vmatprep.mubr.f32.mxu0 0.0
      %649 = vmatmul.mubr.f32.gmra.mrb[0].mxu0 %v477
      %v650 = vpop.f32.mrb[0].mxu0
      %v651 = vadd.f32 0.0, %v650
      %v652 = vpop.f32.mrb[0].mxu0
      %v653 = vadd.f32 0.0, %v652
      %654 = vmatprep.mubr.f32.mxu0 0.0
      %655 = vmatmul.mubr.f32.gmra.mrb[0].mxu0 %v480
      %v656 = vpop.f32.mrb[0].mxu0
      %v657 = vadd.f32 0.0, %v656
      %v658 = vpop.f32.mrb[0].mxu0
      %v659 = vadd.f32 0.0, %v658
      %660 = vmatprep.mubr.f32.mxu0 0.0
      %661 = vmatmul.mubr.f32.gmra.mrb[0].mxu0 %v483
      %v662 = vpop.f32.mrb[0].mxu0
      %v663 = vadd.f32 0.0, %v662
      %v664 = vpop.f32.mrb[0].mxu0
      %v665 = vadd.f32 0.0, %v664
      %666 = vmatprep.mubr.f32.mxu0 0.0
      %667 = vmatmul.mubr.f32.gmra.mrb[0].mxu0 %v486
      %v668 = vpop.f32.mrb[0].mxu0
      %v669 = vadd.f32 0.0, %v668
      %v670 = vpop.f32.mrb[0].mxu0
      %v671 = vadd.f32 0.0, %v670
      %672 = vmatprep.mubr.f32.mxu0 0.0
      %673 = vmatmul.mubr.f32.gmra.mrb[0].mxu0 %v489
      %v674 = vpop.f32.mrb[0].mxu0
      %v675 = vadd.f32 0.0, %v674
      %v676 = vpop.f32.mrb[0].mxu0
      %v677 = vadd.f32 0.0, %v676
      %678 = vmatprep.mubr.f32.mxu0 0.0
      %679 = vmatmul.mubr.f32.gmra.mrb[0].mxu0 %v492
      %v680 = vpop.f32.mrb[0].mxu0
      %v681 = vadd.f32 0.0, %v680
      %v682 = vpop.f32.mrb[0].mxu0
      %v683 = vadd.f32 0.0, %v682
      %684 = vmatprep.mubr.f32.mxu0 0.0
      %685 = vmatmul.mubr.f32.gmra.mrb[0].mxu0 %v495
      %v686 = vpop.f32.mrb[0].mxu0
      %v687 = vadd.f32 0.0, %v686
      %v688 = vpop.f32.mrb[0].mxu0
      %v689 = vadd.f32 0.0, %v688
      %690 = vmatprep.mubr.f32.mxu0 0.0
      %691 = vmatmul.mubr.f32.gmra.mrb[0].mxu0 %v498
      %v692 = vpop.f32.mrb[0].mxu0
      %v693 = vadd.f32 0.0, %v692
      %v694 = vpop.f32.mrb[0].mxu0
      %v695 = vadd.f32 0.0, %v694
      %696 = vmatprep.mubr.f32.mxu0 0.0
      %697 = vmatmul.mubr.f32.gmra.mrb[0].mxu0 %v501
      %v698 = vpop.f32.mrb[0].mxu0
      %v699 = vadd.f32 0.0, %v698
      %v700 = vpop.f32.mrb[0].mxu0
      %v701 = vadd.f32 0.0, %v700
      %702 = vmatprep.mubr.f32.mxu0 0.0
      %703 = vmatmul.mubr.f32.gmra.mrb[0].mxu0 %v504
      %v704 = vpop.f32.mrb[0].mxu0
      %v705 = vadd.f32 0.0, %v704
      %v706 = vpop.f32.mrb[0].mxu0
      %v707 = vadd.f32 0.0, %v706
      %708 = vmatprep.mubr.f32.mxu0 0.0
      %709 = vmatmul.mubr.f32.gmra.mrb[0].mxu0 %v507
      %v710 = vpop.f32.mrb[0].mxu0
      %v711 = vadd.f32 0.0, %v710
      %v712 = vpop.f32.mrb[0].mxu0
      %v713 = vadd.f32 0.0, %v712
      %714 = vmatprep.mubr.f32.mxu0 0.0
      %715 = vmatmul.mubr.f32.gmra.mrb[0].mxu0 %v510
      %v716 = vpop.f32.mrb[0].mxu0
      %v717 = vadd.f32 0.0, %v716
      %v718 = vpop.f32.mrb[0].mxu0
      %v719 = vadd.f32 0.0, %v718
      %720 = vmatprep.mubr.f32.mxu0 0.0
      %721 = vmatmul.mubr.f32.gmra.mrb[0].mxu0 %v513
      %v722 = vpop.f32.mrb[0].mxu0
      %v723 = vadd.f32 0.0, %v722
      %v724 = vpop.f32.mrb[0].mxu0
      %v725 = vadd.f32 0.0, %v724
      %726 = vmatprep.mubr.f32.mxu0 0.0
      %727 = vmatmul.mubr.f32.gmra.mrb[0].mxu0 %v516
      %v728 = vpop.f32.mrb[0].mxu0
      %v729 = vadd.f32 0.0, %v728
      %v730 = vpop.f32.mrb[0].mxu0
      %v731 = vadd.f32 0.0, %v730
      %732 = vmatprep.mubr.f32.mxu0 0.0
      %733 = vmatmul.mubr.f32.gmra.mrb[0].mxu0 %v519
      %v734 = vpop.f32.mrb[0].mxu0
      %v735 = vadd.f32 0.0, %v734
      %v736 = vpop.f32.mrb[0].mxu0
      %v737 = vadd.f32 0.0, %v736
      %738 = vmatprep.mubr.f32.mxu0 0.0
      %739 = vmatmul.mubr.f32.gmra.mrb[0].mxu0 %v522
      %v740 = vpop.f32.mrb[0].mxu0
      %v741 = vadd.f32 0.0, %v740
      %v742 = vpop.f32.mrb[0].mxu0
      %v743 = vadd.f32 0.0, %v742
      %744 = vmatprep.mubr.f32.mxu0 0.0
      %745 = vmatmul.mubr.f32.gmra.mrb[0].mxu0 %v525
      %v746 = vpop.f32.mrb[0].mxu0
      %v747 = vadd.f32 0.0, %v746
      %v748 = vpop.f32.mrb[0].mxu0
      %v749 = vadd.f32 0.0, %v748
      %750 = vmatprep.mubr.f32.mxu0 0.0
      %751 = vmatmul.mubr.f32.gmra.mrb[0].mxu0 %v528
      %v752 = vpop.f32.mrb[0].mxu0
      %v753 = vadd.f32 0.0, %v752
      %v754 = vpop.f32.mrb[0].mxu0
      %v755 = vadd.f32 0.0, %v754
      %756 = vmatprep.mubr.f32.mxu0 0.0
      %757 = vmatmul.mubr.f32.gmra.mrb[0].mxu0 %v531
      %v758 = vpop.f32.mrb[0].mxu0
      %v759 = vadd.f32 0.0, %v758
      %v760 = vpop.f32.mrb[0].mxu0
      %v761 = vadd.f32 0.0, %v760
      %762 = vmatprep.mubr.f32.mxu0 0.0
      %763 = vmatmul.mubr.f32.gmra.mrb[0].mxu0 %v534
      %v764 = vpop.f32.mrb[0].mxu0
      %v765 = vadd.f32 0.0, %v764
      %v766 = vpop.f32.mrb[0].mxu0
      %v767 = vadd.f32 0.0, %v766
      %768 = vmatprep.mubr.f32.mxu0 0.0
      %769 = vmatmul.mubr.f32.gmra.mrb[0].mxu0 %v537
      %v770 = vpop.f32.mrb[0].mxu0
      %v771 = vadd.f32 0.0, %v770
      %v772 = vpop.f32.mrb[0].mxu0
      %v773 = vadd.f32 0.0, %v772
      %774 = vmatprep.mubr.f32.mxu0 0.0
      %775 = vmatmul.mubr.f32.gmra.mrb[0].mxu0 %v540
      %v776 = vpop.f32.mrb[0].mxu0
      %v777 = vadd.f32 0.0, %v776
      %v778 = vpop.f32.mrb[0].mxu0
      %v779 = vadd.f32 0.0, %v778
      %780 = vmatprep.mubr.f32.mxu0 0.0
      %781 = vmatmul.mubr.f32.gmra.mrb[0].mxu0 %v543
      %v782 = vpop.f32.mrb[0].mxu0
      %v783 = vadd.f32 0.0, %v782
      %v784 = vpop.f32.mrb[0].mxu0
      %v785 = vadd.f32 0.0, %v784
      %786 = vmatprep.mubr.f32.mxu0 0.0
      %787 = vmatmul.mubr.f32.gmra.mrb[0].mxu0 %v546
      %v788 = vpop.f32.mrb[0].mxu0
      %v789 = vadd.f32 0.0, %v788
      %v790 = vpop.f32.mrb[0].mxu0
      %v791 = vadd.f32 0.0, %v790
      %792 = vmatprep.mubr.f32.mxu0 0.0
      %793 = vmatmul.mubr.f32.gmra.mrb[0].mxu0 %v549
      %v794 = vpop.f32.mrb[0].mxu0
      %v795 = vadd.f32 0.0, %v794
      %v796 = vpop.f32.mrb[0].mxu0
      %v797 = vadd.f32 0.0, %v796
      %798 = vmatprep.mubr.f32.mxu0 0.0
      %799 = vmatmul.mubr.f32.gmra.mrb[0].mxu0 %v552
      %v800 = vpop.f32.mrb[0].mxu0
      %v801 = vadd.f32 0.0, %v800
      %v802 = vpop.f32.mrb[0].mxu0
      %v803 = vadd.f32 0.0, %v802
      %804 = vmatprep.mubr.f32.mxu0 0.0
      %805 = vmatmul.mubr.f32.gmra.mrb[0].mxu0 %v555
      %v806 = vpop.f32.mrb[0].mxu0
      %v807 = vadd.f32 0.0, %v806
      %v808 = vpop.f32.mrb[0].mxu0
      %v809 = vadd.f32 0.0, %v808
      %810 = vmatprep.mubr.f32.mxu0 0.0
      %811 = vmatmul.mubr.f32.gmra.mrb[0].mxu0 %v558
      %v812 = vpop.f32.mrb[0].mxu0
      %v813 = vadd.f32 0.0, %v812
      %v814 = vpop.f32.mrb[0].mxu0
      %v815 = vadd.f32 0.0, %v814
      %816 = vdwg.mxu0
      %817 = vmatprep.subr.mxu0 0.0
      %818 = vmatpush1.msra.mxu0 %v429
      %819 = vmatprep.subr.mxu0 0.0
      %820 = vmatpush1.msra.mxu0 %v432
      %821 = vmatprep.subr.mxu0 0.0
      %822 = vmatpush1.msra.mxu0 %v435
      %823 = vmatprep.subr.mxu0 0.0
      %824 = vmatpush1.msra.mxu0 %v438
      %825 = vmatprep.subr.mxu0 0.0
      %826 = vmatpush1.msra.mxu0 %v441
      %827 = vmatprep.subr.mxu0 0.0
      %828 = vmatpush1.msra.mxu0 %v444
      %829 = vmatprep.subr.mxu0 0.0
      %830 = vmatpush1.msra.mxu0 %v447
      %831 = vmatprep.subr.mxu0 0.0
      %832 = vmatpush1.msra.mxu0 %v450
      %833 = vmatprep.subr.mxu0 0.0
      %834 = vmatpush1.msra.mxu0 %v453
      %835 = vmatprep.subr.mxu0 0.0
      %836 = vmatpush1.msra.mxu0 %v456
      %837 = vmatprep.subr.mxu0 0.0
      %838 = vmatpush1.msra.mxu0 %v459
      %839 = vmatprep.subr.mxu0 0.0
      %840 = vmatpush1.msra.mxu0 %v462
      %841 = vmatprep.subr.mxu0 0.0
      %842 = vmatpush1.msra.mxu0 0.0
      %843 = vmatprep.subr.mxu0 0.0
      %844 = vmatpush1.msra.mxu0 0.0
      %845 = vmatprep.subr.mxu0 0.0
      %846 = vmatpush1.msra.mxu0 0.0
      %847 = vmatprep.subr.mxu0 0.0
      %848 = vmatpush1.msra.mxu0 0.0
      %849 = vmatprep.subr.mxu0 0.0
      %850 = vmatpush1.msra.mxu0 0.0
      %851 = vmatprep.subr.mxu0 0.0
      %852 = vmatpush1.msra.mxu0 0.0
      %853 = vmatprep.subr.mxu0 0.0
      %854 = vmatpush1.msra.mxu0 0.0
      %855 = vmatprep.subr.mxu0 0.0
      %856 = vmatpush1.msra.mxu0 0.0
      %857 = vmatprep.subr.mxu0 0.0
      %858 = vmatpush1.msra.mxu0 0.0
      %859 = vmatprep.subr.mxu0 0.0
      %860 = vmatpush1.msra.mxu0 0.0
      %861 = vmatprep.subr.mxu0 0.0
      %862 = vmatpush1.msra.mxu0 0.0
      %863 = vmatprep.subr.mxu0 0.0
      %864 = vmatpush1.msra.mxu0 0.0
      %865 = vmatprep.subr.mxu0 0.0
      %866 = vmatpush1.msra.mxu0 0.0
      %867 = vmatprep.subr.mxu0 0.0
      %868 = vmatpush1.msra.mxu0 0.0
      %869 = vmatprep.subr.mxu0 0.0
      %870 = vmatpush1.msra.mxu0 0.0
      %871 = vmatprep.subr.mxu0 0.0
      %872 = vmatpush1.msra.mxu0 0.0
      %873 = vmatprep.subr.mxu0 0.0
      %874 = vmatpush1.msra.mxu0 0.0
      %875 = vmatprep.subr.mxu0 0.0
      %876 = vmatpush1.msra.mxu0 0.0
      %877 = vmatprep.subr.mxu0 0.0
      %878 = vmatpush1.msra.mxu0 0.0
      %879 = vmatprep.subr.mxu0 0.0
      %880 = vmatpush1.msra.mxu0 0.0
      %881 = vmatprep.mubr.f32.mxu0 0.0
      %882 = vmatmul.mubr.f32.gmra.mrb[0].mxu0 %v465
      %v883 = vpop.f32.mrb[0].mxu0
      %v884 = vadd.f32 0.0, %v883
      %v885 = vpop.f32.mrb[0].mxu0
      %886 = vmatprep.mubr.f32.mxu0 0.0
      %887 = vmatmul.mubr.f32.gmra.mrb[0].mxu0 %v468
      %v888 = vpop.f32.mrb[0].mxu0
      %v889 = vadd.f32 0.0, %v888
      %v890 = vpop.f32.mrb[0].mxu0
      %891 = vmatprep.mubr.f32.mxu0 0.0
      %892 = vmatmul.mubr.f32.gmra.mrb[0].mxu0 %v471
      %v893 = vpop.f32.mrb[0].mxu0
      %v894 = vadd.f32 0.0, %v893
      %v895 = vpop.f32.mrb[0].mxu0
      %896 = vmatprep.mubr.f32.mxu0 0.0
      %897 = vmatmul.mubr.f32.gmra.mrb[0].mxu0 %v474
      %v898 = vpop.f32.mrb[0].mxu0
      %v899 = vadd.f32 0.0, %v898
      %v900 = vpop.f32.mrb[0].mxu0
      %901 = vmatprep.mubr.f32.mxu0 0.0
      %902 = vmatmul.mubr.f32.gmra.mrb[0].mxu0 %v477
      %v903 = vpop.f32.mrb[0].mxu0
      %v904 = vadd.f32 0.0, %v903
      %v905 = vpop.f32.mrb[0].mxu0
      %906 = vmatprep.mubr.f32.mxu0 0.0
      %907 = vmatmul.mubr.f32.gmra.mrb[0].mxu0 %v480
      %v908 = vpop.f32.mrb[0].mxu0
      %v909 = vadd.f32 0.0, %v908
      %v910 = vpop.f32.mrb[0].mxu0
      %911 = vmatprep.mubr.f32.mxu0 0.0
      %912 = vmatmul.mubr.f32.gmra.mrb[0].mxu0 %v483
      %v913 = vpop.f32.mrb[0].mxu0
      %v914 = vadd.f32 0.0, %v913
      %v915 = vpop.f32.mrb[0].mxu0
      %916 = vmatprep.mubr.f32.mxu0 0.0
      %917 = vmatmul.mubr.f32.gmra.mrb[0].mxu0 %v486
      %v918 = vpop.f32.mrb[0].mxu0
      %v919 = vadd.f32 0.0, %v918
      %v920 = vpop.f32.mrb[0].mxu0
      %921 = vmatprep.mubr.f32.mxu0 0.0
      %922 = vmatmul.mubr.f32.gmra.mrb[0].mxu0 %v489
      %v923 = vpop.f32.mrb[0].mxu0
      %v924 = vadd.f32 0.0, %v923
      %v925 = vpop.f32.mrb[0].mxu0
      %926 = vmatprep.mubr.f32.mxu0 0.0
      %927 = vmatmul.mubr.f32.gmra.mrb[0].mxu0 %v492
      %v928 = vpop.f32.mrb[0].mxu0
      %v929 = vadd.f32 0.0, %v928
      %v930 = vpop.f32.mrb[0].mxu0
      %931 = vmatprep.mubr.f32.mxu0 0.0
      %932 = vmatmul.mubr.f32.gmra.mrb[0].mxu0 %v495
      %v933 = vpop.f32.mrb[0].mxu0
      %v934 = vadd.f32 0.0, %v933
      %v935 = vpop.f32.mrb[0].mxu0
      %936 = vmatprep.mubr.f32.mxu0 0.0
      %937 = vmatmul.mubr.f32.gmra.mrb[0].mxu0 %v498
      %v938 = vpop.f32.mrb[0].mxu0
      %v939 = vadd.f32 0.0, %v938
      %v940 = vpop.f32.mrb[0].mxu0
      %941 = vmatprep.mubr.f32.mxu0 0.0
      %942 = vmatmul.mubr.f32.gmra.mrb[0].mxu0 %v501
      %v943 = vpop.f32.mrb[0].mxu0
      %v944 = vadd.f32 0.0, %v943
      %v945 = vpop.f32.mrb[0].mxu0
      %946 = vmatprep.mubr.f32.mxu0 0.0
      %947 = vmatmul.mubr.f32.gmra.mrb[0].mxu0 %v504
      %v948 = vpop.f32.mrb[0].mxu0
      %v949 = vadd.f32 0.0, %v948
      %v950 = vpop.f32.mrb[0].mxu0
      %951 = vmatprep.mubr.f32.mxu0 0.0
      %952 = vmatmul.mubr.f32.gmra.mrb[0].mxu0 %v507
      %v953 = vpop.f32.mrb[0].mxu0
      %v954 = vadd.f32 0.0, %v953
      %v955 = vpop.f32.mrb[0].mxu0
      %956 = vmatprep.mubr.f32.mxu0 0.0
      %957 = vmatmul.mubr.f32.gmra.mrb[0].mxu0 %v510
      %v958 = vpop.f32.mrb[0].mxu0
      %v959 = vadd.f32 0.0, %v958
      %v960 = vpop.f32.mrb[0].mxu0
      %961 = vmatprep.mubr.f32.mxu0 0.0
      %962 = vmatmul.mubr.f32.gmra.mrb[0].mxu0 %v513
      %v963 = vpop.f32.mrb[0].mxu0
      %v964 = vadd.f32 0.0, %v963
      %v965 = vpop.f32.mrb[0].mxu0
      %966 = vmatprep.mubr.f32.mxu0 0.0
      %967 = vmatmul.mubr.f32.gmra.mrb[0].mxu0 %v516
      %v968 = vpop.f32.mrb[0].mxu0
      %v969 = vadd.f32 0.0, %v968
      %v970 = vpop.f32.mrb[0].mxu0
      %971 = vmatprep.mubr.f32.mxu0 0.0
      %972 = vmatmul.mubr.f32.gmra.mrb[0].mxu0 %v519
      %v973 = vpop.f32.mrb[0].mxu0
      %v974 = vadd.f32 0.0, %v973
      %v975 = vpop.f32.mrb[0].mxu0
      %976 = vmatprep.mubr.f32.mxu0 0.0
      %977 = vmatmul.mubr.f32.gmra.mrb[0].mxu0 %v522
      %v978 = vpop.f32.mrb[0].mxu0
      %v979 = vadd.f32 0.0, %v978
      %v980 = vpop.f32.mrb[0].mxu0
      %981 = vmatprep.mubr.f32.mxu0 0.0
      %982 = vmatmul.mubr.f32.gmra.mrb[0].mxu0 %v525
      %v983 = vpop.f32.mrb[0].mxu0
      %v984 = vadd.f32 0.0, %v983
      %v985 = vpop.f32.mrb[0].mxu0
      %986 = vmatprep.mubr.f32.mxu0 0.0
      %987 = vmatmul.mubr.f32.gmra.mrb[0].mxu0 %v528
      %v988 = vpop.f32.mrb[0].mxu0
      %v989 = vadd.f32 0.0, %v988
      %v990 = vpop.f32.mrb[0].mxu0
      %991 = vmatprep.mubr.f32.mxu0 0.0
      %992 = vmatmul.mubr.f32.gmra.mrb[0].mxu0 %v531
      %v993 = vpop.f32.mrb[0].mxu0
      %v994 = vadd.f32 0.0, %v993
      %v995 = vpop.f32.mrb[0].mxu0
      %996 = vmatprep.mubr.f32.mxu0 0.0
      %997 = vmatmul.mubr.f32.gmra.mrb[0].mxu0 %v534
      %v998 = vpop.f32.mrb[0].mxu0
      %v999 = vadd.f32 0.0, %v998
      %v1000 = vpop.f32.mrb[0].mxu0
      %1001 = vmatprep.mubr.f32.mxu0 0.0
      %1002 = vmatmul.mubr.f32.gmra.mrb[0].mxu0 %v537
      %v1003 = vpop.f32.mrb[0].mxu0
      %v1004 = vadd.f32 0.0, %v1003
      %v1005 = vpop.f32.mrb[0].mxu0
      %1006 = vmatprep.mubr.f32.mxu0 0.0
      %1007 = vmatmul.mubr.f32.gmra.mrb[0].mxu0 %v540
      %v1008 = vpop.f32.mrb[0].mxu0
      %v1009 = vadd.f32 0.0, %v1008
      %v1010 = vpop.f32.mrb[0].mxu0
      %1011 = vmatprep.mubr.f32.mxu0 0.0
      %1012 = vmatmul.mubr.f32.gmra.mrb[0].mxu0 %v543
      %v1013 = vpop.f32.mrb[0].mxu0
      %v1014 = vadd.f32 0.0, %v1013
      %v1015 = vpop.f32.mrb[0].mxu0
      %1016 = vmatprep.mubr.f32.mxu0 0.0
      %1017 = vmatmul.mubr.f32.gmra.mrb[0].mxu0 %v546
      %v1018 = vpop.f32.mrb[0].mxu0
      %v1019 = vadd.f32 0.0, %v1018
      %v1020 = vpop.f32.mrb[0].mxu0
      %1021 = vmatprep.mubr.f32.mxu0 0.0
      %1022 = vmatmul.mubr.f32.gmra.mrb[0].mxu0 %v549
      %v1023 = vpop.f32.mrb[0].mxu0
      %v1024 = vadd.f32 0.0, %v1023
      %v1025 = vpop.f32.mrb[0].mxu0
      %1026 = vmatprep.mubr.f32.mxu0 0.0
      %1027 = vmatmul.mubr.f32.gmra.mrb[0].mxu0 %v552
      %v1028 = vpop.f32.mrb[0].mxu0
      %v1029 = vadd.f32 0.0, %v1028
      %v1030 = vpop.f32.mrb[0].mxu0
      %1031 = vmatprep.mubr.f32.mxu0 0.0
      %1032 = vmatmul.mubr.f32.gmra.mrb[0].mxu0 %v555
      %v1033 = vpop.f32.mrb[0].mxu0
      %v1034 = vadd.f32 0.0, %v1033
      %v1035 = vpop.f32.mrb[0].mxu0
      %1036 = vmatprep.mubr.f32.mxu0 0.0
      %1037 = vmatmul.mubr.f32.gmra.mrb[0].mxu0 %v558
      %v1038 = vpop.f32.mrb[0].mxu0
      %v1039 = vadd.f32 0.0, %v1038
      %v1040 = vpop.f32.mrb[0].mxu0
      %1041 = vdwg.mxu0
      %v1042 = vld [vmem:[%s3] sm:$0xff]
      %v1043 = vld [vmem:[%s3 + $0x8] sm:$0xff]
      %v1044 = vld [vmem:[%s3 + $0x10] sm:$0xff]
      %v1045 = vld [vmem:[%s3 + $0x18] sm:$0xff]
      %v1046 = vld [vmem:[%s3 + $0x20] sm:$0xff]
      %v1047 = vld [vmem:[%s3 + $0x28] sm:$0xff]
      %v1048 = vld [vmem:[%s3 + $0x30] sm:$0xff]
      %v1049 = vld [vmem:[%s3 + $0x38] sm:$0xff]
      %v1050 = vld [vmem:[%s3 + $0x40] sm:$0xff]
      %v1051 = vld [vmem:[%s3 + $0x48] sm:$0xff]
      %v1052 = vld [vmem:[%s3 + $0x50] sm:$0xff]
      %v1053 = vld [vmem:[%s3 + $0x58] sm:$0xff]
      %v1054 = vmul.f32 %v627, %v627
      %v1055 = vmul.f32 %v633, %v633
      %v1056 = vmul.f32 %v639, %v639
      %v1057 = vmul.f32 %v645, %v645
      %v1058 = vmul.f32 %v651, %v651
      %v1059 = vmul.f32 %v657, %v657
      %v1060 = vmul.f32 %v663, %v663
      %v1061 = vmul.f32 %v669, %v669
      %v1062 = vmul.f32 %v675, %v675
      %v1063 = vmul.f32 %v681, %v681
      %v1064 = vmul.f32 %v687, %v687
      %v1065 = vmul.f32 %v693, %v693
      %v1066 = vmul.f32 %v699, %v699
      %v1067 = vmul.f32 %v705, %v705
      %v1068 = vmul.f32 %v711, %v711
      %v1069 = vmul.f32 %v717, %v717
      %v1070 = vmul.f32 %v723, %v723
      %v1071 = vmul.f32 %v729, %v729
      %v1072 = vmul.f32 %v735, %v735
      %v1073 = vmul.f32 %v741, %v741
      %v1074 = vmul.f32 %v747, %v747
      %v1075 = vmul.f32 %v753, %v753
      %v1076 = vmul.f32 %v759, %v759
      %v1077 = vmul.f32 %v765, %v765
      %v1078 = vmul.f32 %v771, %v771
      %v1079 = vmul.f32 %v777, %v777
      %v1080 = vmul.f32 %v783, %v783
      %v1081 = vmul.f32 %v789, %v789
      %v1082 = vmul.f32 %v795, %v795
      %v1083 = vmul.f32 %v801, %v801
      %v1084 = vmul.f32 %v807, %v807
      %v1085 = vmul.f32 %v813, %v813
      %v1087 = vsel %vm463, %v1054, 0
      %v1090 = vsel %vm463, %v1055, 0
      %v1093 = vsel %vm463, %v1056, 0
      %v1096 = vsel %vm463, %v1057, 0
      %v1099 = vsel %vm463, %v1058, 0
      %v1102 = vsel %vm463, %v1059, 0
      %v1105 = vsel %vm463, %v1060, 0
      %v1108 = vsel %vm463, %v1061, 0
      %v1111 = vsel %vm463, %v1062, 0
      %v1114 = vsel %vm463, %v1063, 0
      %v1117 = vsel %vm463, %v1064, 0
      %v1120 = vsel %vm463, %v1065, 0
      %v1123 = vsel %vm463, %v1066, 0
      %v1126 = vsel %vm463, %v1067, 0
      %v1129 = vsel %vm463, %v1068, 0
      %v1132 = vsel %vm463, %v1069, 0
      %v1135 = vsel %vm463, %v1070, 0
      %v1138 = vsel %vm463, %v1071, 0
      %v1141 = vsel %vm463, %v1072, 0
      %v1144 = vsel %vm463, %v1073, 0
      %v1147 = vsel %vm463, %v1074, 0
      %v1150 = vsel %vm463, %v1075, 0
      %v1153 = vsel %vm463, %v1076, 0
      %v1156 = vsel %vm463, %v1077, 0
      %v1159 = vsel %vm463, %v1078, 0
      %v1162 = vsel %vm463, %v1079, 0
      %v1165 = vsel %vm463, %v1080, 0
      %v1168 = vsel %vm463, %v1081, 0
      %v1171 = vsel %vm463, %v1082, 0
      %v1174 = vsel %vm463, %v1083, 0
      %v1177 = vsel %vm463, %v1084, 0
      %v1180 = vsel %vm463, %v1085, 0
      %1182 = vmatprep.subr.mxu0 0.0
      %1183 = vmatpush1.msra.mxu0 %v1042
      %1184 = vmatprep.subr.mxu0 0.0
      %1185 = vmatpush1.msra.mxu0 %v1043
      %1186 = vmatprep.subr.mxu0 0.0
      %1187 = vmatpush1.msra.mxu0 %v1044
      %1188 = vmatprep.subr.mxu0 0.0
      %1189 = vmatpush1.msra.mxu0 %v1045
      %1190 = vmatprep.subr.mxu0 0.0
      %1191 = vmatpush1.msra.mxu0 %v1046
      %1192 = vmatprep.subr.mxu0 0.0
      %1193 = vmatpush1.msra.mxu0 %v1047
      %1194 = vmatprep.subr.mxu0 0.0
      %1195 = vmatpush1.msra.mxu0 %v1048
      %1196 = vmatprep.subr.mxu0 0.0
      %1197 = vmatpush1.msra.mxu0 %v1049
      %1198 = vmatprep.subr.mxu0 0.0
      %1199 = vmatpush1.msra.mxu0 %v1050
      %1200 = vmatprep.subr.mxu0 0.0
      %1201 = vmatpush1.msra.mxu0 %v1051
      %1202 = vmatprep.subr.mxu0 0.0
      %1203 = vmatpush1.msra.mxu0 %v1052
      %1204 = vmatprep.subr.mxu0 0.0
      %1205 = vmatpush1.msra.mxu0 %v1053
      %1206 = vmatprep.subr.mxu0 0.0
      %1207 = vmatpush1.msra.mxu0 0.0
      %1208 = vmatprep.subr.mxu0 0.0
      %1209 = vmatpush1.msra.mxu0 0.0
      %1210 = vmatprep.subr.mxu0 0.0
      %1211 = vmatpush1.msra.mxu0 0.0
      %1212 = vmatprep.subr.mxu0 0.0
      %1213 = vmatpush1.msra.mxu0 0.0
      %1214 = vmatprep.subr.mxu0 0.0
      %1215 = vmatpush1.msra.mxu0 0.0
      %1216 = vmatprep.subr.mxu0 0.0
      %1217 = vmatpush1.msra.mxu0 0.0
      %1218 = vmatprep.subr.mxu0 0.0
      %1219 = vmatpush1.msra.mxu0 0.0
      %1220 = vmatprep.subr.mxu0 0.0
      %1221 = vmatpush1.msra.mxu0 0.0
      %1222 = vmatprep.subr.mxu0 0.0
      %1223 = vmatpush1.msra.mxu0 0.0
      %1224 = vmatprep.subr.mxu0 0.0
      %1225 = vmatpush1.msra.mxu0 0.0
      %1226 = vmatprep.subr.mxu0 0.0
      %1227 = vmatpush1.msra.mxu0 0.0
      %1228 = vmatprep.subr.mxu0 0.0
      %1229 = vmatpush1.msra.mxu0 0.0
      %1230 = vmatprep.subr.mxu0 0.0
      %1231 = vmatpush1.msra.mxu0 0.0
      %1232 = vmatprep.subr.mxu0 0.0
      %1233 = vmatpush1.msra.mxu0 0.0
      %1234 = vmatprep.subr.mxu0 0.0
      %1235 = vmatpush1.msra.mxu0 0.0
      %1236 = vmatprep.subr.mxu0 0.0
      %1237 = vmatpush1.msra.mxu0 0.0
      %1238 = vmatprep.subr.mxu0 0.0
      %1239 = vmatpush1.msra.mxu0 0.0
      %1240 = vmatprep.subr.mxu0 0.0
      %1241 = vmatpush1.msra.mxu0 0.0
      %1242 = vmatprep.subr.mxu0 0.0
      %1243 = vmatpush1.msra.mxu0 0.0
      %1244 = vmatprep.subr.mxu0 0.0
      %1245 = vmatpush1.msra.mxu0 0.0
      %1246 = vmatprep.mubr.f32.mxu0 0.0
      %1247 = vmatmul.mubr.f32.gmra.mrb[0].mxu0 %v1087
      %v1248 = vpop.f32.mrb[0].mxu0
      %v1249 = vadd.f32 1.1920929e-07, %v1248
      %v1250 = vpop.f32.mrb[0].mxu0
      %1251 = vmatprep.mubr.f32.mxu0 0.0
      %1252 = vmatmul.mubr.f32.gmra.mrb[0].mxu0 %v1090
      %v1253 = vpop.f32.mrb[0].mxu0
      %v1254 = vadd.f32 1.1920929e-07, %v1253
      %v1255 = vpop.f32.mrb[0].mxu0
      %1256 = vmatprep.mubr.f32.mxu0 0.0
      %1257 = vmatmul.mubr.f32.gmra.mrb[0].mxu0 %v1093
      %v1258 = vpop.f32.mrb[0].mxu0
      %v1259 = vadd.f32 1.1920929e-07, %v1258
      %v1260 = vpop.f32.mrb[0].mxu0
      %1261 = vmatprep.mubr.f32.mxu0 0.0
      %1262 = vmatmul.mubr.f32.gmra.mrb[0].mxu0 %v1096
      %v1263 = vpop.f32.mrb[0].mxu0
      %v1264 = vadd.f32 1.1920929e-07, %v1263
      %v1265 = vpop.f32.mrb[0].mxu0
      %1266 = vmatprep.mubr.f32.mxu0 0.0
      %1267 = vmatmul.mubr.f32.gmra.mrb[0].mxu0 %v1099
      %v1268 = vpop.f32.mrb[0].mxu0
      %v1269 = vadd.f32 1.1920929e-07, %v1268
      %v1270 = vpop.f32.mrb[0].mxu0
      %1271 = vmatprep.mubr.f32.mxu0 0.0
      %1272 = vmatmul.mubr.f32.gmra.mrb[0].mxu0 %v1102
      %v1273 = vpop.f32.mrb[0].mxu0
      %v1274 = vadd.f32 1.1920929e-07, %v1273
      %v1275 = vpop.f32.mrb[0].mxu0
      %1276 = vmatprep.mubr.f32.mxu0 0.0
      %1277 = vmatmul.mubr.f32.gmra.mrb[0].mxu0 %v1105
      %v1278 = vpop.f32.mrb[0].mxu0
      %v1279 = vadd.f32 1.1920929e-07, %v1278
      %v1280 = vpop.f32.mrb[0].mxu0
      %1281 = vmatprep.mubr.f32.mxu0 0.0
      %1282 = vmatmul.mubr.f32.gmra.mrb[0].mxu0 %v1108
      %v1283 = vpop.f32.mrb[0].mxu0
      %v1284 = vadd.f32 1.1920929e-07, %v1283
      %v1285 = vpop.f32.mrb[0].mxu0
      %1286 = vmatprep.mubr.f32.mxu0 0.0
      %1287 = vmatmul.mubr.f32.gmra.mrb[0].mxu0 %v1111
      %v1288 = vpop.f32.mrb[0].mxu0
      %v1289 = vadd.f32 1.1920929e-07, %v1288
      %v1290 = vpop.f32.mrb[0].mxu0
      %1291 = vmatprep.mubr.f32.mxu0 0.0
      %1292 = vmatmul.mubr.f32.gmra.mrb[0].mxu0 %v1114
      %v1293 = vpop.f32.mrb[0].mxu0
      %v1294 = vadd.f32 1.1920929e-07, %v1293
      %v1295 = vpop.f32.mrb[0].mxu0
      %1296 = vmatprep.mubr.f32.mxu0 0.0
      %1297 = vmatmul.mubr.f32.gmra.mrb[0].mxu0 %v1117
      %v1298 = vpop.f32.mrb[0].mxu0
      %v1299 = vadd.f32 1.1920929e-07, %v1298
      %v1300 = vpop.f32.mrb[0].mxu0
      %1301 = vmatprep.mubr.f32.mxu0 0.0
      %1302 = vmatmul.mubr.f32.gmra.mrb[0].mxu0 %v1120
      %v1303 = vpop.f32.mrb[0].mxu0
      %v1304 = vadd.f32 1.1920929e-07, %v1303
      %v1305 = vpop.f32.mrb[0].mxu0
      %1306 = vmatprep.mubr.f32.mxu0 0.0
      %1307 = vmatmul.mubr.f32.gmra.mrb[0].mxu0 %v1123
      %v1308 = vpop.f32.mrb[0].mxu0
      %v1309 = vadd.f32 1.1920929e-07, %v1308
      %v1310 = vpop.f32.mrb[0].mxu0
      %1311 = vmatprep.mubr.f32.mxu0 0.0
      %1312 = vmatmul.mubr.f32.gmra.mrb[0].mxu0 %v1126
      %v1313 = vpop.f32.mrb[0].mxu0
      %v1314 = vadd.f32 1.1920929e-07, %v1313
      %v1315 = vpop.f32.mrb[0].mxu0
      %1316 = vmatprep.mubr.f32.mxu0 0.0
      %1317 = vmatmul.mubr.f32.gmra.mrb[0].mxu0 %v1129
      %v1318 = vpop.f32.mrb[0].mxu0
      %v1319 = vadd.f32 1.1920929e-07, %v1318
      %v1320 = vpop.f32.mrb[0].mxu0
      %1321 = vmatprep.mubr.f32.mxu0 0.0
      %1322 = vmatmul.mubr.f32.gmra.mrb[0].mxu0 %v1132
      %v1323 = vpop.f32.mrb[0].mxu0
      %v1324 = vadd.f32 1.1920929e-07, %v1323
      %v1325 = vpop.f32.mrb[0].mxu0
      %1326 = vmatprep.mubr.f32.mxu0 0.0
      %1327 = vmatmul.mubr.f32.gmra.mrb[0].mxu0 %v1135
      %v1328 = vpop.f32.mrb[0].mxu0
      %v1329 = vadd.f32 1.1920929e-07, %v1328
      %v1330 = vpop.f32.mrb[0].mxu0
      %1331 = vmatprep.mubr.f32.mxu0 0.0
      %1332 = vmatmul.mubr.f32.gmra.mrb[0].mxu0 %v1138
      %v1333 = vpop.f32.mrb[0].mxu0
      %v1334 = vadd.f32 1.1920929e-07, %v1333
      %v1335 = vpop.f32.mrb[0].mxu0
      %1336 = vmatprep.mubr.f32.mxu0 0.0
      %1337 = vmatmul.mubr.f32.gmra.mrb[0].mxu0 %v1141
      %v1338 = vpop.f32.mrb[0].mxu0
      %v1339 = vadd.f32 1.1920929e-07, %v1338
      %v1340 = vpop.f32.mrb[0].mxu0
      %1341 = vmatprep.mubr.f32.mxu0 0.0
      %1342 = vmatmul.mubr.f32.gmra.mrb[0].mxu0 %v1144
      %v1343 = vpop.f32.mrb[0].mxu0
      %v1344 = vadd.f32 1.1920929e-07, %v1343
      %v1345 = vpop.f32.mrb[0].mxu0
      %1346 = vmatprep.mubr.f32.mxu0 0.0
      %1347 = vmatmul.mubr.f32.gmra.mrb[0].mxu0 %v1147
      %v1348 = vpop.f32.mrb[0].mxu0
      %v1349 = vadd.f32 1.1920929e-07, %v1348
      %v1350 = vpop.f32.mrb[0].mxu0
      %1351 = vmatprep.mubr.f32.mxu0 0.0
      %1352 = vmatmul.mubr.f32.gmra.mrb[0].mxu0 %v1150
      %v1353 = vpop.f32.mrb[0].mxu0
      %v1354 = vadd.f32 1.1920929e-07, %v1353
      %v1355 = vpop.f32.mrb[0].mxu0
      %1356 = vmatprep.mubr.f32.mxu0 0.0
      %1357 = vmatmul.mubr.f32.gmra.mrb[0].mxu0 %v1153
      %v1358 = vpop.f32.mrb[0].mxu0
      %v1359 = vadd.f32 1.1920929e-07, %v1358
      %v1360 = vpop.f32.mrb[0].mxu0
      %1361 = vmatprep.mubr.f32.mxu0 0.0
      %1362 = vmatmul.mubr.f32.gmra.mrb[0].mxu0 %v1156
      %v1363 = vpop.f32.mrb[0].mxu0
      %v1364 = vadd.f32 1.1920929e-07, %v1363
      %v1365 = vpop.f32.mrb[0].mxu0
      %1366 = vmatprep.mubr.f32.mxu0 0.0
      %1367 = vmatmul.mubr.f32.gmra.mrb[0].mxu0 %v1159
      %v1368 = vpop.f32.mrb[0].mxu0
      %v1369 = vadd.f32 1.1920929e-07, %v1368
      %v1370 = vpop.f32.mrb[0].mxu0
      %1371 = vmatprep.mubr.f32.mxu0 0.0
      %1372 = vmatmul.mubr.f32.gmra.mrb[0].mxu0 %v1162
      %v1373 = vpop.f32.mrb[0].mxu0
      %v1374 = vadd.f32 1.1920929e-07, %v1373
      %v1375 = vpop.f32.mrb[0].mxu0
      %1376 = vmatprep.mubr.f32.mxu0 0.0
      %1377 = vmatmul.mubr.f32.gmra.mrb[0].mxu0 %v1165
      %v1378 = vpop.f32.mrb[0].mxu0
      %v1379 = vadd.f32 1.1920929e-07, %v1378
      %v1380 = vpop.f32.mrb[0].mxu0
      %1381 = vmatprep.mubr.f32.mxu0 0.0
      %1382 = vmatmul.mubr.f32.gmra.mrb[0].mxu0 %v1168
      %v1383 = vpop.f32.mrb[0].mxu0
      %v1384 = vadd.f32 1.1920929e-07, %v1383
      %v1385 = vpop.f32.mrb[0].mxu0
      %1386 = vmatprep.mubr.f32.mxu0 0.0
      %1387 = vmatmul.mubr.f32.gmra.mrb[0].mxu0 %v1171
      %v1388 = vpop.f32.mrb[0].mxu0
      %v1389 = vadd.f32 1.1920929e-07, %v1388
      %v1390 = vpop.f32.mrb[0].mxu0
      %1391 = vmatprep.mubr.f32.mxu0 0.0
      %1392 = vmatmul.mubr.f32.gmra.mrb[0].mxu0 %v1174
      %v1393 = vpop.f32.mrb[0].mxu0
      %v1394 = vadd.f32 1.1920929e-07, %v1393
      %v1395 = vpop.f32.mrb[0].mxu0
      %1396 = vmatprep.mubr.f32.mxu0 0.0
      %1397 = vmatmul.mubr.f32.gmra.mrb[0].mxu0 %v1177
      %v1398 = vpop.f32.mrb[0].mxu0
      %v1399 = vadd.f32 1.1920929e-07, %v1398
      %v1400 = vpop.f32.mrb[0].mxu0
      %1401 = vmatprep.mubr.f32.mxu0 0.0
      %1402 = vmatmul.mubr.f32.gmra.mrb[0].mxu0 %v1180
      %v1403 = vpop.f32.mrb[0].mxu0
      %v1404 = vadd.f32 1.1920929e-07, %v1403
      %v1405 = vpop.f32.mrb[0].mxu0
      %1406 = vdwg.mxu0
      %v1407 = vrsqrt.pop %v1249
      %v1408 = vrsqrt.pop %v1254
      %v1409 = vrsqrt.pop %v1259
      %v1410 = vrsqrt.pop %v1264
      %v1411 = vrsqrt.pop %v1269
      %v1412 = vrsqrt.pop %v1274
      %v1413 = vrsqrt.pop %v1279
      %v1414 = vrsqrt.pop %v1284
      %v1415 = vrsqrt.pop %v1289
      %v1416 = vrsqrt.pop %v1294
      %v1417 = vrsqrt.pop %v1299
      %v1418 = vrsqrt.pop %v1304
      %v1419 = vrsqrt.pop %v1309
      %v1420 = vrsqrt.pop %v1314
      %v1421 = vrsqrt.pop %v1319
      %v1422 = vrsqrt.pop %v1324
      %v1423 = vrsqrt.pop %v1329
      %v1424 = vrsqrt.pop %v1334
      %v1425 = vrsqrt.pop %v1339
      %v1426 = vrsqrt.pop %v1344
      %v1427 = vrsqrt.pop %v1349
      %v1428 = vrsqrt.pop %v1354
      %v1429 = vrsqrt.pop %v1359
      %v1430 = vrsqrt.pop %v1364
      %v1431 = vrsqrt.pop %v1369
      %v1432 = vrsqrt.pop %v1374
      %v1433 = vrsqrt.pop %v1379
      %v1434 = vrsqrt.pop %v1384
      %v1435 = vrsqrt.pop %v1389
      %v1436 = vrsqrt.pop %v1394
      %v1437 = vrsqrt.pop %v1399
      %v1438 = vrsqrt.pop %v1404
      %v1439 = vmul.f32 %v627, %v1407
      %v1440 = vmul.f32 %v633, %v1408
      %v1441 = vmul.f32 %v639, %v1409
      %v1442 = vmul.f32 %v645, %v1410
      %v1443 = vmul.f32 %v651, %v1411
      %v1444 = vmul.f32 %v657, %v1412
      %v1445 = vmul.f32 %v663, %v1413
      %v1446 = vmul.f32 %v669, %v1414
      %v1447 = vmul.f32 %v675, %v1415
      %v1448 = vmul.f32 %v681, %v1416
      %v1449 = vmul.f32 %v687, %v1417
      %v1450 = vmul.f32 %v693, %v1418
      %v1451 = vmul.f32 %v699, %v1419
      %v1452 = vmul.f32 %v705, %v1420
      %v1453 = vmul.f32 %v711, %v1421
      %v1454 = vmul.f32 %v717, %v1422
      %v1455 = vmul.f32 %v723, %v1423
      %v1456 = vmul.f32 %v729, %v1424
      %v1457 = vmul.f32 %v735, %v1425
      %v1458 = vmul.f32 %v741, %v1426
      %v1459 = vmul.f32 %v747, %v1427
      %v1460 = vmul.f32 %v753, %v1428
      %v1461 = vmul.f32 %v759, %v1429
      %v1462 = vmul.f32 %v765, %v1430
      %v1463 = vmul.f32 %v771, %v1431
      %v1464 = vmul.f32 %v777, %v1432
      %v1465 = vmul.f32 %v783, %v1433
      %v1466 = vmul.f32 %v789, %v1434
      %v1467 = vmul.f32 %v795, %v1435
      %v1468 = vmul.f32 %v801, %v1436
      %v1469 = vmul.f32 %v807, %v1437
      %v1470 = vmul.f32 %v813, %v1438
      %v1471 = vmul.f32 %v629, %v629
      %v1472 = vmul.f32 %v635, %v635
      %v1473 = vmul.f32 %v641, %v641
      %v1474 = vmul.f32 %v647, %v647
      %v1475 = vmul.f32 %v653, %v653
      %v1476 = vmul.f32 %v659, %v659
      %v1477 = vmul.f32 %v665, %v665
      %v1478 = vmul.f32 %v671, %v671
      %v1479 = vmul.f32 %v677, %v677
      %v1480 = vmul.f32 %v683, %v683
      %v1481 = vmul.f32 %v689, %v689
      %v1482 = vmul.f32 %v695, %v695
      %v1483 = vmul.f32 %v701, %v701
      %v1484 = vmul.f32 %v707, %v707
      %v1485 = vmul.f32 %v713, %v713
      %v1486 = vmul.f32 %v719, %v719
      %v1487 = vmul.f32 %v725, %v725
      %v1488 = vmul.f32 %v731, %v731
      %v1489 = vmul.f32 %v737, %v737
      %v1490 = vmul.f32 %v743, %v743
      %v1491 = vmul.f32 %v749, %v749
      %v1492 = vmul.f32 %v755, %v755
      %v1493 = vmul.f32 %v761, %v761
      %v1494 = vmul.f32 %v767, %v767
      %v1495 = vmul.f32 %v773, %v773
      %v1496 = vmul.f32 %v779, %v779
      %v1497 = vmul.f32 %v785, %v785
      %v1498 = vmul.f32 %v791, %v791
      %v1499 = vmul.f32 %v797, %v797
      %v1500 = vmul.f32 %v803, %v803
      %v1501 = vmul.f32 %v809, %v809
      %v1502 = vmul.f32 %v815, %v815
      %v1504 = vsel %vm463, %v1471, 0
      %v1507 = vsel %vm463, %v1472, 0
      %v1510 = vsel %vm463, %v1473, 0
      %v1513 = vsel %vm463, %v1474, 0
      %v1516 = vsel %vm463, %v1475, 0
      %v1519 = vsel %vm463, %v1476, 0
      %v1522 = vsel %vm463, %v1477, 0
      %v1525 = vsel %vm463, %v1478, 0
      %v1528 = vsel %vm463, %v1479, 0
      %v1531 = vsel %vm463, %v1480, 0
      %v1534 = vsel %vm463, %v1481, 0
      %v1537 = vsel %vm463, %v1482, 0
      %v1540 = vsel %vm463, %v1483, 0
      %v1543 = vsel %vm463, %v1484, 0
      %v1546 = vsel %vm463, %v1485, 0
      %v1549 = vsel %vm463, %v1486, 0
      %v1552 = vsel %vm463, %v1487, 0
      %v1555 = vsel %vm463, %v1488, 0
      %v1558 = vsel %vm463, %v1489, 0
      %v1561 = vsel %vm463, %v1490, 0
      %v1564 = vsel %vm463, %v1491, 0
      %v1567 = vsel %vm463, %v1492, 0
      %v1570 = vsel %vm463, %v1493, 0
      %v1573 = vsel %vm463, %v1494, 0
      %v1576 = vsel %vm463, %v1495, 0
      %v1579 = vsel %vm463, %v1496, 0
      %v1582 = vsel %vm463, %v1497, 0
      %v1585 = vsel %vm463, %v1498, 0
      %v1588 = vsel %vm463, %v1499, 0
      %v1591 = vsel %vm463, %v1500, 0
      %v1594 = vsel %vm463, %v1501, 0
      %v1597 = vsel %vm463, %v1502, 0
      %1599 = vmatprep.subr.mxu0 0.0
      %1600 = vmatpush1.msra.mxu0 %v1042
      %1601 = vmatprep.subr.mxu0 0.0
      %1602 = vmatpush1.msra.mxu0 %v1043
      %1603 = vmatprep.subr.mxu0 0.0
      %1604 = vmatpush1.msra.mxu0 %v1044
      %1605 = vmatprep.subr.mxu0 0.0
      %1606 = vmatpush1.msra.mxu0 %v1045
      %1607 = vmatprep.subr.mxu0 0.0
      %1608 = vmatpush1.msra.mxu0 %v1046
      %1609 = vmatprep.subr.mxu0 0.0
      %1610 = vmatpush1.msra.mxu0 %v1047
      %1611 = vmatprep.subr.mxu0 0.0
      %1612 = vmatpush1.msra.mxu0 %v1048
      %1613 = vmatprep.subr.mxu0 0.0
      %1614 = vmatpush1.msra.mxu0 %v1049
      %1615 = vmatprep.subr.mxu0 0.0
      %1616 = vmatpush1.msra.mxu0 %v1050
      %1617 = vmatprep.subr.mxu0 0.0
      %1618 = vmatpush1.msra.mxu0 %v1051
      %1619 = vmatprep.subr.mxu0 0.0
      %1620 = vmatpush1.msra.mxu0 %v1052
      %1621 = vmatprep.subr.mxu0 0.0
      %1622 = vmatpush1.msra.mxu0 %v1053
      %1623 = vmatprep.subr.mxu0 0.0
      %1624 = vmatpush1.msra.mxu0 0.0
      %1625 = vmatprep.subr.mxu0 0.0
      %1626 = vmatpush1.msra.mxu0 0.0
      %1627 = vmatprep.subr.mxu0 0.0
      %1628 = vmatpush1.msra.mxu0 0.0
      %1629 = vmatprep.subr.mxu0 0.0
      %1630 = vmatpush1.msra.mxu0 0.0
      %1631 = vmatprep.subr.mxu0 0.0
      %1632 = vmatpush1.msra.mxu0 0.0
      %1633 = vmatprep.subr.mxu0 0.0
      %1634 = vmatpush1.msra.mxu0 0.0
      %1635 = vmatprep.subr.mxu0 0.0
      %1636 = vmatpush1.msra.mxu0 0.0
      %1637 = vmatprep.subr.mxu0 0.0
      %1638 = vmatpush1.msra.mxu0 0.0
      %1639 = vmatprep.subr.mxu0 0.0
      %1640 = vmatpush1.msra.mxu0 0.0
      %1641 = vmatprep.subr.mxu0 0.0
      %1642 = vmatpush1.msra.mxu0 0.0
      %1643 = vmatprep.subr.mxu0 0.0
      %1644 = vmatpush1.msra.mxu0 0.0
      %1645 = vmatprep.subr.mxu0 0.0
      %1646 = vmatpush1.msra.mxu0 0.0
      %1647 = vmatprep.subr.mxu0 0.0
      %1648 = vmatpush1.msra.mxu0 0.0
      %1649 = vmatprep.subr.mxu0 0.0
      %1650 = vmatpush1.msra.mxu0 0.0
      %1651 = vmatprep.subr.mxu0 0.0
      %1652 = vmatpush1.msra.mxu0 0.0
      %1653 = vmatprep.subr.mxu0 0.0
      %1654 = vmatpush1.msra.mxu0 0.0
      %1655 = vmatprep.subr.mxu0 0.0
      %1656 = vmatpush1.msra.mxu0 0.0
      %1657 = vmatprep.subr.mxu0 0.0
      %1658 = vmatpush1.msra.mxu0 0.0
      %1659 = vmatprep.subr.mxu0 0.0
      %1660 = vmatpush1.msra.mxu0 0.0
      %1661 = vmatprep.subr.mxu0 0.0
      %1662 = vmatpush1.msra.mxu0 0.0
      %1663 = vmatprep.mubr.f32.mxu0 0.0
      %1664 = vmatmul.mubr.f32.gmra.mrb[0].mxu0 %v1504
      %v1665 = vpop.f32.mrb[0].mxu0
      %v1666 = vadd.f32 1.1920929e-07, %v1665
      %v1667 = vpop.f32.mrb[0].mxu0
      %1668 = vmatprep.mubr.f32.mxu0 0.0
      %1669 = vmatmul.mubr.f32.gmra.mrb[0].mxu0 %v1507
      %v1670 = vpop.f32.mrb[0].mxu0
      %v1671 = vadd.f32 1.1920929e-07, %v1670
      %v1672 = vpop.f32.mrb[0].mxu0
      %1673 = vmatprep.mubr.f32.mxu0 0.0
      %1674 = vmatmul.mubr.f32.gmra.mrb[0].mxu0 %v1510
      %v1675 = vpop.f32.mrb[0].mxu0
      %v1676 = vadd.f32 1.1920929e-07, %v1675
      %v1677 = vpop.f32.mrb[0].mxu0
      %1678 = vmatprep.mubr.f32.mxu0 0.0
      %1679 = vmatmul.mubr.f32.gmra.mrb[0].mxu0 %v1513
      %v1680 = vpop.f32.mrb[0].mxu0
      %v1681 = vadd.f32 1.1920929e-07, %v1680
      %v1682 = vpop.f32.mrb[0].mxu0
      %1683 = vmatprep.mubr.f32.mxu0 0.0
      %1684 = vmatmul.mubr.f32.gmra.mrb[0].mxu0 %v1516
      %v1685 = vpop.f32.mrb[0].mxu0
      %v1686 = vadd.f32 1.1920929e-07, %v1685
      %v1687 = vpop.f32.mrb[0].mxu0
      %1688 = vmatprep.mubr.f32.mxu0 0.0
      %1689 = vmatmul.mubr.f32.gmra.mrb[0].mxu0 %v1519
      %v1690 = vpop.f32.mrb[0].mxu0
      %v1691 = vadd.f32 1.1920929e-07, %v1690
      %v1692 = vpop.f32.mrb[0].mxu0
      %1693 = vmatprep.mubr.f32.mxu0 0.0
      %1694 = vmatmul.mubr.f32.gmra.mrb[0].mxu0 %v1522
      %v1695 = vpop.f32.mrb[0].mxu0
      %v1696 = vadd.f32 1.1920929e-07, %v1695
      %v1697 = vpop.f32.mrb[0].mxu0
      %1698 = vmatprep.mubr.f32.mxu0 0.0
      %1699 = vmatmul.mubr.f32.gmra.mrb[0].mxu0 %v1525
      %v1700 = vpop.f32.mrb[0].mxu0
      %v1701 = vadd.f32 1.1920929e-07, %v1700
      %v1702 = vpop.f32.mrb[0].mxu0
      %1703 = vmatprep.mubr.f32.mxu0 0.0
      %1704 = vmatmul.mubr.f32.gmra.mrb[0].mxu0 %v1528
      %v1705 = vpop.f32.mrb[0].mxu0
      %v1706 = vadd.f32 1.1920929e-07, %v1705
      %v1707 = vpop.f32.mrb[0].mxu0
      %1708 = vmatprep.mubr.f32.mxu0 0.0
      %1709 = vmatmul.mubr.f32.gmra.mrb[0].mxu0 %v1531
      %v1710 = vpop.f32.mrb[0].mxu0
      %v1711 = vadd.f32 1.1920929e-07, %v1710
      %v1712 = vpop.f32.mrb[0].mxu0
      %1713 = vmatprep.mubr.f32.mxu0 0.0
      %1714 = vmatmul.mubr.f32.gmra.mrb[0].mxu0 %v1534
      %v1715 = vpop.f32.mrb[0].mxu0
      %v1716 = vadd.f32 1.1920929e-07, %v1715
      %v1717 = vpop.f32.mrb[0].mxu0
      %1718 = vmatprep.mubr.f32.mxu0 0.0
      %1719 = vmatmul.mubr.f32.gmra.mrb[0].mxu0 %v1537
      %v1720 = vpop.f32.mrb[0].mxu0
      %v1721 = vadd.f32 1.1920929e-07, %v1720
      %v1722 = vpop.f32.mrb[0].mxu0
      %1723 = vmatprep.mubr.f32.mxu0 0.0
      %1724 = vmatmul.mubr.f32.gmra.mrb[0].mxu0 %v1540
      %v1725 = vpop.f32.mrb[0].mxu0
      %v1726 = vadd.f32 1.1920929e-07, %v1725
      %v1727 = vpop.f32.mrb[0].mxu0
      %1728 = vmatprep.mubr.f32.mxu0 0.0
      %1729 = vmatmul.mubr.f32.gmra.mrb[0].mxu0 %v1543
      %v1730 = vpop.f32.mrb[0].mxu0
      %v1731 = vadd.f32 1.1920929e-07, %v1730
      %v1732 = vpop.f32.mrb[0].mxu0
      %1733 = vmatprep.mubr.f32.mxu0 0.0
      %1734 = vmatmul.mubr.f32.gmra.mrb[0].mxu0 %v1546
      %v1735 = vpop.f32.mrb[0].mxu0
      %v1736 = vadd.f32 1.1920929e-07, %v1735
      %v1737 = vpop.f32.mrb[0].mxu0
      %1738 = vmatprep.mubr.f32.mxu0 0.0
      %1739 = vmatmul.mubr.f32.gmra.mrb[0].mxu0 %v1549
      %v1740 = vpop.f32.mrb[0].mxu0
      %v1741 = vadd.f32 1.1920929e-07, %v1740
      %v1742 = vpop.f32.mrb[0].mxu0
      %1743 = vmatprep.mubr.f32.mxu0 0.0
      %1744 = vmatmul.mubr.f32.gmra.mrb[0].mxu0 %v1552
      %v1745 = vpop.f32.mrb[0].mxu0
      %v1746 = vadd.f32 1.1920929e-07, %v1745
      %v1747 = vpop.f32.mrb[0].mxu0
      %1748 = vmatprep.mubr.f32.mxu0 0.0
      %1749 = vmatmul.mubr.f32.gmra.mrb[0].mxu0 %v1555
      %v1750 = vpop.f32.mrb[0].mxu0
      %v1751 = vadd.f32 1.1920929e-07, %v1750
      %v1752 = vpop.f32.mrb[0].mxu0
      %1753 = vmatprep.mubr.f32.mxu0 0.0
      %1754 = vmatmul.mubr.f32.gmra.mrb[0].mxu0 %v1558
      %v1755 = vpop.f32.mrb[0].mxu0
      %v1756 = vadd.f32 1.1920929e-07, %v1755
      %v1757 = vpop.f32.mrb[0].mxu0
      %1758 = vmatprep.mubr.f32.mxu0 0.0
      %1759 = vmatmul.mubr.f32.gmra.mrb[0].mxu0 %v1561
      %v1760 = vpop.f32.mrb[0].mxu0
      %v1761 = vadd.f32 1.1920929e-07, %v1760
      %v1762 = vpop.f32.mrb[0].mxu0
      %1763 = vmatprep.mubr.f32.mxu0 0.0
      %1764 = vmatmul.mubr.f32.gmra.mrb[0].mxu0 %v1564
      %v1765 = vpop.f32.mrb[0].mxu0
      %v1766 = vadd.f32 1.1920929e-07, %v1765
      %v1767 = vpop.f32.mrb[0].mxu0
      %1768 = vmatprep.mubr.f32.mxu0 0.0
      %1769 = vmatmul.mubr.f32.gmra.mrb[0].mxu0 %v1567
      %v1770 = vpop.f32.mrb[0].mxu0
      %v1771 = vadd.f32 1.1920929e-07, %v1770
      %v1772 = vpop.f32.mrb[0].mxu0
      %1773 = vmatprep.mubr.f32.mxu0 0.0
      %1774 = vmatmul.mubr.f32.gmra.mrb[0].mxu0 %v1570
      %v1775 = vpop.f32.mrb[0].mxu0
      %v1776 = vadd.f32 1.1920929e-07, %v1775
      %v1777 = vpop.f32.mrb[0].mxu0
      %1778 = vmatprep.mubr.f32.mxu0 0.0
      %1779 = vmatmul.mubr.f32.gmra.mrb[0].mxu0 %v1573
      %v1780 = vpop.f32.mrb[0].mxu0
      %v1781 = vadd.f32 1.1920929e-07, %v1780
      %v1782 = vpop.f32.mrb[0].mxu0
      %1783 = vmatprep.mubr.f32.mxu0 0.0
      %1784 = vmatmul.mubr.f32.gmra.mrb[0].mxu0 %v1576
      %v1785 = vpop.f32.mrb[0].mxu0
      %v1786 = vadd.f32 1.1920929e-07, %v1785
      %v1787 = vpop.f32.mrb[0].mxu0
      %1788 = vmatprep.mubr.f32.mxu0 0.0
      %1789 = vmatmul.mubr.f32.gmra.mrb[0].mxu0 %v1579
      %v1790 = vpop.f32.mrb[0].mxu0
      %v1791 = vadd.f32 1.1920929e-07, %v1790
      %v1792 = vpop.f32.mrb[0].mxu0
      %1793 = vmatprep.mubr.f32.mxu0 0.0
      %1794 = vmatmul.mubr.f32.gmra.mrb[0].mxu0 %v1582
      %v1795 = vpop.f32.mrb[0].mxu0
      %v1796 = vadd.f32 1.1920929e-07, %v1795
      %v1797 = vpop.f32.mrb[0].mxu0
      %1798 = vmatprep.mubr.f32.mxu0 0.0
      %1799 = vmatmul.mubr.f32.gmra.mrb[0].mxu0 %v1585
      %v1800 = vpop.f32.mrb[0].mxu0
      %v1801 = vadd.f32 1.1920929e-07, %v1800
      %v1802 = vpop.f32.mrb[0].mxu0
      %1803 = vmatprep.mubr.f32.mxu0 0.0
      %1804 = vmatmul.mubr.f32.gmra.mrb[0].mxu0 %v1588
      %v1805 = vpop.f32.mrb[0].mxu0
      %v1806 = vadd.f32 1.1920929e-07, %v1805
      %v1807 = vpop.f32.mrb[0].mxu0
      %1808 = vmatprep.mubr.f32.mxu0 0.0
      %1809 = vmatmul.mubr.f32.gmra.mrb[0].mxu0 %v1591
      %v1810 = vpop.f32.mrb[0].mxu0
      %v1811 = vadd.f32 1.1920929e-07, %v1810
      %v1812 = vpop.f32.mrb[0].mxu0
      %1813 = vmatprep.mubr.f32.mxu0 0.0
      %1814 = vmatmul.mubr.f32.gmra.mrb[0].mxu0 %v1594
      %v1815 = vpop.f32.mrb[0].mxu0
      %v1816 = vadd.f32 1.1920929e-07, %v1815
      %v1817 = vpop.f32.mrb[0].mxu0
      %1818 = vmatprep.mubr.f32.mxu0 0.0
      %1819 = vmatmul.mubr.f32.gmra.mrb[0].mxu0 %v1597
      %v1820 = vpop.f32.mrb[0].mxu0
      %v1821 = vadd.f32 1.1920929e-07, %v1820
      %v1822 = vpop.f32.mrb[0].mxu0
      %1823 = vdwg.mxu0
      %v1824 = vrsqrt.pop %v1666
      %v1825 = vrsqrt.pop %v1671
      %v1826 = vrsqrt.pop %v1676
      %v1827 = vrsqrt.pop %v1681
      %v1828 = vrsqrt.pop %v1686
      %v1829 = vrsqrt.pop %v1691
      %v1830 = vrsqrt.pop %v1696
      %v1831 = vrsqrt.pop %v1701
      %v1832 = vrsqrt.pop %v1706
      %v1833 = vrsqrt.pop %v1711
      %v1834 = vrsqrt.pop %v1716
      %v1835 = vrsqrt.pop %v1721
      %v1836 = vrsqrt.pop %v1726
      %v1837 = vrsqrt.pop %v1731
      %v1838 = vrsqrt.pop %v1736
      %v1839 = vrsqrt.pop %v1741
      %v1840 = vrsqrt.pop %v1746
      %v1841 = vrsqrt.pop %v1751
      %v1842 = vrsqrt.pop %v1756
      %v1843 = vrsqrt.pop %v1761
      %v1844 = vrsqrt.pop %v1766
      %v1845 = vrsqrt.pop %v1771
      %v1846 = vrsqrt.pop %v1776
      %v1847 = vrsqrt.pop %v1781
      %v1848 = vrsqrt.pop %v1786
      %v1849 = vrsqrt.pop %v1791
      %v1850 = vrsqrt.pop %v1796
      %v1851 = vrsqrt.pop %v1801
      %v1852 = vrsqrt.pop %v1806
      %v1853 = vrsqrt.pop %v1811
      %v1854 = vrsqrt.pop %v1816
      %v1855 = vrsqrt.pop %v1821
      %v1856 = vmul.f32 %v629, %v1824
      %v1857 = vmul.f32 %v635, %v1825
      %v1858 = vmul.f32 %v641, %v1826
      %v1859 = vmul.f32 %v647, %v1827
      %v1860 = vmul.f32 %v653, %v1828
      %v1861 = vmul.f32 %v659, %v1829
      %v1862 = vmul.f32 %v665, %v1830
      %v1863 = vmul.f32 %v671, %v1831
      %v1864 = vmul.f32 %v677, %v1832
      %v1865 = vmul.f32 %v683, %v1833
      %v1866 = vmul.f32 %v689, %v1834
      %v1867 = vmul.f32 %v695, %v1835
      %v1868 = vmul.f32 %v701, %v1836
      %v1869 = vmul.f32 %v707, %v1837
      %v1870 = vmul.f32 %v713, %v1838
      %v1871 = vmul.f32 %v719, %v1839
      %v1872 = vmul.f32 %v725, %v1840
      %v1873 = vmul.f32 %v731, %v1841
      %v1874 = vmul.f32 %v737, %v1842
      %v1875 = vmul.f32 %v743, %v1843
      %v1876 = vmul.f32 %v749, %v1844
      %v1877 = vmul.f32 %v755, %v1845
      %v1878 = vmul.f32 %v761, %v1846
      %v1879 = vmul.f32 %v767, %v1847
      %v1880 = vmul.f32 %v773, %v1848
      %v1881 = vmul.f32 %v779, %v1849
      %v1882 = vmul.f32 %v785, %v1850
      %v1883 = vmul.f32 %v791, %v1851
      %v1884 = vmul.f32 %v797, %v1852
      %v1885 = vmul.f32 %v803, %v1853
      %v1886 = vmul.f32 %v809, %v1854
      %v1887 = vmul.f32 %v815, %v1855
      %v1888 = vld [vmem:[%s4] sm:$0xff]
      %v1889 = vld [vmem:[%s4 + $0x8] sm:$0xff]
      %v1890 = vld [vmem:[%s4 + $0x10] sm:$0xff]
      %v1891 = vld [vmem:[%s4 + $0x18] sm:$0xff]
      %v1892 = vld [vmem:[%s4 + $0x20] sm:$0xff]
      %v1893 = vld [vmem:[%s4 + $0x28] sm:$0xff]
      %v1894 = vld [vmem:[%s4 + $0x30] sm:$0xff]
      %v1895 = vld [vmem:[%s4 + $0x38] sm:$0xff]
      %v1896 = vld [vmem:[%s4 + $0x40] sm:$0xff]
      %v1897 = vld [vmem:[%s4 + $0x48] sm:$0xff]
      %v1898 = vld [vmem:[%s4 + $0x50] sm:$0xff]
      %v1899 = vld [vmem:[%s4 + $0x58] sm:$0xff]
      %v1900 = vld [vmem:[%s5] sm:$0xff]
      %v1901 = vld [vmem:[%s5 + $0x8] sm:$0xff]
      %v1902 = vld [vmem:[%s5 + $0x10] sm:$0xff]
      %v1903 = vld [vmem:[%s5 + $0x18] sm:$0xff]
      %v1904 = vld [vmem:[%s5 + $0x20] sm:$0xff]
      %v1905 = vld [vmem:[%s5 + $0x28] sm:$0xff]
      %v1906 = vld [vmem:[%s5 + $0x30] sm:$0xff]
      %v1907 = vld [vmem:[%s5 + $0x38] sm:$0xff]
      %v1908 = vld [vmem:[%s5 + $0x40] sm:$0xff]
      %v1909 = vld [vmem:[%s5 + $0x48] sm:$0xff]
      %v1910 = vld [vmem:[%s5 + $0x50] sm:$0xff]
      %v1911 = vld [vmem:[%s5 + $0x58] sm:$0xff]
      %v1912 = vld [vmem:[%s5 + $0x60] sm:$0xff]
      %v1913 = vld [vmem:[%s5 + $0x68] sm:$0xff]
      %v1914 = vld [vmem:[%s5 + $0x70] sm:$0xff]
      %v1915 = vld [vmem:[%s5 + $0x78] sm:$0xff]
      %v1916 = vld [vmem:[%s5 + $0x80] sm:$0xff]
      %v1917 = vld [vmem:[%s5 + $0x88] sm:$0xff]
      %v1918 = vld [vmem:[%s5 + $0x90] sm:$0xff]
      %v1919 = vld [vmem:[%s5 + $0x98] sm:$0xff]
      %v1920 = vld [vmem:[%s5 + $0xa0] sm:$0xff]
      %v1921 = vld [vmem:[%s5 + $0xa8] sm:$0xff]
      %v1922 = vld [vmem:[%s5 + $0xb0] sm:$0xff]
      %v1923 = vld [vmem:[%s5 + $0xb8] sm:$0xff]
      %v1924 = vld [vmem:[%s5 + $0xc0] sm:$0xff]
      %v1925 = vld [vmem:[%s5 + $0xc8] sm:$0xff]
      %v1926 = vld [vmem:[%s5 + $0xd0] sm:$0xff]
      %v1927 = vld [vmem:[%s5 + $0xd8] sm:$0xff]
      %v1928 = vld [vmem:[%s5 + $0xe0] sm:$0xff]
      %v1929 = vld [vmem:[%s5 + $0xe8] sm:$0xff]
      %v1930 = vld [vmem:[%s5 + $0xf0] sm:$0xff]
      %v1931 = vld [vmem:[%s5 + $0xf8] sm:$0xff]
      %v1932 = vld [vmem:[%s6] sm:$0xff]
      %v1933 = vld [vmem:[%s6 + $0x8] sm:$0xff]
      %v1934 = vld [vmem:[%s6 + $0x10] sm:$0xff]
      %v1935 = vld [vmem:[%s6 + $0x18] sm:$0xff]
      %v1936 = vld [vmem:[%s6 + $0x20] sm:$0xff]
      %v1937 = vld [vmem:[%s6 + $0x28] sm:$0xff]
      %v1938 = vld [vmem:[%s6 + $0x30] sm:$0xff]
      %v1939 = vld [vmem:[%s6 + $0x38] sm:$0xff]
      %v1940 = vld [vmem:[%s6 + $0x40] sm:$0xff]
      %v1941 = vld [vmem:[%s6 + $0x48] sm:$0xff]
      %v1942 = vld [vmem:[%s6 + $0x50] sm:$0xff]
      %v1943 = vld [vmem:[%s6 + $0x58] sm:$0xff]
      %v1944 = vld [vmem:[%s6 + $0x60] sm:$0xff]
      %v1945 = vld [vmem:[%s6 + $0x68] sm:$0xff]
      %v1946 = vld [vmem:[%s6 + $0x70] sm:$0xff]
      %v1947 = vld [vmem:[%s6 + $0x78] sm:$0xff]
      %v1948 = vld [vmem:[%s6 + $0x80] sm:$0xff]
      %v1949 = vld [vmem:[%s6 + $0x88] sm:$0xff]
      %v1950 = vld [vmem:[%s6 + $0x90] sm:$0xff]
      %v1951 = vld [vmem:[%s6 + $0x98] sm:$0xff]
      %v1952 = vld [vmem:[%s6 + $0xa0] sm:$0xff]
      %v1953 = vld [vmem:[%s6 + $0xa8] sm:$0xff]
      %v1954 = vld [vmem:[%s6 + $0xb0] sm:$0xff]
      %v1955 = vld [vmem:[%s6 + $0xb8] sm:$0xff]
      %v1956 = vld [vmem:[%s6 + $0xc0] sm:$0xff]
      %v1957 = vld [vmem:[%s6 + $0xc8] sm:$0xff]
      %v1958 = vld [vmem:[%s6 + $0xd0] sm:$0xff]
      %v1959 = vld [vmem:[%s6 + $0xd8] sm:$0xff]
      %v1960 = vld [vmem:[%s6 + $0xe0] sm:$0xff]
      %v1961 = vld [vmem:[%s6 + $0xe8] sm:$0xff]
      %v1962 = vld [vmem:[%s6 + $0xf0] sm:$0xff]
      %v1963 = vld [vmem:[%s6 + $0xf8] sm:$0xff]
      %v1965 = vsel %vm463, %v1439, 0
      %v1968 = vsel %vm463, %v1440, 0
      %v1971 = vsel %vm463, %v1441, 0
      %v1974 = vsel %vm463, %v1442, 0
      %v1977 = vsel %vm463, %v1443, 0
      %v1980 = vsel %vm463, %v1444, 0
      %v1983 = vsel %vm463, %v1445, 0
      %v1986 = vsel %vm463, %v1446, 0
      %v1989 = vsel %vm463, %v1447, 0
      %v1992 = vsel %vm463, %v1448, 0
      %v1995 = vsel %vm463, %v1449, 0
      %v1998 = vsel %vm463, %v1450, 0
      %v2001 = vsel %vm463, %v1451, 0
      %v2004 = vsel %vm463, %v1452, 0
      %v2007 = vsel %vm463, %v1453, 0
      %v2010 = vsel %vm463, %v1454, 0
      %v2013 = vsel %vm463, %v1455, 0
      %v2016 = vsel %vm463, %v1456, 0
      %v2019 = vsel %vm463, %v1457, 0
      %v2022 = vsel %vm463, %v1458, 0
      %v2025 = vsel %vm463, %v1459, 0
      %v2028 = vsel %vm463, %v1460, 0
      %v2031 = vsel %vm463, %v1461, 0
      %v2034 = vsel %vm463, %v1462, 0
      %v2037 = vsel %vm463, %v1463, 0
      %v2040 = vsel %vm463, %v1464, 0
      %v2043 = vsel %vm463, %v1465, 0
      %v2046 = vsel %vm463, %v1466, 0
      %v2049 = vsel %vm463, %v1467, 0
      %v2052 = vsel %vm463, %v1468, 0
      %v2055 = vsel %vm463, %v1469, 0
      %v2058 = vsel %vm463, %v1470, 0
      %2060 = vmatprep.subr.mxu0 0.0
      %2061 = vmatpush1.msra.mxu0 %v1888
      %2062 = vmatprep.subr.mxu0 0.0
      %2063 = vmatpush1.msra.mxu0 %v1889
      %2064 = vmatprep.subr.mxu0 0.0
      %2065 = vmatpush1.msra.mxu0 %v1890
      %2066 = vmatprep.subr.mxu0 0.0
      %2067 = vmatpush1.msra.mxu0 %v1891
      %2068 = vmatprep.subr.mxu0 0.0
      %2069 = vmatpush1.msra.mxu0 %v1892
      %2070 = vmatprep.subr.mxu0 0.0
      %2071 = vmatpush1.msra.mxu0 %v1893
      %2072 = vmatprep.subr.mxu0 0.0
      %2073 = vmatpush1.msra.mxu0 %v1894
      %2074 = vmatprep.subr.mxu0 0.0
      %2075 = vmatpush1.msra.mxu0 %v1895
      %2076 = vmatprep.subr.mxu0 0.0
      %2077 = vmatpush1.msra.mxu0 %v1896
      %2078 = vmatprep.subr.mxu0 0.0
      %2079 = vmatpush1.msra.mxu0 %v1897
      %2080 = vmatprep.subr.mxu0 0.0
      %2081 = vmatpush1.msra.mxu0 %v1898
      %2082 = vmatprep.subr.mxu0 0.0
      %2083 = vmatpush1.msra.mxu0 %v1899
      %2084 = vmatprep.subr.mxu0 0.0
      %2085 = vmatpush1.msra.mxu0 0.0
      %2086 = vmatprep.subr.mxu0 0.0
      %2087 = vmatpush1.msra.mxu0 0.0
      %2088 = vmatprep.subr.mxu0 0.0
      %2089 = vmatpush1.msra.mxu0 0.0
      %2090 = vmatprep.subr.mxu0 0.0
      %2091 = vmatpush1.msra.mxu0 0.0
      %2092 = vmatprep.subr.mxu0 0.0
      %2093 = vmatpush1.msra.mxu0 0.0
      %2094 = vmatprep.subr.mxu0 0.0
      %2095 = vmatpush1.msra.mxu0 0.0
      %2096 = vmatprep.subr.mxu0 0.0
      %2097 = vmatpush1.msra.mxu0 0.0
      %2098 = vmatprep.subr.mxu0 0.0
      %2099 = vmatpush1.msra.mxu0 0.0
      %2100 = vmatprep.subr.mxu0 0.0
      %2101 = vmatpush1.msra.mxu0 0.0
      %2102 = vmatprep.subr.mxu0 0.0
      %2103 = vmatpush1.msra.mxu0 0.0
      %2104 = vmatprep.subr.mxu0 0.0
      %2105 = vmatpush1.msra.mxu0 0.0
      %2106 = vmatprep.subr.mxu0 0.0
      %2107 = vmatpush1.msra.mxu0 0.0
      %2108 = vmatprep.subr.mxu0 0.0
      %2109 = vmatpush1.msra.mxu0 0.0
      %2110 = vmatprep.subr.mxu0 0.0
      %2111 = vmatpush1.msra.mxu0 0.0
      %2112 = vmatprep.subr.mxu0 0.0
      %2113 = vmatpush1.msra.mxu0 0.0
      %2114 = vmatprep.subr.mxu0 0.0
      %2115 = vmatpush1.msra.mxu0 0.0
      %2116 = vmatprep.subr.mxu0 0.0
      %2117 = vmatpush1.msra.mxu0 0.0
      %2118 = vmatprep.subr.mxu0 0.0
      %2119 = vmatpush1.msra.mxu0 0.0
      %2120 = vmatprep.subr.mxu0 0.0
      %2121 = vmatpush1.msra.mxu0 0.0
      %2122 = vmatprep.subr.mxu0 0.0
      %2123 = vmatpush1.msra.mxu0 0.0
      %2124 = vmatprep.mubr.f32.mxu0 0.0
      %2125 = vmatmul.mubr.f32.gmra.mrb[0].mxu0 %v1965
      %v2126 = vpop.f32.mrb[0].mxu0
      %v2127 = vadd.f32 0.0, %v2126
      %v2128 = vpop.f32.mrb[0].mxu0
      %2129 = vmatprep.mubr.f32.mxu0 0.0
      %2130 = vmatmul.mubr.f32.gmra.mrb[0].mxu0 %v1968
      %v2131 = vpop.f32.mrb[0].mxu0
      %v2132 = vadd.f32 0.0, %v2131
      %v2133 = vpop.f32.mrb[0].mxu0
      %2134 = vmatprep.mubr.f32.mxu0 0.0
      %2135 = vmatmul.mubr.f32.gmra.mrb[0].mxu0 %v1971
      %v2136 = vpop.f32.mrb[0].mxu0
      %v2137 = vadd.f32 0.0, %v2136
      %v2138 = vpop.f32.mrb[0].mxu0
      %2139 = vmatprep.mubr.f32.mxu0 0.0
      %2140 = vmatmul.mubr.f32.gmra.mrb[0].mxu0 %v1974
      %v2141 = vpop.f32.mrb[0].mxu0
      %v2142 = vadd.f32 0.0, %v2141
      %v2143 = vpop.f32.mrb[0].mxu0
      %2144 = vmatprep.mubr.f32.mxu0 0.0
      %2145 = vmatmul.mubr.f32.gmra.mrb[0].mxu0 %v1977
      %v2146 = vpop.f32.mrb[0].mxu0
      %v2147 = vadd.f32 0.0, %v2146
      %v2148 = vpop.f32.mrb[0].mxu0
      %2149 = vmatprep.mubr.f32.mxu0 0.0
      %2150 = vmatmul.mubr.f32.gmra.mrb[0].mxu0 %v1980
      %v2151 = vpop.f32.mrb[0].mxu0
      %v2152 = vadd.f32 0.0, %v2151
      %v2153 = vpop.f32.mrb[0].mxu0
      %2154 = vmatprep.mubr.f32.mxu0 0.0
      %2155 = vmatmul.mubr.f32.gmra.mrb[0].mxu0 %v1983
      %v2156 = vpop.f32.mrb[0].mxu0
      %v2157 = vadd.f32 0.0, %v2156
      %v2158 = vpop.f32.mrb[0].mxu0
      %2159 = vmatprep.mubr.f32.mxu0 0.0
      %2160 = vmatmul.mubr.f32.gmra.mrb[0].mxu0 %v1986
      %v2161 = vpop.f32.mrb[0].mxu0
      %v2162 = vadd.f32 0.0, %v2161
      %v2163 = vpop.f32.mrb[0].mxu0
      %2164 = vmatprep.mubr.f32.mxu0 0.0
      %2165 = vmatmul.mubr.f32.gmra.mrb[0].mxu0 %v1989
      %v2166 = vpop.f32.mrb[0].mxu0
      %v2167 = vadd.f32 0.0, %v2166
      %v2168 = vpop.f32.mrb[0].mxu0
      %2169 = vmatprep.mubr.f32.mxu0 0.0
      %2170 = vmatmul.mubr.f32.gmra.mrb[0].mxu0 %v1992
      %v2171 = vpop.f32.mrb[0].mxu0
      %v2172 = vadd.f32 0.0, %v2171
      %v2173 = vpop.f32.mrb[0].mxu0
      %2174 = vmatprep.mubr.f32.mxu0 0.0
      %2175 = vmatmul.mubr.f32.gmra.mrb[0].mxu0 %v1995
      %v2176 = vpop.f32.mrb[0].mxu0
      %v2177 = vadd.f32 0.0, %v2176
      %v2178 = vpop.f32.mrb[0].mxu0
      %2179 = vmatprep.mubr.f32.mxu0 0.0
      %2180 = vmatmul.mubr.f32.gmra.mrb[0].mxu0 %v1998
      %v2181 = vpop.f32.mrb[0].mxu0
      %v2182 = vadd.f32 0.0, %v2181
      %v2183 = vpop.f32.mrb[0].mxu0
      %2184 = vmatprep.mubr.f32.mxu0 0.0
      %2185 = vmatmul.mubr.f32.gmra.mrb[0].mxu0 %v2001
      %v2186 = vpop.f32.mrb[0].mxu0
      %v2187 = vadd.f32 0.0, %v2186
      %v2188 = vpop.f32.mrb[0].mxu0
      %2189 = vmatprep.mubr.f32.mxu0 0.0
      %2190 = vmatmul.mubr.f32.gmra.mrb[0].mxu0 %v2004
      %v2191 = vpop.f32.mrb[0].mxu0
      %v2192 = vadd.f32 0.0, %v2191
      %v2193 = vpop.f32.mrb[0].mxu0
      %2194 = vmatprep.mubr.f32.mxu0 0.0
      %2195 = vmatmul.mubr.f32.gmra.mrb[0].mxu0 %v2007
      %v2196 = vpop.f32.mrb[0].mxu0
      %v2197 = vadd.f32 0.0, %v2196
      %v2198 = vpop.f32.mrb[0].mxu0
      %2199 = vmatprep.mubr.f32.mxu0 0.0
      %2200 = vmatmul.mubr.f32.gmra.mrb[0].mxu0 %v2010
      %v2201 = vpop.f32.mrb[0].mxu0
      %v2202 = vadd.f32 0.0, %v2201
      %v2203 = vpop.f32.mrb[0].mxu0
      %2204 = vmatprep.mubr.f32.mxu0 0.0
      %2205 = vmatmul.mubr.f32.gmra.mrb[0].mxu0 %v2013
      %v2206 = vpop.f32.mrb[0].mxu0
      %v2207 = vadd.f32 0.0, %v2206
      %v2208 = vpop.f32.mrb[0].mxu0
      %2209 = vmatprep.mubr.f32.mxu0 0.0
      %2210 = vmatmul.mubr.f32.gmra.mrb[0].mxu0 %v2016
      %v2211 = vpop.f32.mrb[0].mxu0
      %v2212 = vadd.f32 0.0, %v2211
      %v2213 = vpop.f32.mrb[0].mxu0
      %2214 = vmatprep.mubr.f32.mxu0 0.0
      %2215 = vmatmul.mubr.f32.gmra.mrb[0].mxu0 %v2019
      %v2216 = vpop.f32.mrb[0].mxu0
      %v2217 = vadd.f32 0.0, %v2216
      %v2218 = vpop.f32.mrb[0].mxu0
      %2219 = vmatprep.mubr.f32.mxu0 0.0
      %2220 = vmatmul.mubr.f32.gmra.mrb[0].mxu0 %v2022
      %v2221 = vpop.f32.mrb[0].mxu0
      %v2222 = vadd.f32 0.0, %v2221
      %v2223 = vpop.f32.mrb[0].mxu0
      %2224 = vmatprep.mubr.f32.mxu0 0.0
      %2225 = vmatmul.mubr.f32.gmra.mrb[0].mxu0 %v2025
      %v2226 = vpop.f32.mrb[0].mxu0
      %v2227 = vadd.f32 0.0, %v2226
      %v2228 = vpop.f32.mrb[0].mxu0
      %2229 = vmatprep.mubr.f32.mxu0 0.0
      %2230 = vmatmul.mubr.f32.gmra.mrb[0].mxu0 %v2028
      %v2231 = vpop.f32.mrb[0].mxu0
      %v2232 = vadd.f32 0.0, %v2231
      %v2233 = vpop.f32.mrb[0].mxu0
      %2234 = vmatprep.mubr.f32.mxu0 0.0
      %2235 = vmatmul.mubr.f32.gmra.mrb[0].mxu0 %v2031
      %v2236 = vpop.f32.mrb[0].mxu0
      %v2237 = vadd.f32 0.0, %v2236
      %v2238 = vpop.f32.mrb[0].mxu0
      %2239 = vmatprep.mubr.f32.mxu0 0.0
      %2240 = vmatmul.mubr.f32.gmra.mrb[0].mxu0 %v2034
      %v2241 = vpop.f32.mrb[0].mxu0
      %v2242 = vadd.f32 0.0, %v2241
      %v2243 = vpop.f32.mrb[0].mxu0
      %2244 = vmatprep.mubr.f32.mxu0 0.0
      %2245 = vmatmul.mubr.f32.gmra.mrb[0].mxu0 %v2037
      %v2246 = vpop.f32.mrb[0].mxu0
      %v2247 = vadd.f32 0.0, %v2246
      %v2248 = vpop.f32.mrb[0].mxu0
      %2249 = vmatprep.mubr.f32.mxu0 0.0
      %2250 = vmatmul.mubr.f32.gmra.mrb[0].mxu0 %v2040
      %v2251 = vpop.f32.mrb[0].mxu0
      %v2252 = vadd.f32 0.0, %v2251
      %v2253 = vpop.f32.mrb[0].mxu0
      %2254 = vmatprep.mubr.f32.mxu0 0.0
      %2255 = vmatmul.mubr.f32.gmra.mrb[0].mxu0 %v2043
      %v2256 = vpop.f32.mrb[0].mxu0
      %v2257 = vadd.f32 0.0, %v2256
      %v2258 = vpop.f32.mrb[0].mxu0
      %2259 = vmatprep.mubr.f32.mxu0 0.0
      %2260 = vmatmul.mubr.f32.gmra.mrb[0].mxu0 %v2046
      %v2261 = vpop.f32.mrb[0].mxu0
      %v2262 = vadd.f32 0.0, %v2261
      %v2263 = vpop.f32.mrb[0].mxu0
      %2264 = vmatprep.mubr.f32.mxu0 0.0
      %2265 = vmatmul.mubr.f32.gmra.mrb[0].mxu0 %v2049
      %v2266 = vpop.f32.mrb[0].mxu0
      %v2267 = vadd.f32 0.0, %v2266
      %v2268 = vpop.f32.mrb[0].mxu0
      %2269 = vmatprep.mubr.f32.mxu0 0.0
      %2270 = vmatmul.mubr.f32.gmra.mrb[0].mxu0 %v2052
      %v2271 = vpop.f32.mrb[0].mxu0
      %v2272 = vadd.f32 0.0, %v2271
      %v2273 = vpop.f32.mrb[0].mxu0
      %2274 = vmatprep.mubr.f32.mxu0 0.0
      %2275 = vmatmul.mubr.f32.gmra.mrb[0].mxu0 %v2055
      %v2276 = vpop.f32.mrb[0].mxu0
      %v2277 = vadd.f32 0.0, %v2276
      %v2278 = vpop.f32.mrb[0].mxu0
      %2279 = vmatprep.mubr.f32.mxu0 0.0
      %2280 = vmatmul.mubr.f32.gmra.mrb[0].mxu0 %v2058
      %v2281 = vpop.f32.mrb[0].mxu0
      %v2282 = vadd.f32 0.0, %v2281
      %v2283 = vpop.f32.mrb[0].mxu0
      %2284 = vdwg.mxu0
      %v2285 = vmul.f32 %v1439, %v1900
      %v2286 = vmul.f32 %v1440, %v1901
      %v2287 = vmul.f32 %v1441, %v1902
      %v2288 = vmul.f32 %v1442, %v1903
      %v2289 = vmul.f32 %v1443, %v1904
      %v2290 = vmul.f32 %v1444, %v1905
      %v2291 = vmul.f32 %v1445, %v1906
      %v2292 = vmul.f32 %v1446, %v1907
      %v2293 = vmul.f32 %v1447, %v1908
      %v2294 = vmul.f32 %v1448, %v1909
      %v2295 = vmul.f32 %v1449, %v1910
      %v2296 = vmul.f32 %v1450, %v1911
      %v2297 = vmul.f32 %v1451, %v1912
      %v2298 = vmul.f32 %v1452, %v1913
      %v2299 = vmul.f32 %v1453, %v1914
      %v2300 = vmul.f32 %v1454, %v1915
      %v2301 = vmul.f32 %v1455, %v1916
      %v2302 = vmul.f32 %v1456, %v1917
      %v2303 = vmul.f32 %v1457, %v1918
      %v2304 = vmul.f32 %v1458, %v1919
      %v2305 = vmul.f32 %v1459, %v1920
      %v2306 = vmul.f32 %v1460, %v1921
      %v2307 = vmul.f32 %v1461, %v1922
      %v2308 = vmul.f32 %v1462, %v1923
      %v2309 = vmul.f32 %v1463, %v1924
      %v2310 = vmul.f32 %v1464, %v1925
      %v2311 = vmul.f32 %v1465, %v1926
      %v2312 = vmul.f32 %v1466, %v1927
      %v2313 = vmul.f32 %v1467, %v1928
      %v2314 = vmul.f32 %v1468, %v1929
      %v2315 = vmul.f32 %v1469, %v1930
      %v2316 = vmul.f32 %v1470, %v1931
      %v2317 = vmul.f32 %v2127, %v1932
      %v2318 = vmul.f32 %v2132, %v1933
      %v2319 = vmul.f32 %v2137, %v1934
      %v2320 = vmul.f32 %v2142, %v1935
      %v2321 = vmul.f32 %v2147, %v1936
      %v2322 = vmul.f32 %v2152, %v1937
      %v2323 = vmul.f32 %v2157, %v1938
      %v2324 = vmul.f32 %v2162, %v1939
      %v2325 = vmul.f32 %v2167, %v1940
      %v2326 = vmul.f32 %v2172, %v1941
      %v2327 = vmul.f32 %v2177, %v1942
      %v2328 = vmul.f32 %v2182, %v1943
      %v2329 = vmul.f32 %v2187, %v1944
      %v2330 = vmul.f32 %v2192, %v1945
      %v2331 = vmul.f32 %v2197, %v1946
      %v2332 = vmul.f32 %v2202, %v1947
      %v2333 = vmul.f32 %v2207, %v1948
      %v2334 = vmul.f32 %v2212, %v1949
      %v2335 = vmul.f32 %v2217, %v1950
      %v2336 = vmul.f32 %v2222, %v1951
      %v2337 = vmul.f32 %v2227, %v1952
      %v2338 = vmul.f32 %v2232, %v1953
      %v2339 = vmul.f32 %v2237, %v1954
      %v2340 = vmul.f32 %v2242, %v1955
      %v2341 = vmul.f32 %v2247, %v1956
      %v2342 = vmul.f32 %v2252, %v1957
      %v2343 = vmul.f32 %v2257, %v1958
      %v2344 = vmul.f32 %v2262, %v1959
      %v2345 = vmul.f32 %v2267, %v1960
      %v2346 = vmul.f32 %v2272, %v1961
      %v2347 = vmul.f32 %v2277, %v1962
      %v2348 = vmul.f32 %v2282, %v1963
      %v2349 = vadd.f32 %v2285, %v2317
      %v2350 = vadd.f32 %v2286, %v2318
      %v2351 = vadd.f32 %v2287, %v2319
      %v2352 = vadd.f32 %v2288, %v2320
      %v2353 = vadd.f32 %v2289, %v2321
      %v2354 = vadd.f32 %v2290, %v2322
      %v2355 = vadd.f32 %v2291, %v2323
      %v2356 = vadd.f32 %v2292, %v2324
      %v2357 = vadd.f32 %v2293, %v2325
      %v2358 = vadd.f32 %v2294, %v2326
      %v2359 = vadd.f32 %v2295, %v2327
      %v2360 = vadd.f32 %v2296, %v2328
      %v2361 = vadd.f32 %v2297, %v2329
      %v2362 = vadd.f32 %v2298, %v2330
      %v2363 = vadd.f32 %v2299, %v2331
      %v2364 = vadd.f32 %v2300, %v2332
      %v2365 = vadd.f32 %v2301, %v2333
      %v2366 = vadd.f32 %v2302, %v2334
      %v2367 = vadd.f32 %v2303, %v2335
      %v2368 = vadd.f32 %v2304, %v2336
      %v2369 = vadd.f32 %v2305, %v2337
      %v2370 = vadd.f32 %v2306, %v2338
      %v2371 = vadd.f32 %v2307, %v2339
      %v2372 = vadd.f32 %v2308, %v2340
      %v2373 = vadd.f32 %v2309, %v2341
      %v2374 = vadd.f32 %v2310, %v2342
      %v2375 = vadd.f32 %v2311, %v2343
      %v2376 = vadd.f32 %v2312, %v2344
      %v2377 = vadd.f32 %v2313, %v2345
      %v2378 = vadd.f32 %v2314, %v2346
      %v2379 = vadd.f32 %v2315, %v2347
      %v2380 = vadd.f32 %v2316, %v2348
      %v2381 = vld [vmem:[%s7] sm:$0xff]
      %v2382 = vld [vmem:[%s7 + $0x8] sm:$0xff]
      %v2383 = vld [vmem:[%s7 + $0x10] sm:$0xff]
      %v2384 = vld [vmem:[%s7 + $0x18] sm:$0xff]
      %v2385 = vld [vmem:[%s7 + $0x20] sm:$0xff]
      %v2386 = vld [vmem:[%s7 + $0x28] sm:$0xff]
      %v2387 = vld [vmem:[%s7 + $0x30] sm:$0xff]
      %v2388 = vld [vmem:[%s7 + $0x38] sm:$0xff]
      %v2389 = vld [vmem:[%s7 + $0x40] sm:$0xff]
      %v2390 = vld [vmem:[%s7 + $0x48] sm:$0xff]
      %v2391 = vld [vmem:[%s7 + $0x50] sm:$0xff]
      %v2392 = vld [vmem:[%s7 + $0x58] sm:$0xff]
      %v2393 = vld [vmem:[%s7 + $0x60] sm:$0xff]
      %v2394 = vld [vmem:[%s7 + $0x68] sm:$0xff]
      %v2395 = vld [vmem:[%s7 + $0x70] sm:$0xff]
      %v2396 = vld [vmem:[%s7 + $0x78] sm:$0xff]
      %v2397 = vld [vmem:[%s7 + $0x80] sm:$0xff]
      %v2398 = vld [vmem:[%s7 + $0x88] sm:$0xff]
      %v2399 = vld [vmem:[%s7 + $0x90] sm:$0xff]
      %v2400 = vld [vmem:[%s7 + $0x98] sm:$0xff]
      %v2401 = vld [vmem:[%s7 + $0xa0] sm:$0xff]
      %v2402 = vld [vmem:[%s7 + $0xa8] sm:$0xff]
      %v2403 = vld [vmem:[%s7 + $0xb0] sm:$0xff]
      %v2404 = vld [vmem:[%s7 + $0xb8] sm:$0xff]
      %v2405 = vld [vmem:[%s7 + $0xc0] sm:$0xff]
      %v2406 = vld [vmem:[%s7 + $0xc8] sm:$0xff]
      %v2407 = vld [vmem:[%s7 + $0xd0] sm:$0xff]
      %v2408 = vld [vmem:[%s7 + $0xd8] sm:$0xff]
      %v2409 = vld [vmem:[%s7 + $0xe0] sm:$0xff]
      %v2410 = vld [vmem:[%s7 + $0xe8] sm:$0xff]
      %v2411 = vld [vmem:[%s7 + $0xf0] sm:$0xff]
      %v2412 = vld [vmem:[%s7 + $0xf8] sm:$0xff]
      %v2413 = vld [vmem:[%s8] sm:$0xff]
      %v2414 = vld [vmem:[%s8 + $0x8] sm:$0xff]
      %v2415 = vld [vmem:[%s8 + $0x10] sm:$0xff]
      %v2416 = vld [vmem:[%s8 + $0x18] sm:$0xff]
      %v2417 = vld [vmem:[%s8 + $0x20] sm:$0xff]
      %v2418 = vld [vmem:[%s8 + $0x28] sm:$0xff]
      %v2419 = vld [vmem:[%s8 + $0x30] sm:$0xff]
      %v2420 = vld [vmem:[%s8 + $0x38] sm:$0xff]
      %v2421 = vld [vmem:[%s8 + $0x40] sm:$0xff]
      %v2422 = vld [vmem:[%s8 + $0x48] sm:$0xff]
      %v2423 = vld [vmem:[%s8 + $0x50] sm:$0xff]
      %v2424 = vld [vmem:[%s8 + $0x58] sm:$0xff]
      %v2425 = vld [vmem:[%s8 + $0x60] sm:$0xff]
      %v2426 = vld [vmem:[%s8 + $0x68] sm:$0xff]
      %v2427 = vld [vmem:[%s8 + $0x70] sm:$0xff]
      %v2428 = vld [vmem:[%s8 + $0x78] sm:$0xff]
      %v2429 = vld [vmem:[%s8 + $0x80] sm:$0xff]
      %v2430 = vld [vmem:[%s8 + $0x88] sm:$0xff]
      %v2431 = vld [vmem:[%s8 + $0x90] sm:$0xff]
      %v2432 = vld [vmem:[%s8 + $0x98] sm:$0xff]
      %v2433 = vld [vmem:[%s8 + $0xa0] sm:$0xff]
      %v2434 = vld [vmem:[%s8 + $0xa8] sm:$0xff]
      %v2435 = vld [vmem:[%s8 + $0xb0] sm:$0xff]
      %v2436 = vld [vmem:[%s8 + $0xb8] sm:$0xff]
      %v2437 = vld [vmem:[%s8 + $0xc0] sm:$0xff]
      %v2438 = vld [vmem:[%s8 + $0xc8] sm:$0xff]
      %v2439 = vld [vmem:[%s8 + $0xd0] sm:$0xff]
      %v2440 = vld [vmem:[%s8 + $0xd8] sm:$0xff]
      %v2441 = vld [vmem:[%s8 + $0xe0] sm:$0xff]
      %v2442 = vld [vmem:[%s8 + $0xe8] sm:$0xff]
      %v2443 = vld [vmem:[%s8 + $0xf0] sm:$0xff]
      %v2444 = vld [vmem:[%s8 + $0xf8] sm:$0xff]
      %v2446 = vsel %vm463, %v1856, 0
      %v2449 = vsel %vm463, %v1857, 0
      %v2452 = vsel %vm463, %v1858, 0
      %v2455 = vsel %vm463, %v1859, 0
      %v2458 = vsel %vm463, %v1860, 0
      %v2461 = vsel %vm463, %v1861, 0
      %v2464 = vsel %vm463, %v1862, 0
      %v2467 = vsel %vm463, %v1863, 0
      %v2470 = vsel %vm463, %v1864, 0
      %v2473 = vsel %vm463, %v1865, 0
      %v2476 = vsel %vm463, %v1866, 0
      %v2479 = vsel %vm463, %v1867, 0
      %v2482 = vsel %vm463, %v1868, 0
      %v2485 = vsel %vm463, %v1869, 0
      %v2488 = vsel %vm463, %v1870, 0
      %v2491 = vsel %vm463, %v1871, 0
      %v2494 = vsel %vm463, %v1872, 0
      %v2497 = vsel %vm463, %v1873, 0
      %v2500 = vsel %vm463, %v1874, 0
      %v2503 = vsel %vm463, %v1875, 0
      %v2506 = vsel %vm463, %v1876, 0
      %v2509 = vsel %vm463, %v1877, 0
      %v2512 = vsel %vm463, %v1878, 0
      %v2515 = vsel %vm463, %v1879, 0
      %v2518 = vsel %vm463, %v1880, 0
      %v2521 = vsel %vm463, %v1881, 0
      %v2524 = vsel %vm463, %v1882, 0
      %v2527 = vsel %vm463, %v1883, 0
      %v2530 = vsel %vm463, %v1884, 0
      %v2533 = vsel %vm463, %v1885, 0
      %v2536 = vsel %vm463, %v1886, 0
      %v2539 = vsel %vm463, %v1887, 0
      %2541 = vmatprep.subr.mxu0 0.0
      %2542 = vmatpush1.msra.mxu0 %v1888
      %2543 = vmatprep.subr.mxu0 0.0
      %2544 = vmatpush1.msra.mxu0 %v1889
      %2545 = vmatprep.subr.mxu0 0.0
      %2546 = vmatpush1.msra.mxu0 %v1890
      %2547 = vmatprep.subr.mxu0 0.0
      %2548 = vmatpush1.msra.mxu0 %v1891
      %2549 = vmatprep.subr.mxu0 0.0
      %2550 = vmatpush1.msra.mxu0 %v1892
      %2551 = vmatprep.subr.mxu0 0.0
      %2552 = vmatpush1.msra.mxu0 %v1893
      %2553 = vmatprep.subr.mxu0 0.0
      %2554 = vmatpush1.msra.mxu0 %v1894
      %2555 = vmatprep.subr.mxu0 0.0
      %2556 = vmatpush1.msra.mxu0 %v1895
      %2557 = vmatprep.subr.mxu0 0.0
      %2558 = vmatpush1.msra.mxu0 %v1896
      %2559 = vmatprep.subr.mxu0 0.0
      %2560 = vmatpush1.msra.mxu0 %v1897
      %2561 = vmatprep.subr.mxu0 0.0
      %2562 = vmatpush1.msra.mxu0 %v1898
      %2563 = vmatprep.subr.mxu0 0.0
      %2564 = vmatpush1.msra.mxu0 %v1899
      %2565 = vmatprep.subr.mxu0 0.0
      %2566 = vmatpush1.msra.mxu0 0.0
      %2567 = vmatprep.subr.mxu0 0.0
      %2568 = vmatpush1.msra.mxu0 0.0
      %2569 = vmatprep.subr.mxu0 0.0
      %2570 = vmatpush1.msra.mxu0 0.0
      %2571 = vmatprep.subr.mxu0 0.0
      %2572 = vmatpush1.msra.mxu0 0.0
      %2573 = vmatprep.subr.mxu0 0.0
      %2574 = vmatpush1.msra.mxu0 0.0
      %2575 = vmatprep.subr.mxu0 0.0
      %2576 = vmatpush1.msra.mxu0 0.0
      %2577 = vmatprep.subr.mxu0 0.0
      %2578 = vmatpush1.msra.mxu0 0.0
      %2579 = vmatprep.subr.mxu0 0.0
      %2580 = vmatpush1.msra.mxu0 0.0
      %2581 = vmatprep.subr.mxu0 0.0
      %2582 = vmatpush1.msra.mxu0 0.0
      %2583 = vmatprep.subr.mxu0 0.0
      %2584 = vmatpush1.msra.mxu0 0.0
      %2585 = vmatprep.subr.mxu0 0.0
      %2586 = vmatpush1.msra.mxu0 0.0
      %2587 = vmatprep.subr.mxu0 0.0
      %2588 = vmatpush1.msra.mxu0 0.0
      %2589 = vmatprep.subr.mxu0 0.0
      %2590 = vmatpush1.msra.mxu0 0.0
      %2591 = vmatprep.subr.mxu0 0.0
      %2592 = vmatpush1.msra.mxu0 0.0
      %2593 = vmatprep.subr.mxu0 0.0
      %2594 = vmatpush1.msra.mxu0 0.0
      %2595 = vmatprep.subr.mxu0 0.0
      %2596 = vmatpush1.msra.mxu0 0.0
      %2597 = vmatprep.subr.mxu0 0.0
      %2598 = vmatpush1.msra.mxu0 0.0
      %2599 = vmatprep.subr.mxu0 0.0
      %2600 = vmatpush1.msra.mxu0 0.0
      %2601 = vmatprep.subr.mxu0 0.0
      %2602 = vmatpush1.msra.mxu0 0.0
      %2603 = vmatprep.subr.mxu0 0.0
      %2604 = vmatpush1.msra.mxu0 0.0
      %2605 = vmatprep.mubr.f32.mxu0 0.0
      %2606 = vmatmul.mubr.f32.gmra.mrb[0].mxu0 %v2446
      %v2607 = vpop.f32.mrb[0].mxu0
      %v2608 = vadd.f32 0.0, %v2607
      %v2609 = vpop.f32.mrb[0].mxu0
      %2610 = vmatprep.mubr.f32.mxu0 0.0
      %2611 = vmatmul.mubr.f32.gmra.mrb[0].mxu0 %v2449
      %v2612 = vpop.f32.mrb[0].mxu0
      %v2613 = vadd.f32 0.0, %v2612
      %v2614 = vpop.f32.mrb[0].mxu0
      %2615 = vmatprep.mubr.f32.mxu0 0.0
      %2616 = vmatmul.mubr.f32.gmra.mrb[0].mxu0 %v2452
      %v2617 = vpop.f32.mrb[0].mxu0
      %v2618 = vadd.f32 0.0, %v2617
      %v2619 = vpop.f32.mrb[0].mxu0
      %2620 = vmatprep.mubr.f32.mxu0 0.0
      %2621 = vmatmul.mubr.f32.gmra.mrb[0].mxu0 %v2455
      %v2622 = vpop.f32.mrb[0].mxu0
      %v2623 = vadd.f32 0.0, %v2622
      %v2624 = vpop.f32.mrb[0].mxu0
      %2625 = vmatprep.mubr.f32.mxu0 0.0
      %2626 = vmatmul.mubr.f32.gmra.mrb[0].mxu0 %v2458
      %v2627 = vpop.f32.mrb[0].mxu0
      %v2628 = vadd.f32 0.0, %v2627
      %v2629 = vpop.f32.mrb[0].mxu0
      %2630 = vmatprep.mubr.f32.mxu0 0.0
      %2631 = vmatmul.mubr.f32.gmra.mrb[0].mxu0 %v2461
      %v2632 = vpop.f32.mrb[0].mxu0
      %v2633 = vadd.f32 0.0, %v2632
      %v2634 = vpop.f32.mrb[0].mxu0
      %2635 = vmatprep.mubr.f32.mxu0 0.0
      %2636 = vmatmul.mubr.f32.gmra.mrb[0].mxu0 %v2464
      %v2637 = vpop.f32.mrb[0].mxu0
      %v2638 = vadd.f32 0.0, %v2637
      %v2639 = vpop.f32.mrb[0].mxu0
      %2640 = vmatprep.mubr.f32.mxu0 0.0
      %2641 = vmatmul.mubr.f32.gmra.mrb[0].mxu0 %v2467
      %v2642 = vpop.f32.mrb[0].mxu0
      %v2643 = vadd.f32 0.0, %v2642
      %v2644 = vpop.f32.mrb[0].mxu0
      %2645 = vmatprep.mubr.f32.mxu0 0.0
      %2646 = vmatmul.mubr.f32.gmra.mrb[0].mxu0 %v2470
      %v2647 = vpop.f32.mrb[0].mxu0
      %v2648 = vadd.f32 0.0, %v2647
      %v2649 = vpop.f32.mrb[0].mxu0
      %2650 = vmatprep.mubr.f32.mxu0 0.0
      %2651 = vmatmul.mubr.f32.gmra.mrb[0].mxu0 %v2473
      %v2652 = vpop.f32.mrb[0].mxu0
      %v2653 = vadd.f32 0.0, %v2652
      %v2654 = vpop.f32.mrb[0].mxu0
      %2655 = vmatprep.mubr.f32.mxu0 0.0
      %2656 = vmatmul.mubr.f32.gmra.mrb[0].mxu0 %v2476
      %v2657 = vpop.f32.mrb[0].mxu0
      %v2658 = vadd.f32 0.0, %v2657
      %v2659 = vpop.f32.mrb[0].mxu0
      %2660 = vmatprep.mubr.f32.mxu0 0.0
      %2661 = vmatmul.mubr.f32.gmra.mrb[0].mxu0 %v2479
      %v2662 = vpop.f32.mrb[0].mxu0
      %v2663 = vadd.f32 0.0, %v2662
      %v2664 = vpop.f32.mrb[0].mxu0
      %2665 = vmatprep.mubr.f32.mxu0 0.0
      %2666 = vmatmul.mubr.f32.gmra.mrb[0].mxu0 %v2482
      %v2667 = vpop.f32.mrb[0].mxu0
      %v2668 = vadd.f32 0.0, %v2667
      %v2669 = vpop.f32.mrb[0].mxu0
      %2670 = vmatprep.mubr.f32.mxu0 0.0
      %2671 = vmatmul.mubr.f32.gmra.mrb[0].mxu0 %v2485
      %v2672 = vpop.f32.mrb[0].mxu0
      %v2673 = vadd.f32 0.0, %v2672
      %v2674 = vpop.f32.mrb[0].mxu0
      %2675 = vmatprep.mubr.f32.mxu0 0.0
      %2676 = vmatmul.mubr.f32.gmra.mrb[0].mxu0 %v2488
      %v2677 = vpop.f32.mrb[0].mxu0
      %v2678 = vadd.f32 0.0, %v2677
      %v2679 = vpop.f32.mrb[0].mxu0
      %2680 = vmatprep.mubr.f32.mxu0 0.0
      %2681 = vmatmul.mubr.f32.gmra.mrb[0].mxu0 %v2491
      %v2682 = vpop.f32.mrb[0].mxu0
      %v2683 = vadd.f32 0.0, %v2682
      %v2684 = vpop.f32.mrb[0].mxu0
      %2685 = vmatprep.mubr.f32.mxu0 0.0
      %2686 = vmatmul.mubr.f32.gmra.mrb[0].mxu0 %v2494
      %v2687 = vpop.f32.mrb[0].mxu0
      %v2688 = vadd.f32 0.0, %v2687
      %v2689 = vpop.f32.mrb[0].mxu0
      %2690 = vmatprep.mubr.f32.mxu0 0.0
      %2691 = vmatmul.mubr.f32.gmra.mrb[0].mxu0 %v2497
      %v2692 = vpop.f32.mrb[0].mxu0
      %v2693 = vadd.f32 0.0, %v2692
      %v2694 = vpop.f32.mrb[0].mxu0
      %2695 = vmatprep.mubr.f32.mxu0 0.0
      %2696 = vmatmul.mubr.f32.gmra.mrb[0].mxu0 %v2500
      %v2697 = vpop.f32.mrb[0].mxu0
      %v2698 = vadd.f32 0.0, %v2697
      %v2699 = vpop.f32.mrb[0].mxu0
      %2700 = vmatprep.mubr.f32.mxu0 0.0
      %2701 = vmatmul.mubr.f32.gmra.mrb[0].mxu0 %v2503
      %v2702 = vpop.f32.mrb[0].mxu0
      %v2703 = vadd.f32 0.0, %v2702
      %v2704 = vpop.f32.mrb[0].mxu0
      %2705 = vmatprep.mubr.f32.mxu0 0.0
      %2706 = vmatmul.mubr.f32.gmra.mrb[0].mxu0 %v2506
      %v2707 = vpop.f32.mrb[0].mxu0
      %v2708 = vadd.f32 0.0, %v2707
      %v2709 = vpop.f32.mrb[0].mxu0
      %2710 = vmatprep.mubr.f32.mxu0 0.0
      %2711 = vmatmul.mubr.f32.gmra.mrb[0].mxu0 %v2509
      %v2712 = vpop.f32.mrb[0].mxu0
      %v2713 = vadd.f32 0.0, %v2712
      %v2714 = vpop.f32.mrb[0].mxu0
      %2715 = vmatprep.mubr.f32.mxu0 0.0
      %2716 = vmatmul.mubr.f32.gmra.mrb[0].mxu0 %v2512
      %v2717 = vpop.f32.mrb[0].mxu0
      %v2718 = vadd.f32 0.0, %v2717
      %v2719 = vpop.f32.mrb[0].mxu0
      %2720 = vmatprep.mubr.f32.mxu0 0.0
      %2721 = vmatmul.mubr.f32.gmra.mrb[0].mxu0 %v2515
      %v2722 = vpop.f32.mrb[0].mxu0
      %v2723 = vadd.f32 0.0, %v2722
      %v2724 = vpop.f32.mrb[0].mxu0
      %2725 = vmatprep.mubr.f32.mxu0 0.0
      %2726 = vmatmul.mubr.f32.gmra.mrb[0].mxu0 %v2518
      %v2727 = vpop.f32.mrb[0].mxu0
      %v2728 = vadd.f32 0.0, %v2727
      %v2729 = vpop.f32.mrb[0].mxu0
      %2730 = vmatprep.mubr.f32.mxu0 0.0
      %2731 = vmatmul.mubr.f32.gmra.mrb[0].mxu0 %v2521
      %v2732 = vpop.f32.mrb[0].mxu0
      %v2733 = vadd.f32 0.0, %v2732
      %v2734 = vpop.f32.mrb[0].mxu0
      %2735 = vmatprep.mubr.f32.mxu0 0.0
      %2736 = vmatmul.mubr.f32.gmra.mrb[0].mxu0 %v2524
      %v2737 = vpop.f32.mrb[0].mxu0
      %v2738 = vadd.f32 0.0, %v2737
      %v2739 = vpop.f32.mrb[0].mxu0
      %2740 = vmatprep.mubr.f32.mxu0 0.0
      %2741 = vmatmul.mubr.f32.gmra.mrb[0].mxu0 %v2527
      %v2742 = vpop.f32.mrb[0].mxu0
      %v2743 = vadd.f32 0.0, %v2742
      %v2744 = vpop.f32.mrb[0].mxu0
      %2745 = vmatprep.mubr.f32.mxu0 0.0
      %2746 = vmatmul.mubr.f32.gmra.mrb[0].mxu0 %v2530
      %v2747 = vpop.f32.mrb[0].mxu0
      %v2748 = vadd.f32 0.0, %v2747
      %v2749 = vpop.f32.mrb[0].mxu0
      %2750 = vmatprep.mubr.f32.mxu0 0.0
      %2751 = vmatmul.mubr.f32.gmra.mrb[0].mxu0 %v2533
      %v2752 = vpop.f32.mrb[0].mxu0
      %v2753 = vadd.f32 0.0, %v2752
      %v2754 = vpop.f32.mrb[0].mxu0
      %2755 = vmatprep.mubr.f32.mxu0 0.0
      %2756 = vmatmul.mubr.f32.gmra.mrb[0].mxu0 %v2536
      %v2757 = vpop.f32.mrb[0].mxu0
      %v2758 = vadd.f32 0.0, %v2757
      %v2759 = vpop.f32.mrb[0].mxu0
      %2760 = vmatprep.mubr.f32.mxu0 0.0
      %2761 = vmatmul.mubr.f32.gmra.mrb[0].mxu0 %v2539
      %v2762 = vpop.f32.mrb[0].mxu0
      %v2763 = vadd.f32 0.0, %v2762
      %v2764 = vpop.f32.mrb[0].mxu0
      %2765 = vdwg.mxu0
      %v2766 = vmul.f32 %v1856, %v2381
      %v2767 = vmul.f32 %v1857, %v2382
      %v2768 = vmul.f32 %v1858, %v2383
      %v2769 = vmul.f32 %v1859, %v2384
      %v2770 = vmul.f32 %v1860, %v2385
      %v2771 = vmul.f32 %v1861, %v2386
      %v2772 = vmul.f32 %v1862, %v2387
      %v2773 = vmul.f32 %v1863, %v2388
      %v2774 = vmul.f32 %v1864, %v2389
      %v2775 = vmul.f32 %v1865, %v2390
      %v2776 = vmul.f32 %v1866, %v2391
      %v2777 = vmul.f32 %v1867, %v2392
      %v2778 = vmul.f32 %v1868, %v2393
      %v2779 = vmul.f32 %v1869, %v2394
      %v2780 = vmul.f32 %v1870, %v2395
      %v2781 = vmul.f32 %v1871, %v2396
      %v2782 = vmul.f32 %v1872, %v2397
      %v2783 = vmul.f32 %v1873, %v2398
      %v2784 = vmul.f32 %v1874, %v2399
      %v2785 = vmul.f32 %v1875, %v2400
      %v2786 = vmul.f32 %v1876, %v2401
      %v2787 = vmul.f32 %v1877, %v2402
      %v2788 = vmul.f32 %v1878, %v2403
      %v2789 = vmul.f32 %v1879, %v2404
      %v2790 = vmul.f32 %v1880, %v2405
      %v2791 = vmul.f32 %v1881, %v2406
      %v2792 = vmul.f32 %v1882, %v2407
      %v2793 = vmul.f32 %v1883, %v2408
      %v2794 = vmul.f32 %v1884, %v2409
      %v2795 = vmul.f32 %v1885, %v2410
      %v2796 = vmul.f32 %v1886, %v2411
      %v2797 = vmul.f32 %v1887, %v2412
      %v2798 = vmul.f32 %v2608, %v2413
      %v2799 = vmul.f32 %v2613, %v2414
      %v2800 = vmul.f32 %v2618, %v2415
      %v2801 = vmul.f32 %v2623, %v2416
      %v2802 = vmul.f32 %v2628, %v2417
      %v2803 = vmul.f32 %v2633, %v2418
      %v2804 = vmul.f32 %v2638, %v2419
      %v2805 = vmul.f32 %v2643, %v2420
      %v2806 = vmul.f32 %v2648, %v2421
      %v2807 = vmul.f32 %v2653, %v2422
      %v2808 = vmul.f32 %v2658, %v2423
      %v2809 = vmul.f32 %v2663, %v2424
      %v2810 = vmul.f32 %v2668, %v2425
      %v2811 = vmul.f32 %v2673, %v2426
      %v2812 = vmul.f32 %v2678, %v2427
      %v2813 = vmul.f32 %v2683, %v2428
      %v2814 = vmul.f32 %v2688, %v2429
      %v2815 = vmul.f32 %v2693, %v2430
      %v2816 = vmul.f32 %v2698, %v2431
      %v2817 = vmul.f32 %v2703, %v2432
      %v2818 = vmul.f32 %v2708, %v2433
      %v2819 = vmul.f32 %v2713, %v2434
      %v2820 = vmul.f32 %v2718, %v2435
      %v2821 = vmul.f32 %v2723, %v2436
      %v2822 = vmul.f32 %v2728, %v2437
      %v2823 = vmul.f32 %v2733, %v2438
      %v2824 = vmul.f32 %v2738, %v2439
      %v2825 = vmul.f32 %v2743, %v2440
      %v2826 = vmul.f32 %v2748, %v2441
      %v2827 = vmul.f32 %v2753, %v2442
      %v2828 = vmul.f32 %v2758, %v2443
      %v2829 = vmul.f32 %v2763, %v2444
      %v2830 = vadd.f32 %v2766, %v2798
      %v2831 = vadd.f32 %v2767, %v2799
      %v2832 = vadd.f32 %v2768, %v2800
      %v2833 = vadd.f32 %v2769, %v2801
      %v2834 = vadd.f32 %v2770, %v2802
      %v2835 = vadd.f32 %v2771, %v2803
      %v2836 = vadd.f32 %v2772, %v2804
      %v2837 = vadd.f32 %v2773, %v2805
      %v2838 = vadd.f32 %v2774, %v2806
      %v2839 = vadd.f32 %v2775, %v2807
      %v2840 = vadd.f32 %v2776, %v2808
      %v2841 = vadd.f32 %v2777, %v2809
      %v2842 = vadd.f32 %v2778, %v2810
      %v2843 = vadd.f32 %v2779, %v2811
      %v2844 = vadd.f32 %v2780, %v2812
      %v2845 = vadd.f32 %v2781, %v2813
      %v2846 = vadd.f32 %v2782, %v2814
      %v2847 = vadd.f32 %v2783, %v2815
      %v2848 = vadd.f32 %v2784, %v2816
      %v2849 = vadd.f32 %v2785, %v2817
      %v2850 = vadd.f32 %v2786, %v2818
      %v2851 = vadd.f32 %v2787, %v2819
      %v2852 = vadd.f32 %v2788, %v2820
      %v2853 = vadd.f32 %v2789, %v2821
      %v2854 = vadd.f32 %v2790, %v2822
      %v2855 = vadd.f32 %v2791, %v2823
      %v2856 = vadd.f32 %v2792, %v2824
      %v2857 = vadd.f32 %v2793, %v2825
      %v2858 = vadd.f32 %v2794, %v2826
      %v2859 = vadd.f32 %v2795, %v2827
      %v2860 = vadd.f32 %v2796, %v2828
      %v2861 = vadd.f32 %v2797, %v2829
      %v2862 = vld [vmem:[%s9] sm:$0xff]
      %v2863 = vld [vmem:[%s9 + $0x8] sm:$0xff]
      %v2864 = vld [vmem:[%s9 + $0x10] sm:$0xff]
      %v2865 = vld [vmem:[%s9 + $0x18] sm:$0xff]
      %v2866 = vld [vmem:[%s9 + $0x20] sm:$0xff]
      %v2867 = vld [vmem:[%s9 + $0x28] sm:$0xff]
      %v2868 = vld [vmem:[%s9 + $0x30] sm:$0xff]
      %v2869 = vld [vmem:[%s9 + $0x38] sm:$0xff]
      %v2870 = vld [vmem:[%s9 + $0x40] sm:$0xff]
      %v2871 = vld [vmem:[%s9 + $0x48] sm:$0xff]
      %v2872 = vld [vmem:[%s9 + $0x50] sm:$0xff]
      %v2873 = vld [vmem:[%s9 + $0x58] sm:$0xff]
      %v2874 = vld [vmem:[%s9 + $0x60] sm:$0xff]
      %v2875 = vld [vmem:[%s9 + $0x68] sm:$0xff]
      %v2876 = vld [vmem:[%s9 + $0x70] sm:$0xff]
      %v2877 = vld [vmem:[%s9 + $0x78] sm:$0xff]
      %v2878 = vld [vmem:[%s9 + $0x80] sm:$0xff]
      %v2879 = vld [vmem:[%s9 + $0x88] sm:$0xff]
      %v2880 = vld [vmem:[%s9 + $0x90] sm:$0xff]
      %v2881 = vld [vmem:[%s9 + $0x98] sm:$0xff]
      %v2882 = vld [vmem:[%s9 + $0xa0] sm:$0xff]
      %v2883 = vld [vmem:[%s9 + $0xa8] sm:$0xff]
      %v2884 = vld [vmem:[%s9 + $0xb0] sm:$0xff]
      %v2885 = vld [vmem:[%s9 + $0xb8] sm:$0xff]
      %v2886 = vld [vmem:[%s9 + $0xc0] sm:$0xff]
      %v2887 = vld [vmem:[%s9 + $0xc8] sm:$0xff]
      %v2888 = vld [vmem:[%s9 + $0xd0] sm:$0xff]
      %v2889 = vld [vmem:[%s9 + $0xd8] sm:$0xff]
      %v2890 = vld [vmem:[%s9 + $0xe0] sm:$0xff]
      %v2891 = vld [vmem:[%s9 + $0xe8] sm:$0xff]
      %v2892 = vld [vmem:[%s9 + $0xf0] sm:$0xff]
      %v2893 = vld [vmem:[%s9 + $0xf8] sm:$0xff]
      %v2894 = vld [vmem:[%s9 + $0x100] sm:$0xff]
      %v2895 = vld [vmem:[%s9 + $0x108] sm:$0xff]
      %v2896 = vld [vmem:[%s9 + $0x110] sm:$0xff]
      %v2897 = vld [vmem:[%s9 + $0x118] sm:$0xff]
      %v2898 = vld [vmem:[%s9 + $0x120] sm:$0xff]
      %v2899 = vld [vmem:[%s9 + $0x128] sm:$0xff]
      %v2900 = vld [vmem:[%s9 + $0x130] sm:$0xff]
      %v2901 = vld [vmem:[%s9 + $0x138] sm:$0xff]
      %v2902 = vld [vmem:[%s9 + $0x140] sm:$0xff]
      %v2903 = vld [vmem:[%s9 + $0x148] sm:$0xff]
      %v2904 = vld [vmem:[%s9 + $0x150] sm:$0xff]
      %v2905 = vld [vmem:[%s9 + $0x158] sm:$0xff]
      %v2906 = vld [vmem:[%s9 + $0x160] sm:$0xff]
      %v2907 = vld [vmem:[%s9 + $0x168] sm:$0xff]
      %v2908 = vld [vmem:[%s9 + $0x170] sm:$0xff]
      %v2909 = vld [vmem:[%s9 + $0x178] sm:$0xff]
      %v2910 = vld [vmem:[%s9 + $0x180] sm:$0xff]
      %v2911 = vld [vmem:[%s9 + $0x188] sm:$0xff]
      %v2912 = vld [vmem:[%s9 + $0x190] sm:$0xff]
      %v2913 = vld [vmem:[%s9 + $0x198] sm:$0xff]
      %v2914 = vld [vmem:[%s9 + $0x1a0] sm:$0xff]
      %v2915 = vld [vmem:[%s9 + $0x1a8] sm:$0xff]
      %v2916 = vld [vmem:[%s9 + $0x1b0] sm:$0xff]
      %v2917 = vld [vmem:[%s9 + $0x1b8] sm:$0xff]
      %v2918 = vld [vmem:[%s9 + $0x1c0] sm:$0xff]
      %v2919 = vld [vmem:[%s9 + $0x1c8] sm:$0xff]
      %v2920 = vld [vmem:[%s9 + $0x1d0] sm:$0xff]
      %v2921 = vld [vmem:[%s9 + $0x1d8] sm:$0xff]
      %v2922 = vld [vmem:[%s9 + $0x1e0] sm:$0xff]
      %v2923 = vld [vmem:[%s9 + $0x1e8] sm:$0xff]
      %v2924 = vld [vmem:[%s9 + $0x1f0] sm:$0xff]
      %v2925 = vld [vmem:[%s9 + $0x1f8] sm:$0xff]
      %v2926 = vld [vmem:[%s9 + $0x200] sm:$0xff]
      %v2927 = vld [vmem:[%s9 + $0x208] sm:$0xff]
      %v2928 = vld [vmem:[%s9 + $0x210] sm:$0xff]
      %v2929 = vld [vmem:[%s9 + $0x218] sm:$0xff]
      %v2930 = vld [vmem:[%s9 + $0x220] sm:$0xff]
      %v2931 = vld [vmem:[%s9 + $0x228] sm:$0xff]
      %v2932 = vld [vmem:[%s9 + $0x230] sm:$0xff]
      %v2933 = vld [vmem:[%s9 + $0x238] sm:$0xff]
      %v2934 = vld [vmem:[%s9 + $0x240] sm:$0xff]
      %v2935 = vld [vmem:[%s9 + $0x248] sm:$0xff]
      %v2936 = vld [vmem:[%s9 + $0x250] sm:$0xff]
      %v2937 = vld [vmem:[%s9 + $0x258] sm:$0xff]
      %v2938 = vld [vmem:[%s9 + $0x260] sm:$0xff]
      %v2939 = vld [vmem:[%s9 + $0x268] sm:$0xff]
      %v2940 = vld [vmem:[%s9 + $0x270] sm:$0xff]
      %v2941 = vld [vmem:[%s9 + $0x278] sm:$0xff]
      %v2942 = vld [vmem:[%s9 + $0x280] sm:$0xff]
      %v2943 = vld [vmem:[%s9 + $0x288] sm:$0xff]
      %v2944 = vld [vmem:[%s9 + $0x290] sm:$0xff]
      %v2945 = vld [vmem:[%s9 + $0x298] sm:$0xff]
      %v2946 = vld [vmem:[%s9 + $0x2a0] sm:$0xff]
      %v2947 = vld [vmem:[%s9 + $0x2a8] sm:$0xff]
      %v2948 = vld [vmem:[%s9 + $0x2b0] sm:$0xff]
      %v2949 = vld [vmem:[%s9 + $0x2b8] sm:$0xff]
      %v2950 = vld [vmem:[%s9 + $0x2c0] sm:$0xff]
      %v2951 = vld [vmem:[%s9 + $0x2c8] sm:$0xff]
      %v2952 = vld [vmem:[%s9 + $0x2d0] sm:$0xff]
      %v2953 = vld [vmem:[%s9 + $0x2d8] sm:$0xff]
      %v2954 = vld [vmem:[%s9 + $0x2e0] sm:$0xff]
      %v2955 = vld [vmem:[%s9 + $0x2e8] sm:$0xff]
      %v2956 = vld [vmem:[%s9 + $0x2f0] sm:$0xff]
      %v2957 = vld [vmem:[%s9 + $0x2f8] sm:$0xff]
      %v2958 = vld [vmem:[%s10] sm:$0xff]
      %v2959 = vld [vmem:[%s10 + $0x8] sm:$0xff]
      %v2960 = vld [vmem:[%s10 + $0x10] sm:$0xff]
      %v2961 = vld [vmem:[%s10 + $0x18] sm:$0xff]
      %v2962 = vld [vmem:[%s10 + $0x20] sm:$0xff]
      %v2963 = vld [vmem:[%s10 + $0x28] sm:$0xff]
      %v2964 = vld [vmem:[%s10 + $0x30] sm:$0xff]
      %v2965 = vld [vmem:[%s10 + $0x38] sm:$0xff]
      %v2966 = vld [vmem:[%s10 + $0x40] sm:$0xff]
      %v2967 = vld [vmem:[%s10 + $0x48] sm:$0xff]
      %v2968 = vld [vmem:[%s10 + $0x50] sm:$0xff]
      %v2969 = vld [vmem:[%s10 + $0x58] sm:$0xff]
      %v2970 = vld [vmem:[%s10 + $0x60] sm:$0xff]
      %v2971 = vld [vmem:[%s10 + $0x68] sm:$0xff]
      %v2972 = vld [vmem:[%s10 + $0x70] sm:$0xff]
      %v2973 = vld [vmem:[%s10 + $0x78] sm:$0xff]
      %v2974 = vld [vmem:[%s10 + $0x80] sm:$0xff]
      %v2975 = vld [vmem:[%s10 + $0x88] sm:$0xff]
      %v2976 = vld [vmem:[%s10 + $0x90] sm:$0xff]
      %v2977 = vld [vmem:[%s10 + $0x98] sm:$0xff]
      %v2978 = vld [vmem:[%s10 + $0xa0] sm:$0xff]
      %v2979 = vld [vmem:[%s10 + $0xa8] sm:$0xff]
      %v2980 = vld [vmem:[%s10 + $0xb0] sm:$0xff]
      %v2981 = vld [vmem:[%s10 + $0xb8] sm:$0xff]
      %v2982 = vld [vmem:[%s10 + $0xc0] sm:$0xff]
      %v2983 = vld [vmem:[%s10 + $0xc8] sm:$0xff]
      %v2984 = vld [vmem:[%s10 + $0xd0] sm:$0xff]
      %v2985 = vld [vmem:[%s10 + $0xd8] sm:$0xff]
      %v2986 = vld [vmem:[%s10 + $0xe0] sm:$0xff]
      %v2987 = vld [vmem:[%s10 + $0xe8] sm:$0xff]
      %v2988 = vld [vmem:[%s10 + $0xf0] sm:$0xff]
      %v2989 = vld [vmem:[%s10 + $0xf8] sm:$0xff]
      %v2990 = vld [vmem:[%s10 + $0x100] sm:$0xff]
      %v2991 = vld [vmem:[%s10 + $0x108] sm:$0xff]
      %v2992 = vld [vmem:[%s10 + $0x110] sm:$0xff]
      %v2993 = vld [vmem:[%s10 + $0x118] sm:$0xff]
      %v2994 = vld [vmem:[%s10 + $0x120] sm:$0xff]
      %v2995 = vld [vmem:[%s10 + $0x128] sm:$0xff]
      %v2996 = vld [vmem:[%s10 + $0x130] sm:$0xff]
      %v2997 = vld [vmem:[%s10 + $0x138] sm:$0xff]
      %v2998 = vld [vmem:[%s10 + $0x140] sm:$0xff]
      %v2999 = vld [vmem:[%s10 + $0x148] sm:$0xff]
      %v3000 = vld [vmem:[%s10 + $0x150] sm:$0xff]
      %v3001 = vld [vmem:[%s10 + $0x158] sm:$0xff]
      %v3002 = vld [vmem:[%s10 + $0x160] sm:$0xff]
      %v3003 = vld [vmem:[%s10 + $0x168] sm:$0xff]
      %v3004 = vld [vmem:[%s10 + $0x170] sm:$0xff]
      %v3005 = vld [vmem:[%s10 + $0x178] sm:$0xff]
      %v3006 = vld [vmem:[%s10 + $0x180] sm:$0xff]
      %v3007 = vld [vmem:[%s10 + $0x188] sm:$0xff]
      %v3008 = vld [vmem:[%s10 + $0x190] sm:$0xff]
      %v3009 = vld [vmem:[%s10 + $0x198] sm:$0xff]
      %v3010 = vld [vmem:[%s10 + $0x1a0] sm:$0xff]
      %v3011 = vld [vmem:[%s10 + $0x1a8] sm:$0xff]
      %v3012 = vld [vmem:[%s10 + $0x1b0] sm:$0xff]
      %v3013 = vld [vmem:[%s10 + $0x1b8] sm:$0xff]
      %v3014 = vld [vmem:[%s10 + $0x1c0] sm:$0xff]
      %v3015 = vld [vmem:[%s10 + $0x1c8] sm:$0xff]
      %v3016 = vld [vmem:[%s10 + $0x1d0] sm:$0xff]
      %v3017 = vld [vmem:[%s10 + $0x1d8] sm:$0xff]
      %v3018 = vld [vmem:[%s10 + $0x1e0] sm:$0xff]
      %v3019 = vld [vmem:[%s10 + $0x1e8] sm:$0xff]
      %v3020 = vld [vmem:[%s10 + $0x1f0] sm:$0xff]
      %v3021 = vld [vmem:[%s10 + $0x1f8] sm:$0xff]
      %v3022 = vld [vmem:[%s10 + $0x200] sm:$0xff]
      %v3023 = vld [vmem:[%s10 + $0x208] sm:$0xff]
      %v3024 = vld [vmem:[%s10 + $0x210] sm:$0xff]
      %v3025 = vld [vmem:[%s10 + $0x218] sm:$0xff]
      %v3026 = vld [vmem:[%s10 + $0x220] sm:$0xff]
      %v3027 = vld [vmem:[%s10 + $0x228] sm:$0xff]
      %v3028 = vld [vmem:[%s10 + $0x230] sm:$0xff]
      %v3029 = vld [vmem:[%s10 + $0x238] sm:$0xff]
      %v3030 = vld [vmem:[%s10 + $0x240] sm:$0xff]
      %v3031 = vld [vmem:[%s10 + $0x248] sm:$0xff]
      %v3032 = vld [vmem:[%s10 + $0x250] sm:$0xff]
      %v3033 = vld [vmem:[%s10 + $0x258] sm:$0xff]
      %v3034 = vld [vmem:[%s10 + $0x260] sm:$0xff]
      %v3035 = vld [vmem:[%s10 + $0x268] sm:$0xff]
      %v3036 = vld [vmem:[%s10 + $0x270] sm:$0xff]
      %v3037 = vld [vmem:[%s10 + $0x278] sm:$0xff]
      %v3038 = vld [vmem:[%s10 + $0x280] sm:$0xff]
      %v3039 = vld [vmem:[%s10 + $0x288] sm:$0xff]
      %v3040 = vld [vmem:[%s10 + $0x290] sm:$0xff]
      %v3041 = vld [vmem:[%s10 + $0x298] sm:$0xff]
      %v3042 = vld [vmem:[%s10 + $0x2a0] sm:$0xff]
      %v3043 = vld [vmem:[%s10 + $0x2a8] sm:$0xff]
      %v3044 = vld [vmem:[%s10 + $0x2b0] sm:$0xff]
      %v3045 = vld [vmem:[%s10 + $0x2b8] sm:$0xff]
      %v3046 = vld [vmem:[%s10 + $0x2c0] sm:$0xff]
      %v3047 = vld [vmem:[%s10 + $0x2c8] sm:$0xff]
      %v3048 = vld [vmem:[%s10 + $0x2d0] sm:$0xff]
      %v3049 = vld [vmem:[%s10 + $0x2d8] sm:$0xff]
      %v3050 = vld [vmem:[%s10 + $0x2e0] sm:$0xff]
      %v3051 = vld [vmem:[%s10 + $0x2e8] sm:$0xff]
      %v3052 = vld [vmem:[%s10 + $0x2f0] sm:$0xff]
      %v3053 = vld [vmem:[%s10 + $0x2f8] sm:$0xff]
      %v3054 = vmul.f32 %v2830, %v2862
      %v3055 = vmul.f32 %v2831, %v2863
      %v3056 = vmul.f32 %v2832, %v2864
      %v3057 = vmul.f32 %v2833, %v2865
      %v3058 = vmul.f32 %v2834, %v2866
      %v3059 = vmul.f32 %v2835, %v2867
      %v3060 = vmul.f32 %v2836, %v2868
      %v3061 = vmul.f32 %v2837, %v2869
      %v3062 = vmul.f32 %v2838, %v2870
      %v3063 = vmul.f32 %v2839, %v2871
      %v3064 = vmul.f32 %v2840, %v2872
      %v3065 = vmul.f32 %v2841, %v2873
      %v3066 = vmul.f32 %v2842, %v2874
      %v3067 = vmul.f32 %v2843, %v2875
      %v3068 = vmul.f32 %v2844, %v2876
      %v3069 = vmul.f32 %v2845, %v2877
      %v3070 = vmul.f32 %v2830, %v2878
      %v3071 = vmul.f32 %v2831, %v2879
      %v3072 = vmul.f32 %v2832, %v2880
      %v3073 = vmul.f32 %v2833, %v2881
      %v3074 = vmul.f32 %v2834, %v2882
      %v3075 = vmul.f32 %v2835, %v2883
      %v3076 = vmul.f32 %v2836, %v2884
      %v3077 = vmul.f32 %v2837, %v2885
      %v3078 = vmul.f32 %v2838, %v2886
      %v3079 = vmul.f32 %v2839, %v2887
      %v3080 = vmul.f32 %v2840, %v2888
      %v3081 = vmul.f32 %v2841, %v2889
      %v3082 = vmul.f32 %v2842, %v2890
      %v3083 = vmul.f32 %v2843, %v2891
      %v3084 = vmul.f32 %v2844, %v2892
      %v3085 = vmul.f32 %v2845, %v2893
      %v3086 = vmul.f32 %v2830, %v2894
      %v3087 = vmul.f32 %v2831, %v2895
      %v3088 = vmul.f32 %v2832, %v2896
      %v3089 = vmul.f32 %v2833, %v2897
      %v3090 = vmul.f32 %v2834, %v2898
      %v3091 = vmul.f32 %v2835, %v2899
      %v3092 = vmul.f32 %v2836, %v2900
      %v3093 = vmul.f32 %v2837, %v2901
      %v3094 = vmul.f32 %v2838, %v2902
      %v3095 = vmul.f32 %v2839, %v2903
      %v3096 = vmul.f32 %v2840, %v2904
      %v3097 = vmul.f32 %v2841, %v2905
      %v3098 = vmul.f32 %v2842, %v2906
      %v3099 = vmul.f32 %v2843, %v2907
      %v3100 = vmul.f32 %v2844, %v2908
      %v3101 = vmul.f32 %v2845, %v2909
      %v3102 = vmul.f32 %v2830, %v2910
      %v3103 = vmul.f32 %v2831, %v2911
      %v3104 = vmul.f32 %v2832, %v2912
      %v3105 = vmul.f32 %v2833, %v2913
      %v3106 = vmul.f32 %v2834, %v2914
      %v3107 = vmul.f32 %v2835, %v2915
      %v3108 = vmul.f32 %v2836, %v2916
      %v3109 = vmul.f32 %v2837, %v2917
      %v3110 = vmul.f32 %v2838, %v2918
      %v3111 = vmul.f32 %v2839, %v2919
      %v3112 = vmul.f32 %v2840, %v2920
      %v3113 = vmul.f32 %v2841, %v2921
      %v3114 = vmul.f32 %v2842, %v2922
      %v3115 = vmul.f32 %v2843, %v2923
      %v3116 = vmul.f32 %v2844, %v2924
      %v3117 = vmul.f32 %v2845, %v2925
      %v3118 = vmul.f32 %v2830, %v2926
      %v3119 = vmul.f32 %v2831, %v2927
      %v3120 = vmul.f32 %v2832, %v2928
      %v3121 = vmul.f32 %v2833, %v2929
      %v3122 = vmul.f32 %v2834, %v2930
      %v3123 = vmul.f32 %v2835, %v2931
      %v3124 = vmul.f32 %v2836, %v2932
      %v3125 = vmul.f32 %v2837, %v2933
      %v3126 = vmul.f32 %v2838, %v2934
      %v3127 = vmul.f32 %v2839, %v2935
      %v3128 = vmul.f32 %v2840, %v2936
      %v3129 = vmul.f32 %v2841, %v2937
      %v3130 = vmul.f32 %v2842, %v2938
      %v3131 = vmul.f32 %v2843, %v2939
      %v3132 = vmul.f32 %v2844, %v2940
      %v3133 = vmul.f32 %v2845, %v2941
      %v3134 = vmul.f32 %v2830, %v2942
      %v3135 = vmul.f32 %v2831, %v2943
      %v3136 = vmul.f32 %v2832, %v2944
      %v3137 = vmul.f32 %v2833, %v2945
      %v3138 = vmul.f32 %v2834, %v2946
      %v3139 = vmul.f32 %v2835, %v2947
      %v3140 = vmul.f32 %v2836, %v2948
      %v3141 = vmul.f32 %v2837, %v2949
      %v3142 = vmul.f32 %v2838, %v2950
      %v3143 = vmul.f32 %v2839, %v2951
      %v3144 = vmul.f32 %v2840, %v2952
      %v3145 = vmul.f32 %v2841, %v2953
      %v3146 = vmul.f32 %v2842, %v2954
      %v3147 = vmul.f32 %v2843, %v2955
      %v3148 = vmul.f32 %v2844, %v2956
      %v3149 = vmul.f32 %v2845, %v2957
      %v3150 = vmul.f32 %v884, %v2862
      %v3151 = vmul.f32 %v889, %v2863
      %v3152 = vmul.f32 %v894, %v2864
      %v3153 = vmul.f32 %v899, %v2865
      %v3154 = vmul.f32 %v904, %v2866
      %v3155 = vmul.f32 %v909, %v2867
      %v3156 = vmul.f32 %v914, %v2868
      %v3157 = vmul.f32 %v919, %v2869
      %v3158 = vmul.f32 %v924, %v2870
      %v3159 = vmul.f32 %v929, %v2871
      %v3160 = vmul.f32 %v934, %v2872
      %v3161 = vmul.f32 %v939, %v2873
      %v3162 = vmul.f32 %v944, %v2874
      %v3163 = vmul.f32 %v949, %v2875
      %v3164 = vmul.f32 %v954, %v2876
      %v3165 = vmul.f32 %v959, %v2877
      %v3166 = vmul.f32 %v884, %v2878
      %v3167 = vmul.f32 %v889, %v2879
      %v3168 = vmul.f32 %v894, %v2880
      %v3169 = vmul.f32 %v899, %v2881
      %v3170 = vmul.f32 %v904, %v2882
      %v3171 = vmul.f32 %v909, %v2883
      %v3172 = vmul.f32 %v914, %v2884
      %v3173 = vmul.f32 %v919, %v2885
      %v3174 = vmul.f32 %v924, %v2886
      %v3175 = vmul.f32 %v929, %v2887
      %v3176 = vmul.f32 %v934, %v2888
      %v3177 = vmul.f32 %v939, %v2889
      %v3178 = vmul.f32 %v944, %v2890
      %v3179 = vmul.f32 %v949, %v2891
      %v3180 = vmul.f32 %v954, %v2892
      %v3181 = vmul.f32 %v959, %v2893
      %v3182 = vmul.f32 %v884, %v2894
      %v3183 = vmul.f32 %v889, %v2895
      %v3184 = vmul.f32 %v894, %v2896
      %v3185 = vmul.f32 %v899, %v2897
      %v3186 = vmul.f32 %v904, %v2898
      %v3187 = vmul.f32 %v909, %v2899
      %v3188 = vmul.f32 %v914, %v2900
      %v3189 = vmul.f32 %v919, %v2901
      %v3190 = vmul.f32 %v924, %v2902
      %v3191 = vmul.f32 %v929, %v2903
      %v3192 = vmul.f32 %v934, %v2904
      %v3193 = vmul.f32 %v939, %v2905
      %v3194 = vmul.f32 %v944, %v2906
      %v3195 = vmul.f32 %v949, %v2907
      %v3196 = vmul.f32 %v954, %v2908
      %v3197 = vmul.f32 %v959, %v2909
      %v3198 = vmul.f32 %v884, %v2910
      %v3199 = vmul.f32 %v889, %v2911
      %v3200 = vmul.f32 %v894, %v2912
      %v3201 = vmul.f32 %v899, %v2913
      %v3202 = vmul.f32 %v904, %v2914
      %v3203 = vmul.f32 %v909, %v2915
      %v3204 = vmul.f32 %v914, %v2916
      %v3205 = vmul.f32 %v919, %v2917
      %v3206 = vmul.f32 %v924, %v2918
      %v3207 = vmul.f32 %v929, %v2919
      %v3208 = vmul.f32 %v934, %v2920
      %v3209 = vmul.f32 %v939, %v2921
      %v3210 = vmul.f32 %v944, %v2922
      %v3211 = vmul.f32 %v949, %v2923
      %v3212 = vmul.f32 %v954, %v2924
      %v3213 = vmul.f32 %v959, %v2925
      %v3214 = vmul.f32 %v884, %v2926
      %v3215 = vmul.f32 %v889, %v2927
      %v3216 = vmul.f32 %v894, %v2928
      %v3217 = vmul.f32 %v899, %v2929
      %v3218 = vmul.f32 %v904, %v2930
      %v3219 = vmul.f32 %v909, %v2931
      %v3220 = vmul.f32 %v914, %v2932
      %v3221 = vmul.f32 %v919, %v2933
      %v3222 = vmul.f32 %v924, %v2934
      %v3223 = vmul.f32 %v929, %v2935
      %v3224 = vmul.f32 %v934, %v2936
      %v3225 = vmul.f32 %v939, %v2937
      %v3226 = vmul.f32 %v944, %v2938
      %v3227 = vmul.f32 %v949, %v2939
      %v3228 = vmul.f32 %v954, %v2940
      %v3229 = vmul.f32 %v959, %v2941
      %v3230 = vmul.f32 %v884, %v2942
      %v3231 = vmul.f32 %v889, %v2943
      %v3232 = vmul.f32 %v894, %v2944
      %v3233 = vmul.f32 %v899, %v2945
      %v3234 = vmul.f32 %v904, %v2946
      %v3235 = vmul.f32 %v909, %v2947
      %v3236 = vmul.f32 %v914, %v2948
      %v3237 = vmul.f32 %v919, %v2949
      %v3238 = vmul.f32 %v924, %v2950
      %v3239 = vmul.f32 %v929, %v2951
      %v3240 = vmul.f32 %v934, %v2952
      %v3241 = vmul.f32 %v939, %v2953
      %v3242 = vmul.f32 %v944, %v2954
      %v3243 = vmul.f32 %v949, %v2955
      %v3244 = vmul.f32 %v954, %v2956
      %v3245 = vmul.f32 %v959, %v2957
      %v3247 = vsel %vm463, %v2349, 0
      %v3250 = vsel %vm463, %v2350, 0
      %v3253 = vsel %vm463, %v2351, 0
      %v3256 = vsel %vm463, %v2352, 0
      %v3259 = vsel %vm463, %v2353, 0
      %v3262 = vsel %vm463, %v2354, 0
      %v3265 = vsel %vm463, %v2355, 0
      %v3268 = vsel %vm463, %v2356, 0
      %v3271 = vsel %vm463, %v2357, 0
      %v3274 = vsel %vm463, %v2358, 0
      %v3277 = vsel %vm463, %v2359, 0
      %v3280 = vsel %vm463, %v2360, 0
      %v3283 = vsel %vm463, %v2361, 0
      %v3286 = vsel %vm463, %v2362, 0
      %v3289 = vsel %vm463, %v2363, 0
      %v3292 = vsel %vm463, %v2364, 0
      %v3295 = vsel %vm463, %v3054, 0
      %v3298 = vsel %vm463, %v3055, 0
      %v3301 = vsel %vm463, %v3056, 0
      %v3304 = vsel %vm463, %v3057, 0
      %v3307 = vsel %vm463, %v3058, 0
      %v3310 = vsel %vm463, %v3059, 0
      %v3313 = vsel %vm463, %v3060, 0
      %v3316 = vsel %vm463, %v3061, 0
      %v3319 = vsel %vm463, %v3062, 0
      %v3322 = vsel %vm463, %v3063, 0
      %v3325 = vsel %vm463, %v3064, 0
      %v3328 = vsel %vm463, %v3065, 0
      %v3331 = vsel %vm463, %v3066, 0
      %v3334 = vsel %vm463, %v3067, 0
      %v3337 = vsel %vm463, %v3068, 0
      %v3340 = vsel %vm463, %v3069, 0
      %v3343 = vsel %vm463, %v3070, 0
      %v3346 = vsel %vm463, %v3071, 0
      %v3349 = vsel %vm463, %v3072, 0
      %v3352 = vsel %vm463, %v3073, 0
      %v3355 = vsel %vm463, %v3074, 0
      %v3358 = vsel %vm463, %v3075, 0
      %v3361 = vsel %vm463, %v3076, 0
      %v3364 = vsel %vm463, %v3077, 0
      %v3367 = vsel %vm463, %v3078, 0
      %v3370 = vsel %vm463, %v3079, 0
      %v3373 = vsel %vm463, %v3080, 0
      %v3376 = vsel %vm463, %v3081, 0
      %v3379 = vsel %vm463, %v3082, 0
      %v3382 = vsel %vm463, %v3083, 0
      %v3385 = vsel %vm463, %v3084, 0
      %v3388 = vsel %vm463, %v3085, 0
      %v3391 = vsel %vm463, %v3086, 0
      %v3394 = vsel %vm463, %v3087, 0
      %v3397 = vsel %vm463, %v3088, 0
      %v3400 = vsel %vm463, %v3089, 0
      %v3403 = vsel %vm463, %v3090, 0
      %v3406 = vsel %vm463, %v3091, 0
      %v3409 = vsel %vm463, %v3092, 0
      %v3412 = vsel %vm463, %v3093, 0
      %v3415 = vsel %vm463, %v3094, 0
      %v3418 = vsel %vm463, %v3095, 0
      %v3421 = vsel %vm463, %v3096, 0
      %v3424 = vsel %vm463, %v3097, 0
      %v3427 = vsel %vm463, %v3098, 0
      %v3430 = vsel %vm463, %v3099, 0
      %v3433 = vsel %vm463, %v3100, 0
      %v3436 = vsel %vm463, %v3101, 0
      %v3439 = vsel %vm463, %v3102, 0
      %v3442 = vsel %vm463, %v3103, 0
      %v3445 = vsel %vm463, %v3104, 0
      %v3448 = vsel %vm463, %v3105, 0
      %v3451 = vsel %vm463, %v3106, 0
      %v3454 = vsel %vm463, %v3107, 0
      %v3457 = vsel %vm463, %v3108, 0
      %v3460 = vsel %vm463, %v3109, 0
      %v3463 = vsel %vm463, %v3110, 0
      %v3466 = vsel %vm463, %v3111, 0
      %v3469 = vsel %vm463, %v3112, 0
      %v3472 = vsel %vm463, %v3113, 0
      %v3475 = vsel %vm463, %v3114, 0
      %v3478 = vsel %vm463, %v3115, 0
      %v3481 = vsel %vm463, %v3116, 0
      %v3484 = vsel %vm463, %v3117, 0
      %v3487 = vsel %vm463, %v3118, 0
      %v3490 = vsel %vm463, %v3119, 0
      %v3493 = vsel %vm463, %v3120, 0
      %v3496 = vsel %vm463, %v3121, 0
      %v3499 = vsel %vm463, %v3122, 0
      %v3502 = vsel %vm463, %v3123, 0
      %v3505 = vsel %vm463, %v3124, 0
      %v3508 = vsel %vm463, %v3125, 0
      %v3511 = vsel %vm463, %v3126, 0
      %v3514 = vsel %vm463, %v3127, 0
      %v3517 = vsel %vm463, %v3128, 0
      %v3520 = vsel %vm463, %v3129, 0
      %v3523 = vsel %vm463, %v3130, 0
      %v3526 = vsel %vm463, %v3131, 0
      %v3529 = vsel %vm463, %v3132, 0
      %v3532 = vsel %vm463, %v3133, 0
      %v3535 = vsel %vm463, %v3134, 0
      %v3538 = vsel %vm463, %v3135, 0
      %v3541 = vsel %vm463, %v3136, 0
      %v3544 = vsel %vm463, %v3137, 0
      %v3547 = vsel %vm463, %v3138, 0
      %v3550 = vsel %vm463, %v3139, 0
      %v3553 = vsel %vm463, %v3140, 0
      %v3556 = vsel %vm463, %v3141, 0
      %v3559 = vsel %vm463, %v3142, 0
      %v3562 = vsel %vm463, %v3143, 0
      %v3565 = vsel %vm463, %v3144, 0
      %v3568 = vsel %vm463, %v3145, 0
      %v3571 = vsel %vm463, %v3146, 0
      %v3574 = vsel %vm463, %v3147, 0
      %v3577 = vsel %vm463, %v3148, 0
      %v3580 = vsel %vm463, %v3149, 0
      %3582 = vmatprep.subr.mxu0 0.0
      %3583 = vmatpush1.xpose.msra.mxu0 %v3295
      %3584 = vmatprep.subr.mxu0 0.0
      %3585 = vmatpush1.xpose.msra.mxu0 %v3298
      %3586 = vmatprep.subr.mxu0 0.0
      %3587 = vmatpush1.xpose.msra.mxu0 %v3301
      %3588 = vmatprep.subr.mxu0 0.0
      %3589 = vmatpush1.xpose.msra.mxu0 %v3304
      %3590 = vmatprep.subr.mxu0 0.0
      %3591 = vmatpush1.xpose.msra.mxu0 %v3307
      %3592 = vmatprep.subr.mxu0 0.0
      %3593 = vmatpush1.xpose.msra.mxu0 %v3310
      %3594 = vmatprep.subr.mxu0 0.0
      %3595 = vmatpush1.xpose.msra.mxu0 %v3313
      %3596 = vmatprep.subr.mxu0 0.0
      %3597 = vmatpush1.xpose.msra.mxu0 %v3316
      %3598 = vmatprep.subr.mxu0 0.0
      %3599 = vmatpush1.xpose.msra.mxu0 %v3319
      %3600 = vmatprep.subr.mxu0 0.0
      %3601 = vmatpush1.xpose.msra.mxu0 %v3322
      %3602 = vmatprep.subr.mxu0 0.0
      %3603 = vmatpush1.xpose.msra.mxu0 %v3325
      %3604 = vmatprep.subr.mxu0 0.0
      %3605 = vmatpush1.xpose.msra.mxu0 %v3328
      %3606 = vmatprep.subr.mxu0 0.0
      %3607 = vmatpush1.xpose.msra.mxu0 %v3331
      %3608 = vmatprep.subr.mxu0 0.0
      %3609 = vmatpush1.xpose.msra.mxu0 %v3334
      %3610 = vmatprep.subr.mxu0 0.0
      %3611 = vmatpush1.xpose.msra.mxu0 %v3337
      %3612 = vmatprep.subr.mxu0 0.0
      %3613 = vmatpush1.xpose.msra.mxu0 %v3340
      %3614 = vmatprep.subr.mxu0 0.0
      %3615 = vmatpush1.xpose.msra.mxu0 %v3343
      %3616 = vmatprep.subr.mxu0 0.0
      %3617 = vmatpush1.xpose.msra.mxu0 %v3346
      %3618 = vmatprep.subr.mxu0 0.0
      %3619 = vmatpush1.xpose.msra.mxu0 %v3349
      %3620 = vmatprep.subr.mxu0 0.0
      %3621 = vmatpush1.xpose.msra.mxu0 %v3352
      %3622 = vmatprep.subr.mxu0 0.0
      %3623 = vmatpush1.xpose.msra.mxu0 %v3355
      %3624 = vmatprep.subr.mxu0 0.0
      %3625 = vmatpush1.xpose.msra.mxu0 %v3358
      %3626 = vmatprep.subr.mxu0 0.0
      %3627 = vmatpush1.xpose.msra.mxu0 %v3361
      %3628 = vmatprep.subr.mxu0 0.0
      %3629 = vmatpush1.xpose.msra.mxu0 %v3364
      %3630 = vmatprep.subr.mxu0 0.0
      %3631 = vmatpush1.xpose.msra.mxu0 %v3367
      %3632 = vmatprep.subr.mxu0 0.0
      %3633 = vmatpush1.xpose.msra.mxu0 %v3370
      %3634 = vmatprep.subr.mxu0 0.0
      %3635 = vmatpush1.xpose.msra.mxu0 %v3373
      %3636 = vmatprep.subr.mxu0 0.0
      %3637 = vmatpush1.xpose.msra.mxu0 %v3376
      %3638 = vmatprep.subr.mxu0 0.0
      %3639 = vmatpush1.xpose.msra.mxu0 %v3379
      %3640 = vmatprep.subr.mxu0 0.0
      %3641 = vmatpush1.xpose.msra.mxu0 %v3382
      %3642 = vmatprep.subr.mxu0 0.0
      %3643 = vmatpush1.xpose.msra.mxu0 %v3385
      %3644 = vmatprep.subr.mxu0 0.0
      %3645 = vmatpush1.xpose.msra.mxu0 %v3388
      %3646 = vmatprep.mubr.f32.mxu0 0.0
      %3647 = vmatmul.mubr.f32.gmra.mrb[0].mxu0 %v3247
      %v3648 = vpop.f32.mrb[0].mxu0
      %v3649 = vadd.f32 %v2958, %v3648
      %v3650 = vpop.f32.mrb[0].mxu0
      %v3651 = vadd.f32 %v2959, %v3650
      %3652 = vmatprep.mubr.f32.mxu0 0.0
      %3653 = vmatmul.mubr.f32.gmra.mrb[0].mxu0 %v3250
      %v3654 = vpop.f32.mrb[0].mxu0
      %v3655 = vadd.f32 %v2964, %v3654
      %v3656 = vpop.f32.mrb[0].mxu0
      %v3657 = vadd.f32 %v2965, %v3656
      %3658 = vmatprep.mubr.f32.mxu0 0.0
      %3659 = vmatmul.mubr.f32.gmra.mrb[0].mxu0 %v3253
      %v3660 = vpop.f32.mrb[0].mxu0
      %v3661 = vadd.f32 %v2970, %v3660
      %v3662 = vpop.f32.mrb[0].mxu0
      %v3663 = vadd.f32 %v2971, %v3662
      %3664 = vmatprep.mubr.f32.mxu0 0.0
      %3665 = vmatmul.mubr.f32.gmra.mrb[0].mxu0 %v3256
      %v3666 = vpop.f32.mrb[0].mxu0
      %v3667 = vadd.f32 %v2976, %v3666
      %v3668 = vpop.f32.mrb[0].mxu0
      %v3669 = vadd.f32 %v2977, %v3668
      %3670 = vmatprep.mubr.f32.mxu0 0.0
      %3671 = vmatmul.mubr.f32.gmra.mrb[0].mxu0 %v3259
      %v3672 = vpop.f32.mrb[0].mxu0
      %v3673 = vadd.f32 %v2982, %v3672
      %v3674 = vpop.f32.mrb[0].mxu0
      %v3675 = vadd.f32 %v2983, %v3674
      %3676 = vmatprep.mubr.f32.mxu0 0.0
      %3677 = vmatmul.mubr.f32.gmra.mrb[0].mxu0 %v3262
      %v3678 = vpop.f32.mrb[0].mxu0
      %v3679 = vadd.f32 %v2988, %v3678
      %v3680 = vpop.f32.mrb[0].mxu0
      %v3681 = vadd.f32 %v2989, %v3680
      %3682 = vmatprep.mubr.f32.mxu0 0.0
      %3683 = vmatmul.mubr.f32.gmra.mrb[0].mxu0 %v3265
      %v3684 = vpop.f32.mrb[0].mxu0
      %v3685 = vadd.f32 %v2994, %v3684
      %v3686 = vpop.f32.mrb[0].mxu0
      %v3687 = vadd.f32 %v2995, %v3686
      %3688 = vmatprep.mubr.f32.mxu0 0.0
      %3689 = vmatmul.mubr.f32.gmra.mrb[0].mxu0 %v3268
      %v3690 = vpop.f32.mrb[0].mxu0
      %v3691 = vadd.f32 %v3000, %v3690
      %v3692 = vpop.f32.mrb[0].mxu0
      %v3693 = vadd.f32 %v3001, %v3692
      %3694 = vmatprep.mubr.f32.mxu0 0.0
      %3695 = vmatmul.mubr.f32.gmra.mrb[0].mxu0 %v3271
      %v3696 = vpop.f32.mrb[0].mxu0
      %v3697 = vadd.f32 %v3006, %v3696
      %v3698 = vpop.f32.mrb[0].mxu0
      %v3699 = vadd.f32 %v3007, %v3698
      %3700 = vmatprep.mubr.f32.mxu0 0.0
      %3701 = vmatmul.mubr.f32.gmra.mrb[0].mxu0 %v3274
      %v3702 = vpop.f32.mrb[0].mxu0
      %v3703 = vadd.f32 %v3012, %v3702
      %v3704 = vpop.f32.mrb[0].mxu0
      %v3705 = vadd.f32 %v3013, %v3704
      %3706 = vmatprep.mubr.f32.mxu0 0.0
      %3707 = vmatmul.mubr.f32.gmra.mrb[0].mxu0 %v3277
      %v3708 = vpop.f32.mrb[0].mxu0
      %v3709 = vadd.f32 %v3018, %v3708
      %v3710 = vpop.f32.mrb[0].mxu0
      %v3711 = vadd.f32 %v3019, %v3710
      %3712 = vmatprep.mubr.f32.mxu0 0.0
      %3713 = vmatmul.mubr.f32.gmra.mrb[0].mxu0 %v3280
      %v3714 = vpop.f32.mrb[0].mxu0
      %v3715 = vadd.f32 %v3024, %v3714
      %v3716 = vpop.f32.mrb[0].mxu0
      %v3717 = vadd.f32 %v3025, %v3716
      %3718 = vmatprep.mubr.f32.mxu0 0.0
      %3719 = vmatmul.mubr.f32.gmra.mrb[0].mxu0 %v3283
      %v3720 = vpop.f32.mrb[0].mxu0
      %v3721 = vadd.f32 %v3030, %v3720
      %v3722 = vpop.f32.mrb[0].mxu0
      %v3723 = vadd.f32 %v3031, %v3722
      %3724 = vmatprep.mubr.f32.mxu0 0.0
      %3725 = vmatmul.mubr.f32.gmra.mrb[0].mxu0 %v3286
      %v3726 = vpop.f32.mrb[0].mxu0
      %v3727 = vadd.f32 %v3036, %v3726
      %v3728 = vpop.f32.mrb[0].mxu0
      %v3729 = vadd.f32 %v3037, %v3728
      %3730 = vmatprep.mubr.f32.mxu0 0.0
      %3731 = vmatmul.mubr.f32.gmra.mrb[0].mxu0 %v3289
      %v3732 = vpop.f32.mrb[0].mxu0
      %v3733 = vadd.f32 %v3042, %v3732
      %v3734 = vpop.f32.mrb[0].mxu0
      %v3735 = vadd.f32 %v3043, %v3734
      %3736 = vmatprep.mubr.f32.mxu0 0.0
      %3737 = vmatmul.mubr.f32.gmra.mrb[0].mxu0 %v3292
      %v3738 = vpop.f32.mrb[0].mxu0
      %v3739 = vadd.f32 %v3048, %v3738
      %v3740 = vpop.f32.mrb[0].mxu0
      %v3741 = vadd.f32 %v3049, %v3740
      %3742 = vdwg.mxu0
      %3743 = vmatprep.subr.mxu0 0.0
      %3744 = vmatpush1.xpose.msra.mxu0 %v3391
      %3745 = vmatprep.subr.mxu0 0.0
      %3746 = vmatpush1.xpose.msra.mxu0 %v3394
      %3747 = vmatprep.subr.mxu0 0.0
      %3748 = vmatpush1.xpose.msra.mxu0 %v3397
      %3749 = vmatprep.subr.mxu0 0.0
      %3750 = vmatpush1.xpose.msra.mxu0 %v3400
      %3751 = vmatprep.subr.mxu0 0.0
      %3752 = vmatpush1.xpose.msra.mxu0 %v3403
      %3753 = vmatprep.subr.mxu0 0.0
      %3754 = vmatpush1.xpose.msra.mxu0 %v3406
      %3755 = vmatprep.subr.mxu0 0.0
      %3756 = vmatpush1.xpose.msra.mxu0 %v3409
      %3757 = vmatprep.subr.mxu0 0.0
      %3758 = vmatpush1.xpose.msra.mxu0 %v3412
      %3759 = vmatprep.subr.mxu0 0.0
      %3760 = vmatpush1.xpose.msra.mxu0 %v3415
      %3761 = vmatprep.subr.mxu0 0.0
      %3762 = vmatpush1.xpose.msra.mxu0 %v3418
      %3763 = vmatprep.subr.mxu0 0.0
      %3764 = vmatpush1.xpose.msra.mxu0 %v3421
      %3765 = vmatprep.subr.mxu0 0.0
      %3766 = vmatpush1.xpose.msra.mxu0 %v3424
      %3767 = vmatprep.subr.mxu0 0.0
      %3768 = vmatpush1.xpose.msra.mxu0 %v3427
      %3769 = vmatprep.subr.mxu0 0.0
      %3770 = vmatpush1.xpose.msra.mxu0 %v3430
      %3771 = vmatprep.subr.mxu0 0.0
      %3772 = vmatpush1.xpose.msra.mxu0 %v3433
      %3773 = vmatprep.subr.mxu0 0.0
      %3774 = vmatpush1.xpose.msra.mxu0 %v3436
      %3775 = vmatprep.subr.mxu0 0.0
      %3776 = vmatpush1.xpose.msra.mxu0 %v3439
      %3777 = vmatprep.subr.mxu0 0.0
      %3778 = vmatpush1.xpose.msra.mxu0 %v3442
      %3779 = vmatprep.subr.mxu0 0.0
      %3780 = vmatpush1.xpose.msra.mxu0 %v3445
      %3781 = vmatprep.subr.mxu0 0.0
      %3782 = vmatpush1.xpose.msra.mxu0 %v3448
      %3783 = vmatprep.subr.mxu0 0.0
      %3784 = vmatpush1.xpose.msra.mxu0 %v3451
      %3785 = vmatprep.subr.mxu0 0.0
      %3786 = vmatpush1.xpose.msra.mxu0 %v3454
      %3787 = vmatprep.subr.mxu0 0.0
      %3788 = vmatpush1.xpose.msra.mxu0 %v3457
      %3789 = vmatprep.subr.mxu0 0.0
      %3790 = vmatpush1.xpose.msra.mxu0 %v3460
      %3791 = vmatprep.subr.mxu0 0.0
      %3792 = vmatpush1.xpose.msra.mxu0 %v3463
      %3793 = vmatprep.subr.mxu0 0.0
      %3794 = vmatpush1.xpose.msra.mxu0 %v3466
      %3795 = vmatprep.subr.mxu0 0.0
      %3796 = vmatpush1.xpose.msra.mxu0 %v3469
      %3797 = vmatprep.subr.mxu0 0.0
      %3798 = vmatpush1.xpose.msra.mxu0 %v3472
      %3799 = vmatprep.subr.mxu0 0.0
      %3800 = vmatpush1.xpose.msra.mxu0 %v3475
      %3801 = vmatprep.subr.mxu0 0.0
      %3802 = vmatpush1.xpose.msra.mxu0 %v3478
      %3803 = vmatprep.subr.mxu0 0.0
      %3804 = vmatpush1.xpose.msra.mxu0 %v3481
      %3805 = vmatprep.subr.mxu0 0.0
      %3806 = vmatpush1.xpose.msra.mxu0 %v3484
      %3807 = vmatprep.mubr.f32.mxu0 0.0
      %3808 = vmatmul.mubr.f32.gmra.mrb[0].mxu0 %v3247
      %v3809 = vpop.f32.mrb[0].mxu0
      %v3810 = vadd.f32 %v2960, %v3809
      %v3811 = vpop.f32.mrb[0].mxu0
      %v3812 = vadd.f32 %v2961, %v3811
      %3813 = vmatprep.mubr.f32.mxu0 0.0
      %3814 = vmatmul.mubr.f32.gmra.mrb[0].mxu0 %v3250
      %v3815 = vpop.f32.mrb[0].mxu0
      %v3816 = vadd.f32 %v2966, %v3815
      %v3817 = vpop.f32.mrb[0].mxu0
      %v3818 = vadd.f32 %v2967, %v3817
      %3819 = vmatprep.mubr.f32.mxu0 0.0
      %3820 = vmatmul.mubr.f32.gmra.mrb[0].mxu0 %v3253
      %v3821 = vpop.f32.mrb[0].mxu0
      %v3822 = vadd.f32 %v2972, %v3821
      %v3823 = vpop.f32.mrb[0].mxu0
      %v3824 = vadd.f32 %v2973, %v3823
      %3825 = vmatprep.mubr.f32.mxu0 0.0
      %3826 = vmatmul.mubr.f32.gmra.mrb[0].mxu0 %v3256
      %v3827 = vpop.f32.mrb[0].mxu0
      %v3828 = vadd.f32 %v2978, %v3827
      %v3829 = vpop.f32.mrb[0].mxu0
      %v3830 = vadd.f32 %v2979, %v3829
      %3831 = vmatprep.mubr.f32.mxu0 0.0
      %3832 = vmatmul.mubr.f32.gmra.mrb[0].mxu0 %v3259
      %v3833 = vpop.f32.mrb[0].mxu0
      %v3834 = vadd.f32 %v2984, %v3833
      %v3835 = vpop.f32.mrb[0].mxu0
      %v3836 = vadd.f32 %v2985, %v3835
      %3837 = vmatprep.mubr.f32.mxu0 0.0
      %3838 = vmatmul.mubr.f32.gmra.mrb[0].mxu0 %v3262
      %v3839 = vpop.f32.mrb[0].mxu0
      %v3840 = vadd.f32 %v2990, %v3839
      %v3841 = vpop.f32.mrb[0].mxu0
      %v3842 = vadd.f32 %v2991, %v3841
      %3843 = vmatprep.mubr.f32.mxu0 0.0
      %3844 = vmatmul.mubr.f32.gmra.mrb[0].mxu0 %v3265
      %v3845 = vpop.f32.mrb[0].mxu0
      %v3846 = vadd.f32 %v2996, %v3845
      %v3847 = vpop.f32.mrb[0].mxu0
      %v3848 = vadd.f32 %v2997, %v3847
      %3849 = vmatprep.mubr.f32.mxu0 0.0
      %3850 = vmatmul.mubr.f32.gmra.mrb[0].mxu0 %v3268
      %v3851 = vpop.f32.mrb[0].mxu0
      %v3852 = vadd.f32 %v3002, %v3851
      %v3853 = vpop.f32.mrb[0].mxu0
      %v3854 = vadd.f32 %v3003, %v3853
      %3855 = vmatprep.mubr.f32.mxu0 0.0
      %3856 = vmatmul.mubr.f32.gmra.mrb[0].mxu0 %v3271
      %v3857 = vpop.f32.mrb[0].mxu0
      %v3858 = vadd.f32 %v3008, %v3857
      %v3859 = vpop.f32.mrb[0].mxu0
      %v3860 = vadd.f32 %v3009, %v3859
      %3861 = vmatprep.mubr.f32.mxu0 0.0
      %3862 = vmatmul.mubr.f32.gmra.mrb[0].mxu0 %v3274
      %v3863 = vpop.f32.mrb[0].mxu0
      %v3864 = vadd.f32 %v3014, %v3863
      %v3865 = vpop.f32.mrb[0].mxu0
      %v3866 = vadd.f32 %v3015, %v3865
      %3867 = vmatprep.mubr.f32.mxu0 0.0
      %3868 = vmatmul.mubr.f32.gmra.mrb[0].mxu0 %v3277
      %v3869 = vpop.f32.mrb[0].mxu0
      %v3870 = vadd.f32 %v3020, %v3869
      %v3871 = vpop.f32.mrb[0].mxu0
      %v3872 = vadd.f32 %v3021, %v3871
      %3873 = vmatprep.mubr.f32.mxu0 0.0
      %3874 = vmatmul.mubr.f32.gmra.mrb[0].mxu0 %v3280
      %v3875 = vpop.f32.mrb[0].mxu0
      %v3876 = vadd.f32 %v3026, %v3875
      %v3877 = vpop.f32.mrb[0].mxu0
      %v3878 = vadd.f32 %v3027, %v3877
      %3879 = vmatprep.mubr.f32.mxu0 0.0
      %3880 = vmatmul.mubr.f32.gmra.mrb[0].mxu0 %v3283
      %v3881 = vpop.f32.mrb[0].mxu0
      %v3882 = vadd.f32 %v3032, %v3881
      %v3883 = vpop.f32.mrb[0].mxu0
      %v3884 = vadd.f32 %v3033, %v3883
      %3885 = vmatprep.mubr.f32.mxu0 0.0
      %3886 = vmatmul.mubr.f32.gmra.mrb[0].mxu0 %v3286
      %v3887 = vpop.f32.mrb[0].mxu0
      %v3888 = vadd.f32 %v3038, %v3887
      %v3889 = vpop.f32.mrb[0].mxu0
      %v3890 = vadd.f32 %v3039, %v3889
      %3891 = vmatprep.mubr.f32.mxu0 0.0
      %3892 = vmatmul.mubr.f32.gmra.mrb[0].mxu0 %v3289
      %v3893 = vpop.f32.mrb[0].mxu0
      %v3894 = vadd.f32 %v3044, %v3893
      %v3895 = vpop.f32.mrb[0].mxu0
      %v3896 = vadd.f32 %v3045, %v3895
      %3897 = vmatprep.mubr.f32.mxu0 0.0
      %3898 = vmatmul.mubr.f32.gmra.mrb[0].mxu0 %v3292
      %v3899 = vpop.f32.mrb[0].mxu0
      %v3900 = vadd.f32 %v3050, %v3899
      %v3901 = vpop.f32.mrb[0].mxu0
      %v3902 = vadd.f32 %v3051, %v3901
      %3903 = vdwg.mxu0
      %3904 = vmatprep.subr.mxu0 0.0
      %3905 = vmatpush1.xpose.msra.mxu0 %v3487
      %3906 = vmatprep.subr.mxu0 0.0
      %3907 = vmatpush1.xpose.msra.mxu0 %v3490
      %3908 = vmatprep.subr.mxu0 0.0
      %3909 = vmatpush1.xpose.msra.mxu0 %v3493
      %3910 = vmatprep.subr.mxu0 0.0
      %3911 = vmatpush1.xpose.msra.mxu0 %v3496
      %3912 = vmatprep.subr.mxu0 0.0
      %3913 = vmatpush1.xpose.msra.mxu0 %v3499
      %3914 = vmatprep.subr.mxu0 0.0
      %3915 = vmatpush1.xpose.msra.mxu0 %v3502
      %3916 = vmatprep.subr.mxu0 0.0
      %3917 = vmatpush1.xpose.msra.mxu0 %v3505
      %3918 = vmatprep.subr.mxu0 0.0
      %3919 = vmatpush1.xpose.msra.mxu0 %v3508
      %3920 = vmatprep.subr.mxu0 0.0
      %3921 = vmatpush1.xpose.msra.mxu0 %v3511
      %3922 = vmatprep.subr.mxu0 0.0
      %3923 = vmatpush1.xpose.msra.mxu0 %v3514
      %3924 = vmatprep.subr.mxu0 0.0
      %3925 = vmatpush1.xpose.msra.mxu0 %v3517
      %3926 = vmatprep.subr.mxu0 0.0
      %3927 = vmatpush1.xpose.msra.mxu0 %v3520
      %3928 = vmatprep.subr.mxu0 0.0
      %3929 = vmatpush1.xpose.msra.mxu0 %v3523
      %3930 = vmatprep.subr.mxu0 0.0
      %3931 = vmatpush1.xpose.msra.mxu0 %v3526
      %3932 = vmatprep.subr.mxu0 0.0
      %3933 = vmatpush1.xpose.msra.mxu0 %v3529
      %3934 = vmatprep.subr.mxu0 0.0
      %3935 = vmatpush1.xpose.msra.mxu0 %v3532
      %3936 = vmatprep.subr.mxu0 0.0
      %3937 = vmatpush1.xpose.msra.mxu0 %v3535
      %3938 = vmatprep.subr.mxu0 0.0
      %3939 = vmatpush1.xpose.msra.mxu0 %v3538
      %3940 = vmatprep.subr.mxu0 0.0
      %3941 = vmatpush1.xpose.msra.mxu0 %v3541
      %3942 = vmatprep.subr.mxu0 0.0
      %3943 = vmatpush1.xpose.msra.mxu0 %v3544
      %3944 = vmatprep.subr.mxu0 0.0
      %3945 = vmatpush1.xpose.msra.mxu0 %v3547
      %3946 = vmatprep.subr.mxu0 0.0
      %3947 = vmatpush1.xpose.msra.mxu0 %v3550
      %3948 = vmatprep.subr.mxu0 0.0
      %3949 = vmatpush1.xpose.msra.mxu0 %v3553
      %3950 = vmatprep.subr.mxu0 0.0
      %3951 = vmatpush1.xpose.msra.mxu0 %v3556
      %3952 = vmatprep.subr.mxu0 0.0
      %3953 = vmatpush1.xpose.msra.mxu0 %v3559
      %3954 = vmatprep.subr.mxu0 0.0
      %3955 = vmatpush1.xpose.msra.mxu0 %v3562
      %3956 = vmatprep.subr.mxu0 0.0
      %3957 = vmatpush1.xpose.msra.mxu0 %v3565
      %3958 = vmatprep.subr.mxu0 0.0
      %3959 = vmatpush1.xpose.msra.mxu0 %v3568
      %3960 = vmatprep.subr.mxu0 0.0
      %3961 = vmatpush1.xpose.msra.mxu0 %v3571
      %3962 = vmatprep.subr.mxu0 0.0
      %3963 = vmatpush1.xpose.msra.mxu0 %v3574
      %3964 = vmatprep.subr.mxu0 0.0
      %3965 = vmatpush1.xpose.msra.mxu0 %v3577
      %3966 = vmatprep.subr.mxu0 0.0
      %3967 = vmatpush1.xpose.msra.mxu0 %v3580
      %3968 = vmatprep.mubr.f32.mxu0 0.0
      %3969 = vmatmul.mubr.f32.gmra.mrb[0].mxu0 %v3247
      %v3970 = vpop.f32.mrb[0].mxu0
      %v3971 = vadd.f32 %v2962, %v3970
      %v3972 = vpop.f32.mrb[0].mxu0
      %v3973 = vadd.f32 %v2963, %v3972
      %3974 = vmatprep.mubr.f32.mxu0 0.0
      %3975 = vmatmul.mubr.f32.gmra.mrb[0].mxu0 %v3250
      %v3976 = vpop.f32.mrb[0].mxu0
      %v3977 = vadd.f32 %v2968, %v3976
      %v3978 = vpop.f32.mrb[0].mxu0
      %v3979 = vadd.f32 %v2969, %v3978
      %3980 = vmatprep.mubr.f32.mxu0 0.0
      %3981 = vmatmul.mubr.f32.gmra.mrb[0].mxu0 %v3253
      %v3982 = vpop.f32.mrb[0].mxu0
      %v3983 = vadd.f32 %v2974, %v3982
      %v3984 = vpop.f32.mrb[0].mxu0
      %v3985 = vadd.f32 %v2975, %v3984
      %3986 = vmatprep.mubr.f32.mxu0 0.0
      %3987 = vmatmul.mubr.f32.gmra.mrb[0].mxu0 %v3256
      %v3988 = vpop.f32.mrb[0].mxu0
      %v3989 = vadd.f32 %v2980, %v3988
      %v3990 = vpop.f32.mrb[0].mxu0
      %v3991 = vadd.f32 %v2981, %v3990
      %3992 = vmatprep.mubr.f32.mxu0 0.0
      %3993 = vmatmul.mubr.f32.gmra.mrb[0].mxu0 %v3259
      %v3994 = vpop.f32.mrb[0].mxu0
      %v3995 = vadd.f32 %v2986, %v3994
      %v3996 = vpop.f32.mrb[0].mxu0
      %v3997 = vadd.f32 %v2987, %v3996
      %3998 = vmatprep.mubr.f32.mxu0 0.0
      %3999 = vmatmul.mubr.f32.gmra.mrb[0].mxu0 %v3262
      %v4000 = vpop.f32.mrb[0].mxu0
      %v4001 = vadd.f32 %v2992, %v4000
      %v4002 = vpop.f32.mrb[0].mxu0
      %v4003 = vadd.f32 %v2993, %v4002
      %4004 = vmatprep.mubr.f32.mxu0 0.0
      %4005 = vmatmul.mubr.f32.gmra.mrb[0].mxu0 %v3265
      %v4006 = vpop.f32.mrb[0].mxu0
      %v4007 = vadd.f32 %v2998, %v4006
      %v4008 = vpop.f32.mrb[0].mxu0
      %v4009 = vadd.f32 %v2999, %v4008
      %4010 = vmatprep.mubr.f32.mxu0 0.0
      %4011 = vmatmul.mubr.f32.gmra.mrb[0].mxu0 %v3268
      %v4012 = vpop.f32.mrb[0].mxu0
      %v4013 = vadd.f32 %v3004, %v4012
      %v4014 = vpop.f32.mrb[0].mxu0
      %v4015 = vadd.f32 %v3005, %v4014
      %4016 = vmatprep.mubr.f32.mxu0 0.0
      %4017 = vmatmul.mubr.f32.gmra.mrb[0].mxu0 %v3271
      %v4018 = vpop.f32.mrb[0].mxu0
      %v4019 = vadd.f32 %v3010, %v4018
      %v4020 = vpop.f32.mrb[0].mxu0
      %v4021 = vadd.f32 %v3011, %v4020
      %4022 = vmatprep.mubr.f32.mxu0 0.0
      %4023 = vmatmul.mubr.f32.gmra.mrb[0].mxu0 %v3274
      %v4024 = vpop.f32.mrb[0].mxu0
      %v4025 = vadd.f32 %v3016, %v4024
      %v4026 = vpop.f32.mrb[0].mxu0
      %v4027 = vadd.f32 %v3017, %v4026
      %4028 = vmatprep.mubr.f32.mxu0 0.0
      %4029 = vmatmul.mubr.f32.gmra.mrb[0].mxu0 %v3277
      %v4030 = vpop.f32.mrb[0].mxu0
      %v4031 = vadd.f32 %v3022, %v4030
      %v4032 = vpop.f32.mrb[0].mxu0
      %v4033 = vadd.f32 %v3023, %v4032
      %4034 = vmatprep.mubr.f32.mxu0 0.0
      %4035 = vmatmul.mubr.f32.gmra.mrb[0].mxu0 %v3280
      %v4036 = vpop.f32.mrb[0].mxu0
      %v4037 = vadd.f32 %v3028, %v4036
      %v4038 = vpop.f32.mrb[0].mxu0
      %v4039 = vadd.f32 %v3029, %v4038
      %4040 = vmatprep.mubr.f32.mxu0 0.0
      %4041 = vmatmul.mubr.f32.gmra.mrb[0].mxu0 %v3283
      %v4042 = vpop.f32.mrb[0].mxu0
      %v4043 = vadd.f32 %v3034, %v4042
      %v4044 = vpop.f32.mrb[0].mxu0
      %v4045 = vadd.f32 %v3035, %v4044
      %4046 = vmatprep.mubr.f32.mxu0 0.0
      %4047 = vmatmul.mubr.f32.gmra.mrb[0].mxu0 %v3286
      %v4048 = vpop.f32.mrb[0].mxu0
      %v4049 = vadd.f32 %v3040, %v4048
      %v4050 = vpop.f32.mrb[0].mxu0
      %v4051 = vadd.f32 %v3041, %v4050
      %4052 = vmatprep.mubr.f32.mxu0 0.0
      %4053 = vmatmul.mubr.f32.gmra.mrb[0].mxu0 %v3289
      %v4054 = vpop.f32.mrb[0].mxu0
      %v4055 = vadd.f32 %v3046, %v4054
      %v4056 = vpop.f32.mrb[0].mxu0
      %v4057 = vadd.f32 %v3047, %v4056
      %4058 = vmatprep.mubr.f32.mxu0 0.0
      %4059 = vmatmul.mubr.f32.gmra.mrb[0].mxu0 %v3292
      %v4060 = vpop.f32.mrb[0].mxu0
      %v4061 = vadd.f32 %v3052, %v4060
      %v4062 = vpop.f32.mrb[0].mxu0
      %v4063 = vadd.f32 %v3053, %v4062
      %4064 = vdwg.mxu0
      %4065 = vmax.xlane.f32.xlu0 %v3649
      %v4066 = vpop.xlane.xlu0 %4065
      %4067 = vmax.xlane.f32.xlu0 %v3655
      %v4068 = vpop.xlane.xlu0 %4067
      %4069 = vmax.xlane.f32.xlu0 %v3661
      %v4070 = vpop.xlane.xlu0 %4069
      %4071 = vmax.xlane.f32.xlu0 %v3667
      %v4072 = vpop.xlane.xlu0 %4071
      %4073 = vmax.xlane.f32.xlu0 %v3673
      %v4074 = vpop.xlane.xlu0 %4073
      %4075 = vmax.xlane.f32.xlu0 %v3679
      %v4076 = vpop.xlane.xlu0 %4075
      %4077 = vmax.xlane.f32.xlu0 %v3685
      %v4078 = vpop.xlane.xlu0 %4077
      %4079 = vmax.xlane.f32.xlu0 %v3691
      %v4080 = vpop.xlane.xlu0 %4079
      %4081 = vmax.xlane.f32.xlu0 %v3697
      %v4082 = vpop.xlane.xlu0 %4081
      %4083 = vmax.xlane.f32.xlu0 %v3703
      %v4084 = vpop.xlane.xlu0 %4083
      %4085 = vmax.xlane.f32.xlu0 %v3709
      %v4086 = vpop.xlane.xlu0 %4085
      %4087 = vmax.xlane.f32.xlu0 %v3715
      %v4088 = vpop.xlane.xlu0 %4087
      %4089 = vmax.xlane.f32.xlu0 %v3721
      %v4090 = vpop.xlane.xlu0 %4089
      %4091 = vmax.xlane.f32.xlu0 %v3727
      %v4092 = vpop.xlane.xlu0 %4091
      %4093 = vmax.xlane.f32.xlu0 %v3733
      %v4094 = vpop.xlane.xlu0 %4093
      %4095 = vmax.xlane.f32.xlu0 %v3739
      %v4096 = vpop.xlane.xlu0 %4095
      %v4097 = vsub.f32 %v3649, %v4066
      %v4098 = vsub.f32 %v3655, %v4068
      %v4099 = vsub.f32 %v3661, %v4070
      %v4100 = vsub.f32 %v3667, %v4072
      %v4101 = vsub.f32 %v3673, %v4074
      %v4102 = vsub.f32 %v3679, %v4076
      %v4103 = vsub.f32 %v3685, %v4078
      %v4104 = vsub.f32 %v3691, %v4080
      %v4105 = vsub.f32 %v3697, %v4082
      %v4106 = vsub.f32 %v3703, %v4084
      %v4107 = vsub.f32 %v3709, %v4086
      %v4108 = vsub.f32 %v3715, %v4088
      %v4109 = vsub.f32 %v3721, %v4090
      %v4110 = vsub.f32 %v3727, %v4092
      %v4111 = vsub.f32 %v3733, %v4094
      %v4112 = vsub.f32 %v3739, %v4096
      %v4113 = vmul.f32 %v4097, 1.442695
      %v4114 = vpow.pop %v4113
      %v4115 = vmul.f32 %v4098, 1.442695
      %v4116 = vpow.pop %v4115
      %v4117 = vmul.f32 %v4099, 1.442695
      %v4118 = vpow.pop %v4117
      %v4119 = vmul.f32 %v4100, 1.442695
      %v4120 = vpow.pop %v4119
      %v4121 = vmul.f32 %v4101, 1.442695
      %v4122 = vpow.pop %v4121
      %v4123 = vmul.f32 %v4102, 1.442695
      %v4124 = vpow.pop %v4123
      %v4125 = vmul.f32 %v4103, 1.442695
      %v4126 = vpow.pop %v4125
      %v4127 = vmul.f32 %v4104, 1.442695
      %v4128 = vpow.pop %v4127
      %v4129 = vmul.f32 %v4105, 1.442695
      %v4130 = vpow.pop %v4129
      %v4131 = vmul.f32 %v4106, 1.442695
      %v4132 = vpow.pop %v4131
      %v4133 = vmul.f32 %v4107, 1.442695
      %v4134 = vpow.pop %v4133
      %v4135 = vmul.f32 %v4108, 1.442695
      %v4136 = vpow.pop %v4135
      %v4137 = vmul.f32 %v4109, 1.442695
      %v4138 = vpow.pop %v4137
      %v4139 = vmul.f32 %v4110, 1.442695
      %v4140 = vpow.pop %v4139
      %v4141 = vmul.f32 %v4111, 1.442695
      %v4142 = vpow.pop %v4141
      %v4143 = vmul.f32 %v4112, 1.442695
      %v4144 = vpow.pop %v4143
      %4145 = vadd.xlane.f32.xlu0 %v4114
      %v4146 = vpop.xlane.xlu0 %4145
      %4147 = vadd.xlane.f32.xlu0 %v4116
      %v4148 = vpop.xlane.xlu0 %4147
      %4149 = vadd.xlane.f32.xlu0 %v4118
      %v4150 = vpop.xlane.xlu0 %4149
      %4151 = vadd.xlane.f32.xlu0 %v4120
      %v4152 = vpop.xlane.xlu0 %4151
      %4153 = vadd.xlane.f32.xlu0 %v4122
      %v4154 = vpop.xlane.xlu0 %4153
      %4155 = vadd.xlane.f32.xlu0 %v4124
      %v4156 = vpop.xlane.xlu0 %4155
      %4157 = vadd.xlane.f32.xlu0 %v4126
      %v4158 = vpop.xlane.xlu0 %4157
      %4159 = vadd.xlane.f32.xlu0 %v4128
      %v4160 = vpop.xlane.xlu0 %4159
      %4161 = vadd.xlane.f32.xlu0 %v4130
      %v4162 = vpop.xlane.xlu0 %4161
      %4163 = vadd.xlane.f32.xlu0 %v4132
      %v4164 = vpop.xlane.xlu0 %4163
      %4165 = vadd.xlane.f32.xlu0 %v4134
      %v4166 = vpop.xlane.xlu0 %4165
      %4167 = vadd.xlane.f32.xlu0 %v4136
      %v4168 = vpop.xlane.xlu0 %4167
      %4169 = vadd.xlane.f32.xlu0 %v4138
      %v4170 = vpop.xlane.xlu0 %4169
      %4171 = vadd.xlane.f32.xlu0 %v4140
      %v4172 = vpop.xlane.xlu0 %4171
      %4173 = vadd.xlane.f32.xlu0 %v4142
      %v4174 = vpop.xlane.xlu0 %4173
      %4175 = vadd.xlane.f32.xlu0 %v4144
      %v4176 = vpop.xlane.xlu0 %4175
      %v4177 = vrcp.pop %v4146
      %v4178 = vrcp.pop %v4148
      %v4179 = vrcp.pop %v4150
      %v4180 = vrcp.pop %v4152
      %v4181 = vrcp.pop %v4154
      %v4182 = vrcp.pop %v4156
      %v4183 = vrcp.pop %v4158
      %v4184 = vrcp.pop %v4160
      %v4185 = vrcp.pop %v4162
      %v4186 = vrcp.pop %v4164
      %v4187 = vrcp.pop %v4166
      %v4188 = vrcp.pop %v4168
      %v4189 = vrcp.pop %v4170
      %v4190 = vrcp.pop %v4172
      %v4191 = vrcp.pop %v4174
      %v4192 = vrcp.pop %v4176
      %v4193 = vmul.f32 %v4114, %v4177
      %v4194 = vmul.f32 %v4116, %v4178
      %v4195 = vmul.f32 %v4118, %v4179
      %v4196 = vmul.f32 %v4120, %v4180
      %v4197 = vmul.f32 %v4122, %v4181
      %v4198 = vmul.f32 %v4124, %v4182
      %v4199 = vmul.f32 %v4126, %v4183
      %v4200 = vmul.f32 %v4128, %v4184
      %v4201 = vmul.f32 %v4130, %v4185
      %v4202 = vmul.f32 %v4132, %v4186
      %v4203 = vmul.f32 %v4134, %v4187
      %v4204 = vmul.f32 %v4136, %v4188
      %v4205 = vmul.f32 %v4138, %v4189
      %v4206 = vmul.f32 %v4140, %v4190
      %v4207 = vmul.f32 %v4142, %v4191
      %v4208 = vmul.f32 %v4144, %v4192
      %4209 = vst [vmem:[#allocation3] sm:$0xff] %v4193
      %4210 = vst [vmem:[#allocation3 + $0x30] sm:$0xff] %v4194
      %4211 = vst [vmem:[#allocation3 + $0x60] sm:$0xff] %v4195
      %4212 = vst [vmem:[#allocation3 + $0x90] sm:$0xff] %v4196
      %4213 = vst [vmem:[#allocation3 + $0xc0] sm:$0xff] %v4197
      %4214 = vst [vmem:[#allocation3 + $0xf0] sm:$0xff] %v4198
      %4215 = vst [vmem:[#allocation3 + $0x120] sm:$0xff] %v4199
      %4216 = vst [vmem:[#allocation3 + $0x150] sm:$0xff] %v4200
      %4217 = vst [vmem:[#allocation3 + $0x180] sm:$0xff] %v4201
      %4218 = vst [vmem:[#allocation3 + $0x1b0] sm:$0xff] %v4202
      %4219 = vst [vmem:[#allocation3 + $0x1e0] sm:$0xff] %v4203
      %4220 = vst [vmem:[#allocation3 + $0x210] sm:$0xff] %v4204
      %4221 = vst [vmem:[#allocation3 + $0x240] sm:$0xff] %v4205
      %4222 = vst [vmem:[#allocation3 + $0x270] sm:$0xff] %v4206
      %4223 = vst [vmem:[#allocation3 + $0x2a0] sm:$0xff] %v4207
      %4224 = vst [vmem:[#allocation3 + $0x2d0] sm:$0xff] %v4208
      %4225 = vmax.xlane.f32.xlu0 %v3651
      %v4226 = vpop.xlane.xlu0 %4225
      %4227 = vmax.xlane.f32.xlu0 %v3657
      %v4228 = vpop.xlane.xlu0 %4227
      %4229 = vmax.xlane.f32.xlu0 %v3663
      %v4230 = vpop.xlane.xlu0 %4229
      %4231 = vmax.xlane.f32.xlu0 %v3669
      %v4232 = vpop.xlane.xlu0 %4231
      %4233 = vmax.xlane.f32.xlu0 %v3675
      %v4234 = vpop.xlane.xlu0 %4233
      %4235 = vmax.xlane.f32.xlu0 %v3681
      %v4236 = vpop.xlane.xlu0 %4235
      %4237 = vmax.xlane.f32.xlu0 %v3687
      %v4238 = vpop.xlane.xlu0 %4237
      %4239 = vmax.xlane.f32.xlu0 %v3693
      %v4240 = vpop.xlane.xlu0 %4239
      %4241 = vmax.xlane.f32.xlu0 %v3699
      %v4242 = vpop.xlane.xlu0 %4241
      %4243 = vmax.xlane.f32.xlu0 %v3705
      %v4244 = vpop.xlane.xlu0 %4243
      %4245 = vmax.xlane.f32.xlu0 %v3711
      %v4246 = vpop.xlane.xlu0 %4245
      %4247 = vmax.xlane.f32.xlu0 %v3717
      %v4248 = vpop.xlane.xlu0 %4247
      %4249 = vmax.xlane.f32.xlu0 %v3723
      %v4250 = vpop.xlane.xlu0 %4249
      %4251 = vmax.xlane.f32.xlu0 %v3729
      %v4252 = vpop.xlane.xlu0 %4251
      %4253 = vmax.xlane.f32.xlu0 %v3735
      %v4254 = vpop.xlane.xlu0 %4253
      %4255 = vmax.xlane.f32.xlu0 %v3741
      %v4256 = vpop.xlane.xlu0 %4255
      %v4257 = vsub.f32 %v3651, %v4226
      %v4258 = vsub.f32 %v3657, %v4228
      %v4259 = vsub.f32 %v3663, %v4230
      %v4260 = vsub.f32 %v3669, %v4232
      %v4261 = vsub.f32 %v3675, %v4234
      %v4262 = vsub.f32 %v3681, %v4236
      %v4263 = vsub.f32 %v3687, %v4238
      %v4264 = vsub.f32 %v3693, %v4240
      %v4265 = vsub.f32 %v3699, %v4242
      %v4266 = vsub.f32 %v3705, %v4244
      %v4267 = vsub.f32 %v3711, %v4246
      %v4268 = vsub.f32 %v3717, %v4248
      %v4269 = vsub.f32 %v3723, %v4250
      %v4270 = vsub.f32 %v3729, %v4252
      %v4271 = vsub.f32 %v3735, %v4254
      %v4272 = vsub.f32 %v3741, %v4256
      %v4273 = vmul.f32 %v4257, 1.442695
      %v4274 = vpow.pop %v4273
      %v4275 = vmul.f32 %v4258, 1.442695
      %v4276 = vpow.pop %v4275
      %v4277 = vmul.f32 %v4259, 1.442695
      %v4278 = vpow.pop %v4277
      %v4279 = vmul.f32 %v4260, 1.442695
      %v4280 = vpow.pop %v4279
      %v4281 = vmul.f32 %v4261, 1.442695
      %v4282 = vpow.pop %v4281
      %v4283 = vmul.f32 %v4262, 1.442695
      %v4284 = vpow.pop %v4283
      %v4285 = vmul.f32 %v4263, 1.442695
      %v4286 = vpow.pop %v4285
      %v4287 = vmul.f32 %v4264, 1.442695
      %v4288 = vpow.pop %v4287
      %v4289 = vmul.f32 %v4265, 1.442695
      %v4290 = vpow.pop %v4289
      %v4291 = vmul.f32 %v4266, 1.442695
      %v4292 = vpow.pop %v4291
      %v4293 = vmul.f32 %v4267, 1.442695
      %v4294 = vpow.pop %v4293
      %v4295 = vmul.f32 %v4268, 1.442695
      %v4296 = vpow.pop %v4295
      %v4297 = vmul.f32 %v4269, 1.442695
      %v4298 = vpow.pop %v4297
      %v4299 = vmul.f32 %v4270, 1.442695
      %v4300 = vpow.pop %v4299
      %v4301 = vmul.f32 %v4271, 1.442695
      %v4302 = vpow.pop %v4301
      %v4303 = vmul.f32 %v4272, 1.442695
      %v4304 = vpow.pop %v4303
      %4305 = vadd.xlane.f32.xlu0 %v4274
      %v4306 = vpop.xlane.xlu0 %4305
      %4307 = vadd.xlane.f32.xlu0 %v4276
      %v4308 = vpop.xlane.xlu0 %4307
      %4309 = vadd.xlane.f32.xlu0 %v4278
      %v4310 = vpop.xlane.xlu0 %4309
      %4311 = vadd.xlane.f32.xlu0 %v4280
      %v4312 = vpop.xlane.xlu0 %4311
      %4313 = vadd.xlane.f32.xlu0 %v4282
      %v4314 = vpop.xlane.xlu0 %4313
      %4315 = vadd.xlane.f32.xlu0 %v4284
      %v4316 = vpop.xlane.xlu0 %4315
      %4317 = vadd.xlane.f32.xlu0 %v4286
      %v4318 = vpop.xlane.xlu0 %4317
      %4319 = vadd.xlane.f32.xlu0 %v4288
      %v4320 = vpop.xlane.xlu0 %4319
      %4321 = vadd.xlane.f32.xlu0 %v4290
      %v4322 = vpop.xlane.xlu0 %4321
      %4323 = vadd.xlane.f32.xlu0 %v4292
      %v4324 = vpop.xlane.xlu0 %4323
      %4325 = vadd.xlane.f32.xlu0 %v4294
      %v4326 = vpop.xlane.xlu0 %4325
      %4327 = vadd.xlane.f32.xlu0 %v4296
      %v4328 = vpop.xlane.xlu0 %4327
      %4329 = vadd.xlane.f32.xlu0 %v4298
      %v4330 = vpop.xlane.xlu0 %4329
      %4331 = vadd.xlane.f32.xlu0 %v4300
      %v4332 = vpop.xlane.xlu0 %4331
      %4333 = vadd.xlane.f32.xlu0 %v4302
      %v4334 = vpop.xlane.xlu0 %4333
      %4335 = vadd.xlane.f32.xlu0 %v4304
      %v4336 = vpop.xlane.xlu0 %4335
      %v4337 = vrcp.pop %v4306
      %v4338 = vrcp.pop %v4308
      %v4339 = vrcp.pop %v4310
      %v4340 = vrcp.pop %v4312
      %v4341 = vrcp.pop %v4314
      %v4342 = vrcp.pop %v4316
      %v4343 = vrcp.pop %v4318
      %v4344 = vrcp.pop %v4320
      %v4345 = vrcp.pop %v4322
      %v4346 = vrcp.pop %v4324
      %v4347 = vrcp.pop %v4326
      %v4348 = vrcp.pop %v4328
      %v4349 = vrcp.pop %v4330
      %v4350 = vrcp.pop %v4332
      %v4351 = vrcp.pop %v4334
      %v4352 = vrcp.pop %v4336
      %v4353 = vmul.f32 %v4274, %v4337
      %v4354 = vmul.f32 %v4276, %v4338
      %v4355 = vmul.f32 %v4278, %v4339
      %v4356 = vmul.f32 %v4280, %v4340
      %v4357 = vmul.f32 %v4282, %v4341
      %v4358 = vmul.f32 %v4284, %v4342
      %v4359 = vmul.f32 %v4286, %v4343
      %v4360 = vmul.f32 %v4288, %v4344
      %v4361 = vmul.f32 %v4290, %v4345
      %v4362 = vmul.f32 %v4292, %v4346
      %v4363 = vmul.f32 %v4294, %v4347
      %v4364 = vmul.f32 %v4296, %v4348
      %v4365 = vmul.f32 %v4298, %v4349
      %v4366 = vmul.f32 %v4300, %v4350
      %v4367 = vmul.f32 %v4302, %v4351
      %v4368 = vmul.f32 %v4304, %v4352
      %4369 = vst [vmem:[#allocation3 + $0x8] sm:$0xff] %v4353
      %4370 = vst [vmem:[#allocation3 + $0x38] sm:$0xff] %v4354
      %4371 = vst [vmem:[#allocation3 + $0x68] sm:$0xff] %v4355
      %4372 = vst [vmem:[#allocation3 + $0x98] sm:$0xff] %v4356
      %4373 = vst [vmem:[#allocation3 + $0xc8] sm:$0xff] %v4357
      %4374 = vst [vmem:[#allocation3 + $0xf8] sm:$0xff] %v4358
      %4375 = vst [vmem:[#allocation3 + $0x128] sm:$0xff] %v4359
      %4376 = vst [vmem:[#allocation3 + $0x158] sm:$0xff] %v4360
      %4377 = vst [vmem:[#allocation3 + $0x188] sm:$0xff] %v4361
      %4378 = vst [vmem:[#allocation3 + $0x1b8] sm:$0xff] %v4362
      %4379 = vst [vmem:[#allocation3 + $0x1e8] sm:$0xff] %v4363
      %4380 = vst [vmem:[#allocation3 + $0x218] sm:$0xff] %v4364
      %4381 = vst [vmem:[#allocation3 + $0x248] sm:$0xff] %v4365
      %4382 = vst [vmem:[#allocation3 + $0x278] sm:$0xff] %v4366
      %4383 = vst [vmem:[#allocation3 + $0x2a8] sm:$0xff] %v4367
      %4384 = vst [vmem:[#allocation3 + $0x2d8] sm:$0xff] %v4368
      %4385 = vmax.xlane.f32.xlu0 %v3810
      %v4386 = vpop.xlane.xlu0 %4385
      %4387 = vmax.xlane.f32.xlu0 %v3816
      %v4388 = vpop.xlane.xlu0 %4387
      %4389 = vmax.xlane.f32.xlu0 %v3822
      %v4390 = vpop.xlane.xlu0 %4389
      %4391 = vmax.xlane.f32.xlu0 %v3828
      %v4392 = vpop.xlane.xlu0 %4391
      %4393 = vmax.xlane.f32.xlu0 %v3834
      %v4394 = vpop.xlane.xlu0 %4393
      %4395 = vmax.xlane.f32.xlu0 %v3840
      %v4396 = vpop.xlane.xlu0 %4395
      %4397 = vmax.xlane.f32.xlu0 %v3846
      %v4398 = vpop.xlane.xlu0 %4397
      %4399 = vmax.xlane.f32.xlu0 %v3852
      %v4400 = vpop.xlane.xlu0 %4399
      %4401 = vmax.xlane.f32.xlu0 %v3858
      %v4402 = vpop.xlane.xlu0 %4401
      %4403 = vmax.xlane.f32.xlu0 %v3864
      %v4404 = vpop.xlane.xlu0 %4403
      %4405 = vmax.xlane.f32.xlu0 %v3870
      %v4406 = vpop.xlane.xlu0 %4405
      %4407 = vmax.xlane.f32.xlu0 %v3876
      %v4408 = vpop.xlane.xlu0 %4407
      %4409 = vmax.xlane.f32.xlu0 %v3882
      %v4410 = vpop.xlane.xlu0 %4409
      %4411 = vmax.xlane.f32.xlu0 %v3888
      %v4412 = vpop.xlane.xlu0 %4411
      %4413 = vmax.xlane.f32.xlu0 %v3894
      %v4414 = vpop.xlane.xlu0 %4413
      %4415 = vmax.xlane.f32.xlu0 %v3900
      %v4416 = vpop.xlane.xlu0 %4415
      %v4417 = vsub.f32 %v3810, %v4386
      %v4418 = vsub.f32 %v3816, %v4388
      %v4419 = vsub.f32 %v3822, %v4390
      %v4420 = vsub.f32 %v3828, %v4392
      %v4421 = vsub.f32 %v3834, %v4394
      %v4422 = vsub.f32 %v3840, %v4396
      %v4423 = vsub.f32 %v3846, %v4398
      %v4424 = vsub.f32 %v3852, %v4400
      %v4425 = vsub.f32 %v3858, %v4402
      %v4426 = vsub.f32 %v3864, %v4404
      %v4427 = vsub.f32 %v3870, %v4406
      %v4428 = vsub.f32 %v3876, %v4408
      %v4429 = vsub.f32 %v3882, %v4410
      %v4430 = vsub.f32 %v3888, %v4412
      %v4431 = vsub.f32 %v3894, %v4414
      %v4432 = vsub.f32 %v3900, %v4416
      %v4433 = vmul.f32 %v4417, 1.442695
      %v4434 = vpow.pop %v4433
      %v4435 = vmul.f32 %v4418, 1.442695
      %v4436 = vpow.pop %v4435
      %v4437 = vmul.f32 %v4419, 1.442695
      %v4438 = vpow.pop %v4437
      %v4439 = vmul.f32 %v4420, 1.442695
      %v4440 = vpow.pop %v4439
      %v4441 = vmul.f32 %v4421, 1.442695
      %v4442 = vpow.pop %v4441
      %v4443 = vmul.f32 %v4422, 1.442695
      %v4444 = vpow.pop %v4443
      %v4445 = vmul.f32 %v4423, 1.442695
      %v4446 = vpow.pop %v4445
      %v4447 = vmul.f32 %v4424, 1.442695
      %v4448 = vpow.pop %v4447
      %v4449 = vmul.f32 %v4425, 1.442695
      %v4450 = vpow.pop %v4449
      %v4451 = vmul.f32 %v4426, 1.442695
      %v4452 = vpow.pop %v4451
      %v4453 = vmul.f32 %v4427, 1.442695
      %v4454 = vpow.pop %v4453
      %v4455 = vmul.f32 %v4428, 1.442695
      %v4456 = vpow.pop %v4455
      %v4457 = vmul.f32 %v4429, 1.442695
      %v4458 = vpow.pop %v4457
      %v4459 = vmul.f32 %v4430, 1.442695
      %v4460 = vpow.pop %v4459
      %v4461 = vmul.f32 %v4431, 1.442695
      %v4462 = vpow.pop %v4461
      %v4463 = vmul.f32 %v4432, 1.442695
      %v4464 = vpow.pop %v4463
      %4465 = vadd.xlane.f32.xlu0 %v4434
      %v4466 = vpop.xlane.xlu0 %4465
      %4467 = vadd.xlane.f32.xlu0 %v4436
      %v4468 = vpop.xlane.xlu0 %4467
      %4469 = vadd.xlane.f32.xlu0 %v4438
      %v4470 = vpop.xlane.xlu0 %4469
      %4471 = vadd.xlane.f32.xlu0 %v4440
      %v4472 = vpop.xlane.xlu0 %4471
      %4473 = vadd.xlane.f32.xlu0 %v4442
      %v4474 = vpop.xlane.xlu0 %4473
      %4475 = vadd.xlane.f32.xlu0 %v4444
      %v4476 = vpop.xlane.xlu0 %4475
      %4477 = vadd.xlane.f32.xlu0 %v4446
      %v4478 = vpop.xlane.xlu0 %4477
      %4479 = vadd.xlane.f32.xlu0 %v4448
      %v4480 = vpop.xlane.xlu0 %4479
      %4481 = vadd.xlane.f32.xlu0 %v4450
      %v4482 = vpop.xlane.xlu0 %4481
      %4483 = vadd.xlane.f32.xlu0 %v4452
      %v4484 = vpop.xlane.xlu0 %4483
      %4485 = vadd.xlane.f32.xlu0 %v4454
      %v4486 = vpop.xlane.xlu0 %4485
      %4487 = vadd.xlane.f32.xlu0 %v4456
      %v4488 = vpop.xlane.xlu0 %4487
      %4489 = vadd.xlane.f32.xlu0 %v4458
      %v4490 = vpop.xlane.xlu0 %4489
      %4491 = vadd.xlane.f32.xlu0 %v4460
      %v4492 = vpop.xlane.xlu0 %4491
      %4493 = vadd.xlane.f32.xlu0 %v4462
      %v4494 = vpop.xlane.xlu0 %4493
      %4495 = vadd.xlane.f32.xlu0 %v4464
      %v4496 = vpop.xlane.xlu0 %4495
      %v4497 = vrcp.pop %v4466
      %v4498 = vrcp.pop %v4468
      %v4499 = vrcp.pop %v4470
      %v4500 = vrcp.pop %v4472
      %v4501 = vrcp.pop %v4474
      %v4502 = vrcp.pop %v4476
      %v4503 = vrcp.pop %v4478
      %v4504 = vrcp.pop %v4480
      %v4505 = vrcp.pop %v4482
      %v4506 = vrcp.pop %v4484
      %v4507 = vrcp.pop %v4486
      %v4508 = vrcp.pop %v4488
      %v4509 = vrcp.pop %v4490
      %v4510 = vrcp.pop %v4492
      %v4511 = vrcp.pop %v4494
      %v4512 = vrcp.pop %v4496
      %v4513 = vmul.f32 %v4434, %v4497
      %v4514 = vmul.f32 %v4436, %v4498
      %v4515 = vmul.f32 %v4438, %v4499
      %v4516 = vmul.f32 %v4440, %v4500
      %v4517 = vmul.f32 %v4442, %v4501
      %v4518 = vmul.f32 %v4444, %v4502
      %v4519 = vmul.f32 %v4446, %v4503
      %v4520 = vmul.f32 %v4448, %v4504
      %v4521 = vmul.f32 %v4450, %v4505
      %v4522 = vmul.f32 %v4452, %v4506
      %v4523 = vmul.f32 %v4454, %v4507
      %v4524 = vmul.f32 %v4456, %v4508
      %v4525 = vmul.f32 %v4458, %v4509
      %v4526 = vmul.f32 %v4460, %v4510
      %v4527 = vmul.f32 %v4462, %v4511
      %v4528 = vmul.f32 %v4464, %v4512
      %4529 = vst [vmem:[#allocation3 + $0x10] sm:$0xff] %v4513
      %4530 = vst [vmem:[#allocation3 + $0x40] sm:$0xff] %v4514
      %4531 = vst [vmem:[#allocation3 + $0x70] sm:$0xff] %v4515
      %4532 = vst [vmem:[#allocation3 + $0xa0] sm:$0xff] %v4516
      %4533 = vst [vmem:[#allocation3 + $0xd0] sm:$0xff] %v4517
      %4534 = vst [vmem:[#allocation3 + $0x100] sm:$0xff] %v4518
      %4535 = vst [vmem:[#allocation3 + $0x130] sm:$0xff] %v4519
      %4536 = vst [vmem:[#allocation3 + $0x160] sm:$0xff] %v4520
      %4537 = vst [vmem:[#allocation3 + $0x190] sm:$0xff] %v4521
      %4538 = vst [vmem:[#allocation3 + $0x1c0] sm:$0xff] %v4522
      %4539 = vst [vmem:[#allocation3 + $0x1f0] sm:$0xff] %v4523
      %4540 = vst [vmem:[#allocation3 + $0x220] sm:$0xff] %v4524
      %4541 = vst [vmem:[#allocation3 + $0x250] sm:$0xff] %v4525
      %4542 = vst [vmem:[#allocation3 + $0x280] sm:$0xff] %v4526
      %4543 = vst [vmem:[#allocation3 + $0x2b0] sm:$0xff] %v4527
      %4544 = vst [vmem:[#allocation3 + $0x2e0] sm:$0xff] %v4528
      %4545 = vmax.xlane.f32.xlu0 %v3812
      %v4546 = vpop.xlane.xlu0 %4545
      %4547 = vmax.xlane.f32.xlu0 %v3818
      %v4548 = vpop.xlane.xlu0 %4547
      %4549 = vmax.xlane.f32.xlu0 %v3824
      %v4550 = vpop.xlane.xlu0 %4549
      %4551 = vmax.xlane.f32.xlu0 %v3830
      %v4552 = vpop.xlane.xlu0 %4551
      %4553 = vmax.xlane.f32.xlu0 %v3836
      %v4554 = vpop.xlane.xlu0 %4553
      %4555 = vmax.xlane.f32.xlu0 %v3842
      %v4556 = vpop.xlane.xlu0 %4555
      %4557 = vmax.xlane.f32.xlu0 %v3848
      %v4558 = vpop.xlane.xlu0 %4557
      %4559 = vmax.xlane.f32.xlu0 %v3854
      %v4560 = vpop.xlane.xlu0 %4559
      %4561 = vmax.xlane.f32.xlu0 %v3860
      %v4562 = vpop.xlane.xlu0 %4561
      %4563 = vmax.xlane.f32.xlu0 %v3866
      %v4564 = vpop.xlane.xlu0 %4563
      %4565 = vmax.xlane.f32.xlu0 %v3872
      %v4566 = vpop.xlane.xlu0 %4565
      %4567 = vmax.xlane.f32.xlu0 %v3878
      %v4568 = vpop.xlane.xlu0 %4567
      %4569 = vmax.xlane.f32.xlu0 %v3884
      %v4570 = vpop.xlane.xlu0 %4569
      %4571 = vmax.xlane.f32.xlu0 %v3890
      %v4572 = vpop.xlane.xlu0 %4571
      %4573 = vmax.xlane.f32.xlu0 %v3896
      %v4574 = vpop.xlane.xlu0 %4573
      %4575 = vmax.xlane.f32.xlu0 %v3902
      %v4576 = vpop.xlane.xlu0 %4575
      %v4577 = vsub.f32 %v3812, %v4546
      %v4578 = vsub.f32 %v3818, %v4548
      %v4579 = vsub.f32 %v3824, %v4550
      %v4580 = vsub.f32 %v3830, %v4552
      %v4581 = vsub.f32 %v3836, %v4554
      %v4582 = vsub.f32 %v3842, %v4556
      %v4583 = vsub.f32 %v3848, %v4558
      %v4584 = vsub.f32 %v3854, %v4560
      %v4585 = vsub.f32 %v3860, %v4562
      %v4586 = vsub.f32 %v3866, %v4564
      %v4587 = vsub.f32 %v3872, %v4566
      %v4588 = vsub.f32 %v3878, %v4568
      %v4589 = vsub.f32 %v3884, %v4570
      %v4590 = vsub.f32 %v3890, %v4572
      %v4591 = vsub.f32 %v3896, %v4574
      %v4592 = vsub.f32 %v3902, %v4576
      %v4593 = vmul.f32 %v4577, 1.442695
      %v4594 = vpow.pop %v4593
      %v4595 = vmul.f32 %v4578, 1.442695
      %v4596 = vpow.pop %v4595
      %v4597 = vmul.f32 %v4579, 1.442695
      %v4598 = vpow.pop %v4597
      %v4599 = vmul.f32 %v4580, 1.442695
      %v4600 = vpow.pop %v4599
      %v4601 = vmul.f32 %v4581, 1.442695
      %v4602 = vpow.pop %v4601
      %v4603 = vmul.f32 %v4582, 1.442695
      %v4604 = vpow.pop %v4603
      %v4605 = vmul.f32 %v4583, 1.442695
      %v4606 = vpow.pop %v4605
      %v4607 = vmul.f32 %v4584, 1.442695
      %v4608 = vpow.pop %v4607
      %v4609 = vmul.f32 %v4585, 1.442695
      %v4610 = vpow.pop %v4609
      %v4611 = vmul.f32 %v4586, 1.442695
      %v4612 = vpow.pop %v4611
      %v4613 = vmul.f32 %v4587, 1.442695
      %v4614 = vpow.pop %v4613
      %v4615 = vmul.f32 %v4588, 1.442695
      %v4616 = vpow.pop %v4615
      %v4617 = vmul.f32 %v4589, 1.442695
      %v4618 = vpow.pop %v4617
      %v4619 = vmul.f32 %v4590, 1.442695
      %v4620 = vpow.pop %v4619
      %v4621 = vmul.f32 %v4591, 1.442695
      %v4622 = vpow.pop %v4621
      %v4623 = vmul.f32 %v4592, 1.442695
      %v4624 = vpow.pop %v4623
      %4625 = vadd.xlane.f32.xlu0 %v4594
      %v4626 = vpop.xlane.xlu0 %4625
      %4627 = vadd.xlane.f32.xlu0 %v4596
      %v4628 = vpop.xlane.xlu0 %4627
      %4629 = vadd.xlane.f32.xlu0 %v4598
      %v4630 = vpop.xlane.xlu0 %4629
      %4631 = vadd.xlane.f32.xlu0 %v4600
      %v4632 = vpop.xlane.xlu0 %4631
      %4633 = vadd.xlane.f32.xlu0 %v4602
      %v4634 = vpop.xlane.xlu0 %4633
      %4635 = vadd.xlane.f32.xlu0 %v4604
      %v4636 = vpop.xlane.xlu0 %4635
      %4637 = vadd.xlane.f32.xlu0 %v4606
      %v4638 = vpop.xlane.xlu0 %4637
      %4639 = vadd.xlane.f32.xlu0 %v4608
      %v4640 = vpop.xlane.xlu0 %4639
      %4641 = vadd.xlane.f32.xlu0 %v4610
      %v4642 = vpop.xlane.xlu0 %4641
      %4643 = vadd.xlane.f32.xlu0 %v4612
      %v4644 = vpop.xlane.xlu0 %4643
      %4645 = vadd.xlane.f32.xlu0 %v4614
      %v4646 = vpop.xlane.xlu0 %4645
      %4647 = vadd.xlane.f32.xlu0 %v4616
      %v4648 = vpop.xlane.xlu0 %4647
      %4649 = vadd.xlane.f32.xlu0 %v4618
      %v4650 = vpop.xlane.xlu0 %4649
      %4651 = vadd.xlane.f32.xlu0 %v4620
      %v4652 = vpop.xlane.xlu0 %4651
      %4653 = vadd.xlane.f32.xlu0 %v4622
      %v4654 = vpop.xlane.xlu0 %4653
      %4655 = vadd.xlane.f32.xlu0 %v4624
      %v4656 = vpop.xlane.xlu0 %4655
      %v4657 = vrcp.pop %v4626
      %v4658 = vrcp.pop %v4628
      %v4659 = vrcp.pop %v4630
      %v4660 = vrcp.pop %v4632
      %v4661 = vrcp.pop %v4634
      %v4662 = vrcp.pop %v4636
      %v4663 = vrcp.pop %v4638
      %v4664 = vrcp.pop %v4640
      %v4665 = vrcp.pop %v4642
      %v4666 = vrcp.pop %v4644
      %v4667 = vrcp.pop %v4646
      %v4668 = vrcp.pop %v4648
      %v4669 = vrcp.pop %v4650
      %v4670 = vrcp.pop %v4652
      %v4671 = vrcp.pop %v4654
      %v4672 = vrcp.pop %v4656
      %v4673 = vmul.f32 %v4594, %v4657
      %v4674 = vmul.f32 %v4596, %v4658
      %v4675 = vmul.f32 %v4598, %v4659
      %v4676 = vmul.f32 %v4600, %v4660
      %v4677 = vmul.f32 %v4602, %v4661
      %v4678 = vmul.f32 %v4604, %v4662
      %v4679 = vmul.f32 %v4606, %v4663
      %v4680 = vmul.f32 %v4608, %v4664
      %v4681 = vmul.f32 %v4610, %v4665
      %v4682 = vmul.f32 %v4612, %v4666
      %v4683 = vmul.f32 %v4614, %v4667
      %v4684 = vmul.f32 %v4616, %v4668
      %v4685 = vmul.f32 %v4618, %v4669
      %v4686 = vmul.f32 %v4620, %v4670
      %v4687 = vmul.f32 %v4622, %v4671
      %v4688 = vmul.f32 %v4624, %v4672
      %4689 = vst [vmem:[#allocation3 + $0x18] sm:$0xff] %v4673
      %4690 = vst [vmem:[#allocation3 + $0x48] sm:$0xff] %v4674
      %4691 = vst [vmem:[#allocation3 + $0x78] sm:$0xff] %v4675
      %4692 = vst [vmem:[#allocation3 + $0xa8] sm:$0xff] %v4676
      %4693 = vst [vmem:[#allocation3 + $0xd8] sm:$0xff] %v4677
      %4694 = vst [vmem:[#allocation3 + $0x108] sm:$0xff] %v4678
      %4695 = vst [vmem:[#allocation3 + $0x138] sm:$0xff] %v4679
      %4696 = vst [vmem:[#allocation3 + $0x168] sm:$0xff] %v4680
      %4697 = vst [vmem:[#allocation3 + $0x198] sm:$0xff] %v4681
      %4698 = vst [vmem:[#allocation3 + $0x1c8] sm:$0xff] %v4682
      %4699 = vst [vmem:[#allocation3 + $0x1f8] sm:$0xff] %v4683
      %4700 = vst [vmem:[#allocation3 + $0x228] sm:$0xff] %v4684
      %4701 = vst [vmem:[#allocation3 + $0x258] sm:$0xff] %v4685
      %4702 = vst [vmem:[#allocation3 + $0x288] sm:$0xff] %v4686
      %4703 = vst [vmem:[#allocation3 + $0x2b8] sm:$0xff] %v4687
      %4704 = vst [vmem:[#allocation3 + $0x2e8] sm:$0xff] %v4688
      %4705 = vmax.xlane.f32.xlu0 %v3971
      %v4706 = vpop.xlane.xlu0 %4705
      %4707 = vmax.xlane.f32.xlu0 %v3977
      %v4708 = vpop.xlane.xlu0 %4707
      %4709 = vmax.xlane.f32.xlu0 %v3983
      %v4710 = vpop.xlane.xlu0 %4709
      %4711 = vmax.xlane.f32.xlu0 %v3989
      %v4712 = vpop.xlane.xlu0 %4711
      %4713 = vmax.xlane.f32.xlu0 %v3995
      %v4714 = vpop.xlane.xlu0 %4713
      %4715 = vmax.xlane.f32.xlu0 %v4001
      %v4716 = vpop.xlane.xlu0 %4715
      %4717 = vmax.xlane.f32.xlu0 %v4007
      %v4718 = vpop.xlane.xlu0 %4717
      %4719 = vmax.xlane.f32.xlu0 %v4013
      %v4720 = vpop.xlane.xlu0 %4719
      %4721 = vmax.xlane.f32.xlu0 %v4019
      %v4722 = vpop.xlane.xlu0 %4721
      %4723 = vmax.xlane.f32.xlu0 %v4025
      %v4724 = vpop.xlane.xlu0 %4723
      %4725 = vmax.xlane.f32.xlu0 %v4031
      %v4726 = vpop.xlane.xlu0 %4725
      %4727 = vmax.xlane.f32.xlu0 %v4037
      %v4728 = vpop.xlane.xlu0 %4727
      %4729 = vmax.xlane.f32.xlu0 %v4043
      %v4730 = vpop.xlane.xlu0 %4729
      %4731 = vmax.xlane.f32.xlu0 %v4049
      %v4732 = vpop.xlane.xlu0 %4731
      %4733 = vmax.xlane.f32.xlu0 %v4055
      %v4734 = vpop.xlane.xlu0 %4733
      %4735 = vmax.xlane.f32.xlu0 %v4061
      %v4736 = vpop.xlane.xlu0 %4735
      %v4737 = vsub.f32 %v3971, %v4706
      %v4738 = vsub.f32 %v3977, %v4708
      %v4739 = vsub.f32 %v3983, %v4710
      %v4740 = vsub.f32 %v3989, %v4712
      %v4741 = vsub.f32 %v3995, %v4714
      %v4742 = vsub.f32 %v4001, %v4716
      %v4743 = vsub.f32 %v4007, %v4718
      %v4744 = vsub.f32 %v4013, %v4720
      %v4745 = vsub.f32 %v4019, %v4722
      %v4746 = vsub.f32 %v4025, %v4724
      %v4747 = vsub.f32 %v4031, %v4726
      %v4748 = vsub.f32 %v4037, %v4728
      %v4749 = vsub.f32 %v4043, %v4730
      %v4750 = vsub.f32 %v4049, %v4732
      %v4751 = vsub.f32 %v4055, %v4734
      %v4752 = vsub.f32 %v4061, %v4736
      %v4753 = vmul.f32 %v4737, 1.442695
      %v4754 = vpow.pop %v4753
      %v4755 = vmul.f32 %v4738, 1.442695
      %v4756 = vpow.pop %v4755
      %v4757 = vmul.f32 %v4739, 1.442695
      %v4758 = vpow.pop %v4757
      %v4759 = vmul.f32 %v4740, 1.442695
      %v4760 = vpow.pop %v4759
      %v4761 = vmul.f32 %v4741, 1.442695
      %v4762 = vpow.pop %v4761
      %v4763 = vmul.f32 %v4742, 1.442695
      %v4764 = vpow.pop %v4763
      %v4765 = vmul.f32 %v4743, 1.442695
      %v4766 = vpow.pop %v4765
      %v4767 = vmul.f32 %v4744, 1.442695
      %v4768 = vpow.pop %v4767
      %v4769 = vmul.f32 %v4745, 1.442695
      %v4770 = vpow.pop %v4769
      %v4771 = vmul.f32 %v4746, 1.442695
      %v4772 = vpow.pop %v4771
      %v4773 = vmul.f32 %v4747, 1.442695
      %v4774 = vpow.pop %v4773
      %v4775 = vmul.f32 %v4748, 1.442695
      %v4776 = vpow.pop %v4775
      %v4777 = vmul.f32 %v4749, 1.442695
      %v4778 = vpow.pop %v4777
      %v4779 = vmul.f32 %v4750, 1.442695
      %v4780 = vpow.pop %v4779
      %v4781 = vmul.f32 %v4751, 1.442695
      %v4782 = vpow.pop %v4781
      %v4783 = vmul.f32 %v4752, 1.442695
      %v4784 = vpow.pop %v4783
      %4785 = vadd.xlane.f32.xlu0 %v4754
      %v4786 = vpop.xlane.xlu0 %4785
      %4787 = vadd.xlane.f32.xlu0 %v4756
      %v4788 = vpop.xlane.xlu0 %4787
      %4789 = vadd.xlane.f32.xlu0 %v4758
      %v4790 = vpop.xlane.xlu0 %4789
      %4791 = vadd.xlane.f32.xlu0 %v4760
      %v4792 = vpop.xlane.xlu0 %4791
      %4793 = vadd.xlane.f32.xlu0 %v4762
      %v4794 = vpop.xlane.xlu0 %4793
      %4795 = vadd.xlane.f32.xlu0 %v4764
      %v4796 = vpop.xlane.xlu0 %4795
      %4797 = vadd.xlane.f32.xlu0 %v4766
      %v4798 = vpop.xlane.xlu0 %4797
      %4799 = vadd.xlane.f32.xlu0 %v4768
      %v4800 = vpop.xlane.xlu0 %4799
      %4801 = vadd.xlane.f32.xlu0 %v4770
      %v4802 = vpop.xlane.xlu0 %4801
      %4803 = vadd.xlane.f32.xlu0 %v4772
      %v4804 = vpop.xlane.xlu0 %4803
      %4805 = vadd.xlane.f32.xlu0 %v4774
      %v4806 = vpop.xlane.xlu0 %4805
      %4807 = vadd.xlane.f32.xlu0 %v4776
      %v4808 = vpop.xlane.xlu0 %4807
      %4809 = vadd.xlane.f32.xlu0 %v4778
      %v4810 = vpop.xlane.xlu0 %4809
      %4811 = vadd.xlane.f32.xlu0 %v4780
      %v4812 = vpop.xlane.xlu0 %4811
      %4813 = vadd.xlane.f32.xlu0 %v4782
      %v4814 = vpop.xlane.xlu0 %4813
      %4815 = vadd.xlane.f32.xlu0 %v4784
      %v4816 = vpop.xlane.xlu0 %4815
      %v4817 = vrcp.pop %v4786
      %v4818 = vrcp.pop %v4788
      %v4819 = vrcp.pop %v4790
      %v4820 = vrcp.pop %v4792
      %v4821 = vrcp.pop %v4794
      %v4822 = vrcp.pop %v4796
      %v4823 = vrcp.pop %v4798
      %v4824 = vrcp.pop %v4800
      %v4825 = vrcp.pop %v4802
      %v4826 = vrcp.pop %v4804
      %v4827 = vrcp.pop %v4806
      %v4828 = vrcp.pop %v4808
      %v4829 = vrcp.pop %v4810
      %v4830 = vrcp.pop %v4812
      %v4831 = vrcp.pop %v4814
      %v4832 = vrcp.pop %v4816
      %v4833 = vmul.f32 %v4754, %v4817
      %v4834 = vmul.f32 %v4756, %v4818
      %v4835 = vmul.f32 %v4758, %v4819
      %v4836 = vmul.f32 %v4760, %v4820
      %v4837 = vmul.f32 %v4762, %v4821
      %v4838 = vmul.f32 %v4764, %v4822
      %v4839 = vmul.f32 %v4766, %v4823
      %v4840 = vmul.f32 %v4768, %v4824
      %v4841 = vmul.f32 %v4770, %v4825
      %v4842 = vmul.f32 %v4772, %v4826
      %v4843 = vmul.f32 %v4774, %v4827
      %v4844 = vmul.f32 %v4776, %v4828
      %v4845 = vmul.f32 %v4778, %v4829
      %v4846 = vmul.f32 %v4780, %v4830
      %v4847 = vmul.f32 %v4782, %v4831
      %v4848 = vmul.f32 %v4784, %v4832
      %4849 = vst [vmem:[#allocation3 + $0x20] sm:$0xff] %v4833
      %4850 = vst [vmem:[#allocation3 + $0x50] sm:$0xff] %v4834
      %4851 = vst [vmem:[#allocation3 + $0x80] sm:$0xff] %v4835
      %4852 = vst [vmem:[#allocation3 + $0xb0] sm:$0xff] %v4836
      %4853 = vst [vmem:[#allocation3 + $0xe0] sm:$0xff] %v4837
      %4854 = vst [vmem:[#allocation3 + $0x110] sm:$0xff] %v4838
      %4855 = vst [vmem:[#allocation3 + $0x140] sm:$0xff] %v4839
      %4856 = vst [vmem:[#allocation3 + $0x170] sm:$0xff] %v4840
      %4857 = vst [vmem:[#allocation3 + $0x1a0] sm:$0xff] %v4841
      %4858 = vst [vmem:[#allocation3 + $0x1d0] sm:$0xff] %v4842
      %4859 = vst [vmem:[#allocation3 + $0x200] sm:$0xff] %v4843
      %4860 = vst [vmem:[#allocation3 + $0x230] sm:$0xff] %v4844
      %4861 = vst [vmem:[#allocation3 + $0x260] sm:$0xff] %v4845
      %4862 = vst [vmem:[#allocation3 + $0x290] sm:$0xff] %v4846
      %4863 = vst [vmem:[#allocation3 + $0x2c0] sm:$0xff] %v4847
      %4864 = vst [vmem:[#allocation3 + $0x2f0] sm:$0xff] %v4848
      %4865 = vmax.xlane.f32.xlu0 %v3973
      %v4866 = vpop.xlane.xlu0 %4865
      %4867 = vmax.xlane.f32.xlu0 %v3979
      %v4868 = vpop.xlane.xlu0 %4867
      %4869 = vmax.xlane.f32.xlu0 %v3985
      %v4870 = vpop.xlane.xlu0 %4869
      %4871 = vmax.xlane.f32.xlu0 %v3991
      %v4872 = vpop.xlane.xlu0 %4871
      %4873 = vmax.xlane.f32.xlu0 %v3997
      %v4874 = vpop.xlane.xlu0 %4873
      %4875 = vmax.xlane.f32.xlu0 %v4003
      %v4876 = vpop.xlane.xlu0 %4875
      %4877 = vmax.xlane.f32.xlu0 %v4009
      %v4878 = vpop.xlane.xlu0 %4877
      %4879 = vmax.xlane.f32.xlu0 %v4015
      %v4880 = vpop.xlane.xlu0 %4879
      %4881 = vmax.xlane.f32.xlu0 %v4021
      %v4882 = vpop.xlane.xlu0 %4881
      %4883 = vmax.xlane.f32.xlu0 %v4027
      %v4884 = vpop.xlane.xlu0 %4883
      %4885 = vmax.xlane.f32.xlu0 %v4033
      %v4886 = vpop.xlane.xlu0 %4885
      %4887 = vmax.xlane.f32.xlu0 %v4039
      %v4888 = vpop.xlane.xlu0 %4887
      %4889 = vmax.xlane.f32.xlu0 %v4045
      %v4890 = vpop.xlane.xlu0 %4889
      %4891 = vmax.xlane.f32.xlu0 %v4051
      %v4892 = vpop.xlane.xlu0 %4891
      %4893 = vmax.xlane.f32.xlu0 %v4057
      %v4894 = vpop.xlane.xlu0 %4893
      %4895 = vmax.xlane.f32.xlu0 %v4063
      %v4896 = vpop.xlane.xlu0 %4895
      %v4897 = vsub.f32 %v3973, %v4866
      %v4898 = vsub.f32 %v3979, %v4868
      %v4899 = vsub.f32 %v3985, %v4870
      %v4900 = vsub.f32 %v3991, %v4872
      %v4901 = vsub.f32 %v3997, %v4874
      %v4902 = vsub.f32 %v4003, %v4876
      %v4903 = vsub.f32 %v4009, %v4878
      %v4904 = vsub.f32 %v4015, %v4880
      %v4905 = vsub.f32 %v4021, %v4882
      %v4906 = vsub.f32 %v4027, %v4884
      %v4907 = vsub.f32 %v4033, %v4886
      %v4908 = vsub.f32 %v4039, %v4888
      %v4909 = vsub.f32 %v4045, %v4890
      %v4910 = vsub.f32 %v4051, %v4892
      %v4911 = vsub.f32 %v4057, %v4894
      %v4912 = vsub.f32 %v4063, %v4896
      %v4913 = vmul.f32 %v4897, 1.442695
      %v4914 = vpow.pop %v4913
      %v4915 = vmul.f32 %v4898, 1.442695
      %v4916 = vpow.pop %v4915
      %v4917 = vmul.f32 %v4899, 1.442695
      %v4918 = vpow.pop %v4917
      %v4919 = vmul.f32 %v4900, 1.442695
      %v4920 = vpow.pop %v4919
      %v4921 = vmul.f32 %v4901, 1.442695
      %v4922 = vpow.pop %v4921
      %v4923 = vmul.f32 %v4902, 1.442695
      %v4924 = vpow.pop %v4923
      %v4925 = vmul.f32 %v4903, 1.442695
      %v4926 = vpow.pop %v4925
      %v4927 = vmul.f32 %v4904, 1.442695
      %v4928 = vpow.pop %v4927
      %v4929 = vmul.f32 %v4905, 1.442695
      %v4930 = vpow.pop %v4929
      %v4931 = vmul.f32 %v4906, 1.442695
      %v4932 = vpow.pop %v4931
      %v4933 = vmul.f32 %v4907, 1.442695
      %v4934 = vpow.pop %v4933
      %v4935 = vmul.f32 %v4908, 1.442695
      %v4936 = vpow.pop %v4935
      %v4937 = vmul.f32 %v4909, 1.442695
      %v4938 = vpow.pop %v4937
      %v4939 = vmul.f32 %v4910, 1.442695
      %v4940 = vpow.pop %v4939
      %v4941 = vmul.f32 %v4911, 1.442695
      %v4942 = vpow.pop %v4941
      %v4943 = vmul.f32 %v4912, 1.442695
      %v4944 = vpow.pop %v4943
      %4945 = vadd.xlane.f32.xlu0 %v4914
      %v4946 = vpop.xlane.xlu0 %4945
      %4947 = vadd.xlane.f32.xlu0 %v4916
      %v4948 = vpop.xlane.xlu0 %4947
      %4949 = vadd.xlane.f32.xlu0 %v4918
      %v4950 = vpop.xlane.xlu0 %4949
      %4951 = vadd.xlane.f32.xlu0 %v4920
      %v4952 = vpop.xlane.xlu0 %4951
      %4953 = vadd.xlane.f32.xlu0 %v4922
      %v4954 = vpop.xlane.xlu0 %4953
      %4955 = vadd.xlane.f32.xlu0 %v4924
      %v4956 = vpop.xlane.xlu0 %4955
      %4957 = vadd.xlane.f32.xlu0 %v4926
      %v4958 = vpop.xlane.xlu0 %4957
      %4959 = vadd.xlane.f32.xlu0 %v4928
      %v4960 = vpop.xlane.xlu0 %4959
      %4961 = vadd.xlane.f32.xlu0 %v4930
      %v4962 = vpop.xlane.xlu0 %4961
      %4963 = vadd.xlane.f32.xlu0 %v4932
      %v4964 = vpop.xlane.xlu0 %4963
      %4965 = vadd.xlane.f32.xlu0 %v4934
      %v4966 = vpop.xlane.xlu0 %4965
      %4967 = vadd.xlane.f32.xlu0 %v4936
      %v4968 = vpop.xlane.xlu0 %4967
      %4969 = vadd.xlane.f32.xlu0 %v4938
      %v4970 = vpop.xlane.xlu0 %4969
      %4971 = vadd.xlane.f32.xlu0 %v4940
      %v4972 = vpop.xlane.xlu0 %4971
      %4973 = vadd.xlane.f32.xlu0 %v4942
      %v4974 = vpop.xlane.xlu0 %4973
      %4975 = vadd.xlane.f32.xlu0 %v4944
      %v4976 = vpop.xlane.xlu0 %4975
      %v4977 = vrcp.pop %v4946
      %v4978 = vrcp.pop %v4948
      %v4979 = vrcp.pop %v4950
      %v4980 = vrcp.pop %v4952
      %v4981 = vrcp.pop %v4954
      %v4982 = vrcp.pop %v4956
      %v4983 = vrcp.pop %v4958
      %v4984 = vrcp.pop %v4960
      %v4985 = vrcp.pop %v4962
      %v4986 = vrcp.pop %v4964
      %v4987 = vrcp.pop %v4966
      %v4988 = vrcp.pop %v4968
      %v4989 = vrcp.pop %v4970
      %v4990 = vrcp.pop %v4972
      %v4991 = vrcp.pop %v4974
      %v4992 = vrcp.pop %v4976
      %v4993 = vmul.f32 %v4914, %v4977
      %v4994 = vmul.f32 %v4916, %v4978
      %v4995 = vmul.f32 %v4918, %v4979
      %v4996 = vmul.f32 %v4920, %v4980
      %v4997 = vmul.f32 %v4922, %v4981
      %v4998 = vmul.f32 %v4924, %v4982
      %v4999 = vmul.f32 %v4926, %v4983
      %v5000 = vmul.f32 %v4928, %v4984
      %v5001 = vmul.f32 %v4930, %v4985
      %v5002 = vmul.f32 %v4932, %v4986
      %v5003 = vmul.f32 %v4934, %v4987
      %v5004 = vmul.f32 %v4936, %v4988
      %v5005 = vmul.f32 %v4938, %v4989
      %v5006 = vmul.f32 %v4940, %v4990
      %v5007 = vmul.f32 %v4942, %v4991
      %v5008 = vmul.f32 %v4944, %v4992
      %5009 = vst [vmem:[#allocation3 + $0x28] sm:$0xff] %v4993
      %5010 = vst [vmem:[#allocation3 + $0x58] sm:$0xff] %v4994
      %5011 = vst [vmem:[#allocation3 + $0x88] sm:$0xff] %v4995
      %5012 = vst [vmem:[#allocation3 + $0xb8] sm:$0xff] %v4996
      %5013 = vst [vmem:[#allocation3 + $0xe8] sm:$0xff] %v4997
      %5014 = vst [vmem:[#allocation3 + $0x118] sm:$0xff] %v4998
      %5015 = vst [vmem:[#allocation3 + $0x148] sm:$0xff] %v4999
      %5016 = vst [vmem:[#allocation3 + $0x178] sm:$0xff] %v5000
      %5017 = vst [vmem:[#allocation3 + $0x1a8] sm:$0xff] %v5001
      %5018 = vst [vmem:[#allocation3 + $0x1d8] sm:$0xff] %v5002
      %5019 = vst [vmem:[#allocation3 + $0x208] sm:$0xff] %v5003
      %5020 = vst [vmem:[#allocation3 + $0x238] sm:$0xff] %v5004
      %5021 = vst [vmem:[#allocation3 + $0x268] sm:$0xff] %v5005
      %5022 = vst [vmem:[#allocation3 + $0x298] sm:$0xff] %v5006
      %5023 = vst [vmem:[#allocation3 + $0x2c8] sm:$0xff] %v5007
      %5024 = vst [vmem:[#allocation3 + $0x2f8] sm:$0xff] %v5008
      %v5025 = vld [vmem:[#allocation3] sm:$0xff]
      %v5026 = vld [vmem:[#allocation3 + $0x8] sm:$0xff]
      %v5027 = vld [vmem:[#allocation3 + $0x10] sm:$0xff]
      %v5028 = vld [vmem:[#allocation3 + $0x18] sm:$0xff]
      %v5029 = vld [vmem:[#allocation3 + $0x20] sm:$0xff]
      %v5030 = vld [vmem:[#allocation3 + $0x28] sm:$0xff]
      %v5031 = vld [vmem:[#allocation3 + $0x30] sm:$0xff]
      %v5032 = vld [vmem:[#allocation3 + $0x38] sm:$0xff]
      %v5033 = vld [vmem:[#allocation3 + $0x40] sm:$0xff]
      %v5034 = vld [vmem:[#allocation3 + $0x48] sm:$0xff]
      %v5035 = vld [vmem:[#allocation3 + $0x50] sm:$0xff]
      %v5036 = vld [vmem:[#allocation3 + $0x58] sm:$0xff]
      %v5037 = vld [vmem:[#allocation3 + $0x60] sm:$0xff]
      %v5038 = vld [vmem:[#allocation3 + $0x68] sm:$0xff]
      %v5039 = vld [vmem:[#allocation3 + $0x70] sm:$0xff]
      %v5040 = vld [vmem:[#allocation3 + $0x78] sm:$0xff]
      %v5041 = vld [vmem:[#allocation3 + $0x80] sm:$0xff]
      %v5042 = vld [vmem:[#allocation3 + $0x88] sm:$0xff]
      %v5043 = vld [vmem:[#allocation3 + $0x90] sm:$0xff]
      %v5044 = vld [vmem:[#allocation3 + $0x98] sm:$0xff]
      %v5045 = vld [vmem:[#allocation3 + $0xa0] sm:$0xff]
      %v5046 = vld [vmem:[#allocation3 + $0xa8] sm:$0xff]
      %v5047 = vld [vmem:[#allocation3 + $0xb0] sm:$0xff]
      %v5048 = vld [vmem:[#allocation3 + $0xb8] sm:$0xff]
      %v5049 = vld [vmem:[#allocation3 + $0xc0] sm:$0xff]
      %v5050 = vld [vmem:[#allocation3 + $0xc8] sm:$0xff]
      %v5051 = vld [vmem:[#allocation3 + $0xd0] sm:$0xff]
      %v5052 = vld [vmem:[#allocation3 + $0xd8] sm:$0xff]
      %v5053 = vld [vmem:[#allocation3 + $0xe0] sm:$0xff]
      %v5054 = vld [vmem:[#allocation3 + $0xe8] sm:$0xff]
      %v5055 = vld [vmem:[#allocation3 + $0xf0] sm:$0xff]
      %v5056 = vld [vmem:[#allocation3 + $0xf8] sm:$0xff]
      %v5057 = vld [vmem:[#allocation3 + $0x100] sm:$0xff]
      %v5058 = vld [vmem:[#allocation3 + $0x108] sm:$0xff]
      %v5059 = vld [vmem:[#allocation3 + $0x110] sm:$0xff]
      %v5060 = vld [vmem:[#allocation3 + $0x118] sm:$0xff]
      %v5061 = vld [vmem:[#allocation3 + $0x120] sm:$0xff]
      %v5062 = vld [vmem:[#allocation3 + $0x128] sm:$0xff]
      %v5063 = vld [vmem:[#allocation3 + $0x130] sm:$0xff]
      %v5064 = vld [vmem:[#allocation3 + $0x138] sm:$0xff]
      %v5065 = vld [vmem:[#allocation3 + $0x140] sm:$0xff]
      %v5066 = vld [vmem:[#allocation3 + $0x148] sm:$0xff]
      %v5067 = vld [vmem:[#allocation3 + $0x150] sm:$0xff]
      %v5068 = vld [vmem:[#allocation3 + $0x158] sm:$0xff]
      %v5069 = vld [vmem:[#allocation3 + $0x160] sm:$0xff]
      %v5070 = vld [vmem:[#allocation3 + $0x168] sm:$0xff]
      %v5071 = vld [vmem:[#allocation3 + $0x170] sm:$0xff]
      %v5072 = vld [vmem:[#allocation3 + $0x178] sm:$0xff]
      %v5073 = vld [vmem:[#allocation3 + $0x180] sm:$0xff]
      %v5074 = vld [vmem:[#allocation3 + $0x188] sm:$0xff]
      %v5075 = vld [vmem:[#allocation3 + $0x190] sm:$0xff]
      %v5076 = vld [vmem:[#allocation3 + $0x198] sm:$0xff]
      %v5077 = vld [vmem:[#allocation3 + $0x1a0] sm:$0xff]
      %v5078 = vld [vmem:[#allocation3 + $0x1a8] sm:$0xff]
      %v5079 = vld [vmem:[#allocation3 + $0x1b0] sm:$0xff]
      %v5080 = vld [vmem:[#allocation3 + $0x1b8] sm:$0xff]
      %v5081 = vld [vmem:[#allocation3 + $0x1c0] sm:$0xff]
      %v5082 = vld [vmem:[#allocation3 + $0x1c8] sm:$0xff]
      %v5083 = vld [vmem:[#allocation3 + $0x1d0] sm:$0xff]
      %v5084 = vld [vmem:[#allocation3 + $0x1d8] sm:$0xff]
      %v5085 = vld [vmem:[#allocation3 + $0x1e0] sm:$0xff]
      %v5086 = vld [vmem:[#allocation3 + $0x1e8] sm:$0xff]
      %v5087 = vld [vmem:[#allocation3 + $0x1f0] sm:$0xff]
      %v5088 = vld [vmem:[#allocation3 + $0x1f8] sm:$0xff]
      %v5089 = vld [vmem:[#allocation3 + $0x200] sm:$0xff]
      %v5090 = vld [vmem:[#allocation3 + $0x208] sm:$0xff]
      %v5091 = vld [vmem:[#allocation3 + $0x210] sm:$0xff]
      %v5092 = vld [vmem:[#allocation3 + $0x218] sm:$0xff]
      %v5093 = vld [vmem:[#allocation3 + $0x220] sm:$0xff]
      %v5094 = vld [vmem:[#allocation3 + $0x228] sm:$0xff]
      %v5095 = vld [vmem:[#allocation3 + $0x230] sm:$0xff]
      %v5096 = vld [vmem:[#allocation3 + $0x238] sm:$0xff]
      %v5097 = vld [vmem:[#allocation3 + $0x240] sm:$0xff]
      %v5098 = vld [vmem:[#allocation3 + $0x248] sm:$0xff]
      %v5099 = vld [vmem:[#allocation3 + $0x250] sm:$0xff]
      %v5100 = vld [vmem:[#allocation3 + $0x258] sm:$0xff]
      %v5101 = vld [vmem:[#allocation3 + $0x260] sm:$0xff]
      %v5102 = vld [vmem:[#allocation3 + $0x268] sm:$0xff]
      %v5103 = vld [vmem:[#allocation3 + $0x270] sm:$0xff]
      %v5104 = vld [vmem:[#allocation3 + $0x278] sm:$0xff]
      %v5105 = vld [vmem:[#allocation3 + $0x280] sm:$0xff]
      %v5106 = vld [vmem:[#allocation3 + $0x288] sm:$0xff]
      %v5107 = vld [vmem:[#allocation3 + $0x290] sm:$0xff]
      %v5108 = vld [vmem:[#allocation3 + $0x298] sm:$0xff]
      %v5109 = vld [vmem:[#allocation3 + $0x2a0] sm:$0xff]
      %v5110 = vld [vmem:[#allocation3 + $0x2a8] sm:$0xff]
      %v5111 = vld [vmem:[#allocation3 + $0x2b0] sm:$0xff]
      %v5112 = vld [vmem:[#allocation3 + $0x2b8] sm:$0xff]
      %v5113 = vld [vmem:[#allocation3 + $0x2c0] sm:$0xff]
      %v5114 = vld [vmem:[#allocation3 + $0x2c8] sm:$0xff]
      %v5115 = vld [vmem:[#allocation3 + $0x2d0] sm:$0xff]
      %v5116 = vld [vmem:[#allocation3 + $0x2d8] sm:$0xff]
      %v5117 = vld [vmem:[#allocation3 + $0x2e0] sm:$0xff]
      %v5118 = vld [vmem:[#allocation3 + $0x2e8] sm:$0xff]
      %v5119 = vld [vmem:[#allocation3 + $0x2f0] sm:$0xff]
      %v5120 = vld [vmem:[#allocation3 + $0x2f8] sm:$0xff]
      %5121 = vmatprep.subr.mxu0 0.0
      %5122 = vmatpush1.msra.mxu0 %v3150
      %5123 = vmatprep.subr.mxu0 0.0
      %5124 = vmatpush1.msra.mxu0 %v3151
      %5125 = vmatprep.subr.mxu0 0.0
      %5126 = vmatpush1.msra.mxu0 %v3152
      %5127 = vmatprep.subr.mxu0 0.0
      %5128 = vmatpush1.msra.mxu0 %v3153
      %5129 = vmatprep.subr.mxu0 0.0
      %5130 = vmatpush1.msra.mxu0 %v3154
      %5131 = vmatprep.subr.mxu0 0.0
      %5132 = vmatpush1.msra.mxu0 %v3155
      %5133 = vmatprep.subr.mxu0 0.0
      %5134 = vmatpush1.msra.mxu0 %v3156
      %5135 = vmatprep.subr.mxu0 0.0
      %5136 = vmatpush1.msra.mxu0 %v3157
      %5137 = vmatprep.subr.mxu0 0.0
      %5138 = vmatpush1.msra.mxu0 %v3158
      %5139 = vmatprep.subr.mxu0 0.0
      %5140 = vmatpush1.msra.mxu0 %v3159
      %5141 = vmatprep.subr.mxu0 0.0
      %5142 = vmatpush1.msra.mxu0 %v3160
      %5143 = vmatprep.subr.mxu0 0.0
      %5144 = vmatpush1.msra.mxu0 %v3161
      %5145 = vmatprep.subr.mxu0 0.0
      %5146 = vmatpush1.msra.mxu0 %v3162
      %5147 = vmatprep.subr.mxu0 0.0
      %5148 = vmatpush1.msra.mxu0 %v3163
      %5149 = vmatprep.subr.mxu0 0.0
      %5150 = vmatpush1.msra.mxu0 %v3164
      %5151 = vmatprep.subr.mxu0 0.0
      %5152 = vmatpush1.msra.mxu0 %v3165
      %5153 = vmatprep.subr.mxu0 0.0
      %5154 = vmatpush1.msra.mxu0 %v3166
      %5155 = vmatprep.subr.mxu0 0.0
      %5156 = vmatpush1.msra.mxu0 %v3167
      %5157 = vmatprep.subr.mxu0 0.0
      %5158 = vmatpush1.msra.mxu0 %v3168
      %5159 = vmatprep.subr.mxu0 0.0
      %5160 = vmatpush1.msra.mxu0 %v3169
      %5161 = vmatprep.subr.mxu0 0.0
      %5162 = vmatpush1.msra.mxu0 %v3170
      %5163 = vmatprep.subr.mxu0 0.0
      %5164 = vmatpush1.msra.mxu0 %v3171
      %5165 = vmatprep.subr.mxu0 0.0
      %5166 = vmatpush1.msra.mxu0 %v3172
      %5167 = vmatprep.subr.mxu0 0.0
      %5168 = vmatpush1.msra.mxu0 %v3173
      %5169 = vmatprep.subr.mxu0 0.0
      %5170 = vmatpush1.msra.mxu0 %v3174
      %5171 = vmatprep.subr.mxu0 0.0
      %5172 = vmatpush1.msra.mxu0 %v3175
      %5173 = vmatprep.subr.mxu0 0.0
      %5174 = vmatpush1.msra.mxu0 %v3176
      %5175 = vmatprep.subr.mxu0 0.0
      %5176 = vmatpush1.msra.mxu0 %v3177
      %5177 = vmatprep.subr.mxu0 0.0
      %5178 = vmatpush1.msra.mxu0 %v3178
      %5179 = vmatprep.subr.mxu0 0.0
      %5180 = vmatpush1.msra.mxu0 %v3179
      %5181 = vmatprep.subr.mxu0 0.0
      %5182 = vmatpush1.msra.mxu0 %v3180
      %5183 = vmatprep.subr.mxu0 0.0
      %5184 = vmatpush1.msra.mxu0 %v3181
      %5185 = vmatprep.mubr.f32.mxu0 %v5026
      %5186 = vmatmul.mubr.f32.gmra.mrb[0].mxu0 %v5025
      %v5187 = vpop.f32.mrb[0].mxu0
      %v5188 = vadd.f32 0.0, %v5187
      %v5189 = vpop.f32.mrb[0].mxu0
      %5190 = vmatprep.mubr.f32.mxu0 %v5032
      %5191 = vmatmul.mubr.f32.gmra.mrb[0].mxu0 %v5031
      %v5192 = vpop.f32.mrb[0].mxu0
      %v5193 = vadd.f32 0.0, %v5192
      %v5194 = vpop.f32.mrb[0].mxu0
      %5195 = vmatprep.mubr.f32.mxu0 %v5038
      %5196 = vmatmul.mubr.f32.gmra.mrb[0].mxu0 %v5037
      %v5197 = vpop.f32.mrb[0].mxu0
      %v5198 = vadd.f32 0.0, %v5197
      %v5199 = vpop.f32.mrb[0].mxu0
      %5200 = vmatprep.mubr.f32.mxu0 %v5044
      %5201 = vmatmul.mubr.f32.gmra.mrb[0].mxu0 %v5043
      %v5202 = vpop.f32.mrb[0].mxu0
      %v5203 = vadd.f32 0.0, %v5202
      %v5204 = vpop.f32.mrb[0].mxu0
      %5205 = vmatprep.mubr.f32.mxu0 %v5050
      %5206 = vmatmul.mubr.f32.gmra.mrb[0].mxu0 %v5049
      %v5207 = vpop.f32.mrb[0].mxu0
      %v5208 = vadd.f32 0.0, %v5207
      %v5209 = vpop.f32.mrb[0].mxu0
      %5210 = vmatprep.mubr.f32.mxu0 %v5056
      %5211 = vmatmul.mubr.f32.gmra.mrb[0].mxu0 %v5055
      %v5212 = vpop.f32.mrb[0].mxu0
      %v5213 = vadd.f32 0.0, %v5212
      %v5214 = vpop.f32.mrb[0].mxu0
      %5215 = vmatprep.mubr.f32.mxu0 %v5062
      %5216 = vmatmul.mubr.f32.gmra.mrb[0].mxu0 %v5061
      %v5217 = vpop.f32.mrb[0].mxu0
      %v5218 = vadd.f32 0.0, %v5217
      %v5219 = vpop.f32.mrb[0].mxu0
      %5220 = vmatprep.mubr.f32.mxu0 %v5068
      %5221 = vmatmul.mubr.f32.gmra.mrb[0].mxu0 %v5067
      %v5222 = vpop.f32.mrb[0].mxu0
      %v5223 = vadd.f32 0.0, %v5222
      %v5224 = vpop.f32.mrb[0].mxu0
      %5225 = vmatprep.mubr.f32.mxu0 %v5074
      %5226 = vmatmul.mubr.f32.gmra.mrb[0].mxu0 %v5073
      %v5227 = vpop.f32.mrb[0].mxu0
      %v5228 = vadd.f32 0.0, %v5227
      %v5229 = vpop.f32.mrb[0].mxu0
      %5230 = vmatprep.mubr.f32.mxu0 %v5080
      %5231 = vmatmul.mubr.f32.gmra.mrb[0].mxu0 %v5079
      %v5232 = vpop.f32.mrb[0].mxu0
      %v5233 = vadd.f32 0.0, %v5232
      %v5234 = vpop.f32.mrb[0].mxu0
      %5235 = vmatprep.mubr.f32.mxu0 %v5086
      %5236 = vmatmul.mubr.f32.gmra.mrb[0].mxu0 %v5085
      %v5237 = vpop.f32.mrb[0].mxu0
      %v5238 = vadd.f32 0.0, %v5237
      %v5239 = vpop.f32.mrb[0].mxu0
      %5240 = vmatprep.mubr.f32.mxu0 %v5092
      %5241 = vmatmul.mubr.f32.gmra.mrb[0].mxu0 %v5091
      %v5242 = vpop.f32.mrb[0].mxu0
      %v5243 = vadd.f32 0.0, %v5242
      %v5244 = vpop.f32.mrb[0].mxu0
      %5245 = vmatprep.mubr.f32.mxu0 %v5098
      %5246 = vmatmul.mubr.f32.gmra.mrb[0].mxu0 %v5097
      %v5247 = vpop.f32.mrb[0].mxu0
      %v5248 = vadd.f32 0.0, %v5247
      %v5249 = vpop.f32.mrb[0].mxu0
      %5250 = vmatprep.mubr.f32.mxu0 %v5104
      %5251 = vmatmul.mubr.f32.gmra.mrb[0].mxu0 %v5103
      %v5252 = vpop.f32.mrb[0].mxu0
      %v5253 = vadd.f32 0.0, %v5252
      %v5254 = vpop.f32.mrb[0].mxu0
      %5255 = vmatprep.mubr.f32.mxu0 %v5110
      %5256 = vmatmul.mubr.f32.gmra.mrb[0].mxu0 %v5109
      %v5257 = vpop.f32.mrb[0].mxu0
      %v5258 = vadd.f32 0.0, %v5257
      %v5259 = vpop.f32.mrb[0].mxu0
      %5260 = vmatprep.mubr.f32.mxu0 %v5116
      %5261 = vmatmul.mubr.f32.gmra.mrb[0].mxu0 %v5115
      %v5262 = vpop.f32.mrb[0].mxu0
      %v5263 = vadd.f32 0.0, %v5262
      %v5264 = vpop.f32.mrb[0].mxu0
      %5265 = vdwg.mxu0
      %5266 = vmatprep.subr.mxu0 0.0
      %5267 = vmatpush1.msra.mxu0 %v3182
      %5268 = vmatprep.subr.mxu0 0.0
      %5269 = vmatpush1.msra.mxu0 %v3183
      %5270 = vmatprep.subr.mxu0 0.0
      %5271 = vmatpush1.msra.mxu0 %v3184
      %5272 = vmatprep.subr.mxu0 0.0
      %5273 = vmatpush1.msra.mxu0 %v3185
      %5274 = vmatprep.subr.mxu0 0.0
      %5275 = vmatpush1.msra.mxu0 %v3186
      %5276 = vmatprep.subr.mxu0 0.0
      %5277 = vmatpush1.msra.mxu0 %v3187
      %5278 = vmatprep.subr.mxu0 0.0
      %5279 = vmatpush1.msra.mxu0 %v3188
      %5280 = vmatprep.subr.mxu0 0.0
      %5281 = vmatpush1.msra.mxu0 %v3189
      %5282 = vmatprep.subr.mxu0 0.0
      %5283 = vmatpush1.msra.mxu0 %v3190
      %5284 = vmatprep.subr.mxu0 0.0
      %5285 = vmatpush1.msra.mxu0 %v3191
      %5286 = vmatprep.subr.mxu0 0.0
      %5287 = vmatpush1.msra.mxu0 %v3192
      %5288 = vmatprep.subr.mxu0 0.0
      %5289 = vmatpush1.msra.mxu0 %v3193
      %5290 = vmatprep.subr.mxu0 0.0
      %5291 = vmatpush1.msra.mxu0 %v3194
      %5292 = vmatprep.subr.mxu0 0.0
      %5293 = vmatpush1.msra.mxu0 %v3195
      %5294 = vmatprep.subr.mxu0 0.0
      %5295 = vmatpush1.msra.mxu0 %v3196
      %5296 = vmatprep.subr.mxu0 0.0
      %5297 = vmatpush1.msra.mxu0 %v3197
      %5298 = vmatprep.subr.mxu0 0.0
      %5299 = vmatpush1.msra.mxu0 %v3198
      %5300 = vmatprep.subr.mxu0 0.0
      %5301 = vmatpush1.msra.mxu0 %v3199
      %5302 = vmatprep.subr.mxu0 0.0
      %5303 = vmatpush1.msra.mxu0 %v3200
      %5304 = vmatprep.subr.mxu0 0.0
      %5305 = vmatpush1.msra.mxu0 %v3201
      %5306 = vmatprep.subr.mxu0 0.0
      %5307 = vmatpush1.msra.mxu0 %v3202
      %5308 = vmatprep.subr.mxu0 0.0
      %5309 = vmatpush1.msra.mxu0 %v3203
      %5310 = vmatprep.subr.mxu0 0.0
      %5311 = vmatpush1.msra.mxu0 %v3204
      %5312 = vmatprep.subr.mxu0 0.0
      %5313 = vmatpush1.msra.mxu0 %v3205
      %5314 = vmatprep.subr.mxu0 0.0
      %5315 = vmatpush1.msra.mxu0 %v3206
      %5316 = vmatprep.subr.mxu0 0.0
      %5317 = vmatpush1.msra.mxu0 %v3207
      %5318 = vmatprep.subr.mxu0 0.0
      %5319 = vmatpush1.msra.mxu0 %v3208
      %5320 = vmatprep.subr.mxu0 0.0
      %5321 = vmatpush1.msra.mxu0 %v3209
      %5322 = vmatprep.subr.mxu0 0.0
      %5323 = vmatpush1.msra.mxu0 %v3210
      %5324 = vmatprep.subr.mxu0 0.0
      %5325 = vmatpush1.msra.mxu0 %v3211
      %5326 = vmatprep.subr.mxu0 0.0
      %5327 = vmatpush1.msra.mxu0 %v3212
      %5328 = vmatprep.subr.mxu0 0.0
      %5329 = vmatpush1.msra.mxu0 %v3213
      %5330 = vmatprep.mubr.f32.mxu0 %v5028
      %5331 = vmatmul.mubr.f32.gmra.mrb[0].mxu0 %v5027
      %v5332 = vpop.f32.mrb[0].mxu0
      %v5333 = vadd.f32 %v5188, %v5332
      %v5334 = vpop.f32.mrb[0].mxu0
      %5335 = vmatprep.mubr.f32.mxu0 %v5034
      %5336 = vmatmul.mubr.f32.gmra.mrb[0].mxu0 %v5033
      %v5337 = vpop.f32.mrb[0].mxu0
      %v5338 = vadd.f32 %v5193, %v5337
      %v5339 = vpop.f32.mrb[0].mxu0
      %5340 = vmatprep.mubr.f32.mxu0 %v5040
      %5341 = vmatmul.mubr.f32.gmra.mrb[0].mxu0 %v5039
      %v5342 = vpop.f32.mrb[0].mxu0
      %v5343 = vadd.f32 %v5198, %v5342
      %v5344 = vpop.f32.mrb[0].mxu0
      %5345 = vmatprep.mubr.f32.mxu0 %v5046
      %5346 = vmatmul.mubr.f32.gmra.mrb[0].mxu0 %v5045
      %v5347 = vpop.f32.mrb[0].mxu0
      %v5348 = vadd.f32 %v5203, %v5347
      %v5349 = vpop.f32.mrb[0].mxu0
      %5350 = vmatprep.mubr.f32.mxu0 %v5052
      %5351 = vmatmul.mubr.f32.gmra.mrb[0].mxu0 %v5051
      %v5352 = vpop.f32.mrb[0].mxu0
      %v5353 = vadd.f32 %v5208, %v5352
      %v5354 = vpop.f32.mrb[0].mxu0
      %5355 = vmatprep.mubr.f32.mxu0 %v5058
      %5356 = vmatmul.mubr.f32.gmra.mrb[0].mxu0 %v5057
      %v5357 = vpop.f32.mrb[0].mxu0
      %v5358 = vadd.f32 %v5213, %v5357
      %v5359 = vpop.f32.mrb[0].mxu0
      %5360 = vmatprep.mubr.f32.mxu0 %v5064
      %5361 = vmatmul.mubr.f32.gmra.mrb[0].mxu0 %v5063
      %v5362 = vpop.f32.mrb[0].mxu0
      %v5363 = vadd.f32 %v5218, %v5362
      %v5364 = vpop.f32.mrb[0].mxu0
      %5365 = vmatprep.mubr.f32.mxu0 %v5070
      %5366 = vmatmul.mubr.f32.gmra.mrb[0].mxu0 %v5069
      %v5367 = vpop.f32.mrb[0].mxu0
      %v5368 = vadd.f32 %v5223, %v5367
      %v5369 = vpop.f32.mrb[0].mxu0
      %5370 = vmatprep.mubr.f32.mxu0 %v5076
      %5371 = vmatmul.mubr.f32.gmra.mrb[0].mxu0 %v5075
      %v5372 = vpop.f32.mrb[0].mxu0
      %v5373 = vadd.f32 %v5228, %v5372
      %v5374 = vpop.f32.mrb[0].mxu0
      %5375 = vmatprep.mubr.f32.mxu0 %v5082
      %5376 = vmatmul.mubr.f32.gmra.mrb[0].mxu0 %v5081
      %v5377 = vpop.f32.mrb[0].mxu0
      %v5378 = vadd.f32 %v5233, %v5377
      %v5379 = vpop.f32.mrb[0].mxu0
      %5380 = vmatprep.mubr.f32.mxu0 %v5088
      %5381 = vmatmul.mubr.f32.gmra.mrb[0].mxu0 %v5087
      %v5382 = vpop.f32.mrb[0].mxu0
      %v5383 = vadd.f32 %v5238, %v5382
      %v5384 = vpop.f32.mrb[0].mxu0
      %5385 = vmatprep.mubr.f32.mxu0 %v5094
      %5386 = vmatmul.mubr.f32.gmra.mrb[0].mxu0 %v5093
      %v5387 = vpop.f32.mrb[0].mxu0
      %v5388 = vadd.f32 %v5243, %v5387
      %v5389 = vpop.f32.mrb[0].mxu0
      %5390 = vmatprep.mubr.f32.mxu0 %v5100
      %5391 = vmatmul.mubr.f32.gmra.mrb[0].mxu0 %v5099
      %v5392 = vpop.f32.mrb[0].mxu0
      %v5393 = vadd.f32 %v5248, %v5392
      %v5394 = vpop.f32.mrb[0].mxu0
      %5395 = vmatprep.mubr.f32.mxu0 %v5106
      %5396 = vmatmul.mubr.f32.gmra.mrb[0].mxu0 %v5105
      %v5397 = vpop.f32.mrb[0].mxu0
      %v5398 = vadd.f32 %v5253, %v5397
      %v5399 = vpop.f32.mrb[0].mxu0
      %5400 = vmatprep.mubr.f32.mxu0 %v5112
      %5401 = vmatmul.mubr.f32.gmra.mrb[0].mxu0 %v5111
      %v5402 = vpop.f32.mrb[0].mxu0
      %v5403 = vadd.f32 %v5258, %v5402
      %v5404 = vpop.f32.mrb[0].mxu0
      %5405 = vmatprep.mubr.f32.mxu0 %v5118
      %5406 = vmatmul.mubr.f32.gmra.mrb[0].mxu0 %v5117
      %v5407 = vpop.f32.mrb[0].mxu0
      %v5408 = vadd.f32 %v5263, %v5407
      %v5409 = vpop.f32.mrb[0].mxu0
      %5410 = vdwg.mxu0
      %5411 = vmatprep.subr.mxu0 0.0
      %5412 = vmatpush1.msra.mxu0 %v3214
      %5413 = vmatprep.subr.mxu0 0.0
      %5414 = vmatpush1.msra.mxu0 %v3215
      %5415 = vmatprep.subr.mxu0 0.0
      %5416 = vmatpush1.msra.mxu0 %v3216
      %5417 = vmatprep.subr.mxu0 0.0
      %5418 = vmatpush1.msra.mxu0 %v3217
      %5419 = vmatprep.subr.mxu0 0.0
      %5420 = vmatpush1.msra.mxu0 %v3218
      %5421 = vmatprep.subr.mxu0 0.0
      %5422 = vmatpush1.msra.mxu0 %v3219
      %5423 = vmatprep.subr.mxu0 0.0
      %5424 = vmatpush1.msra.mxu0 %v3220
      %5425 = vmatprep.subr.mxu0 0.0
      %5426 = vmatpush1.msra.mxu0 %v3221
      %5427 = vmatprep.subr.mxu0 0.0
      %5428 = vmatpush1.msra.mxu0 %v3222
      %5429 = vmatprep.subr.mxu0 0.0
      %5430 = vmatpush1.msra.mxu0 %v3223
      %5431 = vmatprep.subr.mxu0 0.0
      %5432 = vmatpush1.msra.mxu0 %v3224
      %5433 = vmatprep.subr.mxu0 0.0
      %5434 = vmatpush1.msra.mxu0 %v3225
      %5435 = vmatprep.subr.mxu0 0.0
      %5436 = vmatpush1.msra.mxu0 %v3226
      %5437 = vmatprep.subr.mxu0 0.0
      %5438 = vmatpush1.msra.mxu0 %v3227
      %5439 = vmatprep.subr.mxu0 0.0
      %5440 = vmatpush1.msra.mxu0 %v3228
      %5441 = vmatprep.subr.mxu0 0.0
      %5442 = vmatpush1.msra.mxu0 %v3229
      %5443 = vmatprep.subr.mxu0 0.0
      %5444 = vmatpush1.msra.mxu0 %v3230
      %5445 = vmatprep.subr.mxu0 0.0
      %5446 = vmatpush1.msra.mxu0 %v3231
      %5447 = vmatprep.subr.mxu0 0.0
      %5448 = vmatpush1.msra.mxu0 %v3232
      %5449 = vmatprep.subr.mxu0 0.0
      %5450 = vmatpush1.msra.mxu0 %v3233
      %5451 = vmatprep.subr.mxu0 0.0
      %5452 = vmatpush1.msra.mxu0 %v3234
      %5453 = vmatprep.subr.mxu0 0.0
      %5454 = vmatpush1.msra.mxu0 %v3235
      %5455 = vmatprep.subr.mxu0 0.0
      %5456 = vmatpush1.msra.mxu0 %v3236
      %5457 = vmatprep.subr.mxu0 0.0
      %5458 = vmatpush1.msra.mxu0 %v3237
      %5459 = vmatprep.subr.mxu0 0.0
      %5460 = vmatpush1.msra.mxu0 %v3238
      %5461 = vmatprep.subr.mxu0 0.0
      %5462 = vmatpush1.msra.mxu0 %v3239
      %5463 = vmatprep.subr.mxu0 0.0
      %5464 = vmatpush1.msra.mxu0 %v3240
      %5465 = vmatprep.subr.mxu0 0.0
      %5466 = vmatpush1.msra.mxu0 %v3241
      %5467 = vmatprep.subr.mxu0 0.0
      %5468 = vmatpush1.msra.mxu0 %v3242
      %5469 = vmatprep.subr.mxu0 0.0
      %5470 = vmatpush1.msra.mxu0 %v3243
      %5471 = vmatprep.subr.mxu0 0.0
      %5472 = vmatpush1.msra.mxu0 %v3244
      %5473 = vmatprep.subr.mxu0 0.0
      %5474 = vmatpush1.msra.mxu0 %v3245
      %5475 = vmatprep.mubr.f32.mxu0 %v5030
      %5476 = vmatmul.mubr.f32.gmra.mrb[0].mxu0 %v5029
      %v5477 = vpop.f32.mrb[0].mxu0
      %v5478 = vadd.f32 %v5333, %v5477
      %v5479 = vpop.f32.mrb[0].mxu0
      %5480 = vmatprep.mubr.f32.mxu0 %v5036
      %5481 = vmatmul.mubr.f32.gmra.mrb[0].mxu0 %v5035
      %v5482 = vpop.f32.mrb[0].mxu0
      %v5483 = vadd.f32 %v5338, %v5482
      %v5484 = vpop.f32.mrb[0].mxu0
      %5485 = vmatprep.mubr.f32.mxu0 %v5042
      %5486 = vmatmul.mubr.f32.gmra.mrb[0].mxu0 %v5041
      %v5487 = vpop.f32.mrb[0].mxu0
      %v5488 = vadd.f32 %v5343, %v5487
      %v5489 = vpop.f32.mrb[0].mxu0
      %5490 = vmatprep.mubr.f32.mxu0 %v5048
      %5491 = vmatmul.mubr.f32.gmra.mrb[0].mxu0 %v5047
      %v5492 = vpop.f32.mrb[0].mxu0
      %v5493 = vadd.f32 %v5348, %v5492
      %v5494 = vpop.f32.mrb[0].mxu0
      %5495 = vmatprep.mubr.f32.mxu0 %v5054
      %5496 = vmatmul.mubr.f32.gmra.mrb[0].mxu0 %v5053
      %v5497 = vpop.f32.mrb[0].mxu0
      %v5498 = vadd.f32 %v5353, %v5497
      %v5499 = vpop.f32.mrb[0].mxu0
      %5500 = vmatprep.mubr.f32.mxu0 %v5060
      %5501 = vmatmul.mubr.f32.gmra.mrb[0].mxu0 %v5059
      %v5502 = vpop.f32.mrb[0].mxu0
      %v5503 = vadd.f32 %v5358, %v5502
      %v5504 = vpop.f32.mrb[0].mxu0
      %5505 = vmatprep.mubr.f32.mxu0 %v5066
      %5506 = vmatmul.mubr.f32.gmra.mrb[0].mxu0 %v5065
      %v5507 = vpop.f32.mrb[0].mxu0
      %v5508 = vadd.f32 %v5363, %v5507
      %v5509 = vpop.f32.mrb[0].mxu0
      %5510 = vmatprep.mubr.f32.mxu0 %v5072
      %5511 = vmatmul.mubr.f32.gmra.mrb[0].mxu0 %v5071
      %v5512 = vpop.f32.mrb[0].mxu0
      %v5513 = vadd.f32 %v5368, %v5512
      %v5514 = vpop.f32.mrb[0].mxu0
      %5515 = vmatprep.mubr.f32.mxu0 %v5078
      %5516 = vmatmul.mubr.f32.gmra.mrb[0].mxu0 %v5077
      %v5517 = vpop.f32.mrb[0].mxu0
      %v5518 = vadd.f32 %v5373, %v5517
      %v5519 = vpop.f32.mrb[0].mxu0
      %5520 = vmatprep.mubr.f32.mxu0 %v5084
      %5521 = vmatmul.mubr.f32.gmra.mrb[0].mxu0 %v5083
      %v5522 = vpop.f32.mrb[0].mxu0
      %v5523 = vadd.f32 %v5378, %v5522
      %v5524 = vpop.f32.mrb[0].mxu0
      %5525 = vmatprep.mubr.f32.mxu0 %v5090
      %5526 = vmatmul.mubr.f32.gmra.mrb[0].mxu0 %v5089
      %v5527 = vpop.f32.mrb[0].mxu0
      %v5528 = vadd.f32 %v5383, %v5527
      %v5529 = vpop.f32.mrb[0].mxu0
      %5530 = vmatprep.mubr.f32.mxu0 %v5096
      %5531 = vmatmul.mubr.f32.gmra.mrb[0].mxu0 %v5095
      %v5532 = vpop.f32.mrb[0].mxu0
      %v5533 = vadd.f32 %v5388, %v5532
      %v5534 = vpop.f32.mrb[0].mxu0
      %5535 = vmatprep.mubr.f32.mxu0 %v5102
      %5536 = vmatmul.mubr.f32.gmra.mrb[0].mxu0 %v5101
      %v5537 = vpop.f32.mrb[0].mxu0
      %v5538 = vadd.f32 %v5393, %v5537
      %v5539 = vpop.f32.mrb[0].mxu0
      %5540 = vmatprep.mubr.f32.mxu0 %v5108
      %5541 = vmatmul.mubr.f32.gmra.mrb[0].mxu0 %v5107
      %v5542 = vpop.f32.mrb[0].mxu0
      %v5543 = vadd.f32 %v5398, %v5542
      %v5544 = vpop.f32.mrb[0].mxu0
      %5545 = vmatprep.mubr.f32.mxu0 %v5114
      %5546 = vmatmul.mubr.f32.gmra.mrb[0].mxu0 %v5113
      %v5547 = vpop.f32.mrb[0].mxu0
      %v5548 = vadd.f32 %v5403, %v5547
      %v5549 = vpop.f32.mrb[0].mxu0
      %5550 = vmatprep.mubr.f32.mxu0 %v5120
      %5551 = vmatmul.mubr.f32.gmra.mrb[0].mxu0 %v5119
      %v5552 = vpop.f32.mrb[0].mxu0
      %v5553 = vadd.f32 %v5408, %v5552
      %v5554 = vpop.f32.mrb[0].mxu0
      %5555 = vdwg.mxu0
      %5556 = vst.msk [vmem:[#allocation2] sm:$0xff] %vm463, %v5478
      %5557 = vst.msk [vmem:[#allocation2 + $0x8] sm:$0xff] %vm463, %v5483
      %5558 = vst.msk [vmem:[#allocation2 + $0x10] sm:$0xff] %vm463, %v5488
      %5559 = vst.msk [vmem:[#allocation2 + $0x18] sm:$0xff] %vm463, %v5493
      %5560 = vst.msk [vmem:[#allocation2 + $0x20] sm:$0xff] %vm463, %v5498
      %5561 = vst.msk [vmem:[#allocation2 + $0x28] sm:$0xff] %vm463, %v5503
      %5562 = vst.msk [vmem:[#allocation2 + $0x30] sm:$0xff] %vm463, %v5508
      %5563 = vst.msk [vmem:[#allocation2 + $0x38] sm:$0xff] %vm463, %v5513
      %5564 = vst.msk [vmem:[#allocation2 + $0x40] sm:$0xff] %vm463, %v5518
      %5565 = vst.msk [vmem:[#allocation2 + $0x48] sm:$0xff] %vm463, %v5523
      %5566 = vst.msk [vmem:[#allocation2 + $0x50] sm:$0xff] %vm463, %v5528
      %5567 = vst.msk [vmem:[#allocation2 + $0x58] sm:$0xff] %vm463, %v5533
      %5568 = vst.msk [vmem:[#allocation2 + $0x60] sm:$0xff] %vm463, %v5538
      %5569 = vst.msk [vmem:[#allocation2 + $0x68] sm:$0xff] %vm463, %v5543
      %5570 = vst.msk [vmem:[#allocation2 + $0x70] sm:$0xff] %vm463, %v5548
      %5571 = vst.msk [vmem:[#allocation2 + $0x78] sm:$0xff] %vm463, %v5553
      %v5572 = vmul.f32 %v2846, %v2862
      %v5573 = vmul.f32 %v2847, %v2863
      %v5574 = vmul.f32 %v2848, %v2864
      %v5575 = vmul.f32 %v2849, %v2865
      %v5576 = vmul.f32 %v2850, %v2866
      %v5577 = vmul.f32 %v2851, %v2867
      %v5578 = vmul.f32 %v2852, %v2868
      %v5579 = vmul.f32 %v2853, %v2869
      %v5580 = vmul.f32 %v2854, %v2870
      %v5581 = vmul.f32 %v2855, %v2871
      %v5582 = vmul.f32 %v2856, %v2872
      %v5583 = vmul.f32 %v2857, %v2873
      %v5584 = vmul.f32 %v2858, %v2874
      %v5585 = vmul.f32 %v2859, %v2875
      %v5586 = vmul.f32 %v2860, %v2876
      %v5587 = vmul.f32 %v2861, %v2877
      %v5588 = vmul.f32 %v2846, %v2878
      %v5589 = vmul.f32 %v2847, %v2879
      %v5590 = vmul.f32 %v2848, %v2880
      %v5591 = vmul.f32 %v2849, %v2881
      %v5592 = vmul.f32 %v2850, %v2882
      %v5593 = vmul.f32 %v2851, %v2883
      %v5594 = vmul.f32 %v2852, %v2884
      %v5595 = vmul.f32 %v2853, %v2885
      %v5596 = vmul.f32 %v2854, %v2886
      %v5597 = vmul.f32 %v2855, %v2887
      %v5598 = vmul.f32 %v2856, %v2888
      %v5599 = vmul.f32 %v2857, %v2889
      %v5600 = vmul.f32 %v2858, %v2890
      %v5601 = vmul.f32 %v2859, %v2891
      %v5602 = vmul.f32 %v2860, %v2892
      %v5603 = vmul.f32 %v2861, %v2893
      %v5604 = vmul.f32 %v2846, %v2894
      %v5605 = vmul.f32 %v2847, %v2895
      %v5606 = vmul.f32 %v2848, %v2896
      %v5607 = vmul.f32 %v2849, %v2897
      %v5608 = vmul.f32 %v2850, %v2898
      %v5609 = vmul.f32 %v2851, %v2899
      %v5610 = vmul.f32 %v2852, %v2900
      %v5611 = vmul.f32 %v2853, %v2901
      %v5612 = vmul.f32 %v2854, %v2902
      %v5613 = vmul.f32 %v2855, %v2903
      %v5614 = vmul.f32 %v2856, %v2904
      %v5615 = vmul.f32 %v2857, %v2905
      %v5616 = vmul.f32 %v2858, %v2906
      %v5617 = vmul.f32 %v2859, %v2907
      %v5618 = vmul.f32 %v2860, %v2908
      %v5619 = vmul.f32 %v2861, %v2909
      %v5620 = vmul.f32 %v2846, %v2910
      %v5621 = vmul.f32 %v2847, %v2911
      %v5622 = vmul.f32 %v2848, %v2912
      %v5623 = vmul.f32 %v2849, %v2913
      %v5624 = vmul.f32 %v2850, %v2914
      %v5625 = vmul.f32 %v2851, %v2915
      %v5626 = vmul.f32 %v2852, %v2916
      %v5627 = vmul.f32 %v2853, %v2917
      %v5628 = vmul.f32 %v2854, %v2918
      %v5629 = vmul.f32 %v2855, %v2919
      %v5630 = vmul.f32 %v2856, %v2920
      %v5631 = vmul.f32 %v2857, %v2921
      %v5632 = vmul.f32 %v2858, %v2922
      %v5633 = vmul.f32 %v2859, %v2923
      %v5634 = vmul.f32 %v2860, %v2924
      %v5635 = vmul.f32 %v2861, %v2925
      %v5636 = vmul.f32 %v2846, %v2926
      %v5637 = vmul.f32 %v2847, %v2927
      %v5638 = vmul.f32 %v2848, %v2928
      %v5639 = vmul.f32 %v2849, %v2929
      %v5640 = vmul.f32 %v2850, %v2930
      %v5641 = vmul.f32 %v2851, %v2931
      %v5642 = vmul.f32 %v2852, %v2932
      %v5643 = vmul.f32 %v2853, %v2933
      %v5644 = vmul.f32 %v2854, %v2934
      %v5645 = vmul.f32 %v2855, %v2935
      %v5646 = vmul.f32 %v2856, %v2936
      %v5647 = vmul.f32 %v2857, %v2937
      %v5648 = vmul.f32 %v2858, %v2938
      %v5649 = vmul.f32 %v2859, %v2939
      %v5650 = vmul.f32 %v2860, %v2940
      %v5651 = vmul.f32 %v2861, %v2941
      %v5652 = vmul.f32 %v2846, %v2942
      %v5653 = vmul.f32 %v2847, %v2943
      %v5654 = vmul.f32 %v2848, %v2944
      %v5655 = vmul.f32 %v2849, %v2945
      %v5656 = vmul.f32 %v2850, %v2946
      %v5657 = vmul.f32 %v2851, %v2947
      %v5658 = vmul.f32 %v2852, %v2948
      %v5659 = vmul.f32 %v2853, %v2949
      %v5660 = vmul.f32 %v2854, %v2950
      %v5661 = vmul.f32 %v2855, %v2951
      %v5662 = vmul.f32 %v2856, %v2952
      %v5663 = vmul.f32 %v2857, %v2953
      %v5664 = vmul.f32 %v2858, %v2954
      %v5665 = vmul.f32 %v2859, %v2955
      %v5666 = vmul.f32 %v2860, %v2956
      %v5667 = vmul.f32 %v2861, %v2957
      %v5668 = vmul.f32 %v964, %v2862
      %v5669 = vmul.f32 %v969, %v2863
      %v5670 = vmul.f32 %v974, %v2864
      %v5671 = vmul.f32 %v979, %v2865
      %v5672 = vmul.f32 %v984, %v2866
      %v5673 = vmul.f32 %v989, %v2867
      %v5674 = vmul.f32 %v994, %v2868
      %v5675 = vmul.f32 %v999, %v2869
      %v5676 = vmul.f32 %v1004, %v2870
      %v5677 = vmul.f32 %v1009, %v2871
      %v5678 = vmul.f32 %v1014, %v2872
      %v5679 = vmul.f32 %v1019, %v2873
      %v5680 = vmul.f32 %v1024, %v2874
      %v5681 = vmul.f32 %v1029, %v2875
      %v5682 = vmul.f32 %v1034, %v2876
      %v5683 = vmul.f32 %v1039, %v2877
      %v5684 = vmul.f32 %v964, %v2878
      %v5685 = vmul.f32 %v969, %v2879
      %v5686 = vmul.f32 %v974, %v2880
      %v5687 = vmul.f32 %v979, %v2881
      %v5688 = vmul.f32 %v984, %v2882
      %v5689 = vmul.f32 %v989, %v2883
      %v5690 = vmul.f32 %v994, %v2884
      %v5691 = vmul.f32 %v999, %v2885
      %v5692 = vmul.f32 %v1004, %v2886
      %v5693 = vmul.f32 %v1009, %v2887
      %v5694 = vmul.f32 %v1014, %v2888
      %v5695 = vmul.f32 %v1019, %v2889
      %v5696 = vmul.f32 %v1024, %v2890
      %v5697 = vmul.f32 %v1029, %v2891
      %v5698 = vmul.f32 %v1034, %v2892
      %v5699 = vmul.f32 %v1039, %v2893
      %v5700 = vmul.f32 %v964, %v2894
      %v5701 = vmul.f32 %v969, %v2895
      %v5702 = vmul.f32 %v974, %v2896
      %v5703 = vmul.f32 %v979, %v2897
      %v5704 = vmul.f32 %v984, %v2898
      %v5705 = vmul.f32 %v989, %v2899
      %v5706 = vmul.f32 %v994, %v2900
      %v5707 = vmul.f32 %v999, %v2901
      %v5708 = vmul.f32 %v1004, %v2902
      %v5709 = vmul.f32 %v1009, %v2903
      %v5710 = vmul.f32 %v1014, %v2904
      %v5711 = vmul.f32 %v1019, %v2905
      %v5712 = vmul.f32 %v1024, %v2906
      %v5713 = vmul.f32 %v1029, %v2907
      %v5714 = vmul.f32 %v1034, %v2908
      %v5715 = vmul.f32 %v1039, %v2909
      %v5716 = vmul.f32 %v964, %v2910
      %v5717 = vmul.f32 %v969, %v2911
      %v5718 = vmul.f32 %v974, %v2912
      %v5719 = vmul.f32 %v979, %v2913
      %v5720 = vmul.f32 %v984, %v2914
      %v5721 = vmul.f32 %v989, %v2915
      %v5722 = vmul.f32 %v994, %v2916
      %v5723 = vmul.f32 %v999, %v2917
      %v5724 = vmul.f32 %v1004, %v2918
      %v5725 = vmul.f32 %v1009, %v2919
      %v5726 = vmul.f32 %v1014, %v2920
      %v5727 = vmul.f32 %v1019, %v2921
      %v5728 = vmul.f32 %v1024, %v2922
      %v5729 = vmul.f32 %v1029, %v2923
      %v5730 = vmul.f32 %v1034, %v2924
      %v5731 = vmul.f32 %v1039, %v2925
      %v5732 = vmul.f32 %v964, %v2926
      %v5733 = vmul.f32 %v969, %v2927
      %v5734 = vmul.f32 %v974, %v2928
      %v5735 = vmul.f32 %v979, %v2929
      %v5736 = vmul.f32 %v984, %v2930
      %v5737 = vmul.f32 %v989, %v2931
      %v5738 = vmul.f32 %v994, %v2932
      %v5739 = vmul.f32 %v999, %v2933
      %v5740 = vmul.f32 %v1004, %v2934
      %v5741 = vmul.f32 %v1009, %v2935
      %v5742 = vmul.f32 %v1014, %v2936
      %v5743 = vmul.f32 %v1019, %v2937
      %v5744 = vmul.f32 %v1024, %v2938
      %v5745 = vmul.f32 %v1029, %v2939
      %v5746 = vmul.f32 %v1034, %v2940
      %v5747 = vmul.f32 %v1039, %v2941
      %v5748 = vmul.f32 %v964, %v2942
      %v5749 = vmul.f32 %v969, %v2943
      %v5750 = vmul.f32 %v974, %v2944
      %v5751 = vmul.f32 %v979, %v2945
      %v5752 = vmul.f32 %v984, %v2946
      %v5753 = vmul.f32 %v989, %v2947
      %v5754 = vmul.f32 %v994, %v2948
      %v5755 = vmul.f32 %v999, %v2949
      %v5756 = vmul.f32 %v1004, %v2950
      %v5757 = vmul.f32 %v1009, %v2951
      %v5758 = vmul.f32 %v1014, %v2952
      %v5759 = vmul.f32 %v1019, %v2953
      %v5760 = vmul.f32 %v1024, %v2954
      %v5761 = vmul.f32 %v1029, %v2955
      %v5762 = vmul.f32 %v1034, %v2956
      %v5763 = vmul.f32 %v1039, %v2957
      %v5765 = vsel %vm463, %v2365, 0
      %v5768 = vsel %vm463, %v2366, 0
      %v5771 = vsel %vm463, %v2367, 0
      %v5774 = vsel %vm463, %v2368, 0
      %v5777 = vsel %vm463, %v2369, 0
      %v5780 = vsel %vm463, %v2370, 0
      %v5783 = vsel %vm463, %v2371, 0
      %v5786 = vsel %vm463, %v2372, 0
      %v5789 = vsel %vm463, %v2373, 0
      %v5792 = vsel %vm463, %v2374, 0
      %v5795 = vsel %vm463, %v2375, 0
      %v5798 = vsel %vm463, %v2376, 0
      %v5801 = vsel %vm463, %v2377, 0
      %v5804 = vsel %vm463, %v2378, 0
      %v5807 = vsel %vm463, %v2379, 0
      %v5810 = vsel %vm463, %v2380, 0
      %v5813 = vsel %vm463, %v5572, 0
      %v5816 = vsel %vm463, %v5573, 0
      %v5819 = vsel %vm463, %v5574, 0
      %v5822 = vsel %vm463, %v5575, 0
      %v5825 = vsel %vm463, %v5576, 0
      %v5828 = vsel %vm463, %v5577, 0
      %v5831 = vsel %vm463, %v5578, 0
      %v5834 = vsel %vm463, %v5579, 0
      %v5837 = vsel %vm463, %v5580, 0
      %v5840 = vsel %vm463, %v5581, 0
      %v5843 = vsel %vm463, %v5582, 0
      %v5846 = vsel %vm463, %v5583, 0
      %v5849 = vsel %vm463, %v5584, 0
      %v5852 = vsel %vm463, %v5585, 0
      %v5855 = vsel %vm463, %v5586, 0
      %v5858 = vsel %vm463, %v5587, 0
      %v5861 = vsel %vm463, %v5588, 0
      %v5864 = vsel %vm463, %v5589, 0
      %v5867 = vsel %vm463, %v5590, 0
      %v5870 = vsel %vm463, %v5591, 0
      %v5873 = vsel %vm463, %v5592, 0
      %v5876 = vsel %vm463, %v5593, 0
      %v5879 = vsel %vm463, %v5594, 0
      %v5882 = vsel %vm463, %v5595, 0
      %v5885 = vsel %vm463, %v5596, 0
      %v5888 = vsel %vm463, %v5597, 0
      %v5891 = vsel %vm463, %v5598, 0
      %v5894 = vsel %vm463, %v5599, 0
      %v5897 = vsel %vm463, %v5600, 0
      %v5900 = vsel %vm463, %v5601, 0
      %v5903 = vsel %vm463, %v5602, 0
      %v5906 = vsel %vm463, %v5603, 0
      %v5909 = vsel %vm463, %v5604, 0
      %v5912 = vsel %vm463, %v5605, 0
      %v5915 = vsel %vm463, %v5606, 0
      %v5918 = vsel %vm463, %v5607, 0
      %v5921 = vsel %vm463, %v5608, 0
      %v5924 = vsel %vm463, %v5609, 0
      %v5927 = vsel %vm463, %v5610, 0
      %v5930 = vsel %vm463, %v5611, 0
      %v5933 = vsel %vm463, %v5612, 0
      %v5936 = vsel %vm463, %v5613, 0
      %v5939 = vsel %vm463, %v5614, 0
      %v5942 = vsel %vm463, %v5615, 0
      %v5945 = vsel %vm463, %v5616, 0
      %v5948 = vsel %vm463, %v5617, 0
      %v5951 = vsel %vm463, %v5618, 0
      %v5954 = vsel %vm463, %v5619, 0
      %v5957 = vsel %vm463, %v5620, 0
      %v5960 = vsel %vm463, %v5621, 0
      %v5963 = vsel %vm463, %v5622, 0
      %v5966 = vsel %vm463, %v5623, 0
      %v5969 = vsel %vm463, %v5624, 0
      %v5972 = vsel %vm463, %v5625, 0
      %v5975 = vsel %vm463, %v5626, 0
      %v5978 = vsel %vm463, %v5627, 0
      %v5981 = vsel %vm463, %v5628, 0
      %v5984 = vsel %vm463, %v5629, 0
      %v5987 = vsel %vm463, %v5630, 0
      %v5990 = vsel %vm463, %v5631, 0
      %v5993 = vsel %vm463, %v5632, 0
      %v5996 = vsel %vm463, %v5633, 0
      %v5999 = vsel %vm463, %v5634, 0
      %v6002 = vsel %vm463, %v5635, 0
      %v6005 = vsel %vm463, %v5636, 0
      %v6008 = vsel %vm463, %v5637, 0
      %v6011 = vsel %vm463, %v5638, 0
      %v6014 = vsel %vm463, %v5639, 0
      %v6017 = vsel %vm463, %v5640, 0
      %v6020 = vsel %vm463, %v5641, 0
      %v6023 = vsel %vm463, %v5642, 0
      %v6026 = vsel %vm463, %v5643, 0
      %v6029 = vsel %vm463, %v5644, 0
      %v6032 = vsel %vm463, %v5645, 0
      %v6035 = vsel %vm463, %v5646, 0
      %v6038 = vsel %vm463, %v5647, 0
      %v6041 = vsel %vm463, %v5648, 0
      %v6044 = vsel %vm463, %v5649, 0
      %v6047 = vsel %vm463, %v5650, 0
      %v6050 = vsel %vm463, %v5651, 0
      %v6053 = vsel %vm463, %v5652, 0
      %v6056 = vsel %vm463, %v5653, 0
      %v6059 = vsel %vm463, %v5654, 0
      %v6062 = vsel %vm463, %v5655, 0
      %v6065 = vsel %vm463, %v5656, 0
      %v6068 = vsel %vm463, %v5657, 0
      %v6071 = vsel %vm463, %v5658, 0
      %v6074 = vsel %vm463, %v5659, 0
      %v6077 = vsel %vm463, %v5660, 0
      %v6080 = vsel %vm463, %v5661, 0
      %v6083 = vsel %vm463, %v5662, 0
      %v6086 = vsel %vm463, %v5663, 0
      %v6089 = vsel %vm463, %v5664, 0
      %v6092 = vsel %vm463, %v5665, 0
      %v6095 = vsel %vm463, %v5666, 0
      %v6098 = vsel %vm463, %v5667, 0
      %6100 = vmatprep.subr.mxu0 0.0
      %6101 = vmatpush1.xpose.msra.mxu0 %v5813
      %6102 = vmatprep.subr.mxu0 0.0
      %6103 = vmatpush1.xpose.msra.mxu0 %v5816
      %6104 = vmatprep.subr.mxu0 0.0
      %6105 = vmatpush1.xpose.msra.mxu0 %v5819
      %6106 = vmatprep.subr.mxu0 0.0
      %6107 = vmatpush1.xpose.msra.mxu0 %v5822
      %6108 = vmatprep.subr.mxu0 0.0
      %6109 = vmatpush1.xpose.msra.mxu0 %v5825
      %6110 = vmatprep.subr.mxu0 0.0
      %6111 = vmatpush1.xpose.msra.mxu0 %v5828
      %6112 = vmatprep.subr.mxu0 0.0
      %6113 = vmatpush1.xpose.msra.mxu0 %v5831
      %6114 = vmatprep.subr.mxu0 0.0
      %6115 = vmatpush1.xpose.msra.mxu0 %v5834
      %6116 = vmatprep.subr.mxu0 0.0
      %6117 = vmatpush1.xpose.msra.mxu0 %v5837
      %6118 = vmatprep.subr.mxu0 0.0
      %6119 = vmatpush1.xpose.msra.mxu0 %v5840
      %6120 = vmatprep.subr.mxu0 0.0
      %6121 = vmatpush1.xpose.msra.mxu0 %v5843
      %6122 = vmatprep.subr.mxu0 0.0
      %6123 = vmatpush1.xpose.msra.mxu0 %v5846
      %6124 = vmatprep.subr.mxu0 0.0
      %6125 = vmatpush1.xpose.msra.mxu0 %v5849
      %6126 = vmatprep.subr.mxu0 0.0
      %6127 = vmatpush1.xpose.msra.mxu0 %v5852
      %6128 = vmatprep.subr.mxu0 0.0
      %6129 = vmatpush1.xpose.msra.mxu0 %v5855
      %6130 = vmatprep.subr.mxu0 0.0
      %6131 = vmatpush1.xpose.msra.mxu0 %v5858
      %6132 = vmatprep.subr.mxu0 0.0
      %6133 = vmatpush1.xpose.msra.mxu0 %v5861
      %6134 = vmatprep.subr.mxu0 0.0
      %6135 = vmatpush1.xpose.msra.mxu0 %v5864
      %6136 = vmatprep.subr.mxu0 0.0
      %6137 = vmatpush1.xpose.msra.mxu0 %v5867
      %6138 = vmatprep.subr.mxu0 0.0
      %6139 = vmatpush1.xpose.msra.mxu0 %v5870
      %6140 = vmatprep.subr.mxu0 0.0
      %6141 = vmatpush1.xpose.msra.mxu0 %v5873
      %6142 = vmatprep.subr.mxu0 0.0
      %6143 = vmatpush1.xpose.msra.mxu0 %v5876
      %6144 = vmatprep.subr.mxu0 0.0
      %6145 = vmatpush1.xpose.msra.mxu0 %v5879
      %6146 = vmatprep.subr.mxu0 0.0
      %6147 = vmatpush1.xpose.msra.mxu0 %v5882
      %6148 = vmatprep.subr.mxu0 0.0
      %6149 = vmatpush1.xpose.msra.mxu0 %v5885
      %6150 = vmatprep.subr.mxu0 0.0
      %6151 = vmatpush1.xpose.msra.mxu0 %v5888
      %6152 = vmatprep.subr.mxu0 0.0
      %6153 = vmatpush1.xpose.msra.mxu0 %v5891
      %6154 = vmatprep.subr.mxu0 0.0
      %6155 = vmatpush1.xpose.msra.mxu0 %v5894
      %6156 = vmatprep.subr.mxu0 0.0
      %6157 = vmatpush1.xpose.msra.mxu0 %v5897
      %6158 = vmatprep.subr.mxu0 0.0
      %6159 = vmatpush1.xpose.msra.mxu0 %v5900
      %6160 = vmatprep.subr.mxu0 0.0
      %6161 = vmatpush1.xpose.msra.mxu0 %v5903
      %6162 = vmatprep.subr.mxu0 0.0
      %6163 = vmatpush1.xpose.msra.mxu0 %v5906
      %6164 = vmatprep.mubr.f32.mxu0 0.0
      %6165 = vmatmul.mubr.f32.gmra.mrb[0].mxu0 %v5765
      %v6166 = vpop.f32.mrb[0].mxu0
      %v6167 = vadd.f32 %v2958, %v6166
      %v6168 = vpop.f32.mrb[0].mxu0
      %v6169 = vadd.f32 %v2959, %v6168
      %6170 = vmatprep.mubr.f32.mxu0 0.0
      %6171 = vmatmul.mubr.f32.gmra.mrb[0].mxu0 %v5768
      %v6172 = vpop.f32.mrb[0].mxu0
      %v6173 = vadd.f32 %v2964, %v6172
      %v6174 = vpop.f32.mrb[0].mxu0
      %v6175 = vadd.f32 %v2965, %v6174
      %6176 = vmatprep.mubr.f32.mxu0 0.0
      %6177 = vmatmul.mubr.f32.gmra.mrb[0].mxu0 %v5771
      %v6178 = vpop.f32.mrb[0].mxu0
      %v6179 = vadd.f32 %v2970, %v6178
      %v6180 = vpop.f32.mrb[0].mxu0
      %v6181 = vadd.f32 %v2971, %v6180
      %6182 = vmatprep.mubr.f32.mxu0 0.0
      %6183 = vmatmul.mubr.f32.gmra.mrb[0].mxu0 %v5774
      %v6184 = vpop.f32.mrb[0].mxu0
      %v6185 = vadd.f32 %v2976, %v6184
      %v6186 = vpop.f32.mrb[0].mxu0
      %v6187 = vadd.f32 %v2977, %v6186
      %6188 = vmatprep.mubr.f32.mxu0 0.0
      %6189 = vmatmul.mubr.f32.gmra.mrb[0].mxu0 %v5777
      %v6190 = vpop.f32.mrb[0].mxu0
      %v6191 = vadd.f32 %v2982, %v6190
      %v6192 = vpop.f32.mrb[0].mxu0
      %v6193 = vadd.f32 %v2983, %v6192
      %6194 = vmatprep.mubr.f32.mxu0 0.0
      %6195 = vmatmul.mubr.f32.gmra.mrb[0].mxu0 %v5780
      %v6196 = vpop.f32.mrb[0].mxu0
      %v6197 = vadd.f32 %v2988, %v6196
      %v6198 = vpop.f32.mrb[0].mxu0
      %v6199 = vadd.f32 %v2989, %v6198
      %6200 = vmatprep.mubr.f32.mxu0 0.0
      %6201 = vmatmul.mubr.f32.gmra.mrb[0].mxu0 %v5783
      %v6202 = vpop.f32.mrb[0].mxu0
      %v6203 = vadd.f32 %v2994, %v6202
      %v6204 = vpop.f32.mrb[0].mxu0
      %v6205 = vadd.f32 %v2995, %v6204
      %6206 = vmatprep.mubr.f32.mxu0 0.0
      %6207 = vmatmul.mubr.f32.gmra.mrb[0].mxu0 %v5786
      %v6208 = vpop.f32.mrb[0].mxu0
      %v6209 = vadd.f32 %v3000, %v6208
      %v6210 = vpop.f32.mrb[0].mxu0
      %v6211 = vadd.f32 %v3001, %v6210
      %6212 = vmatprep.mubr.f32.mxu0 0.0
      %6213 = vmatmul.mubr.f32.gmra.mrb[0].mxu0 %v5789
      %v6214 = vpop.f32.mrb[0].mxu0
      %v6215 = vadd.f32 %v3006, %v6214
      %v6216 = vpop.f32.mrb[0].mxu0
      %v6217 = vadd.f32 %v3007, %v6216
      %6218 = vmatprep.mubr.f32.mxu0 0.0
      %6219 = vmatmul.mubr.f32.gmra.mrb[0].mxu0 %v5792
      %v6220 = vpop.f32.mrb[0].mxu0
      %v6221 = vadd.f32 %v3012, %v6220
      %v6222 = vpop.f32.mrb[0].mxu0
      %v6223 = vadd.f32 %v3013, %v6222
      %6224 = vmatprep.mubr.f32.mxu0 0.0
      %6225 = vmatmul.mubr.f32.gmra.mrb[0].mxu0 %v5795
      %v6226 = vpop.f32.mrb[0].mxu0
      %v6227 = vadd.f32 %v3018, %v6226
      %v6228 = vpop.f32.mrb[0].mxu0
      %v6229 = vadd.f32 %v3019, %v6228
      %6230 = vmatprep.mubr.f32.mxu0 0.0
      %6231 = vmatmul.mubr.f32.gmra.mrb[0].mxu0 %v5798
      %v6232 = vpop.f32.mrb[0].mxu0
      %v6233 = vadd.f32 %v3024, %v6232
      %v6234 = vpop.f32.mrb[0].mxu0
      %v6235 = vadd.f32 %v3025, %v6234
      %6236 = vmatprep.mubr.f32.mxu0 0.0
      %6237 = vmatmul.mubr.f32.gmra.mrb[0].mxu0 %v5801
      %v6238 = vpop.f32.mrb[0].mxu0
      %v6239 = vadd.f32 %v3030, %v6238
      %v6240 = vpop.f32.mrb[0].mxu0
      %v6241 = vadd.f32 %v3031, %v6240
      %6242 = vmatprep.mubr.f32.mxu0 0.0
      %6243 = vmatmul.mubr.f32.gmra.mrb[0].mxu0 %v5804
      %v6244 = vpop.f32.mrb[0].mxu0
      %v6245 = vadd.f32 %v3036, %v6244
      %v6246 = vpop.f32.mrb[0].mxu0
      %v6247 = vadd.f32 %v3037, %v6246
      %6248 = vmatprep.mubr.f32.mxu0 0.0
      %6249 = vmatmul.mubr.f32.gmra.mrb[0].mxu0 %v5807
      %v6250 = vpop.f32.mrb[0].mxu0
      %v6251 = vadd.f32 %v3042, %v6250
      %v6252 = vpop.f32.mrb[0].mxu0
      %v6253 = vadd.f32 %v3043, %v6252
      %6254 = vmatprep.mubr.f32.mxu0 0.0
      %6255 = vmatmul.mubr.f32.gmra.mrb[0].mxu0 %v5810
      %v6256 = vpop.f32.mrb[0].mxu0
      %v6257 = vadd.f32 %v3048, %v6256
      %v6258 = vpop.f32.mrb[0].mxu0
      %v6259 = vadd.f32 %v3049, %v6258
      %6260 = vdwg.mxu0
      %6261 = vmatprep.subr.mxu0 0.0
      %6262 = vmatpush1.xpose.msra.mxu0 %v5909
      %6263 = vmatprep.subr.mxu0 0.0
      %6264 = vmatpush1.xpose.msra.mxu0 %v5912
      %6265 = vmatprep.subr.mxu0 0.0
      %6266 = vmatpush1.xpose.msra.mxu0 %v5915
      %6267 = vmatprep.subr.mxu0 0.0
      %6268 = vmatpush1.xpose.msra.mxu0 %v5918
      %6269 = vmatprep.subr.mxu0 0.0
      %6270 = vmatpush1.xpose.msra.mxu0 %v5921
      %6271 = vmatprep.subr.mxu0 0.0
      %6272 = vmatpush1.xpose.msra.mxu0 %v5924
      %6273 = vmatprep.subr.mxu0 0.0
      %6274 = vmatpush1.xpose.msra.mxu0 %v5927
      %6275 = vmatprep.subr.mxu0 0.0
      %6276 = vmatpush1.xpose.msra.mxu0 %v5930
      %6277 = vmatprep.subr.mxu0 0.0
      %6278 = vmatpush1.xpose.msra.mxu0 %v5933
      %6279 = vmatprep.subr.mxu0 0.0
      %6280 = vmatpush1.xpose.msra.mxu0 %v5936
      %6281 = vmatprep.subr.mxu0 0.0
      %6282 = vmatpush1.xpose.msra.mxu0 %v5939
      %6283 = vmatprep.subr.mxu0 0.0
      %6284 = vmatpush1.xpose.msra.mxu0 %v5942
      %6285 = vmatprep.subr.mxu0 0.0
      %6286 = vmatpush1.xpose.msra.mxu0 %v5945
      %6287 = vmatprep.subr.mxu0 0.0
      %6288 = vmatpush1.xpose.msra.mxu0 %v5948
      %6289 = vmatprep.subr.mxu0 0.0
      %6290 = vmatpush1.xpose.msra.mxu0 %v5951
      %6291 = vmatprep.subr.mxu0 0.0
      %6292 = vmatpush1.xpose.msra.mxu0 %v5954
      %6293 = vmatprep.subr.mxu0 0.0
      %6294 = vmatpush1.xpose.msra.mxu0 %v5957
      %6295 = vmatprep.subr.mxu0 0.0
      %6296 = vmatpush1.xpose.msra.mxu0 %v5960
      %6297 = vmatprep.subr.mxu0 0.0
      %6298 = vmatpush1.xpose.msra.mxu0 %v5963
      %6299 = vmatprep.subr.mxu0 0.0
      %6300 = vmatpush1.xpose.msra.mxu0 %v5966
      %6301 = vmatprep.subr.mxu0 0.0
      %6302 = vmatpush1.xpose.msra.mxu0 %v5969
      %6303 = vmatprep.subr.mxu0 0.0
      %6304 = vmatpush1.xpose.msra.mxu0 %v5972
      %6305 = vmatprep.subr.mxu0 0.0
      %6306 = vmatpush1.xpose.msra.mxu0 %v5975
      %6307 = vmatprep.subr.mxu0 0.0
      %6308 = vmatpush1.xpose.msra.mxu0 %v5978
      %6309 = vmatprep.subr.mxu0 0.0
      %6310 = vmatpush1.xpose.msra.mxu0 %v5981
      %6311 = vmatprep.subr.mxu0 0.0
      %6312 = vmatpush1.xpose.msra.mxu0 %v5984
      %6313 = vmatprep.subr.mxu0 0.0
      %6314 = vmatpush1.xpose.msra.mxu0 %v5987
      %6315 = vmatprep.subr.mxu0 0.0
      %6316 = vmatpush1.xpose.msra.mxu0 %v5990
      %6317 = vmatprep.subr.mxu0 0.0
      %6318 = vmatpush1.xpose.msra.mxu0 %v5993
      %6319 = vmatprep.subr.mxu0 0.0
      %6320 = vmatpush1.xpose.msra.mxu0 %v5996
      %6321 = vmatprep.subr.mxu0 0.0
      %6322 = vmatpush1.xpose.msra.mxu0 %v5999
      %6323 = vmatprep.subr.mxu0 0.0
      %6324 = vmatpush1.xpose.msra.mxu0 %v6002
      %6325 = vmatprep.mubr.f32.mxu0 0.0
      %6326 = vmatmul.mubr.f32.gmra.mrb[0].mxu0 %v5765
      %v6327 = vpop.f32.mrb[0].mxu0
      %v6328 = vadd.f32 %v2960, %v6327
      %v6329 = vpop.f32.mrb[0].mxu0
      %v6330 = vadd.f32 %v2961, %v6329
      %6331 = vmatprep.mubr.f32.mxu0 0.0
      %6332 = vmatmul.mubr.f32.gmra.mrb[0].mxu0 %v5768
      %v6333 = vpop.f32.mrb[0].mxu0
      %v6334 = vadd.f32 %v2966, %v6333
      %v6335 = vpop.f32.mrb[0].mxu0
      %v6336 = vadd.f32 %v2967, %v6335
      %6337 = vmatprep.mubr.f32.mxu0 0.0
      %6338 = vmatmul.mubr.f32.gmra.mrb[0].mxu0 %v5771
      %v6339 = vpop.f32.mrb[0].mxu0
      %v6340 = vadd.f32 %v2972, %v6339
      %v6341 = vpop.f32.mrb[0].mxu0
      %v6342 = vadd.f32 %v2973, %v6341
      %6343 = vmatprep.mubr.f32.mxu0 0.0
      %6344 = vmatmul.mubr.f32.gmra.mrb[0].mxu0 %v5774
      %v6345 = vpop.f32.mrb[0].mxu0
      %v6346 = vadd.f32 %v2978, %v6345
      %v6347 = vpop.f32.mrb[0].mxu0
      %v6348 = vadd.f32 %v2979, %v6347
      %6349 = vmatprep.mubr.f32.mxu0 0.0
      %6350 = vmatmul.mubr.f32.gmra.mrb[0].mxu0 %v5777
      %v6351 = vpop.f32.mrb[0].mxu0
      %v6352 = vadd.f32 %v2984, %v6351
      %v6353 = vpop.f32.mrb[0].mxu0
      %v6354 = vadd.f32 %v2985, %v6353
      %6355 = vmatprep.mubr.f32.mxu0 0.0
      %6356 = vmatmul.mubr.f32.gmra.mrb[0].mxu0 %v5780
      %v6357 = vpop.f32.mrb[0].mxu0
      %v6358 = vadd.f32 %v2990, %v6357
      %v6359 = vpop.f32.mrb[0].mxu0
      %v6360 = vadd.f32 %v2991, %v6359
      %6361 = vmatprep.mubr.f32.mxu0 0.0
      %6362 = vmatmul.mubr.f32.gmra.mrb[0].mxu0 %v5783
      %v6363 = vpop.f32.mrb[0].mxu0
      %v6364 = vadd.f32 %v2996, %v6363
      %v6365 = vpop.f32.mrb[0].mxu0
      %v6366 = vadd.f32 %v2997, %v6365
      %6367 = vmatprep.mubr.f32.mxu0 0.0
      %6368 = vmatmul.mubr.f32.gmra.mrb[0].mxu0 %v5786
      %v6369 = vpop.f32.mrb[0].mxu0
      %v6370 = vadd.f32 %v3002, %v6369
      %v6371 = vpop.f32.mrb[0].mxu0
      %v6372 = vadd.f32 %v3003, %v6371
      %6373 = vmatprep.mubr.f32.mxu0 0.0
      %6374 = vmatmul.mubr.f32.gmra.mrb[0].mxu0 %v5789
      %v6375 = vpop.f32.mrb[0].mxu0
      %v6376 = vadd.f32 %v3008, %v6375
      %v6377 = vpop.f32.mrb[0].mxu0
      %v6378 = vadd.f32 %v3009, %v6377
      %6379 = vmatprep.mubr.f32.mxu0 0.0
      %6380 = vmatmul.mubr.f32.gmra.mrb[0].mxu0 %v5792
      %v6381 = vpop.f32.mrb[0].mxu0
      %v6382 = vadd.f32 %v3014, %v6381
      %v6383 = vpop.f32.mrb[0].mxu0
      %v6384 = vadd.f32 %v3015, %v6383
      %6385 = vmatprep.mubr.f32.mxu0 0.0
      %6386 = vmatmul.mubr.f32.gmra.mrb[0].mxu0 %v5795
      %v6387 = vpop.f32.mrb[0].mxu0
      %v6388 = vadd.f32 %v3020, %v6387
      %v6389 = vpop.f32.mrb[0].mxu0
      %v6390 = vadd.f32 %v3021, %v6389
      %6391 = vmatprep.mubr.f32.mxu0 0.0
      %6392 = vmatmul.mubr.f32.gmra.mrb[0].mxu0 %v5798
      %v6393 = vpop.f32.mrb[0].mxu0
      %v6394 = vadd.f32 %v3026, %v6393
      %v6395 = vpop.f32.mrb[0].mxu0
      %v6396 = vadd.f32 %v3027, %v6395
      %6397 = vmatprep.mubr.f32.mxu0 0.0
      %6398 = vmatmul.mubr.f32.gmra.mrb[0].mxu0 %v5801
      %v6399 = vpop.f32.mrb[0].mxu0
      %v6400 = vadd.f32 %v3032, %v6399
      %v6401 = vpop.f32.mrb[0].mxu0
      %v6402 = vadd.f32 %v3033, %v6401
      %6403 = vmatprep.mubr.f32.mxu0 0.0
      %6404 = vmatmul.mubr.f32.gmra.mrb[0].mxu0 %v5804
      %v6405 = vpop.f32.mrb[0].mxu0
      %v6406 = vadd.f32 %v3038, %v6405
      %v6407 = vpop.f32.mrb[0].mxu0
      %v6408 = vadd.f32 %v3039, %v6407
      %6409 = vmatprep.mubr.f32.mxu0 0.0
      %6410 = vmatmul.mubr.f32.gmra.mrb[0].mxu0 %v5807
      %v6411 = vpop.f32.mrb[0].mxu0
      %v6412 = vadd.f32 %v3044, %v6411
      %v6413 = vpop.f32.mrb[0].mxu0
      %v6414 = vadd.f32 %v3045, %v6413
      %6415 = vmatprep.mubr.f32.mxu0 0.0
      %6416 = vmatmul.mubr.f32.gmra.mrb[0].mxu0 %v5810
      %v6417 = vpop.f32.mrb[0].mxu0
      %v6418 = vadd.f32 %v3050, %v6417
      %v6419 = vpop.f32.mrb[0].mxu0
      %v6420 = vadd.f32 %v3051, %v6419
      %6421 = vdwg.mxu0
      %6422 = vmatprep.subr.mxu0 0.0
      %6423 = vmatpush1.xpose.msra.mxu0 %v6005
      %6424 = vmatprep.subr.mxu0 0.0
      %6425 = vmatpush1.xpose.msra.mxu0 %v6008
      %6426 = vmatprep.subr.mxu0 0.0
      %6427 = vmatpush1.xpose.msra.mxu0 %v6011
      %6428 = vmatprep.subr.mxu0 0.0
      %6429 = vmatpush1.xpose.msra.mxu0 %v6014
      %6430 = vmatprep.subr.mxu0 0.0
      %6431 = vmatpush1.xpose.msra.mxu0 %v6017
      %6432 = vmatprep.subr.mxu0 0.0
      %6433 = vmatpush1.xpose.msra.mxu0 %v6020
      %6434 = vmatprep.subr.mxu0 0.0
      %6435 = vmatpush1.xpose.msra.mxu0 %v6023
      %6436 = vmatprep.subr.mxu0 0.0
      %6437 = vmatpush1.xpose.msra.mxu0 %v6026
      %6438 = vmatprep.subr.mxu0 0.0
      %6439 = vmatpush1.xpose.msra.mxu0 %v6029
      %6440 = vmatprep.subr.mxu0 0.0
      %6441 = vmatpush1.xpose.msra.mxu0 %v6032
      %6442 = vmatprep.subr.mxu0 0.0
      %6443 = vmatpush1.xpose.msra.mxu0 %v6035
      %6444 = vmatprep.subr.mxu0 0.0
      %6445 = vmatpush1.xpose.msra.mxu0 %v6038
      %6446 = vmatprep.subr.mxu0 0.0
      %6447 = vmatpush1.xpose.msra.mxu0 %v6041
      %6448 = vmatprep.subr.mxu0 0.0
      %6449 = vmatpush1.xpose.msra.mxu0 %v6044
      %6450 = vmatprep.subr.mxu0 0.0
      %6451 = vmatpush1.xpose.msra.mxu0 %v6047
      %6452 = vmatprep.subr.mxu0 0.0
      %6453 = vmatpush1.xpose.msra.mxu0 %v6050
      %6454 = vmatprep.subr.mxu0 0.0
      %6455 = vmatpush1.xpose.msra.mxu0 %v6053
      %6456 = vmatprep.subr.mxu0 0.0
      %6457 = vmatpush1.xpose.msra.mxu0 %v6056
      %6458 = vmatprep.subr.mxu0 0.0
      %6459 = vmatpush1.xpose.msra.mxu0 %v6059
      %6460 = vmatprep.subr.mxu0 0.0
      %6461 = vmatpush1.xpose.msra.mxu0 %v6062
      %6462 = vmatprep.subr.mxu0 0.0
      %6463 = vmatpush1.xpose.msra.mxu0 %v6065
      %6464 = vmatprep.subr.mxu0 0.0
      %6465 = vmatpush1.xpose.msra.mxu0 %v6068
      %6466 = vmatprep.subr.mxu0 0.0
      %6467 = vmatpush1.xpose.msra.mxu0 %v6071
      %6468 = vmatprep.subr.mxu0 0.0
      %6469 = vmatpush1.xpose.msra.mxu0 %v6074
      %6470 = vmatprep.subr.mxu0 0.0
      %6471 = vmatpush1.xpose.msra.mxu0 %v6077
      %6472 = vmatprep.subr.mxu0 0.0
      %6473 = vmatpush1.xpose.msra.mxu0 %v6080
      %6474 = vmatprep.subr.mxu0 0.0
      %6475 = vmatpush1.xpose.msra.mxu0 %v6083
      %6476 = vmatprep.subr.mxu0 0.0
      %6477 = vmatpush1.xpose.msra.mxu0 %v6086
      %6478 = vmatprep.subr.mxu0 0.0
      %6479 = vmatpush1.xpose.msra.mxu0 %v6089
      %6480 = vmatprep.subr.mxu0 0.0
      %6481 = vmatpush1.xpose.msra.mxu0 %v6092
      %6482 = vmatprep.subr.mxu0 0.0
      %6483 = vmatpush1.xpose.msra.mxu0 %v6095
      %6484 = vmatprep.subr.mxu0 0.0
      %6485 = vmatpush1.xpose.msra.mxu0 %v6098
      %6486 = vmatprep.mubr.f32.mxu0 0.0
      %6487 = vmatmul.mubr.f32.gmra.mrb[0].mxu0 %v5765
      %v6488 = vpop.f32.mrb[0].mxu0
      %v6489 = vadd.f32 %v2962, %v6488
      %v6490 = vpop.f32.mrb[0].mxu0
      %v6491 = vadd.f32 %v2963, %v6490
      %6492 = vmatprep.mubr.f32.mxu0 0.0
      %6493 = vmatmul.mubr.f32.gmra.mrb[0].mxu0 %v5768
      %v6494 = vpop.f32.mrb[0].mxu0
      %v6495 = vadd.f32 %v2968, %v6494
      %v6496 = vpop.f32.mrb[0].mxu0
      %v6497 = vadd.f32 %v2969, %v6496
      %6498 = vmatprep.mubr.f32.mxu0 0.0
      %6499 = vmatmul.mubr.f32.gmra.mrb[0].mxu0 %v5771
      %v6500 = vpop.f32.mrb[0].mxu0
      %v6501 = vadd.f32 %v2974, %v6500
      %v6502 = vpop.f32.mrb[0].mxu0
      %v6503 = vadd.f32 %v2975, %v6502
      %6504 = vmatprep.mubr.f32.mxu0 0.0
      %6505 = vmatmul.mubr.f32.gmra.mrb[0].mxu0 %v5774
      %v6506 = vpop.f32.mrb[0].mxu0
      %v6507 = vadd.f32 %v2980, %v6506
      %v6508 = vpop.f32.mrb[0].mxu0
      %v6509 = vadd.f32 %v2981, %v6508
      %6510 = vmatprep.mubr.f32.mxu0 0.0
      %6511 = vmatmul.mubr.f32.gmra.mrb[0].mxu0 %v5777
      %v6512 = vpop.f32.mrb[0].mxu0
      %v6513 = vadd.f32 %v2986, %v6512
      %v6514 = vpop.f32.mrb[0].mxu0
      %v6515 = vadd.f32 %v2987, %v6514
      %6516 = vmatprep.mubr.f32.mxu0 0.0
      %6517 = vmatmul.mubr.f32.gmra.mrb[0].mxu0 %v5780
      %v6518 = vpop.f32.mrb[0].mxu0
      %v6519 = vadd.f32 %v2992, %v6518
      %v6520 = vpop.f32.mrb[0].mxu0
      %v6521 = vadd.f32 %v2993, %v6520
      %6522 = vmatprep.mubr.f32.mxu0 0.0
      %6523 = vmatmul.mubr.f32.gmra.mrb[0].mxu0 %v5783
      %v6524 = vpop.f32.mrb[0].mxu0
      %v6525 = vadd.f32 %v2998, %v6524
      %v6526 = vpop.f32.mrb[0].mxu0
      %v6527 = vadd.f32 %v2999, %v6526
      %6528 = vmatprep.mubr.f32.mxu0 0.0
      %6529 = vmatmul.mubr.f32.gmra.mrb[0].mxu0 %v5786
      %v6530 = vpop.f32.mrb[0].mxu0
      %v6531 = vadd.f32 %v3004, %v6530
      %v6532 = vpop.f32.mrb[0].mxu0
      %v6533 = vadd.f32 %v3005, %v6532
      %6534 = vmatprep.mubr.f32.mxu0 0.0
      %6535 = vmatmul.mubr.f32.gmra.mrb[0].mxu0 %v5789
      %v6536 = vpop.f32.mrb[0].mxu0
      %v6537 = vadd.f32 %v3010, %v6536
      %v6538 = vpop.f32.mrb[0].mxu0
      %v6539 = vadd.f32 %v3011, %v6538
      %6540 = vmatprep.mubr.f32.mxu0 0.0
      %6541 = vmatmul.mubr.f32.gmra.mrb[0].mxu0 %v5792
      %v6542 = vpop.f32.mrb[0].mxu0
      %v6543 = vadd.f32 %v3016, %v6542
      %v6544 = vpop.f32.mrb[0].mxu0
      %v6545 = vadd.f32 %v3017, %v6544
      %6546 = vmatprep.mubr.f32.mxu0 0.0
      %6547 = vmatmul.mubr.f32.gmra.mrb[0].mxu0 %v5795
      %v6548 = vpop.f32.mrb[0].mxu0
      %v6549 = vadd.f32 %v3022, %v6548
      %v6550 = vpop.f32.mrb[0].mxu0
      %v6551 = vadd.f32 %v3023, %v6550
      %6552 = vmatprep.mubr.f32.mxu0 0.0
      %6553 = vmatmul.mubr.f32.gmra.mrb[0].mxu0 %v5798
      %v6554 = vpop.f32.mrb[0].mxu0
      %v6555 = vadd.f32 %v3028, %v6554
      %v6556 = vpop.f32.mrb[0].mxu0
      %v6557 = vadd.f32 %v3029, %v6556
      %6558 = vmatprep.mubr.f32.mxu0 0.0
      %6559 = vmatmul.mubr.f32.gmra.mrb[0].mxu0 %v5801
      %v6560 = vpop.f32.mrb[0].mxu0
      %v6561 = vadd.f32 %v3034, %v6560
      %v6562 = vpop.f32.mrb[0].mxu0
      %v6563 = vadd.f32 %v3035, %v6562
      %6564 = vmatprep.mubr.f32.mxu0 0.0
      %6565 = vmatmul.mubr.f32.gmra.mrb[0].mxu0 %v5804
      %v6566 = vpop.f32.mrb[0].mxu0
      %v6567 = vadd.f32 %v3040, %v6566
      %v6568 = vpop.f32.mrb[0].mxu0
      %v6569 = vadd.f32 %v3041, %v6568
      %6570 = vmatprep.mubr.f32.mxu0 0.0
      %6571 = vmatmul.mubr.f32.gmra.mrb[0].mxu0 %v5807
      %v6572 = vpop.f32.mrb[0].mxu0
      %v6573 = vadd.f32 %v3046, %v6572
      %v6574 = vpop.f32.mrb[0].mxu0
      %v6575 = vadd.f32 %v3047, %v6574
      %6576 = vmatprep.mubr.f32.mxu0 0.0
      %6577 = vmatmul.mubr.f32.gmra.mrb[0].mxu0 %v5810
      %v6578 = vpop.f32.mrb[0].mxu0
      %v6579 = vadd.f32 %v3052, %v6578
      %v6580 = vpop.f32.mrb[0].mxu0
      %v6581 = vadd.f32 %v3053, %v6580
      %6582 = vdwg.mxu0
      %6583 = vmax.xlane.f32.xlu0 %v6167
      %v6584 = vpop.xlane.xlu0 %6583
      %6585 = vmax.xlane.f32.xlu0 %v6173
      %v6586 = vpop.xlane.xlu0 %6585
      %6587 = vmax.xlane.f32.xlu0 %v6179
      %v6588 = vpop.xlane.xlu0 %6587
      %6589 = vmax.xlane.f32.xlu0 %v6185
      %v6590 = vpop.xlane.xlu0 %6589
      %6591 = vmax.xlane.f32.xlu0 %v6191
      %v6592 = vpop.xlane.xlu0 %6591
      %6593 = vmax.xlane.f32.xlu0 %v6197
      %v6594 = vpop.xlane.xlu0 %6593
      %6595 = vmax.xlane.f32.xlu0 %v6203
      %v6596 = vpop.xlane.xlu0 %6595
      %6597 = vmax.xlane.f32.xlu0 %v6209
      %v6598 = vpop.xlane.xlu0 %6597
      %6599 = vmax.xlane.f32.xlu0 %v6215
      %v6600 = vpop.xlane.xlu0 %6599
      %6601 = vmax.xlane.f32.xlu0 %v6221
      %v6602 = vpop.xlane.xlu0 %6601
      %6603 = vmax.xlane.f32.xlu0 %v6227
      %v6604 = vpop.xlane.xlu0 %6603
      %6605 = vmax.xlane.f32.xlu0 %v6233
      %v6606 = vpop.xlane.xlu0 %6605
      %6607 = vmax.xlane.f32.xlu0 %v6239
      %v6608 = vpop.xlane.xlu0 %6607
      %6609 = vmax.xlane.f32.xlu0 %v6245
      %v6610 = vpop.xlane.xlu0 %6609
      %6611 = vmax.xlane.f32.xlu0 %v6251
      %v6612 = vpop.xlane.xlu0 %6611
      %6613 = vmax.xlane.f32.xlu0 %v6257
      %v6614 = vpop.xlane.xlu0 %6613
      %v6615 = vsub.f32 %v6167, %v6584
      %v6616 = vsub.f32 %v6173, %v6586
      %v6617 = vsub.f32 %v6179, %v6588
      %v6618 = vsub.f32 %v6185, %v6590
      %v6619 = vsub.f32 %v6191, %v6592
      %v6620 = vsub.f32 %v6197, %v6594
      %v6621 = vsub.f32 %v6203, %v6596
      %v6622 = vsub.f32 %v6209, %v6598
      %v6623 = vsub.f32 %v6215, %v6600
      %v6624 = vsub.f32 %v6221, %v6602
      %v6625 = vsub.f32 %v6227, %v6604
      %v6626 = vsub.f32 %v6233, %v6606
      %v6627 = vsub.f32 %v6239, %v6608
      %v6628 = vsub.f32 %v6245, %v6610
      %v6629 = vsub.f32 %v6251, %v6612
      %v6630 = vsub.f32 %v6257, %v6614
      %v6631 = vmul.f32 %v6615, 1.442695
      %v6632 = vpow.pop %v6631
      %v6633 = vmul.f32 %v6616, 1.442695
      %v6634 = vpow.pop %v6633
      %v6635 = vmul.f32 %v6617, 1.442695
      %v6636 = vpow.pop %v6635
      %v6637 = vmul.f32 %v6618, 1.442695
      %v6638 = vpow.pop %v6637
      %v6639 = vmul.f32 %v6619, 1.442695
      %v6640 = vpow.pop %v6639
      %v6641 = vmul.f32 %v6620, 1.442695
      %v6642 = vpow.pop %v6641
      %v6643 = vmul.f32 %v6621, 1.442695
      %v6644 = vpow.pop %v6643
      %v6645 = vmul.f32 %v6622, 1.442695
      %v6646 = vpow.pop %v6645
      %v6647 = vmul.f32 %v6623, 1.442695
      %v6648 = vpow.pop %v6647
      %v6649 = vmul.f32 %v6624, 1.442695
      %v6650 = vpow.pop %v6649
      %v6651 = vmul.f32 %v6625, 1.442695
      %v6652 = vpow.pop %v6651
      %v6653 = vmul.f32 %v6626, 1.442695
      %v6654 = vpow.pop %v6653
      %v6655 = vmul.f32 %v6627, 1.442695
      %v6656 = vpow.pop %v6655
      %v6657 = vmul.f32 %v6628, 1.442695
      %v6658 = vpow.pop %v6657
      %v6659 = vmul.f32 %v6629, 1.442695
      %v6660 = vpow.pop %v6659
      %v6661 = vmul.f32 %v6630, 1.442695
      %v6662 = vpow.pop %v6661
      %6663 = vadd.xlane.f32.xlu0 %v6632
      %v6664 = vpop.xlane.xlu0 %6663
      %6665 = vadd.xlane.f32.xlu0 %v6634
      %v6666 = vpop.xlane.xlu0 %6665
      %6667 = vadd.xlane.f32.xlu0 %v6636
      %v6668 = vpop.xlane.xlu0 %6667
      %6669 = vadd.xlane.f32.xlu0 %v6638
      %v6670 = vpop.xlane.xlu0 %6669
      %6671 = vadd.xlane.f32.xlu0 %v6640
      %v6672 = vpop.xlane.xlu0 %6671
      %6673 = vadd.xlane.f32.xlu0 %v6642
      %v6674 = vpop.xlane.xlu0 %6673
      %6675 = vadd.xlane.f32.xlu0 %v6644
      %v6676 = vpop.xlane.xlu0 %6675
      %6677 = vadd.xlane.f32.xlu0 %v6646
      %v6678 = vpop.xlane.xlu0 %6677
      %6679 = vadd.xlane.f32.xlu0 %v6648
      %v6680 = vpop.xlane.xlu0 %6679
      %6681 = vadd.xlane.f32.xlu0 %v6650
      %v6682 = vpop.xlane.xlu0 %6681
      %6683 = vadd.xlane.f32.xlu0 %v6652
      %v6684 = vpop.xlane.xlu0 %6683
      %6685 = vadd.xlane.f32.xlu0 %v6654
      %v6686 = vpop.xlane.xlu0 %6685
      %6687 = vadd.xlane.f32.xlu0 %v6656
      %v6688 = vpop.xlane.xlu0 %6687
      %6689 = vadd.xlane.f32.xlu0 %v6658
      %v6690 = vpop.xlane.xlu0 %6689
      %6691 = vadd.xlane.f32.xlu0 %v6660
      %v6692 = vpop.xlane.xlu0 %6691
      %6693 = vadd.xlane.f32.xlu0 %v6662
      %v6694 = vpop.xlane.xlu0 %6693
      %v6695 = vrcp.pop %v6664
      %v6696 = vrcp.pop %v6666
      %v6697 = vrcp.pop %v6668
      %v6698 = vrcp.pop %v6670
      %v6699 = vrcp.pop %v6672
      %v6700 = vrcp.pop %v6674
      %v6701 = vrcp.pop %v6676
      %v6702 = vrcp.pop %v6678
      %v6703 = vrcp.pop %v6680
      %v6704 = vrcp.pop %v6682
      %v6705 = vrcp.pop %v6684
      %v6706 = vrcp.pop %v6686
      %v6707 = vrcp.pop %v6688
      %v6708 = vrcp.pop %v6690
      %v6709 = vrcp.pop %v6692
      %v6710 = vrcp.pop %v6694
      %v6711 = vmul.f32 %v6632, %v6695
      %v6712 = vmul.f32 %v6634, %v6696
      %v6713 = vmul.f32 %v6636, %v6697
      %v6714 = vmul.f32 %v6638, %v6698
      %v6715 = vmul.f32 %v6640, %v6699
      %v6716 = vmul.f32 %v6642, %v6700
      %v6717 = vmul.f32 %v6644, %v6701
      %v6718 = vmul.f32 %v6646, %v6702
      %v6719 = vmul.f32 %v6648, %v6703
      %v6720 = vmul.f32 %v6650, %v6704
      %v6721 = vmul.f32 %v6652, %v6705
      %v6722 = vmul.f32 %v6654, %v6706
      %v6723 = vmul.f32 %v6656, %v6707
      %v6724 = vmul.f32 %v6658, %v6708
      %v6725 = vmul.f32 %v6660, %v6709
      %v6726 = vmul.f32 %v6662, %v6710
      %6727 = vst [vmem:[#allocation3] sm:$0xff] %v6711
      %6728 = vst [vmem:[#allocation3 + $0x30] sm:$0xff] %v6712
      %6729 = vst [vmem:[#allocation3 + $0x60] sm:$0xff] %v6713
      %6730 = vst [vmem:[#allocation3 + $0x90] sm:$0xff] %v6714
      %6731 = vst [vmem:[#allocation3 + $0xc0] sm:$0xff] %v6715
      %6732 = vst [vmem:[#allocation3 + $0xf0] sm:$0xff] %v6716
      %6733 = vst [vmem:[#allocation3 + $0x120] sm:$0xff] %v6717
      %6734 = vst [vmem:[#allocation3 + $0x150] sm:$0xff] %v6718
      %6735 = vst [vmem:[#allocation3 + $0x180] sm:$0xff] %v6719
      %6736 = vst [vmem:[#allocation3 + $0x1b0] sm:$0xff] %v6720
      %6737 = vst [vmem:[#allocation3 + $0x1e0] sm:$0xff] %v6721
      %6738 = vst [vmem:[#allocation3 + $0x210] sm:$0xff] %v6722
      %6739 = vst [vmem:[#allocation3 + $0x240] sm:$0xff] %v6723
      %6740 = vst [vmem:[#allocation3 + $0x270] sm:$0xff] %v6724
      %6741 = vst [vmem:[#allocation3 + $0x2a0] sm:$0xff] %v6725
      %6742 = vst [vmem:[#allocation3 + $0x2d0] sm:$0xff] %v6726
      %6743 = vmax.xlane.f32.xlu0 %v6169
      %v6744 = vpop.xlane.xlu0 %6743
      %6745 = vmax.xlane.f32.xlu0 %v6175
      %v6746 = vpop.xlane.xlu0 %6745
      %6747 = vmax.xlane.f32.xlu0 %v6181
      %v6748 = vpop.xlane.xlu0 %6747
      %6749 = vmax.xlane.f32.xlu0 %v6187
      %v6750 = vpop.xlane.xlu0 %6749
      %6751 = vmax.xlane.f32.xlu0 %v6193
      %v6752 = vpop.xlane.xlu0 %6751
      %6753 = vmax.xlane.f32.xlu0 %v6199
      %v6754 = vpop.xlane.xlu0 %6753
      %6755 = vmax.xlane.f32.xlu0 %v6205
      %v6756 = vpop.xlane.xlu0 %6755
      %6757 = vmax.xlane.f32.xlu0 %v6211
      %v6758 = vpop.xlane.xlu0 %6757
      %6759 = vmax.xlane.f32.xlu0 %v6217
      %v6760 = vpop.xlane.xlu0 %6759
      %6761 = vmax.xlane.f32.xlu0 %v6223
      %v6762 = vpop.xlane.xlu0 %6761
      %6763 = vmax.xlane.f32.xlu0 %v6229
      %v6764 = vpop.xlane.xlu0 %6763
      %6765 = vmax.xlane.f32.xlu0 %v6235
      %v6766 = vpop.xlane.xlu0 %6765
      %6767 = vmax.xlane.f32.xlu0 %v6241
      %v6768 = vpop.xlane.xlu0 %6767
      %6769 = vmax.xlane.f32.xlu0 %v6247
      %v6770 = vpop.xlane.xlu0 %6769
      %6771 = vmax.xlane.f32.xlu0 %v6253
      %v6772 = vpop.xlane.xlu0 %6771
      %6773 = vmax.xlane.f32.xlu0 %v6259
      %v6774 = vpop.xlane.xlu0 %6773
      %v6775 = vsub.f32 %v6169, %v6744
      %v6776 = vsub.f32 %v6175, %v6746
      %v6777 = vsub.f32 %v6181, %v6748
      %v6778 = vsub.f32 %v6187, %v6750
      %v6779 = vsub.f32 %v6193, %v6752
      %v6780 = vsub.f32 %v6199, %v6754
      %v6781 = vsub.f32 %v6205, %v6756
      %v6782 = vsub.f32 %v6211, %v6758
      %v6783 = vsub.f32 %v6217, %v6760
      %v6784 = vsub.f32 %v6223, %v6762
      %v6785 = vsub.f32 %v6229, %v6764
      %v6786 = vsub.f32 %v6235, %v6766
      %v6787 = vsub.f32 %v6241, %v6768
      %v6788 = vsub.f32 %v6247, %v6770
      %v6789 = vsub.f32 %v6253, %v6772
      %v6790 = vsub.f32 %v6259, %v6774
      %v6791 = vmul.f32 %v6775, 1.442695
      %v6792 = vpow.pop %v6791
      %v6793 = vmul.f32 %v6776, 1.442695
      %v6794 = vpow.pop %v6793
      %v6795 = vmul.f32 %v6777, 1.442695
      %v6796 = vpow.pop %v6795
      %v6797 = vmul.f32 %v6778, 1.442695
      %v6798 = vpow.pop %v6797
      %v6799 = vmul.f32 %v6779, 1.442695
      %v6800 = vpow.pop %v6799
      %v6801 = vmul.f32 %v6780, 1.442695
      %v6802 = vpow.pop %v6801
      %v6803 = vmul.f32 %v6781, 1.442695
      %v6804 = vpow.pop %v6803
      %v6805 = vmul.f32 %v6782, 1.442695
      %v6806 = vpow.pop %v6805
      %v6807 = vmul.f32 %v6783, 1.442695
      %v6808 = vpow.pop %v6807
      %v6809 = vmul.f32 %v6784, 1.442695
      %v6810 = vpow.pop %v6809
      %v6811 = vmul.f32 %v6785, 1.442695
      %v6812 = vpow.pop %v6811
      %v6813 = vmul.f32 %v6786, 1.442695
      %v6814 = vpow.pop %v6813
      %v6815 = vmul.f32 %v6787, 1.442695
      %v6816 = vpow.pop %v6815
      %v6817 = vmul.f32 %v6788, 1.442695
      %v6818 = vpow.pop %v6817
      %v6819 = vmul.f32 %v6789, 1.442695
      %v6820 = vpow.pop %v6819
      %v6821 = vmul.f32 %v6790, 1.442695
      %v6822 = vpow.pop %v6821
      %6823 = vadd.xlane.f32.xlu0 %v6792
      %v6824 = vpop.xlane.xlu0 %6823
      %6825 = vadd.xlane.f32.xlu0 %v6794
      %v6826 = vpop.xlane.xlu0 %6825
      %6827 = vadd.xlane.f32.xlu0 %v6796
      %v6828 = vpop.xlane.xlu0 %6827
      %6829 = vadd.xlane.f32.xlu0 %v6798
      %v6830 = vpop.xlane.xlu0 %6829
      %6831 = vadd.xlane.f32.xlu0 %v6800
      %v6832 = vpop.xlane.xlu0 %6831
      %6833 = vadd.xlane.f32.xlu0 %v6802
      %v6834 = vpop.xlane.xlu0 %6833
      %6835 = vadd.xlane.f32.xlu0 %v6804
      %v6836 = vpop.xlane.xlu0 %6835
      %6837 = vadd.xlane.f32.xlu0 %v6806
      %v6838 = vpop.xlane.xlu0 %6837
      %6839 = vadd.xlane.f32.xlu0 %v6808
      %v6840 = vpop.xlane.xlu0 %6839
      %6841 = vadd.xlane.f32.xlu0 %v6810
      %v6842 = vpop.xlane.xlu0 %6841
      %6843 = vadd.xlane.f32.xlu0 %v6812
      %v6844 = vpop.xlane.xlu0 %6843
      %6845 = vadd.xlane.f32.xlu0 %v6814
      %v6846 = vpop.xlane.xlu0 %6845
      %6847 = vadd.xlane.f32.xlu0 %v6816
      %v6848 = vpop.xlane.xlu0 %6847
      %6849 = vadd.xlane.f32.xlu0 %v6818
      %v6850 = vpop.xlane.xlu0 %6849
      %6851 = vadd.xlane.f32.xlu0 %v6820
      %v6852 = vpop.xlane.xlu0 %6851
      %6853 = vadd.xlane.f32.xlu0 %v6822
      %v6854 = vpop.xlane.xlu0 %6853
      %v6855 = vrcp.pop %v6824
      %v6856 = vrcp.pop %v6826
      %v6857 = vrcp.pop %v6828
      %v6858 = vrcp.pop %v6830
      %v6859 = vrcp.pop %v6832
      %v6860 = vrcp.pop %v6834
      %v6861 = vrcp.pop %v6836
      %v6862 = vrcp.pop %v6838
      %v6863 = vrcp.pop %v6840
      %v6864 = vrcp.pop %v6842
      %v6865 = vrcp.pop %v6844
      %v6866 = vrcp.pop %v6846
      %v6867 = vrcp.pop %v6848
      %v6868 = vrcp.pop %v6850
      %v6869 = vrcp.pop %v6852
      %v6870 = vrcp.pop %v6854
      %v6871 = vmul.f32 %v6792, %v6855
      %v6872 = vmul.f32 %v6794, %v6856
      %v6873 = vmul.f32 %v6796, %v6857
      %v6874 = vmul.f32 %v6798, %v6858
      %v6875 = vmul.f32 %v6800, %v6859
      %v6876 = vmul.f32 %v6802, %v6860
      %v6877 = vmul.f32 %v6804, %v6861
      %v6878 = vmul.f32 %v6806, %v6862
      %v6879 = vmul.f32 %v6808, %v6863
      %v6880 = vmul.f32 %v6810, %v6864
      %v6881 = vmul.f32 %v6812, %v6865
      %v6882 = vmul.f32 %v6814, %v6866
      %v6883 = vmul.f32 %v6816, %v6867
      %v6884 = vmul.f32 %v6818, %v6868
      %v6885 = vmul.f32 %v6820, %v6869
      %v6886 = vmul.f32 %v6822, %v6870
      %6887 = vst [vmem:[#allocation3 + $0x8] sm:$0xff] %v6871
      %6888 = vst [vmem:[#allocation3 + $0x38] sm:$0xff] %v6872
      %6889 = vst [vmem:[#allocation3 + $0x68] sm:$0xff] %v6873
      %6890 = vst [vmem:[#allocation3 + $0x98] sm:$0xff] %v6874
      %6891 = vst [vmem:[#allocation3 + $0xc8] sm:$0xff] %v6875
      %6892 = vst [vmem:[#allocation3 + $0xf8] sm:$0xff] %v6876
      %6893 = vst [vmem:[#allocation3 + $0x128] sm:$0xff] %v6877
      %6894 = vst [vmem:[#allocation3 + $0x158] sm:$0xff] %v6878
      %6895 = vst [vmem:[#allocation3 + $0x188] sm:$0xff] %v6879
      %6896 = vst [vmem:[#allocation3 + $0x1b8] sm:$0xff] %v6880
      %6897 = vst [vmem:[#allocation3 + $0x1e8] sm:$0xff] %v6881
      %6898 = vst [vmem:[#allocation3 + $0x218] sm:$0xff] %v6882
      %6899 = vst [vmem:[#allocation3 + $0x248] sm:$0xff] %v6883
      %6900 = vst [vmem:[#allocation3 + $0x278] sm:$0xff] %v6884
      %6901 = vst [vmem:[#allocation3 + $0x2a8] sm:$0xff] %v6885
      %6902 = vst [vmem:[#allocation3 + $0x2d8] sm:$0xff] %v6886
      %6903 = vmax.xlane.f32.xlu0 %v6328
      %v6904 = vpop.xlane.xlu0 %6903
      %6905 = vmax.xlane.f32.xlu0 %v6334
      %v6906 = vpop.xlane.xlu0 %6905
      %6907 = vmax.xlane.f32.xlu0 %v6340
      %v6908 = vpop.xlane.xlu0 %6907
      %6909 = vmax.xlane.f32.xlu0 %v6346
      %v6910 = vpop.xlane.xlu0 %6909
      %6911 = vmax.xlane.f32.xlu0 %v6352
      %v6912 = vpop.xlane.xlu0 %6911
      %6913 = vmax.xlane.f32.xlu0 %v6358
      %v6914 = vpop.xlane.xlu0 %6913
      %6915 = vmax.xlane.f32.xlu0 %v6364
      %v6916 = vpop.xlane.xlu0 %6915
      %6917 = vmax.xlane.f32.xlu0 %v6370
      %v6918 = vpop.xlane.xlu0 %6917
      %6919 = vmax.xlane.f32.xlu0 %v6376
      %v6920 = vpop.xlane.xlu0 %6919
      %6921 = vmax.xlane.f32.xlu0 %v6382
      %v6922 = vpop.xlane.xlu0 %6921
      %6923 = vmax.xlane.f32.xlu0 %v6388
      %v6924 = vpop.xlane.xlu0 %6923
      %6925 = vmax.xlane.f32.xlu0 %v6394
      %v6926 = vpop.xlane.xlu0 %6925
      %6927 = vmax.xlane.f32.xlu0 %v6400
      %v6928 = vpop.xlane.xlu0 %6927
      %6929 = vmax.xlane.f32.xlu0 %v6406
      %v6930 = vpop.xlane.xlu0 %6929
      %6931 = vmax.xlane.f32.xlu0 %v6412
      %v6932 = vpop.xlane.xlu0 %6931
      %6933 = vmax.xlane.f32.xlu0 %v6418
      %v6934 = vpop.xlane.xlu0 %6933
      %v6935 = vsub.f32 %v6328, %v6904
      %v6936 = vsub.f32 %v6334, %v6906
      %v6937 = vsub.f32 %v6340, %v6908
      %v6938 = vsub.f32 %v6346, %v6910
      %v6939 = vsub.f32 %v6352, %v6912
      %v6940 = vsub.f32 %v6358, %v6914
      %v6941 = vsub.f32 %v6364, %v6916
      %v6942 = vsub.f32 %v6370, %v6918
      %v6943 = vsub.f32 %v6376, %v6920
      %v6944 = vsub.f32 %v6382, %v6922
      %v6945 = vsub.f32 %v6388, %v6924
      %v6946 = vsub.f32 %v6394, %v6926
      %v6947 = vsub.f32 %v6400, %v6928
      %v6948 = vsub.f32 %v6406, %v6930
      %v6949 = vsub.f32 %v6412, %v6932
      %v6950 = vsub.f32 %v6418, %v6934
      %v6951 = vmul.f32 %v6935, 1.442695
      %v6952 = vpow.pop %v6951
      %v6953 = vmul.f32 %v6936, 1.442695
      %v6954 = vpow.pop %v6953
      %v6955 = vmul.f32 %v6937, 1.442695
      %v6956 = vpow.pop %v6955
      %v6957 = vmul.f32 %v6938, 1.442695
      %v6958 = vpow.pop %v6957
      %v6959 = vmul.f32 %v6939, 1.442695
      %v6960 = vpow.pop %v6959
      %v6961 = vmul.f32 %v6940, 1.442695
      %v6962 = vpow.pop %v6961
      %v6963 = vmul.f32 %v6941, 1.442695
      %v6964 = vpow.pop %v6963
      %v6965 = vmul.f32 %v6942, 1.442695
      %v6966 = vpow.pop %v6965
      %v6967 = vmul.f32 %v6943, 1.442695
      %v6968 = vpow.pop %v6967
      %v6969 = vmul.f32 %v6944, 1.442695
      %v6970 = vpow.pop %v6969
      %v6971 = vmul.f32 %v6945, 1.442695
      %v6972 = vpow.pop %v6971
      %v6973 = vmul.f32 %v6946, 1.442695
      %v6974 = vpow.pop %v6973
      %v6975 = vmul.f32 %v6947, 1.442695
      %v6976 = vpow.pop %v6975
      %v6977 = vmul.f32 %v6948, 1.442695
      %v6978 = vpow.pop %v6977
      %v6979 = vmul.f32 %v6949, 1.442695
      %v6980 = vpow.pop %v6979
      %v6981 = vmul.f32 %v6950, 1.442695
      %v6982 = vpow.pop %v6981
      %6983 = vadd.xlane.f32.xlu0 %v6952
      %v6984 = vpop.xlane.xlu0 %6983
      %6985 = vadd.xlane.f32.xlu0 %v6954
      %v6986 = vpop.xlane.xlu0 %6985
      %6987 = vadd.xlane.f32.xlu0 %v6956
      %v6988 = vpop.xlane.xlu0 %6987
      %6989 = vadd.xlane.f32.xlu0 %v6958
      %v6990 = vpop.xlane.xlu0 %6989
      %6991 = vadd.xlane.f32.xlu0 %v6960
      %v6992 = vpop.xlane.xlu0 %6991
      %6993 = vadd.xlane.f32.xlu0 %v6962
      %v6994 = vpop.xlane.xlu0 %6993
      %6995 = vadd.xlane.f32.xlu0 %v6964
      %v6996 = vpop.xlane.xlu0 %6995
      %6997 = vadd.xlane.f32.xlu0 %v6966
      %v6998 = vpop.xlane.xlu0 %6997
      %6999 = vadd.xlane.f32.xlu0 %v6968
      %v7000 = vpop.xlane.xlu0 %6999
      %7001 = vadd.xlane.f32.xlu0 %v6970
      %v7002 = vpop.xlane.xlu0 %7001
      %7003 = vadd.xlane.f32.xlu0 %v6972
      %v7004 = vpop.xlane.xlu0 %7003
      %7005 = vadd.xlane.f32.xlu0 %v6974
      %v7006 = vpop.xlane.xlu0 %7005
      %7007 = vadd.xlane.f32.xlu0 %v6976
      %v7008 = vpop.xlane.xlu0 %7007
      %7009 = vadd.xlane.f32.xlu0 %v6978
      %v7010 = vpop.xlane.xlu0 %7009
      %7011 = vadd.xlane.f32.xlu0 %v6980
      %v7012 = vpop.xlane.xlu0 %7011
      %7013 = vadd.xlane.f32.xlu0 %v6982
      %v7014 = vpop.xlane.xlu0 %7013
      %v7015 = vrcp.pop %v6984
      %v7016 = vrcp.pop %v6986
      %v7017 = vrcp.pop %v6988
      %v7018 = vrcp.pop %v6990
      %v7019 = vrcp.pop %v6992
      %v7020 = vrcp.pop %v6994
      %v7021 = vrcp.pop %v6996
      %v7022 = vrcp.pop %v6998
      %v7023 = vrcp.pop %v7000
      %v7024 = vrcp.pop %v7002
      %v7025 = vrcp.pop %v7004
      %v7026 = vrcp.pop %v7006
      %v7027 = vrcp.pop %v7008
      %v7028 = vrcp.pop %v7010
      %v7029 = vrcp.pop %v7012
      %v7030 = vrcp.pop %v7014
      %v7031 = vmul.f32 %v6952, %v7015
      %v7032 = vmul.f32 %v6954, %v7016
      %v7033 = vmul.f32 %v6956, %v7017
      %v7034 = vmul.f32 %v6958, %v7018
      %v7035 = vmul.f32 %v6960, %v7019
      %v7036 = vmul.f32 %v6962, %v7020
      %v7037 = vmul.f32 %v6964, %v7021
      %v7038 = vmul.f32 %v6966, %v7022
      %v7039 = vmul.f32 %v6968, %v7023
      %v7040 = vmul.f32 %v6970, %v7024
      %v7041 = vmul.f32 %v6972, %v7025
      %v7042 = vmul.f32 %v6974, %v7026
      %v7043 = vmul.f32 %v6976, %v7027
      %v7044 = vmul.f32 %v6978, %v7028
      %v7045 = vmul.f32 %v6980, %v7029
      %v7046 = vmul.f32 %v6982, %v7030
      %7047 = vst [vmem:[#allocation3 + $0x10] sm:$0xff] %v7031
      %7048 = vst [vmem:[#allocation3 + $0x40] sm:$0xff] %v7032
      %7049 = vst [vmem:[#allocation3 + $0x70] sm:$0xff] %v7033
      %7050 = vst [vmem:[#allocation3 + $0xa0] sm:$0xff] %v7034
      %7051 = vst [vmem:[#allocation3 + $0xd0] sm:$0xff] %v7035
      %7052 = vst [vmem:[#allocation3 + $0x100] sm:$0xff] %v7036
      %7053 = vst [vmem:[#allocation3 + $0x130] sm:$0xff] %v7037
      %7054 = vst [vmem:[#allocation3 + $0x160] sm:$0xff] %v7038
      %7055 = vst [vmem:[#allocation3 + $0x190] sm:$0xff] %v7039
      %7056 = vst [vmem:[#allocation3 + $0x1c0] sm:$0xff] %v7040
      %7057 = vst [vmem:[#allocation3 + $0x1f0] sm:$0xff] %v7041
      %7058 = vst [vmem:[#allocation3 + $0x220] sm:$0xff] %v7042
      %7059 = vst [vmem:[#allocation3 + $0x250] sm:$0xff] %v7043
      %7060 = vst [vmem:[#allocation3 + $0x280] sm:$0xff] %v7044
      %7061 = vst [vmem:[#allocation3 + $0x2b0] sm:$0xff] %v7045
      %7062 = vst [vmem:[#allocation3 + $0x2e0] sm:$0xff] %v7046
      %7063 = vmax.xlane.f32.xlu0 %v6330
      %v7064 = vpop.xlane.xlu0 %7063
      %7065 = vmax.xlane.f32.xlu0 %v6336
      %v7066 = vpop.xlane.xlu0 %7065
      %7067 = vmax.xlane.f32.xlu0 %v6342
      %v7068 = vpop.xlane.xlu0 %7067
      %7069 = vmax.xlane.f32.xlu0 %v6348
      %v7070 = vpop.xlane.xlu0 %7069
      %7071 = vmax.xlane.f32.xlu0 %v6354
      %v7072 = vpop.xlane.xlu0 %7071
      %7073 = vmax.xlane.f32.xlu0 %v6360
      %v7074 = vpop.xlane.xlu0 %7073
      %7075 = vmax.xlane.f32.xlu0 %v6366
      %v7076 = vpop.xlane.xlu0 %7075
      %7077 = vmax.xlane.f32.xlu0 %v6372
      %v7078 = vpop.xlane.xlu0 %7077
      %7079 = vmax.xlane.f32.xlu0 %v6378
      %v7080 = vpop.xlane.xlu0 %7079
      %7081 = vmax.xlane.f32.xlu0 %v6384
      %v7082 = vpop.xlane.xlu0 %7081
      %7083 = vmax.xlane.f32.xlu0 %v6390
      %v7084 = vpop.xlane.xlu0 %7083
      %7085 = vmax.xlane.f32.xlu0 %v6396
      %v7086 = vpop.xlane.xlu0 %7085
      %7087 = vmax.xlane.f32.xlu0 %v6402
      %v7088 = vpop.xlane.xlu0 %7087
      %7089 = vmax.xlane.f32.xlu0 %v6408
      %v7090 = vpop.xlane.xlu0 %7089
      %7091 = vmax.xlane.f32.xlu0 %v6414
      %v7092 = vpop.xlane.xlu0 %7091
      %7093 = vmax.xlane.f32.xlu0 %v6420
      %v7094 = vpop.xlane.xlu0 %7093
      %v7095 = vsub.f32 %v6330, %v7064
      %v7096 = vsub.f32 %v6336, %v7066
      %v7097 = vsub.f32 %v6342, %v7068
      %v7098 = vsub.f32 %v6348, %v7070
      %v7099 = vsub.f32 %v6354, %v7072
      %v7100 = vsub.f32 %v6360, %v7074
      %v7101 = vsub.f32 %v6366, %v7076
      %v7102 = vsub.f32 %v6372, %v7078
      %v7103 = vsub.f32 %v6378, %v7080
      %v7104 = vsub.f32 %v6384, %v7082
      %v7105 = vsub.f32 %v6390, %v7084
      %v7106 = vsub.f32 %v6396, %v7086
      %v7107 = vsub.f32 %v6402, %v7088
      %v7108 = vsub.f32 %v6408, %v7090
      %v7109 = vsub.f32 %v6414, %v7092
      %v7110 = vsub.f32 %v6420, %v7094
      %v7111 = vmul.f32 %v7095, 1.442695
      %v7112 = vpow.pop %v7111
      %v7113 = vmul.f32 %v7096, 1.442695
      %v7114 = vpow.pop %v7113
      %v7115 = vmul.f32 %v7097, 1.442695
      %v7116 = vpow.pop %v7115
      %v7117 = vmul.f32 %v7098, 1.442695
      %v7118 = vpow.pop %v7117
      %v7119 = vmul.f32 %v7099, 1.442695
      %v7120 = vpow.pop %v7119
      %v7121 = vmul.f32 %v7100, 1.442695
      %v7122 = vpow.pop %v7121
      %v7123 = vmul.f32 %v7101, 1.442695
      %v7124 = vpow.pop %v7123
      %v7125 = vmul.f32 %v7102, 1.442695
      %v7126 = vpow.pop %v7125
      %v7127 = vmul.f32 %v7103, 1.442695
      %v7128 = vpow.pop %v7127
      %v7129 = vmul.f32 %v7104, 1.442695
      %v7130 = vpow.pop %v7129
      %v7131 = vmul.f32 %v7105, 1.442695
      %v7132 = vpow.pop %v7131
      %v7133 = vmul.f32 %v7106, 1.442695
      %v7134 = vpow.pop %v7133
      %v7135 = vmul.f32 %v7107, 1.442695
      %v7136 = vpow.pop %v7135
      %v7137 = vmul.f32 %v7108, 1.442695
      %v7138 = vpow.pop %v7137
      %v7139 = vmul.f32 %v7109, 1.442695
      %v7140 = vpow.pop %v7139
      %v7141 = vmul.f32 %v7110, 1.442695
      %v7142 = vpow.pop %v7141
      %7143 = vadd.xlane.f32.xlu0 %v7112
      %v7144 = vpop.xlane.xlu0 %7143
      %7145 = vadd.xlane.f32.xlu0 %v7114
      %v7146 = vpop.xlane.xlu0 %7145
      %7147 = vadd.xlane.f32.xlu0 %v7116
      %v7148 = vpop.xlane.xlu0 %7147
      %7149 = vadd.xlane.f32.xlu0 %v7118
      %v7150 = vpop.xlane.xlu0 %7149
      %7151 = vadd.xlane.f32.xlu0 %v7120
      %v7152 = vpop.xlane.xlu0 %7151
      %7153 = vadd.xlane.f32.xlu0 %v7122
      %v7154 = vpop.xlane.xlu0 %7153
      %7155 = vadd.xlane.f32.xlu0 %v7124
      %v7156 = vpop.xlane.xlu0 %7155
      %7157 = vadd.xlane.f32.xlu0 %v7126
      %v7158 = vpop.xlane.xlu0 %7157
      %7159 = vadd.xlane.f32.xlu0 %v7128
      %v7160 = vpop.xlane.xlu0 %7159
      %7161 = vadd.xlane.f32.xlu0 %v7130
      %v7162 = vpop.xlane.xlu0 %7161
      %7163 = vadd.xlane.f32.xlu0 %v7132
      %v7164 = vpop.xlane.xlu0 %7163
      %7165 = vadd.xlane.f32.xlu0 %v7134
      %v7166 = vpop.xlane.xlu0 %7165
      %7167 = vadd.xlane.f32.xlu0 %v7136
      %v7168 = vpop.xlane.xlu0 %7167
      %7169 = vadd.xlane.f32.xlu0 %v7138
      %v7170 = vpop.xlane.xlu0 %7169
      %7171 = vadd.xlane.f32.xlu0 %v7140
      %v7172 = vpop.xlane.xlu0 %7171
      %7173 = vadd.xlane.f32.xlu0 %v7142
      %v7174 = vpop.xlane.xlu0 %7173
      %v7175 = vrcp.pop %v7144
      %v7176 = vrcp.pop %v7146
      %v7177 = vrcp.pop %v7148
      %v7178 = vrcp.pop %v7150
      %v7179 = vrcp.pop %v7152
      %v7180 = vrcp.pop %v7154
      %v7181 = vrcp.pop %v7156
      %v7182 = vrcp.pop %v7158
      %v7183 = vrcp.pop %v7160
      %v7184 = vrcp.pop %v7162
      %v7185 = vrcp.pop %v7164
      %v7186 = vrcp.pop %v7166
      %v7187 = vrcp.pop %v7168
      %v7188 = vrcp.pop %v7170
      %v7189 = vrcp.pop %v7172
      %v7190 = vrcp.pop %v7174
      %v7191 = vmul.f32 %v7112, %v7175
      %v7192 = vmul.f32 %v7114, %v7176
      %v7193 = vmul.f32 %v7116, %v7177
      %v7194 = vmul.f32 %v7118, %v7178
      %v7195 = vmul.f32 %v7120, %v7179
      %v7196 = vmul.f32 %v7122, %v7180
      %v7197 = vmul.f32 %v7124, %v7181
      %v7198 = vmul.f32 %v7126, %v7182
      %v7199 = vmul.f32 %v7128, %v7183
      %v7200 = vmul.f32 %v7130, %v7184
      %v7201 = vmul.f32 %v7132, %v7185
      %v7202 = vmul.f32 %v7134, %v7186
      %v7203 = vmul.f32 %v7136, %v7187
      %v7204 = vmul.f32 %v7138, %v7188
      %v7205 = vmul.f32 %v7140, %v7189
      %v7206 = vmul.f32 %v7142, %v7190
      %7207 = vst [vmem:[#allocation3 + $0x18] sm:$0xff] %v7191
      %7208 = vst [vmem:[#allocation3 + $0x48] sm:$0xff] %v7192
      %7209 = vst [vmem:[#allocation3 + $0x78] sm:$0xff] %v7193
      %7210 = vst [vmem:[#allocation3 + $0xa8] sm:$0xff] %v7194
      %7211 = vst [vmem:[#allocation3 + $0xd8] sm:$0xff] %v7195
      %7212 = vst [vmem:[#allocation3 + $0x108] sm:$0xff] %v7196
      %7213 = vst [vmem:[#allocation3 + $0x138] sm:$0xff] %v7197
      %7214 = vst [vmem:[#allocation3 + $0x168] sm:$0xff] %v7198
      %7215 = vst [vmem:[#allocation3 + $0x198] sm:$0xff] %v7199
      %7216 = vst [vmem:[#allocation3 + $0x1c8] sm:$0xff] %v7200
      %7217 = vst [vmem:[#allocation3 + $0x1f8] sm:$0xff] %v7201
      %7218 = vst [vmem:[#allocation3 + $0x228] sm:$0xff] %v7202
      %7219 = vst [vmem:[#allocation3 + $0x258] sm:$0xff] %v7203
      %7220 = vst [vmem:[#allocation3 + $0x288] sm:$0xff] %v7204
      %7221 = vst [vmem:[#allocation3 + $0x2b8] sm:$0xff] %v7205
      %7222 = vst [vmem:[#allocation3 + $0x2e8] sm:$0xff] %v7206
      %7223 = vmax.xlane.f32.xlu0 %v6489
      %v7224 = vpop.xlane.xlu0 %7223
      %7225 = vmax.xlane.f32.xlu0 %v6495
      %v7226 = vpop.xlane.xlu0 %7225
      %7227 = vmax.xlane.f32.xlu0 %v6501
      %v7228 = vpop.xlane.xlu0 %7227
      %7229 = vmax.xlane.f32.xlu0 %v6507
      %v7230 = vpop.xlane.xlu0 %7229
      %7231 = vmax.xlane.f32.xlu0 %v6513
      %v7232 = vpop.xlane.xlu0 %7231
      %7233 = vmax.xlane.f32.xlu0 %v6519
      %v7234 = vpop.xlane.xlu0 %7233
      %7235 = vmax.xlane.f32.xlu0 %v6525
      %v7236 = vpop.xlane.xlu0 %7235
      %7237 = vmax.xlane.f32.xlu0 %v6531
      %v7238 = vpop.xlane.xlu0 %7237
      %7239 = vmax.xlane.f32.xlu0 %v6537
      %v7240 = vpop.xlane.xlu0 %7239
      %7241 = vmax.xlane.f32.xlu0 %v6543
      %v7242 = vpop.xlane.xlu0 %7241
      %7243 = vmax.xlane.f32.xlu0 %v6549
      %v7244 = vpop.xlane.xlu0 %7243
      %7245 = vmax.xlane.f32.xlu0 %v6555
      %v7246 = vpop.xlane.xlu0 %7245
      %7247 = vmax.xlane.f32.xlu0 %v6561
      %v7248 = vpop.xlane.xlu0 %7247
      %7249 = vmax.xlane.f32.xlu0 %v6567
      %v7250 = vpop.xlane.xlu0 %7249
      %7251 = vmax.xlane.f32.xlu0 %v6573
      %v7252 = vpop.xlane.xlu0 %7251
      %7253 = vmax.xlane.f32.xlu0 %v6579
      %v7254 = vpop.xlane.xlu0 %7253
      %v7255 = vsub.f32 %v6489, %v7224
      %v7256 = vsub.f32 %v6495, %v7226
      %v7257 = vsub.f32 %v6501, %v7228
      %v7258 = vsub.f32 %v6507, %v7230
      %v7259 = vsub.f32 %v6513, %v7232
      %v7260 = vsub.f32 %v6519, %v7234
      %v7261 = vsub.f32 %v6525, %v7236
      %v7262 = vsub.f32 %v6531, %v7238
      %v7263 = vsub.f32 %v6537, %v7240
      %v7264 = vsub.f32 %v6543, %v7242
      %v7265 = vsub.f32 %v6549, %v7244
      %v7266 = vsub.f32 %v6555, %v7246
      %v7267 = vsub.f32 %v6561, %v7248
      %v7268 = vsub.f32 %v6567, %v7250
      %v7269 = vsub.f32 %v6573, %v7252
      %v7270 = vsub.f32 %v6579, %v7254
      %v7271 = vmul.f32 %v7255, 1.442695
      %v7272 = vpow.pop %v7271
      %v7273 = vmul.f32 %v7256, 1.442695
      %v7274 = vpow.pop %v7273
      %v7275 = vmul.f32 %v7257, 1.442695
      %v7276 = vpow.pop %v7275
      %v7277 = vmul.f32 %v7258, 1.442695
      %v7278 = vpow.pop %v7277
      %v7279 = vmul.f32 %v7259, 1.442695
      %v7280 = vpow.pop %v7279
      %v7281 = vmul.f32 %v7260, 1.442695
      %v7282 = vpow.pop %v7281
      %v7283 = vmul.f32 %v7261, 1.442695
      %v7284 = vpow.pop %v7283
      %v7285 = vmul.f32 %v7262, 1.442695
      %v7286 = vpow.pop %v7285
      %v7287 = vmul.f32 %v7263, 1.442695
      %v7288 = vpow.pop %v7287
      %v7289 = vmul.f32 %v7264, 1.442695
      %v7290 = vpow.pop %v7289
      %v7291 = vmul.f32 %v7265, 1.442695
      %v7292 = vpow.pop %v7291
      %v7293 = vmul.f32 %v7266, 1.442695
      %v7294 = vpow.pop %v7293
      %v7295 = vmul.f32 %v7267, 1.442695
      %v7296 = vpow.pop %v7295
      %v7297 = vmul.f32 %v7268, 1.442695
      %v7298 = vpow.pop %v7297
      %v7299 = vmul.f32 %v7269, 1.442695
      %v7300 = vpow.pop %v7299
      %v7301 = vmul.f32 %v7270, 1.442695
      %v7302 = vpow.pop %v7301
      %7303 = vadd.xlane.f32.xlu0 %v7272
      %v7304 = vpop.xlane.xlu0 %7303
      %7305 = vadd.xlane.f32.xlu0 %v7274
      %v7306 = vpop.xlane.xlu0 %7305
      %7307 = vadd.xlane.f32.xlu0 %v7276
      %v7308 = vpop.xlane.xlu0 %7307
      %7309 = vadd.xlane.f32.xlu0 %v7278
      %v7310 = vpop.xlane.xlu0 %7309
      %7311 = vadd.xlane.f32.xlu0 %v7280
      %v7312 = vpop.xlane.xlu0 %7311
      %7313 = vadd.xlane.f32.xlu0 %v7282
      %v7314 = vpop.xlane.xlu0 %7313
      %7315 = vadd.xlane.f32.xlu0 %v7284
      %v7316 = vpop.xlane.xlu0 %7315
      %7317 = vadd.xlane.f32.xlu0 %v7286
      %v7318 = vpop.xlane.xlu0 %7317
      %7319 = vadd.xlane.f32.xlu0 %v7288
      %v7320 = vpop.xlane.xlu0 %7319
      %7321 = vadd.xlane.f32.xlu0 %v7290
      %v7322 = vpop.xlane.xlu0 %7321
      %7323 = vadd.xlane.f32.xlu0 %v7292
      %v7324 = vpop.xlane.xlu0 %7323
      %7325 = vadd.xlane.f32.xlu0 %v7294
      %v7326 = vpop.xlane.xlu0 %7325
      %7327 = vadd.xlane.f32.xlu0 %v7296
      %v7328 = vpop.xlane.xlu0 %7327
      %7329 = vadd.xlane.f32.xlu0 %v7298
      %v7330 = vpop.xlane.xlu0 %7329
      %7331 = vadd.xlane.f32.xlu0 %v7300
      %v7332 = vpop.xlane.xlu0 %7331
      %7333 = vadd.xlane.f32.xlu0 %v7302
      %v7334 = vpop.xlane.xlu0 %7333
      %v7335 = vrcp.pop %v7304
      %v7336 = vrcp.pop %v7306
      %v7337 = vrcp.pop %v7308
      %v7338 = vrcp.pop %v7310
      %v7339 = vrcp.pop %v7312
      %v7340 = vrcp.pop %v7314
      %v7341 = vrcp.pop %v7316
      %v7342 = vrcp.pop %v7318
      %v7343 = vrcp.pop %v7320
      %v7344 = vrcp.pop %v7322
      %v7345 = vrcp.pop %v7324
      %v7346 = vrcp.pop %v7326
      %v7347 = vrcp.pop %v7328
      %v7348 = vrcp.pop %v7330
      %v7349 = vrcp.pop %v7332
      %v7350 = vrcp.pop %v7334
      %v7351 = vmul.f32 %v7272, %v7335
      %v7352 = vmul.f32 %v7274, %v7336
      %v7353 = vmul.f32 %v7276, %v7337
      %v7354 = vmul.f32 %v7278, %v7338
      %v7355 = vmul.f32 %v7280, %v7339
      %v7356 = vmul.f32 %v7282, %v7340
      %v7357 = vmul.f32 %v7284, %v7341
      %v7358 = vmul.f32 %v7286, %v7342
      %v7359 = vmul.f32 %v7288, %v7343
      %v7360 = vmul.f32 %v7290, %v7344
      %v7361 = vmul.f32 %v7292, %v7345
      %v7362 = vmul.f32 %v7294, %v7346
      %v7363 = vmul.f32 %v7296, %v7347
      %v7364 = vmul.f32 %v7298, %v7348
      %v7365 = vmul.f32 %v7300, %v7349
      %v7366 = vmul.f32 %v7302, %v7350
      %7367 = vst [vmem:[#allocation3 + $0x20] sm:$0xff] %v7351
      %7368 = vst [vmem:[#allocation3 + $0x50] sm:$0xff] %v7352
      %7369 = vst [vmem:[#allocation3 + $0x80] sm:$0xff] %v7353
      %7370 = vst [vmem:[#allocation3 + $0xb0] sm:$0xff] %v7354
      %7371 = vst [vmem:[#allocation3 + $0xe0] sm:$0xff] %v7355
      %7372 = vst [vmem:[#allocation3 + $0x110] sm:$0xff] %v7356
      %7373 = vst [vmem:[#allocation3 + $0x140] sm:$0xff] %v7357
      %7374 = vst [vmem:[#allocation3 + $0x170] sm:$0xff] %v7358
      %7375 = vst [vmem:[#allocation3 + $0x1a0] sm:$0xff] %v7359
      %7376 = vst [vmem:[#allocation3 + $0x1d0] sm:$0xff] %v7360
      %7377 = vst [vmem:[#allocation3 + $0x200] sm:$0xff] %v7361
      %7378 = vst [vmem:[#allocation3 + $0x230] sm:$0xff] %v7362
      %7379 = vst [vmem:[#allocation3 + $0x260] sm:$0xff] %v7363
      %7380 = vst [vmem:[#allocation3 + $0x290] sm:$0xff] %v7364
      %7381 = vst [vmem:[#allocation3 + $0x2c0] sm:$0xff] %v7365
      %7382 = vst [vmem:[#allocation3 + $0x2f0] sm:$0xff] %v7366
      %7383 = vmax.xlane.f32.xlu0 %v6491
      %v7384 = vpop.xlane.xlu0 %7383
      %7385 = vmax.xlane.f32.xlu0 %v6497
      %v7386 = vpop.xlane.xlu0 %7385
      %7387 = vmax.xlane.f32.xlu0 %v6503
      %v7388 = vpop.xlane.xlu0 %7387
      %7389 = vmax.xlane.f32.xlu0 %v6509
      %v7390 = vpop.xlane.xlu0 %7389
      %7391 = vmax.xlane.f32.xlu0 %v6515
      %v7392 = vpop.xlane.xlu0 %7391
      %7393 = vmax.xlane.f32.xlu0 %v6521
      %v7394 = vpop.xlane.xlu0 %7393
      %7395 = vmax.xlane.f32.xlu0 %v6527
      %v7396 = vpop.xlane.xlu0 %7395
      %7397 = vmax.xlane.f32.xlu0 %v6533
      %v7398 = vpop.xlane.xlu0 %7397
      %7399 = vmax.xlane.f32.xlu0 %v6539
      %v7400 = vpop.xlane.xlu0 %7399
      %7401 = vmax.xlane.f32.xlu0 %v6545
      %v7402 = vpop.xlane.xlu0 %7401
      %7403 = vmax.xlane.f32.xlu0 %v6551
      %v7404 = vpop.xlane.xlu0 %7403
      %7405 = vmax.xlane.f32.xlu0 %v6557
      %v7406 = vpop.xlane.xlu0 %7405
      %7407 = vmax.xlane.f32.xlu0 %v6563
      %v7408 = vpop.xlane.xlu0 %7407
      %7409 = vmax.xlane.f32.xlu0 %v6569
      %v7410 = vpop.xlane.xlu0 %7409
      %7411 = vmax.xlane.f32.xlu0 %v6575
      %v7412 = vpop.xlane.xlu0 %7411
      %7413 = vmax.xlane.f32.xlu0 %v6581
      %v7414 = vpop.xlane.xlu0 %7413
      %v7415 = vsub.f32 %v6491, %v7384
      %v7416 = vsub.f32 %v6497, %v7386
      %v7417 = vsub.f32 %v6503, %v7388
      %v7418 = vsub.f32 %v6509, %v7390
      %v7419 = vsub.f32 %v6515, %v7392
      %v7420 = vsub.f32 %v6521, %v7394
      %v7421 = vsub.f32 %v6527, %v7396
      %v7422 = vsub.f32 %v6533, %v7398
      %v7423 = vsub.f32 %v6539, %v7400
      %v7424 = vsub.f32 %v6545, %v7402
      %v7425 = vsub.f32 %v6551, %v7404
      %v7426 = vsub.f32 %v6557, %v7406
      %v7427 = vsub.f32 %v6563, %v7408
      %v7428 = vsub.f32 %v6569, %v7410
      %v7429 = vsub.f32 %v6575, %v7412
      %v7430 = vsub.f32 %v6581, %v7414
      %v7431 = vmul.f32 %v7415, 1.442695
      %v7432 = vpow.pop %v7431
      %v7433 = vmul.f32 %v7416, 1.442695
      %v7434 = vpow.pop %v7433
      %v7435 = vmul.f32 %v7417, 1.442695
      %v7436 = vpow.pop %v7435
      %v7437 = vmul.f32 %v7418, 1.442695
      %v7438 = vpow.pop %v7437
      %v7439 = vmul.f32 %v7419, 1.442695
      %v7440 = vpow.pop %v7439
      %v7441 = vmul.f32 %v7420, 1.442695
      %v7442 = vpow.pop %v7441
      %v7443 = vmul.f32 %v7421, 1.442695
      %v7444 = vpow.pop %v7443
      %v7445 = vmul.f32 %v7422, 1.442695
      %v7446 = vpow.pop %v7445
      %v7447 = vmul.f32 %v7423, 1.442695
      %v7448 = vpow.pop %v7447
      %v7449 = vmul.f32 %v7424, 1.442695
      %v7450 = vpow.pop %v7449
      %v7451 = vmul.f32 %v7425, 1.442695
      %v7452 = vpow.pop %v7451
      %v7453 = vmul.f32 %v7426, 1.442695
      %v7454 = vpow.pop %v7453
      %v7455 = vmul.f32 %v7427, 1.442695
      %v7456 = vpow.pop %v7455
      %v7457 = vmul.f32 %v7428, 1.442695
      %v7458 = vpow.pop %v7457
      %v7459 = vmul.f32 %v7429, 1.442695
      %v7460 = vpow.pop %v7459
      %v7461 = vmul.f32 %v7430, 1.442695
      %v7462 = vpow.pop %v7461
      %7463 = vadd.xlane.f32.xlu0 %v7432
      %v7464 = vpop.xlane.xlu0 %7463
      %7465 = vadd.xlane.f32.xlu0 %v7434
      %v7466 = vpop.xlane.xlu0 %7465
      %7467 = vadd.xlane.f32.xlu0 %v7436
      %v7468 = vpop.xlane.xlu0 %7467
      %7469 = vadd.xlane.f32.xlu0 %v7438
      %v7470 = vpop.xlane.xlu0 %7469
      %7471 = vadd.xlane.f32.xlu0 %v7440
      %v7472 = vpop.xlane.xlu0 %7471
      %7473 = vadd.xlane.f32.xlu0 %v7442
      %v7474 = vpop.xlane.xlu0 %7473
      %7475 = vadd.xlane.f32.xlu0 %v7444
      %v7476 = vpop.xlane.xlu0 %7475
      %7477 = vadd.xlane.f32.xlu0 %v7446
      %v7478 = vpop.xlane.xlu0 %7477
      %7479 = vadd.xlane.f32.xlu0 %v7448
      %v7480 = vpop.xlane.xlu0 %7479
      %7481 = vadd.xlane.f32.xlu0 %v7450
      %v7482 = vpop.xlane.xlu0 %7481
      %7483 = vadd.xlane.f32.xlu0 %v7452
      %v7484 = vpop.xlane.xlu0 %7483
      %7485 = vadd.xlane.f32.xlu0 %v7454
      %v7486 = vpop.xlane.xlu0 %7485
      %7487 = vadd.xlane.f32.xlu0 %v7456
      %v7488 = vpop.xlane.xlu0 %7487
      %7489 = vadd.xlane.f32.xlu0 %v7458
      %v7490 = vpop.xlane.xlu0 %7489
      %7491 = vadd.xlane.f32.xlu0 %v7460
      %v7492 = vpop.xlane.xlu0 %7491
      %7493 = vadd.xlane.f32.xlu0 %v7462
      %v7494 = vpop.xlane.xlu0 %7493
      %v7495 = vrcp.pop %v7464
      %v7496 = vrcp.pop %v7466
      %v7497 = vrcp.pop %v7468
      %v7498 = vrcp.pop %v7470
      %v7499 = vrcp.pop %v7472
      %v7500 = vrcp.pop %v7474
      %v7501 = vrcp.pop %v7476
      %v7502 = vrcp.pop %v7478
      %v7503 = vrcp.pop %v7480
      %v7504 = vrcp.pop %v7482
      %v7505 = vrcp.pop %v7484
      %v7506 = vrcp.pop %v7486
      %v7507 = vrcp.pop %v7488
      %v7508 = vrcp.pop %v7490
      %v7509 = vrcp.pop %v7492
      %v7510 = vrcp.pop %v7494
      %v7511 = vmul.f32 %v7432, %v7495
      %v7512 = vmul.f32 %v7434, %v7496
      %v7513 = vmul.f32 %v7436, %v7497
      %v7514 = vmul.f32 %v7438, %v7498
      %v7515 = vmul.f32 %v7440, %v7499
      %v7516 = vmul.f32 %v7442, %v7500
      %v7517 = vmul.f32 %v7444, %v7501
      %v7518 = vmul.f32 %v7446, %v7502
      %v7519 = vmul.f32 %v7448, %v7503
      %v7520 = vmul.f32 %v7450, %v7504
      %v7521 = vmul.f32 %v7452, %v7505
      %v7522 = vmul.f32 %v7454, %v7506
      %v7523 = vmul.f32 %v7456, %v7507
      %v7524 = vmul.f32 %v7458, %v7508
      %v7525 = vmul.f32 %v7460, %v7509
      %v7526 = vmul.f32 %v7462, %v7510
      %7527 = vst [vmem:[#allocation3 + $0x28] sm:$0xff] %v7511
      %7528 = vst [vmem:[#allocation3 + $0x58] sm:$0xff] %v7512
      %7529 = vst [vmem:[#allocation3 + $0x88] sm:$0xff] %v7513
      %7530 = vst [vmem:[#allocation3 + $0xb8] sm:$0xff] %v7514
      %7531 = vst [vmem:[#allocation3 + $0xe8] sm:$0xff] %v7515
      %7532 = vst [vmem:[#allocation3 + $0x118] sm:$0xff] %v7516
      %7533 = vst [vmem:[#allocation3 + $0x148] sm:$0xff] %v7517
      %7534 = vst [vmem:[#allocation3 + $0x178] sm:$0xff] %v7518
      %7535 = vst [vmem:[#allocation3 + $0x1a8] sm:$0xff] %v7519
      %7536 = vst [vmem:[#allocation3 + $0x1d8] sm:$0xff] %v7520
      %7537 = vst [vmem:[#allocation3 + $0x208] sm:$0xff] %v7521
      %7538 = vst [vmem:[#allocation3 + $0x238] sm:$0xff] %v7522
      %7539 = vst [vmem:[#allocation3 + $0x268] sm:$0xff] %v7523
      %7540 = vst [vmem:[#allocation3 + $0x298] sm:$0xff] %v7524
      %7541 = vst [vmem:[#allocation3 + $0x2c8] sm:$0xff] %v7525
      %7542 = vst [vmem:[#allocation3 + $0x2f8] sm:$0xff] %v7526
      %v7543 = vld [vmem:[#allocation3] sm:$0xff]
      %v7544 = vld [vmem:[#allocation3 + $0x8] sm:$0xff]
      %v7545 = vld [vmem:[#allocation3 + $0x10] sm:$0xff]
      %v7546 = vld [vmem:[#allocation3 + $0x18] sm:$0xff]
      %v7547 = vld [vmem:[#allocation3 + $0x20] sm:$0xff]
      %v7548 = vld [vmem:[#allocation3 + $0x28] sm:$0xff]
      %v7549 = vld [vmem:[#allocation3 + $0x30] sm:$0xff]
      %v7550 = vld [vmem:[#allocation3 + $0x38] sm:$0xff]
      %v7551 = vld [vmem:[#allocation3 + $0x40] sm:$0xff]
      %v7552 = vld [vmem:[#allocation3 + $0x48] sm:$0xff]
      %v7553 = vld [vmem:[#allocation3 + $0x50] sm:$0xff]
      %v7554 = vld [vmem:[#allocation3 + $0x58] sm:$0xff]
      %v7555 = vld [vmem:[#allocation3 + $0x60] sm:$0xff]
      %v7556 = vld [vmem:[#allocation3 + $0x68] sm:$0xff]
      %v7557 = vld [vmem:[#allocation3 + $0x70] sm:$0xff]
      %v7558 = vld [vmem:[#allocation3 + $0x78] sm:$0xff]
      %v7559 = vld [vmem:[#allocation3 + $0x80] sm:$0xff]
      %v7560 = vld [vmem:[#allocation3 + $0x88] sm:$0xff]
      %v7561 = vld [vmem:[#allocation3 + $0x90] sm:$0xff]
      %v7562 = vld [vmem:[#allocation3 + $0x98] sm:$0xff]
      %v7563 = vld [vmem:[#allocation3 + $0xa0] sm:$0xff]
      %v7564 = vld [vmem:[#allocation3 + $0xa8] sm:$0xff]
      %v7565 = vld [vmem:[#allocation3 + $0xb0] sm:$0xff]
      %v7566 = vld [vmem:[#allocation3 + $0xb8] sm:$0xff]
      %v7567 = vld [vmem:[#allocation3 + $0xc0] sm:$0xff]
      %v7568 = vld [vmem:[#allocation3 + $0xc8] sm:$0xff]
      %v7569 = vld [vmem:[#allocation3 + $0xd0] sm:$0xff]
      %v7570 = vld [vmem:[#allocation3 + $0xd8] sm:$0xff]
      %v7571 = vld [vmem:[#allocation3 + $0xe0] sm:$0xff]
      %v7572 = vld [vmem:[#allocation3 + $0xe8] sm:$0xff]
      %v7573 = vld [vmem:[#allocation3 + $0xf0] sm:$0xff]
      %v7574 = vld [vmem:[#allocation3 + $0xf8] sm:$0xff]
      %v7575 = vld [vmem:[#allocation3 + $0x100] sm:$0xff]
      %v7576 = vld [vmem:[#allocation3 + $0x108] sm:$0xff]
      %v7577 = vld [vmem:[#allocation3 + $0x110] sm:$0xff]
      %v7578 = vld [vmem:[#allocation3 + $0x118] sm:$0xff]
      %v7579 = vld [vmem:[#allocation3 + $0x120] sm:$0xff]
      %v7580 = vld [vmem:[#allocation3 + $0x128] sm:$0xff]
      %v7581 = vld [vmem:[#allocation3 + $0x130] sm:$0xff]
      %v7582 = vld [vmem:[#allocation3 + $0x138] sm:$0xff]
      %v7583 = vld [vmem:[#allocation3 + $0x140] sm:$0xff]
      %v7584 = vld [vmem:[#allocation3 + $0x148] sm:$0xff]
      %v7585 = vld [vmem:[#allocation3 + $0x150] sm:$0xff]
      %v7586 = vld [vmem:[#allocation3 + $0x158] sm:$0xff]
      %v7587 = vld [vmem:[#allocation3 + $0x160] sm:$0xff]
      %v7588 = vld [vmem:[#allocation3 + $0x168] sm:$0xff]
      %v7589 = vld [vmem:[#allocation3 + $0x170] sm:$0xff]
      %v7590 = vld [vmem:[#allocation3 + $0x178] sm:$0xff]
      %v7591 = vld [vmem:[#allocation3 + $0x180] sm:$0xff]
      %v7592 = vld [vmem:[#allocation3 + $0x188] sm:$0xff]
      %v7593 = vld [vmem:[#allocation3 + $0x190] sm:$0xff]
      %v7594 = vld [vmem:[#allocation3 + $0x198] sm:$0xff]
      %v7595 = vld [vmem:[#allocation3 + $0x1a0] sm:$0xff]
      %v7596 = vld [vmem:[#allocation3 + $0x1a8] sm:$0xff]
      %v7597 = vld [vmem:[#allocation3 + $0x1b0] sm:$0xff]
      %v7598 = vld [vmem:[#allocation3 + $0x1b8] sm:$0xff]
      %v7599 = vld [vmem:[#allocation3 + $0x1c0] sm:$0xff]
      %v7600 = vld [vmem:[#allocation3 + $0x1c8] sm:$0xff]
      %v7601 = vld [vmem:[#allocation3 + $0x1d0] sm:$0xff]
      %v7602 = vld [vmem:[#allocation3 + $0x1d8] sm:$0xff]
      %v7603 = vld [vmem:[#allocation3 + $0x1e0] sm:$0xff]
      %v7604 = vld [vmem:[#allocation3 + $0x1e8] sm:$0xff]
      %v7605 = vld [vmem:[#allocation3 + $0x1f0] sm:$0xff]
      %v7606 = vld [vmem:[#allocation3 + $0x1f8] sm:$0xff]
      %v7607 = vld [vmem:[#allocation3 + $0x200] sm:$0xff]
      %v7608 = vld [vmem:[#allocation3 + $0x208] sm:$0xff]
      %v7609 = vld [vmem:[#allocation3 + $0x210] sm:$0xff]
      %v7610 = vld [vmem:[#allocation3 + $0x218] sm:$0xff]
      %v7611 = vld [vmem:[#allocation3 + $0x220] sm:$0xff]
      %v7612 = vld [vmem:[#allocation3 + $0x228] sm:$0xff]
      %v7613 = vld [vmem:[#allocation3 + $0x230] sm:$0xff]
      %v7614 = vld [vmem:[#allocation3 + $0x238] sm:$0xff]
      %v7615 = vld [vmem:[#allocation3 + $0x240] sm:$0xff]
      %v7616 = vld [vmem:[#allocation3 + $0x248] sm:$0xff]
      %v7617 = vld [vmem:[#allocation3 + $0x250] sm:$0xff]
      %v7618 = vld [vmem:[#allocation3 + $0x258] sm:$0xff]
      %v7619 = vld [vmem:[#allocation3 + $0x260] sm:$0xff]
      %v7620 = vld [vmem:[#allocation3 + $0x268] sm:$0xff]
      %v7621 = vld [vmem:[#allocation3 + $0x270] sm:$0xff]
      %v7622 = vld [vmem:[#allocation3 + $0x278] sm:$0xff]
      %v7623 = vld [vmem:[#allocation3 + $0x280] sm:$0xff]
      %v7624 = vld [vmem:[#allocation3 + $0x288] sm:$0xff]
      %v7625 = vld [vmem:[#allocation3 + $0x290] sm:$0xff]
      %v7626 = vld [vmem:[#allocation3 + $0x298] sm:$0xff]
      %v7627 = vld [vmem:[#allocation3 + $0x2a0] sm:$0xff]
      %v7628 = vld [vmem:[#allocation3 + $0x2a8] sm:$0xff]
      %v7629 = vld [vmem:[#allocation3 + $0x2b0] sm:$0xff]
      %v7630 = vld [vmem:[#allocation3 + $0x2b8] sm:$0xff]
      %v7631 = vld [vmem:[#allocation3 + $0x2c0] sm:$0xff]
      %v7632 = vld [vmem:[#allocation3 + $0x2c8] sm:$0xff]
      %v7633 = vld [vmem:[#allocation3 + $0x2d0] sm:$0xff]
      %v7634 = vld [vmem:[#allocation3 + $0x2d8] sm:$0xff]
      %v7635 = vld [vmem:[#allocation3 + $0x2e0] sm:$0xff]
      %v7636 = vld [vmem:[#allocation3 + $0x2e8] sm:$0xff]
      %v7637 = vld [vmem:[#allocation3 + $0x2f0] sm:$0xff]
      %v7638 = vld [vmem:[#allocation3 + $0x2f8] sm:$0xff]
      %7639 = vmatprep.subr.mxu0 0.0
      %7640 = vmatpush1.msra.mxu0 %v5668
      %7641 = vmatprep.subr.mxu0 0.0
      %7642 = vmatpush1.msra.mxu0 %v5669
      %7643 = vmatprep.subr.mxu0 0.0
      %7644 = vmatpush1.msra.mxu0 %v5670
      %7645 = vmatprep.subr.mxu0 0.0
      %7646 = vmatpush1.msra.mxu0 %v5671
      %7647 = vmatprep.subr.mxu0 0.0
      %7648 = vmatpush1.msra.mxu0 %v5672
      %7649 = vmatprep.subr.mxu0 0.0
      %7650 = vmatpush1.msra.mxu0 %v5673
      %7651 = vmatprep.subr.mxu0 0.0
      %7652 = vmatpush1.msra.mxu0 %v5674
      %7653 = vmatprep.subr.mxu0 0.0
      %7654 = vmatpush1.msra.mxu0 %v5675
      %7655 = vmatprep.subr.mxu0 0.0
      %7656 = vmatpush1.msra.mxu0 %v5676
      %7657 = vmatprep.subr.mxu0 0.0
      %7658 = vmatpush1.msra.mxu0 %v5677
      %7659 = vmatprep.subr.mxu0 0.0
      %7660 = vmatpush1.msra.mxu0 %v5678
      %7661 = vmatprep.subr.mxu0 0.0
      %7662 = vmatpush1.msra.mxu0 %v5679
      %7663 = vmatprep.subr.mxu0 0.0
      %7664 = vmatpush1.msra.mxu0 %v5680
      %7665 = vmatprep.subr.mxu0 0.0
      %7666 = vmatpush1.msra.mxu0 %v5681
      %7667 = vmatprep.subr.mxu0 0.0
      %7668 = vmatpush1.msra.mxu0 %v5682
      %7669 = vmatprep.subr.mxu0 0.0
      %7670 = vmatpush1.msra.mxu0 %v5683
      %7671 = vmatprep.subr.mxu0 0.0
      %7672 = vmatpush1.msra.mxu0 %v5684
      %7673 = vmatprep.subr.mxu0 0.0
      %7674 = vmatpush1.msra.mxu0 %v5685
      %7675 = vmatprep.subr.mxu0 0.0
      %7676 = vmatpush1.msra.mxu0 %v5686
      %7677 = vmatprep.subr.mxu0 0.0
      %7678 = vmatpush1.msra.mxu0 %v5687
      %7679 = vmatprep.subr.mxu0 0.0
      %7680 = vmatpush1.msra.mxu0 %v5688
      %7681 = vmatprep.subr.mxu0 0.0
      %7682 = vmatpush1.msra.mxu0 %v5689
      %7683 = vmatprep.subr.mxu0 0.0
      %7684 = vmatpush1.msra.mxu0 %v5690
      %7685 = vmatprep.subr.mxu0 0.0
      %7686 = vmatpush1.msra.mxu0 %v5691
      %7687 = vmatprep.subr.mxu0 0.0
      %7688 = vmatpush1.msra.mxu0 %v5692
      %7689 = vmatprep.subr.mxu0 0.0
      %7690 = vmatpush1.msra.mxu0 %v5693
      %7691 = vmatprep.subr.mxu0 0.0
      %7692 = vmatpush1.msra.mxu0 %v5694
      %7693 = vmatprep.subr.mxu0 0.0
      %7694 = vmatpush1.msra.mxu0 %v5695
      %7695 = vmatprep.subr.mxu0 0.0
      %7696 = vmatpush1.msra.mxu0 %v5696
      %7697 = vmatprep.subr.mxu0 0.0
      %7698 = vmatpush1.msra.mxu0 %v5697
      %7699 = vmatprep.subr.mxu0 0.0
      %7700 = vmatpush1.msra.mxu0 %v5698
      %7701 = vmatprep.subr.mxu0 0.0
      %7702 = vmatpush1.msra.mxu0 %v5699
      %7703 = vmatprep.mubr.f32.mxu0 %v7544
      %7704 = vmatmul.mubr.f32.gmra.mrb[0].mxu0 %v7543
      %v7705 = vpop.f32.mrb[0].mxu0
      %v7706 = vadd.f32 0.0, %v7705
      %v7707 = vpop.f32.mrb[0].mxu0
      %7708 = vmatprep.mubr.f32.mxu0 %v7550
      %7709 = vmatmul.mubr.f32.gmra.mrb[0].mxu0 %v7549
      %v7710 = vpop.f32.mrb[0].mxu0
      %v7711 = vadd.f32 0.0, %v7710
      %v7712 = vpop.f32.mrb[0].mxu0
      %7713 = vmatprep.mubr.f32.mxu0 %v7556
      %7714 = vmatmul.mubr.f32.gmra.mrb[0].mxu0 %v7555
      %v7715 = vpop.f32.mrb[0].mxu0
      %v7716 = vadd.f32 0.0, %v7715
      %v7717 = vpop.f32.mrb[0].mxu0
      %7718 = vmatprep.mubr.f32.mxu0 %v7562
      %7719 = vmatmul.mubr.f32.gmra.mrb[0].mxu0 %v7561
      %v7720 = vpop.f32.mrb[0].mxu0
      %v7721 = vadd.f32 0.0, %v7720
      %v7722 = vpop.f32.mrb[0].mxu0
      %7723 = vmatprep.mubr.f32.mxu0 %v7568
      %7724 = vmatmul.mubr.f32.gmra.mrb[0].mxu0 %v7567
      %v7725 = vpop.f32.mrb[0].mxu0
      %v7726 = vadd.f32 0.0, %v7725
      %v7727 = vpop.f32.mrb[0].mxu0
      %7728 = vmatprep.mubr.f32.mxu0 %v7574
      %7729 = vmatmul.mubr.f32.gmra.mrb[0].mxu0 %v7573
      %v7730 = vpop.f32.mrb[0].mxu0
      %v7731 = vadd.f32 0.0, %v7730
      %v7732 = vpop.f32.mrb[0].mxu0
      %7733 = vmatprep.mubr.f32.mxu0 %v7580
      %7734 = vmatmul.mubr.f32.gmra.mrb[0].mxu0 %v7579
      %v7735 = vpop.f32.mrb[0].mxu0
      %v7736 = vadd.f32 0.0, %v7735
      %v7737 = vpop.f32.mrb[0].mxu0
      %7738 = vmatprep.mubr.f32.mxu0 %v7586
      %7739 = vmatmul.mubr.f32.gmra.mrb[0].mxu0 %v7585
      %v7740 = vpop.f32.mrb[0].mxu0
      %v7741 = vadd.f32 0.0, %v7740
      %v7742 = vpop.f32.mrb[0].mxu0
      %7743 = vmatprep.mubr.f32.mxu0 %v7592
      %7744 = vmatmul.mubr.f32.gmra.mrb[0].mxu0 %v7591
      %v7745 = vpop.f32.mrb[0].mxu0
      %v7746 = vadd.f32 0.0, %v7745
      %v7747 = vpop.f32.mrb[0].mxu0
      %7748 = vmatprep.mubr.f32.mxu0 %v7598
      %7749 = vmatmul.mubr.f32.gmra.mrb[0].mxu0 %v7597
      %v7750 = vpop.f32.mrb[0].mxu0
      %v7751 = vadd.f32 0.0, %v7750
      %v7752 = vpop.f32.mrb[0].mxu0
      %7753 = vmatprep.mubr.f32.mxu0 %v7604
      %7754 = vmatmul.mubr.f32.gmra.mrb[0].mxu0 %v7603
      %v7755 = vpop.f32.mrb[0].mxu0
      %v7756 = vadd.f32 0.0, %v7755
      %v7757 = vpop.f32.mrb[0].mxu0
      %7758 = vmatprep.mubr.f32.mxu0 %v7610
      %7759 = vmatmul.mubr.f32.gmra.mrb[0].mxu0 %v7609
      %v7760 = vpop.f32.mrb[0].mxu0
      %v7761 = vadd.f32 0.0, %v7760
      %v7762 = vpop.f32.mrb[0].mxu0
      %7763 = vmatprep.mubr.f32.mxu0 %v7616
      %7764 = vmatmul.mubr.f32.gmra.mrb[0].mxu0 %v7615
      %v7765 = vpop.f32.mrb[0].mxu0
      %v7766 = vadd.f32 0.0, %v7765
      %v7767 = vpop.f32.mrb[0].mxu0
      %7768 = vmatprep.mubr.f32.mxu0 %v7622
      %7769 = vmatmul.mubr.f32.gmra.mrb[0].mxu0 %v7621
      %v7770 = vpop.f32.mrb[0].mxu0
      %v7771 = vadd.f32 0.0, %v7770
      %v7772 = vpop.f32.mrb[0].mxu0
      %7773 = vmatprep.mubr.f32.mxu0 %v7628
      %7774 = vmatmul.mubr.f32.gmra.mrb[0].mxu0 %v7627
      %v7775 = vpop.f32.mrb[0].mxu0
      %v7776 = vadd.f32 0.0, %v7775
      %v7777 = vpop.f32.mrb[0].mxu0
      %7778 = vmatprep.mubr.f32.mxu0 %v7634
      %7779 = vmatmul.mubr.f32.gmra.mrb[0].mxu0 %v7633
      %v7780 = vpop.f32.mrb[0].mxu0
      %v7781 = vadd.f32 0.0, %v7780
      %v7782 = vpop.f32.mrb[0].mxu0
      %7783 = vdwg.mxu0
      %7784 = vmatprep.subr.mxu0 0.0
      %7785 = vmatpush1.msra.mxu0 %v5700
      %7786 = vmatprep.subr.mxu0 0.0
      %7787 = vmatpush1.msra.mxu0 %v5701
      %7788 = vmatprep.subr.mxu0 0.0
      %7789 = vmatpush1.msra.mxu0 %v5702
      %7790 = vmatprep.subr.mxu0 0.0
      %7791 = vmatpush1.msra.mxu0 %v5703
      %7792 = vmatprep.subr.mxu0 0.0
      %7793 = vmatpush1.msra.mxu0 %v5704
      %7794 = vmatprep.subr.mxu0 0.0
      %7795 = vmatpush1.msra.mxu0 %v5705
      %7796 = vmatprep.subr.mxu0 0.0
      %7797 = vmatpush1.msra.mxu0 %v5706
      %7798 = vmatprep.subr.mxu0 0.0
      %7799 = vmatpush1.msra.mxu0 %v5707
      %7800 = vmatprep.subr.mxu0 0.0
      %7801 = vmatpush1.msra.mxu0 %v5708
      %7802 = vmatprep.subr.mxu0 0.0
      %7803 = vmatpush1.msra.mxu0 %v5709
      %7804 = vmatprep.subr.mxu0 0.0
      %7805 = vmatpush1.msra.mxu0 %v5710
      %7806 = vmatprep.subr.mxu0 0.0
      %7807 = vmatpush1.msra.mxu0 %v5711
      %7808 = vmatprep.subr.mxu0 0.0
      %7809 = vmatpush1.msra.mxu0 %v5712
      %7810 = vmatprep.subr.mxu0 0.0
      %7811 = vmatpush1.msra.mxu0 %v5713
      %7812 = vmatprep.subr.mxu0 0.0
      %7813 = vmatpush1.msra.mxu0 %v5714
      %7814 = vmatprep.subr.mxu0 0.0
      %7815 = vmatpush1.msra.mxu0 %v5715
      %7816 = vmatprep.subr.mxu0 0.0
      %7817 = vmatpush1.msra.mxu0 %v5716
      %7818 = vmatprep.subr.mxu0 0.0
      %7819 = vmatpush1.msra.mxu0 %v5717
      %7820 = vmatprep.subr.mxu0 0.0
      %7821 = vmatpush1.msra.mxu0 %v5718
      %7822 = vmatprep.subr.mxu0 0.0
      %7823 = vmatpush1.msra.mxu0 %v5719
      %7824 = vmatprep.subr.mxu0 0.0
      %7825 = vmatpush1.msra.mxu0 %v5720
      %7826 = vmatprep.subr.mxu0 0.0
      %7827 = vmatpush1.msra.mxu0 %v5721
      %7828 = vmatprep.subr.mxu0 0.0
      %7829 = vmatpush1.msra.mxu0 %v5722
      %7830 = vmatprep.subr.mxu0 0.0
      %7831 = vmatpush1.msra.mxu0 %v5723
      %7832 = vmatprep.subr.mxu0 0.0
      %7833 = vmatpush1.msra.mxu0 %v5724
      %7834 = vmatprep.subr.mxu0 0.0
      %7835 = vmatpush1.msra.mxu0 %v5725
      %7836 = vmatprep.subr.mxu0 0.0
      %7837 = vmatpush1.msra.mxu0 %v5726
      %7838 = vmatprep.subr.mxu0 0.0
      %7839 = vmatpush1.msra.mxu0 %v5727
      %7840 = vmatprep.subr.mxu0 0.0
      %7841 = vmatpush1.msra.mxu0 %v5728
      %7842 = vmatprep.subr.mxu0 0.0
      %7843 = vmatpush1.msra.mxu0 %v5729
      %7844 = vmatprep.subr.mxu0 0.0
      %7845 = vmatpush1.msra.mxu0 %v5730
      %7846 = vmatprep.subr.mxu0 0.0
      %7847 = vmatpush1.msra.mxu0 %v5731
      %7848 = vmatprep.mubr.f32.mxu0 %v7546
      %7849 = vmatmul.mubr.f32.gmra.mrb[0].mxu0 %v7545
      %v7850 = vpop.f32.mrb[0].mxu0
      %v7851 = vadd.f32 %v7706, %v7850
      %v7852 = vpop.f32.mrb[0].mxu0
      %7853 = vmatprep.mubr.f32.mxu0 %v7552
      %7854 = vmatmul.mubr.f32.gmra.mrb[0].mxu0 %v7551
      %v7855 = vpop.f32.mrb[0].mxu0
      %v7856 = vadd.f32 %v7711, %v7855
      %v7857 = vpop.f32.mrb[0].mxu0
      %7858 = vmatprep.mubr.f32.mxu0 %v7558
      %7859 = vmatmul.mubr.f32.gmra.mrb[0].mxu0 %v7557
      %v7860 = vpop.f32.mrb[0].mxu0
      %v7861 = vadd.f32 %v7716, %v7860
      %v7862 = vpop.f32.mrb[0].mxu0
      %7863 = vmatprep.mubr.f32.mxu0 %v7564
      %7864 = vmatmul.mubr.f32.gmra.mrb[0].mxu0 %v7563
      %v7865 = vpop.f32.mrb[0].mxu0
      %v7866 = vadd.f32 %v7721, %v7865
      %v7867 = vpop.f32.mrb[0].mxu0
      %7868 = vmatprep.mubr.f32.mxu0 %v7570
      %7869 = vmatmul.mubr.f32.gmra.mrb[0].mxu0 %v7569
      %v7870 = vpop.f32.mrb[0].mxu0
      %v7871 = vadd.f32 %v7726, %v7870
      %v7872 = vpop.f32.mrb[0].mxu0
      %7873 = vmatprep.mubr.f32.mxu0 %v7576
      %7874 = vmatmul.mubr.f32.gmra.mrb[0].mxu0 %v7575
      %v7875 = vpop.f32.mrb[0].mxu0
      %v7876 = vadd.f32 %v7731, %v7875
      %v7877 = vpop.f32.mrb[0].mxu0
      %7878 = vmatprep.mubr.f32.mxu0 %v7582
      %7879 = vmatmul.mubr.f32.gmra.mrb[0].mxu0 %v7581
      %v7880 = vpop.f32.mrb[0].mxu0
      %v7881 = vadd.f32 %v7736, %v7880
      %v7882 = vpop.f32.mrb[0].mxu0
      %7883 = vmatprep.mubr.f32.mxu0 %v7588
      %7884 = vmatmul.mubr.f32.gmra.mrb[0].mxu0 %v7587
      %v7885 = vpop.f32.mrb[0].mxu0
      %v7886 = vadd.f32 %v7741, %v7885
      %v7887 = vpop.f32.mrb[0].mxu0
      %7888 = vmatprep.mubr.f32.mxu0 %v7594
      %7889 = vmatmul.mubr.f32.gmra.mrb[0].mxu0 %v7593
      %v7890 = vpop.f32.mrb[0].mxu0
      %v7891 = vadd.f32 %v7746, %v7890
      %v7892 = vpop.f32.mrb[0].mxu0
      %7893 = vmatprep.mubr.f32.mxu0 %v7600
      %7894 = vmatmul.mubr.f32.gmra.mrb[0].mxu0 %v7599
      %v7895 = vpop.f32.mrb[0].mxu0
      %v7896 = vadd.f32 %v7751, %v7895
      %v7897 = vpop.f32.mrb[0].mxu0
      %7898 = vmatprep.mubr.f32.mxu0 %v7606
      %7899 = vmatmul.mubr.f32.gmra.mrb[0].mxu0 %v7605
      %v7900 = vpop.f32.mrb[0].mxu0
      %v7901 = vadd.f32 %v7756, %v7900
      %v7902 = vpop.f32.mrb[0].mxu0
      %7903 = vmatprep.mubr.f32.mxu0 %v7612
      %7904 = vmatmul.mubr.f32.gmra.mrb[0].mxu0 %v7611
      %v7905 = vpop.f32.mrb[0].mxu0
      %v7906 = vadd.f32 %v7761, %v7905
      %v7907 = vpop.f32.mrb[0].mxu0
      %7908 = vmatprep.mubr.f32.mxu0 %v7618
      %7909 = vmatmul.mubr.f32.gmra.mrb[0].mxu0 %v7617
      %v7910 = vpop.f32.mrb[0].mxu0
      %v7911 = vadd.f32 %v7766, %v7910
      %v7912 = vpop.f32.mrb[0].mxu0
      %7913 = vmatprep.mubr.f32.mxu0 %v7624
      %7914 = vmatmul.mubr.f32.gmra.mrb[0].mxu0 %v7623
      %v7915 = vpop.f32.mrb[0].mxu0
      %v7916 = vadd.f32 %v7771, %v7915
      %v7917 = vpop.f32.mrb[0].mxu0
      %7918 = vmatprep.mubr.f32.mxu0 %v7630
      %7919 = vmatmul.mubr.f32.gmra.mrb[0].mxu0 %v7629
      %v7920 = vpop.f32.mrb[0].mxu0
      %v7921 = vadd.f32 %v7776, %v7920
      %v7922 = vpop.f32.mrb[0].mxu0
      %7923 = vmatprep.mubr.f32.mxu0 %v7636
      %7924 = vmatmul.mubr.f32.gmra.mrb[0].mxu0 %v7635
      %v7925 = vpop.f32.mrb[0].mxu0
      %v7926 = vadd.f32 %v7781, %v7925
      %v7927 = vpop.f32.mrb[0].mxu0
      %7928 = vdwg.mxu0
      %7929 = vmatprep.subr.mxu0 0.0
      %7930 = vmatpush1.msra.mxu0 %v5732
      %7931 = vmatprep.subr.mxu0 0.0
      %7932 = vmatpush1.msra.mxu0 %v5733
      %7933 = vmatprep.subr.mxu0 0.0
      %7934 = vmatpush1.msra.mxu0 %v5734
      %7935 = vmatprep.subr.mxu0 0.0
      %7936 = vmatpush1.msra.mxu0 %v5735
      %7937 = vmatprep.subr.mxu0 0.0
      %7938 = vmatpush1.msra.mxu0 %v5736
      %7939 = vmatprep.subr.mxu0 0.0
      %7940 = vmatpush1.msra.mxu0 %v5737
      %7941 = vmatprep.subr.mxu0 0.0
      %7942 = vmatpush1.msra.mxu0 %v5738
      %7943 = vmatprep.subr.mxu0 0.0
      %7944 = vmatpush1.msra.mxu0 %v5739
      %7945 = vmatprep.subr.mxu0 0.0
      %7946 = vmatpush1.msra.mxu0 %v5740
      %7947 = vmatprep.subr.mxu0 0.0
      %7948 = vmatpush1.msra.mxu0 %v5741
      %7949 = vmatprep.subr.mxu0 0.0
      %7950 = vmatpush1.msra.mxu0 %v5742
      %7951 = vmatprep.subr.mxu0 0.0
      %7952 = vmatpush1.msra.mxu0 %v5743
      %7953 = vmatprep.subr.mxu0 0.0
      %7954 = vmatpush1.msra.mxu0 %v5744
      %7955 = vmatprep.subr.mxu0 0.0
      %7956 = vmatpush1.msra.mxu0 %v5745
      %7957 = vmatprep.subr.mxu0 0.0
      %7958 = vmatpush1.msra.mxu0 %v5746
      %7959 = vmatprep.subr.mxu0 0.0
      %7960 = vmatpush1.msra.mxu0 %v5747
      %7961 = vmatprep.subr.mxu0 0.0
      %7962 = vmatpush1.msra.mxu0 %v5748
      %7963 = vmatprep.subr.mxu0 0.0
      %7964 = vmatpush1.msra.mxu0 %v5749
      %7965 = vmatprep.subr.mxu0 0.0
      %7966 = vmatpush1.msra.mxu0 %v5750
      %7967 = vmatprep.subr.mxu0 0.0
      %7968 = vmatpush1.msra.mxu0 %v5751
      %7969 = vmatprep.subr.mxu0 0.0
      %7970 = vmatpush1.msra.mxu0 %v5752
      %7971 = vmatprep.subr.mxu0 0.0
      %7972 = vmatpush1.msra.mxu0 %v5753
      %7973 = vmatprep.subr.mxu0 0.0
      %7974 = vmatpush1.msra.mxu0 %v5754
      %7975 = vmatprep.subr.mxu0 0.0
      %7976 = vmatpush1.msra.mxu0 %v5755
      %7977 = vmatprep.subr.mxu0 0.0
      %7978 = vmatpush1.msra.mxu0 %v5756
      %7979 = vmatprep.subr.mxu0 0.0
      %7980 = vmatpush1.msra.mxu0 %v5757
      %7981 = vmatprep.subr.mxu0 0.0
      %7982 = vmatpush1.msra.mxu0 %v5758
      %7983 = vmatprep.subr.mxu0 0.0
      %7984 = vmatpush1.msra.mxu0 %v5759
      %7985 = vmatprep.subr.mxu0 0.0
      %7986 = vmatpush1.msra.mxu0 %v5760
      %7987 = vmatprep.subr.mxu0 0.0
      %7988 = vmatpush1.msra.mxu0 %v5761
      %7989 = vmatprep.subr.mxu0 0.0
      %7990 = vmatpush1.msra.mxu0 %v5762
      %7991 = vmatprep.subr.mxu0 0.0
      %7992 = vmatpush1.msra.mxu0 %v5763
      %7993 = vmatprep.mubr.f32.mxu0 %v7548
      %7994 = vmatmul.mubr.f32.gmra.mrb[0].mxu0 %v7547
      %v7995 = vpop.f32.mrb[0].mxu0
      %v7996 = vadd.f32 %v7851, %v7995
      %v7997 = vpop.f32.mrb[0].mxu0
      %7998 = vmatprep.mubr.f32.mxu0 %v7554
      %7999 = vmatmul.mubr.f32.gmra.mrb[0].mxu0 %v7553
      %v8000 = vpop.f32.mrb[0].mxu0
      %v8001 = vadd.f32 %v7856, %v8000
      %v8002 = vpop.f32.mrb[0].mxu0
      %8003 = vmatprep.mubr.f32.mxu0 %v7560
      %8004 = vmatmul.mubr.f32.gmra.mrb[0].mxu0 %v7559
      %v8005 = vpop.f32.mrb[0].mxu0
      %v8006 = vadd.f32 %v7861, %v8005
      %v8007 = vpop.f32.mrb[0].mxu0
      %8008 = vmatprep.mubr.f32.mxu0 %v7566
      %8009 = vmatmul.mubr.f32.gmra.mrb[0].mxu0 %v7565
      %v8010 = vpop.f32.mrb[0].mxu0
      %v8011 = vadd.f32 %v7866, %v8010
      %v8012 = vpop.f32.mrb[0].mxu0
      %8013 = vmatprep.mubr.f32.mxu0 %v7572
      %8014 = vmatmul.mubr.f32.gmra.mrb[0].mxu0 %v7571
      %v8015 = vpop.f32.mrb[0].mxu0
      %v8016 = vadd.f32 %v7871, %v8015
      %v8017 = vpop.f32.mrb[0].mxu0
      %8018 = vmatprep.mubr.f32.mxu0 %v7578
      %8019 = vmatmul.mubr.f32.gmra.mrb[0].mxu0 %v7577
      %v8020 = vpop.f32.mrb[0].mxu0
      %v8021 = vadd.f32 %v7876, %v8020
      %v8022 = vpop.f32.mrb[0].mxu0
      %8023 = vmatprep.mubr.f32.mxu0 %v7584
      %8024 = vmatmul.mubr.f32.gmra.mrb[0].mxu0 %v7583
      %v8025 = vpop.f32.mrb[0].mxu0
      %v8026 = vadd.f32 %v7881, %v8025
      %v8027 = vpop.f32.mrb[0].mxu0
      %8028 = vmatprep.mubr.f32.mxu0 %v7590
      %8029 = vmatmul.mubr.f32.gmra.mrb[0].mxu0 %v7589
      %v8030 = vpop.f32.mrb[0].mxu0
      %v8031 = vadd.f32 %v7886, %v8030
      %v8032 = vpop.f32.mrb[0].mxu0
      %8033 = vmatprep.mubr.f32.mxu0 %v7596
      %8034 = vmatmul.mubr.f32.gmra.mrb[0].mxu0 %v7595
      %v8035 = vpop.f32.mrb[0].mxu0
      %v8036 = vadd.f32 %v7891, %v8035
      %v8037 = vpop.f32.mrb[0].mxu0
      %8038 = vmatprep.mubr.f32.mxu0 %v7602
      %8039 = vmatmul.mubr.f32.gmra.mrb[0].mxu0 %v7601
      %v8040 = vpop.f32.mrb[0].mxu0
      %v8041 = vadd.f32 %v7896, %v8040
      %v8042 = vpop.f32.mrb[0].mxu0
      %8043 = vmatprep.mubr.f32.mxu0 %v7608
      %8044 = vmatmul.mubr.f32.gmra.mrb[0].mxu0 %v7607
      %v8045 = vpop.f32.mrb[0].mxu0
      %v8046 = vadd.f32 %v7901, %v8045
      %v8047 = vpop.f32.mrb[0].mxu0
      %8048 = vmatprep.mubr.f32.mxu0 %v7614
      %8049 = vmatmul.mubr.f32.gmra.mrb[0].mxu0 %v7613
      %v8050 = vpop.f32.mrb[0].mxu0
      %v8051 = vadd.f32 %v7906, %v8050
      %v8052 = vpop.f32.mrb[0].mxu0
      %8053 = vmatprep.mubr.f32.mxu0 %v7620
      %8054 = vmatmul.mubr.f32.gmra.mrb[0].mxu0 %v7619
      %v8055 = vpop.f32.mrb[0].mxu0
      %v8056 = vadd.f32 %v7911, %v8055
      %v8057 = vpop.f32.mrb[0].mxu0
      %8058 = vmatprep.mubr.f32.mxu0 %v7626
      %8059 = vmatmul.mubr.f32.gmra.mrb[0].mxu0 %v7625
      %v8060 = vpop.f32.mrb[0].mxu0
      %v8061 = vadd.f32 %v7916, %v8060
      %v8062 = vpop.f32.mrb[0].mxu0
      %8063 = vmatprep.mubr.f32.mxu0 %v7632
      %8064 = vmatmul.mubr.f32.gmra.mrb[0].mxu0 %v7631
      %v8065 = vpop.f32.mrb[0].mxu0
      %v8066 = vadd.f32 %v7921, %v8065
      %v8067 = vpop.f32.mrb[0].mxu0
      %8068 = vmatprep.mubr.f32.mxu0 %v7638
      %8069 = vmatmul.mubr.f32.gmra.mrb[0].mxu0 %v7637
      %v8070 = vpop.f32.mrb[0].mxu0
      %v8071 = vadd.f32 %v7926, %v8070
      %v8072 = vpop.f32.mrb[0].mxu0
      %8073 = vdwg.mxu0
      %8074 = vst.msk [vmem:[#allocation2 + $0x80] sm:$0xff] %vm463, %v7996
      %8075 = vst.msk [vmem:[#allocation2 + $0x88] sm:$0xff] %vm463, %v8001
      %8076 = vst.msk [vmem:[#allocation2 + $0x90] sm:$0xff] %vm463, %v8006
      %8077 = vst.msk [vmem:[#allocation2 + $0x98] sm:$0xff] %vm463, %v8011
      %8078 = vst.msk [vmem:[#allocation2 + $0xa0] sm:$0xff] %vm463, %v8016
      %8079 = vst.msk [vmem:[#allocation2 + $0xa8] sm:$0xff] %vm463, %v8021
      %8080 = vst.msk [vmem:[#allocation2 + $0xb0] sm:$0xff] %vm463, %v8026
      %8081 = vst.msk [vmem:[#allocation2 + $0xb8] sm:$0xff] %vm463, %v8031
      %8082 = vst.msk [vmem:[#allocation2 + $0xc0] sm:$0xff] %vm463, %v8036
      %8083 = vst.msk [vmem:[#allocation2 + $0xc8] sm:$0xff] %vm463, %v8041
      %8084 = vst.msk [vmem:[#allocation2 + $0xd0] sm:$0xff] %vm463, %v8046
      %8085 = vst.msk [vmem:[#allocation2 + $0xd8] sm:$0xff] %vm463, %v8051
      %8086 = vst.msk [vmem:[#allocation2 + $0xe0] sm:$0xff] %vm463, %v8056
      %8087 = vst.msk [vmem:[#allocation2 + $0xe8] sm:$0xff] %vm463, %v8061
      %8088 = vst.msk [vmem:[#allocation2 + $0xf0] sm:$0xff] %vm463, %v8066
      %8089 = vst.msk [vmem:[#allocation2 + $0xf8] sm:$0xff] %vm463, %v8071
      %v8090 = vld [vmem:[#allocation2] sm:$0xff]
      %v8091 = vld [vmem:[#allocation2 + $0x8] sm:$0xff]
      %v8092 = vld [vmem:[#allocation2 + $0x10] sm:$0xff]
      %v8093 = vld [vmem:[#allocation2 + $0x18] sm:$0xff]
      %v8094 = vld [vmem:[#allocation2 + $0x20] sm:$0xff]
      %v8095 = vld [vmem:[#allocation2 + $0x28] sm:$0xff]
      %v8096 = vld [vmem:[#allocation2 + $0x30] sm:$0xff]
      %v8097 = vld [vmem:[#allocation2 + $0x38] sm:$0xff]
      %v8098 = vld [vmem:[#allocation2 + $0x40] sm:$0xff]
      %v8099 = vld [vmem:[#allocation2 + $0x48] sm:$0xff]
      %v8100 = vld [vmem:[#allocation2 + $0x50] sm:$0xff]
      %v8101 = vld [vmem:[#allocation2 + $0x58] sm:$0xff]
      %v8102 = vld [vmem:[#allocation2 + $0x60] sm:$0xff]
      %v8103 = vld [vmem:[#allocation2 + $0x68] sm:$0xff]
      %v8104 = vld [vmem:[#allocation2 + $0x70] sm:$0xff]
      %v8105 = vld [vmem:[#allocation2 + $0x78] sm:$0xff]
      %v8106 = vld [vmem:[#allocation2 + $0x80] sm:$0xff]
      %v8107 = vld [vmem:[#allocation2 + $0x88] sm:$0xff]
      %v8108 = vld [vmem:[#allocation2 + $0x90] sm:$0xff]
      %v8109 = vld [vmem:[#allocation2 + $0x98] sm:$0xff]
      %v8110 = vld [vmem:[#allocation2 + $0xa0] sm:$0xff]
      %v8111 = vld [vmem:[#allocation2 + $0xa8] sm:$0xff]
      %v8112 = vld [vmem:[#allocation2 + $0xb0] sm:$0xff]
      %v8113 = vld [vmem:[#allocation2 + $0xb8] sm:$0xff]
      %v8114 = vld [vmem:[#allocation2 + $0xc0] sm:$0xff]
      %v8115 = vld [vmem:[#allocation2 + $0xc8] sm:$0xff]
      %v8116 = vld [vmem:[#allocation2 + $0xd0] sm:$0xff]
      %v8117 = vld [vmem:[#allocation2 + $0xd8] sm:$0xff]
      %v8118 = vld [vmem:[#allocation2 + $0xe0] sm:$0xff]
      %v8119 = vld [vmem:[#allocation2 + $0xe8] sm:$0xff]
      %v8120 = vld [vmem:[#allocation2 + $0xf0] sm:$0xff]
      %v8121 = vld [vmem:[#allocation2 + $0xf8] sm:$0xff]
      %v8122 = vld [vmem:[%s2] sm:$0xff]
      %v8123 = vld [vmem:[%s2 + $0x8] sm:$0xff]
      %v8124 = vld [vmem:[%s2 + $0x10] sm:$0xff]
      %v8125 = vld [vmem:[%s2 + $0x18] sm:$0xff]
      %v8126 = vld [vmem:[%s2 + $0x20] sm:$0xff]
      %v8127 = vld [vmem:[%s2 + $0x28] sm:$0xff]
      %v8128 = vld [vmem:[%s2 + $0x30] sm:$0xff]
      %v8129 = vld [vmem:[%s2 + $0x38] sm:$0xff]
      %v8130 = vld [vmem:[%s2 + $0x40] sm:$0xff]
      %v8131 = vld [vmem:[%s2 + $0x48] sm:$0xff]
      %v8132 = vld [vmem:[%s2 + $0x50] sm:$0xff]
      %v8133 = vld [vmem:[%s2 + $0x58] sm:$0xff]
      %v8135 = vsel %vm463, %v8090, 0
      %v8138 = vsel %vm463, %v8091, 0
      %v8141 = vsel %vm463, %v8092, 0
      %v8144 = vsel %vm463, %v8093, 0
      %v8147 = vsel %vm463, %v8094, 0
      %v8150 = vsel %vm463, %v8095, 0
      %v8153 = vsel %vm463, %v8096, 0
      %v8156 = vsel %vm463, %v8097, 0
      %v8159 = vsel %vm463, %v8098, 0
      %v8162 = vsel %vm463, %v8099, 0
      %v8165 = vsel %vm463, %v8100, 0
      %v8168 = vsel %vm463, %v8101, 0
      %v8171 = vsel %vm463, %v8102, 0
      %v8174 = vsel %vm463, %v8103, 0
      %v8177 = vsel %vm463, %v8104, 0
      %v8180 = vsel %vm463, %v8105, 0
      %v8183 = vsel %vm463, %v8106, 0
      %v8186 = vsel %vm463, %v8107, 0
      %v8189 = vsel %vm463, %v8108, 0
      %v8192 = vsel %vm463, %v8109, 0
      %v8195 = vsel %vm463, %v8110, 0
      %v8198 = vsel %vm463, %v8111, 0
      %v8201 = vsel %vm463, %v8112, 0
      %v8204 = vsel %vm463, %v8113, 0
      %v8207 = vsel %vm463, %v8114, 0
      %v8210 = vsel %vm463, %v8115, 0
      %v8213 = vsel %vm463, %v8116, 0
      %v8216 = vsel %vm463, %v8117, 0
      %v8219 = vsel %vm463, %v8118, 0
      %v8222 = vsel %vm463, %v8119, 0
      %v8225 = vsel %vm463, %v8120, 0
      %v8228 = vsel %vm463, %v8121, 0
      %8230 = vmatprep.subr.mxu0 0.0
      %8231 = vmatpush1.msra.mxu0 %v8122
      %8232 = vmatprep.subr.mxu0 0.0
      %8233 = vmatpush1.msra.mxu0 %v8123
      %8234 = vmatprep.subr.mxu0 0.0
      %8235 = vmatpush1.msra.mxu0 %v8124
      %8236 = vmatprep.subr.mxu0 0.0
      %8237 = vmatpush1.msra.mxu0 %v8125
      %8238 = vmatprep.subr.mxu0 0.0
      %8239 = vmatpush1.msra.mxu0 %v8126
      %8240 = vmatprep.subr.mxu0 0.0
      %8241 = vmatpush1.msra.mxu0 %v8127
      %8242 = vmatprep.subr.mxu0 0.0
      %8243 = vmatpush1.msra.mxu0 %v8128
      %8244 = vmatprep.subr.mxu0 0.0
      %8245 = vmatpush1.msra.mxu0 %v8129
      %8246 = vmatprep.subr.mxu0 0.0
      %8247 = vmatpush1.msra.mxu0 %v8130
      %8248 = vmatprep.subr.mxu0 0.0
      %8249 = vmatpush1.msra.mxu0 %v8131
      %8250 = vmatprep.subr.mxu0 0.0
      %8251 = vmatpush1.msra.mxu0 %v8132
      %8252 = vmatprep.subr.mxu0 0.0
      %8253 = vmatpush1.msra.mxu0 %v8133
      %8254 = vmatprep.subr.mxu0 0.0
      %8255 = vmatpush1.msra.mxu0 0.0
      %8256 = vmatprep.subr.mxu0 0.0
      %8257 = vmatpush1.msra.mxu0 0.0
      %8258 = vmatprep.subr.mxu0 0.0
      %8259 = vmatpush1.msra.mxu0 0.0
      %8260 = vmatprep.subr.mxu0 0.0
      %8261 = vmatpush1.msra.mxu0 0.0
      %8262 = vmatprep.subr.mxu0 0.0
      %8263 = vmatpush1.msra.mxu0 0.0
      %8264 = vmatprep.subr.mxu0 0.0
      %8265 = vmatpush1.msra.mxu0 0.0
      %8266 = vmatprep.subr.mxu0 0.0
      %8267 = vmatpush1.msra.mxu0 0.0
      %8268 = vmatprep.subr.mxu0 0.0
      %8269 = vmatpush1.msra.mxu0 0.0
      %8270 = vmatprep.subr.mxu0 0.0
      %8271 = vmatpush1.msra.mxu0 0.0
      %8272 = vmatprep.subr.mxu0 0.0
      %8273 = vmatpush1.msra.mxu0 0.0
      %8274 = vmatprep.subr.mxu0 0.0
      %8275 = vmatpush1.msra.mxu0 0.0
      %8276 = vmatprep.subr.mxu0 0.0
      %8277 = vmatpush1.msra.mxu0 0.0
      %8278 = vmatprep.subr.mxu0 0.0
      %8279 = vmatpush1.msra.mxu0 0.0
      %8280 = vmatprep.subr.mxu0 0.0
      %8281 = vmatpush1.msra.mxu0 0.0
      %8282 = vmatprep.subr.mxu0 0.0
      %8283 = vmatpush1.msra.mxu0 0.0
      %8284 = vmatprep.subr.mxu0 0.0
      %8285 = vmatpush1.msra.mxu0 0.0
      %8286 = vmatprep.subr.mxu0 0.0
      %8287 = vmatpush1.msra.mxu0 0.0
      %8288 = vmatprep.subr.mxu0 0.0
      %8289 = vmatpush1.msra.mxu0 0.0
      %8290 = vmatprep.subr.mxu0 0.0
      %8291 = vmatpush1.msra.mxu0 0.0
      %8292 = vmatprep.subr.mxu0 0.0
      %8293 = vmatpush1.msra.mxu0 0.0
      %8294 = vmatprep.mubr.f32.mxu0 0.0
      %8295 = vmatmul.mubr.f32.gmra.mrb[0].mxu0 %v8135
      %v8296 = vpop.f32.mrb[0].mxu0
      %v8297 = vadd.f32 0.0, %v8296
      %v8298 = vpop.f32.mrb[0].mxu0
      %8299 = vmatprep.mubr.f32.mxu0 0.0
      %8300 = vmatmul.mubr.f32.gmra.mrb[0].mxu0 %v8138
      %v8301 = vpop.f32.mrb[0].mxu0
      %v8302 = vadd.f32 0.0, %v8301
      %v8303 = vpop.f32.mrb[0].mxu0
      %8304 = vmatprep.mubr.f32.mxu0 0.0
      %8305 = vmatmul.mubr.f32.gmra.mrb[0].mxu0 %v8141
      %v8306 = vpop.f32.mrb[0].mxu0
      %v8307 = vadd.f32 0.0, %v8306
      %v8308 = vpop.f32.mrb[0].mxu0
      %8309 = vmatprep.mubr.f32.mxu0 0.0
      %8310 = vmatmul.mubr.f32.gmra.mrb[0].mxu0 %v8144
      %v8311 = vpop.f32.mrb[0].mxu0
      %v8312 = vadd.f32 0.0, %v8311
      %v8313 = vpop.f32.mrb[0].mxu0
      %8314 = vmatprep.mubr.f32.mxu0 0.0
      %8315 = vmatmul.mubr.f32.gmra.mrb[0].mxu0 %v8147
      %v8316 = vpop.f32.mrb[0].mxu0
      %v8317 = vadd.f32 0.0, %v8316
      %v8318 = vpop.f32.mrb[0].mxu0
      %8319 = vmatprep.mubr.f32.mxu0 0.0
      %8320 = vmatmul.mubr.f32.gmra.mrb[0].mxu0 %v8150
      %v8321 = vpop.f32.mrb[0].mxu0
      %v8322 = vadd.f32 0.0, %v8321
      %v8323 = vpop.f32.mrb[0].mxu0
      %8324 = vmatprep.mubr.f32.mxu0 0.0
      %8325 = vmatmul.mubr.f32.gmra.mrb[0].mxu0 %v8153
      %v8326 = vpop.f32.mrb[0].mxu0
      %v8327 = vadd.f32 0.0, %v8326
      %v8328 = vpop.f32.mrb[0].mxu0
      %8329 = vmatprep.mubr.f32.mxu0 0.0
      %8330 = vmatmul.mubr.f32.gmra.mrb[0].mxu0 %v8156
      %v8331 = vpop.f32.mrb[0].mxu0
      %v8332 = vadd.f32 0.0, %v8331
      %v8333 = vpop.f32.mrb[0].mxu0
      %8334 = vmatprep.mubr.f32.mxu0 0.0
      %8335 = vmatmul.mubr.f32.gmra.mrb[0].mxu0 %v8159
      %v8336 = vpop.f32.mrb[0].mxu0
      %v8337 = vadd.f32 0.0, %v8336
      %v8338 = vpop.f32.mrb[0].mxu0
      %8339 = vmatprep.mubr.f32.mxu0 0.0
      %8340 = vmatmul.mubr.f32.gmra.mrb[0].mxu0 %v8162
      %v8341 = vpop.f32.mrb[0].mxu0
      %v8342 = vadd.f32 0.0, %v8341
      %v8343 = vpop.f32.mrb[0].mxu0
      %8344 = vmatprep.mubr.f32.mxu0 0.0
      %8345 = vmatmul.mubr.f32.gmra.mrb[0].mxu0 %v8165
      %v8346 = vpop.f32.mrb[0].mxu0
      %v8347 = vadd.f32 0.0, %v8346
      %v8348 = vpop.f32.mrb[0].mxu0
      %8349 = vmatprep.mubr.f32.mxu0 0.0
      %8350 = vmatmul.mubr.f32.gmra.mrb[0].mxu0 %v8168
      %v8351 = vpop.f32.mrb[0].mxu0
      %v8352 = vadd.f32 0.0, %v8351
      %v8353 = vpop.f32.mrb[0].mxu0
      %8354 = vmatprep.mubr.f32.mxu0 0.0
      %8355 = vmatmul.mubr.f32.gmra.mrb[0].mxu0 %v8171
      %v8356 = vpop.f32.mrb[0].mxu0
      %v8357 = vadd.f32 0.0, %v8356
      %v8358 = vpop.f32.mrb[0].mxu0
      %8359 = vmatprep.mubr.f32.mxu0 0.0
      %8360 = vmatmul.mubr.f32.gmra.mrb[0].mxu0 %v8174
      %v8361 = vpop.f32.mrb[0].mxu0
      %v8362 = vadd.f32 0.0, %v8361
      %v8363 = vpop.f32.mrb[0].mxu0
      %8364 = vmatprep.mubr.f32.mxu0 0.0
      %8365 = vmatmul.mubr.f32.gmra.mrb[0].mxu0 %v8177
      %v8366 = vpop.f32.mrb[0].mxu0
      %v8367 = vadd.f32 0.0, %v8366
      %v8368 = vpop.f32.mrb[0].mxu0
      %8369 = vmatprep.mubr.f32.mxu0 0.0
      %8370 = vmatmul.mubr.f32.gmra.mrb[0].mxu0 %v8180
      %v8371 = vpop.f32.mrb[0].mxu0
      %v8372 = vadd.f32 0.0, %v8371
      %v8373 = vpop.f32.mrb[0].mxu0
      %8374 = vmatprep.mubr.f32.mxu0 0.0
      %8375 = vmatmul.mubr.f32.gmra.mrb[0].mxu0 %v8183
      %v8376 = vpop.f32.mrb[0].mxu0
      %v8377 = vadd.f32 0.0, %v8376
      %v8378 = vpop.f32.mrb[0].mxu0
      %8379 = vmatprep.mubr.f32.mxu0 0.0
      %8380 = vmatmul.mubr.f32.gmra.mrb[0].mxu0 %v8186
      %v8381 = vpop.f32.mrb[0].mxu0
      %v8382 = vadd.f32 0.0, %v8381
      %v8383 = vpop.f32.mrb[0].mxu0
      %8384 = vmatprep.mubr.f32.mxu0 0.0
      %8385 = vmatmul.mubr.f32.gmra.mrb[0].mxu0 %v8189
      %v8386 = vpop.f32.mrb[0].mxu0
      %v8387 = vadd.f32 0.0, %v8386
      %v8388 = vpop.f32.mrb[0].mxu0
      %8389 = vmatprep.mubr.f32.mxu0 0.0
      %8390 = vmatmul.mubr.f32.gmra.mrb[0].mxu0 %v8192
      %v8391 = vpop.f32.mrb[0].mxu0
      %v8392 = vadd.f32 0.0, %v8391
      %v8393 = vpop.f32.mrb[0].mxu0
      %8394 = vmatprep.mubr.f32.mxu0 0.0
      %8395 = vmatmul.mubr.f32.gmra.mrb[0].mxu0 %v8195
      %v8396 = vpop.f32.mrb[0].mxu0
      %v8397 = vadd.f32 0.0, %v8396
      %v8398 = vpop.f32.mrb[0].mxu0
      %8399 = vmatprep.mubr.f32.mxu0 0.0
      %8400 = vmatmul.mubr.f32.gmra.mrb[0].mxu0 %v8198
      %v8401 = vpop.f32.mrb[0].mxu0
      %v8402 = vadd.f32 0.0, %v8401
      %v8403 = vpop.f32.mrb[0].mxu0
      %8404 = vmatprep.mubr.f32.mxu0 0.0
      %8405 = vmatmul.mubr.f32.gmra.mrb[0].mxu0 %v8201
      %v8406 = vpop.f32.mrb[0].mxu0
      %v8407 = vadd.f32 0.0, %v8406
      %v8408 = vpop.f32.mrb[0].mxu0
      %8409 = vmatprep.mubr.f32.mxu0 0.0
      %8410 = vmatmul.mubr.f32.gmra.mrb[0].mxu0 %v8204
      %v8411 = vpop.f32.mrb[0].mxu0
      %v8412 = vadd.f32 0.0, %v8411
      %v8413 = vpop.f32.mrb[0].mxu0
      %8414 = vmatprep.mubr.f32.mxu0 0.0
      %8415 = vmatmul.mubr.f32.gmra.mrb[0].mxu0 %v8207
      %v8416 = vpop.f32.mrb[0].mxu0
      %v8417 = vadd.f32 0.0, %v8416
      %v8418 = vpop.f32.mrb[0].mxu0
      %8419 = vmatprep.mubr.f32.mxu0 0.0
      %8420 = vmatmul.mubr.f32.gmra.mrb[0].mxu0 %v8210
      %v8421 = vpop.f32.mrb[0].mxu0
      %v8422 = vadd.f32 0.0, %v8421
      %v8423 = vpop.f32.mrb[0].mxu0
      %8424 = vmatprep.mubr.f32.mxu0 0.0
      %8425 = vmatmul.mubr.f32.gmra.mrb[0].mxu0 %v8213
      %v8426 = vpop.f32.mrb[0].mxu0
      %v8427 = vadd.f32 0.0, %v8426
      %v8428 = vpop.f32.mrb[0].mxu0
      %8429 = vmatprep.mubr.f32.mxu0 0.0
      %8430 = vmatmul.mubr.f32.gmra.mrb[0].mxu0 %v8216
      %v8431 = vpop.f32.mrb[0].mxu0
      %v8432 = vadd.f32 0.0, %v8431
      %v8433 = vpop.f32.mrb[0].mxu0
      %8434 = vmatprep.mubr.f32.mxu0 0.0
      %8435 = vmatmul.mubr.f32.gmra.mrb[0].mxu0 %v8219
      %v8436 = vpop.f32.mrb[0].mxu0
      %v8437 = vadd.f32 0.0, %v8436
      %v8438 = vpop.f32.mrb[0].mxu0
      %8439 = vmatprep.mubr.f32.mxu0 0.0
      %8440 = vmatmul.mubr.f32.gmra.mrb[0].mxu0 %v8222
      %v8441 = vpop.f32.mrb[0].mxu0
      %v8442 = vadd.f32 0.0, %v8441
      %v8443 = vpop.f32.mrb[0].mxu0
      %8444 = vmatprep.mubr.f32.mxu0 0.0
      %8445 = vmatmul.mubr.f32.gmra.mrb[0].mxu0 %v8225
      %v8446 = vpop.f32.mrb[0].mxu0
      %v8447 = vadd.f32 0.0, %v8446
      %v8448 = vpop.f32.mrb[0].mxu0
      %8449 = vmatprep.mubr.f32.mxu0 0.0
      %8450 = vmatmul.mubr.f32.gmra.mrb[0].mxu0 %v8228
      %v8451 = vpop.f32.mrb[0].mxu0
      %v8452 = vadd.f32 0.0, %v8451
      %v8453 = vpop.f32.mrb[0].mxu0
      %8454 = vdwg.mxu0
      %8455 = vst.msk [vmem:[%s393] sm:$0xff] %vm463, %v8297
      %8456 = vst.msk [vmem:[%s393 + $0x8] sm:$0xff] %vm463, %v8302
      %8457 = vst.msk [vmem:[%s393 + $0x10] sm:$0xff] %vm463, %v8307
      %8458 = vst.msk [vmem:[%s393 + $0x18] sm:$0xff] %vm463, %v8312
      %8459 = vst.msk [vmem:[%s393 + $0x20] sm:$0xff] %vm463, %v8317
      %8460 = vst.msk [vmem:[%s393 + $0x28] sm:$0xff] %vm463, %v8322
      %8461 = vst.msk [vmem:[%s393 + $0x30] sm:$0xff] %vm463, %v8327
      %8462 = vst.msk [vmem:[%s393 + $0x38] sm:$0xff] %vm463, %v8332
      %8463 = vst.msk [vmem:[%s393 + $0x40] sm:$0xff] %vm463, %v8337
      %8464 = vst.msk [vmem:[%s393 + $0x48] sm:$0xff] %vm463, %v8342
      %8465 = vst.msk [vmem:[%s393 + $0x50] sm:$0xff] %vm463, %v8347
      %8466 = vst.msk [vmem:[%s393 + $0x58] sm:$0xff] %vm463, %v8352
      %8467 = vst.msk [vmem:[%s393 + $0x60] sm:$0xff] %vm463, %v8357
      %8468 = vst.msk [vmem:[%s393 + $0x68] sm:$0xff] %vm463, %v8362
      %8469 = vst.msk [vmem:[%s393 + $0x70] sm:$0xff] %vm463, %v8367
      %8470 = vst.msk [vmem:[%s393 + $0x78] sm:$0xff] %vm463, %v8372
      %8471 = vst.msk [vmem:[%s393 + $0x80] sm:$0xff] %vm463, %v8377
      %8472 = vst.msk [vmem:[%s393 + $0x88] sm:$0xff] %vm463, %v8382
      %8473 = vst.msk [vmem:[%s393 + $0x90] sm:$0xff] %vm463, %v8387
      %8474 = vst.msk [vmem:[%s393 + $0x98] sm:$0xff] %vm463, %v8392
      %8475 = vst.msk [vmem:[%s393 + $0xa0] sm:$0xff] %vm463, %v8397
      %8476 = vst.msk [vmem:[%s393 + $0xa8] sm:$0xff] %vm463, %v8402
      %8477 = vst.msk [vmem:[%s393 + $0xb0] sm:$0xff] %vm463, %v8407
      %8478 = vst.msk [vmem:[%s393 + $0xb8] sm:$0xff] %vm463, %v8412
      %8479 = vst.msk [vmem:[%s393 + $0xc0] sm:$0xff] %vm463, %v8417
      %8480 = vst.msk [vmem:[%s393 + $0xc8] sm:$0xff] %vm463, %v8422
      %8481 = vst.msk [vmem:[%s393 + $0xd0] sm:$0xff] %vm463, %v8427
      %8482 = vst.msk [vmem:[%s393 + $0xd8] sm:$0xff] %vm463, %v8432
      %8483 = vst.msk [vmem:[%s393 + $0xe0] sm:$0xff] %vm463, %v8437
      %8484 = vst.msk [vmem:[%s393 + $0xe8] sm:$0xff] %vm463, %v8442
      %8485 = vst.msk [vmem:[%s393 + $0xf0] sm:$0xff] %vm463, %v8447
      %8486 = vst.msk [vmem:[%s393 + $0xf8] sm:$0xff] %vm463, %v8452
      %s8487 = smul.u32 2, %s22
      %p8488 = scmp.lt.s32.totalorder %s8487, 3
      %s8489 = scalar_select %p8488, %s8487, 3
      %s8490 = smul.addr %s8489, 16
      %s8491 = smul.addr %s8490, 8
      %s8492 = scalar_lea.vmem %s11, %s8491
      // Predicated region
      $region65: #{tpu_custom_call.1} parent=63 // pred_check
        %p8493 = pneg %p276
      $region66: #{tpu_custom_call.1} parent=63 // pred_check_branch
        %8495 = sbr.rel (%p8493) target = $region68
      $region67: #{tpu_custom_call.1} parent=63 // pred_region
        %s8496 = smul.u32 2, %s22
      $region68: #{tpu_custom_call.1} parent=63 // pred_fallthru
        _
    $region64: #{tpu_custom_call.1} parent=5 // pred_fallthru
      _
    %p8497 = scmp.le.s32.totalorder 2, %s17
    // Predicated region
    $region69: #{tpu_custom_call.1} parent=5 // pred_check
      %p8498 = pneg %p8497
    $region70: #{tpu_custom_call.1} parent=5 // pred_check_branch
      %8500 = sbr.rel (%p8498) target = $region72
    $region71: #{tpu_custom_call.1} parent=5 // pred_region
      %s8501 = ssub.s32 %s17, 2
      // Predicated region
      $region73: #{tpu_custom_call.1} parent=71 // pred_check
        %p8502 = pneg %p282
      $region74: #{tpu_custom_call.1} parent=71 // pred_check_branch
        %8504 = sbr.rel (%p8502) target = $region76
      $region75: #{tpu_custom_call.1} parent=71 // pred_region
        %s8505 = smul.u32 2, %s23
        %p8506 = scmp.lt.s32.totalorder %s8505, 3
        %s8507 = scalar_select %p8506, %s8505, 3
        %s8508 = smul.addr %s8507, 16
        %s8509 = smul.addr %s8508, 8
        %s8510 = scalar_lea.vmem %s11, %s8509
      $region76: #{tpu_custom_call.1} parent=71 // pred_fallthru
        _
    $region72: #{tpu_custom_call.1} parent=5 // pred_fallthru
      _
  $region6: #{tpu_custom_call.1} parent=0 // loop_footer
    %s21 = sadd.s32 1, %s17
  $region7: #{tpu_custom_call.1} parent=0 // loop_footer_branch
    %16 = sbr.rel target = $region3
  $region8: #{tpu_custom_call.1} parent=0 // loop_exit
    _

</llo_original>
